<compile_context>
chip_gen: v7x
topology: tpu7x:2x2x1
jax: 0.10.0
libtpu: 0.0.40
codegen_flags: <defaults>
</compile_context>

<pallas_src>
import jax
import jax.numpy as jnp
from jax import lax
from jax.experimental import pallas as pl
from jax.experimental.pallas import tpu as pltpu

DILATIONS = (1, 2, 4, 8)
MAXPAD = max(DILATIONS)   # one zero-padded scratch big enough for every conv
LANE = 128
SUBLANE = 8


def _round_up(n, m):
    return (n + m - 1) // m * m


def _resident_spec(shape):
    """BlockSpec for a grid-invariant operand (weights / bias).

    The block index never changes over the batch grid, so double buffering
    buys nothing; request a single buffer to halve VMEM residency.  Falls
    back to the default spec on JAX versions without pipeline_mode.
    """
    index_map = lambda b: (0,) * len(shape)
    try:
        return pl.BlockSpec(shape, index_map, pipeline_mode=pl.Buffered(1))
    except Exception:   # pragma: no cover - older jax without pipeline_mode
        return pl.BlockSpec(shape, index_map)


def _make_dblock_kernel(H, Wp, Cp, w_true):
    """Builds the kernel for static shapes.

    H      : spatial height (leading dim, no tiling constraint)
    Wp     : spatial width, padded to a multiple of 8 (sublane dim)
    Cp     : channels, padded to a multiple of 128 (lane dim)
    w_true : original width (columns >= w_true are masked back to zero)
    """
    M = MAXPAD

    def kernel(x_ref, w1, b1, w2, b2, w3, b3, w4, b4, out_ref, pad_ref):
        # x_ref  : (1, H, Wp, Cp)        input tile (NHWC, f32)
        # w*     : (9*Cp, Cp)            conv weights, HWIO rows (ky, kx, ci), bf16
        # b*     : (1, Cp)               conv bias, f32
        # out_ref: (1, H, Wp, Cp)
        # pad_ref: (H+2M, Wp+2M, Cp)     f32 VMEM scratch with a zero frame

        # Zero only the border frame (thin strips); the interior is fully
        # rewritten by every conv.  Re-done each grid step so the scratch is
        # valid on every core under "parallel" batch semantics.
        pad_ref[:M, :, :] = jnp.zeros((M, Wp + 2 * M, Cp), jnp.float32)
        pad_ref[M + H:, :, :] = jnp.zeros((M, Wp + 2 * M, Cp), jnp.float32)
        pad_ref[M:M + H, :M, :] = jnp.zeros((H, M, Cp), jnp.float32)
        pad_ref[M:M + H, M + Wp:, :] = jnp.zeros((H, M, Cp), jnp.float32)

        x = x_ref[0].astype(jnp.float32)        # (H, Wp, Cp)
        acc = x
        cur = x

        if w_true != Wp:
            col = lax.broadcasted_iota(jnp.int32, (1, Wp, 1), 1)
            col_mask = col < w_true

        for (w_ref, b_ref), d in zip(((w1, b1), (w2, b2), (w3, b3), (w4, b4)),
                                     DILATIONS):
            # place the current feature map into the interior (aligned store:
            # sublane offset M=8, extent Wp % 8 == 0)
            pad_ref[M:M + H, M:M + Wp, :] = cur

            # 3 kx-shifted slabs (kx = -1, 0, +1), lane-concatenated ONCE into
            # (H+2d, Wp, 3*Cp) bf16.  Only these W-offset slices can be
            # sublane-misaligned; the per-ky shifts below are leading-dim
            # slices of the in-register concat and are free.
            slabs = []
            for kx in range(3):
                ox = M + (kx - 1) * d
                slabs.append(
                    pad_ref[M - d:M + H + d, ox:ox + Wp, :]
                    .astype(jnp.bfloat16))                    # (H+2d, Wp, Cp)
            cat = jnp.concatenate(slabs, axis=-1)             # (H+2d, Wp, 3Cp)

            # bias-initialized f32 accumulator, 3 MXU dots with K = 3*Cp.
            # Weight rows are ordered (ky, kx, ci): the ky block
            # w_ref[ky*3Cp:(ky+1)*3Cp] matches the [kx=-1 | kx=0 | kx=+1]
            # lane order of `cat`.
            conv = jnp.broadcast_to(b_ref[...], (H * Wp, Cp))
            for ky in range(3):
                lhs = cat[ky * d:ky * d + H].reshape(H * Wp, 3 * Cp)
                rhs = w_ref[ky * 3 * Cp:(ky + 1) * 3 * Cp, :]
                conv = conv + jnp.dot(lhs, rhs,
                                      preferred_element_type=jnp.float32)

            cur = jnp.maximum(conv.reshape(H, Wp, Cp), 0.0)
            if w_true != Wp:
                # keep the "same"-padding semantics of the reference conv:
                # padded columns must stay exactly zero for the next conv.
                cur = jnp.where(col_mask, cur, 0.0)
            acc = acc + cur                      # running sum x + out1 + ...

        out_ref[0] = acc.astype(out_ref.dtype)

    return kernel


def dblock_forward(x_nchw, params):
    """x_nchw: (B, C, H, W) float32.  params: list of 4 (w_hwio, bias) pairs.

    Intended to be called under jax.jit (fuses the layout plumbing and lets
    input_output_aliases reuse the padded input's HBM buffer).
    """
    x = jnp.transpose(x_nchw, (0, 2, 3, 1)).astype(jnp.float32)   # -> NHWC
    B, H, W, C = x.shape

    Cp = _round_up(C, LANE)        # lane-dense channels
    Wp = _round_up(W, SUBLANE)     # tile-aligned sublane dim
    M = MAXPAD

    if (Wp != W) or (Cp != C):
        x = jnp.pad(x, ((0, 0), (0, 0), (0, Wp - W), (0, Cp - C)))

    # weights: (3,3,C,C) HWIO -> zero-pad channels -> (9*Cp, Cp) rows ordered
    # (ky, kx, ci), bf16.  Bias -> (1, Cp) f32.
    w9s, biases = [], []
    for w, bias in params:
        wp = jnp.pad(w, ((0, 0), (0, 0), (0, Cp - C), (0, Cp - C)))
        w9s.append(wp.reshape(9 * Cp, Cp).astype(jnp.bfloat16))
        biases.append(jnp.pad(bias, ((0, 0), (0, Cp - C))).astype(jnp.float32))

    kernel = _make_dblock_kernel(H, Wp, Cp, W)

    in_specs = [pl.BlockSpec((1, H, Wp, Cp), lambda b: (b, 0, 0, 0))]
    args = [x]
    for w9, bias in zip(w9s, biases):
        in_specs.append(_resident_spec((9 * Cp, Cp)))
        in_specs.append(_resident_spec((1, Cp)))
        args.append(w9)
        args.append(bias)

    # VMEM footprint estimate, including in-kernel temporaries.
    pad_bytes = (H + 2 * M) * (Wp + 2 * M) * Cp * 4        # f32 scratch
    cat_bytes = (H + 2 * M) * Wp * 3 * Cp * 2              # bf16 3-slab concat
    live_f32 = 3 * H * Wp * Cp * 4                         # acc, cur, conv
    io_bytes = 2 * 2 * H * Wp * Cp * 4                     # in + out, 2 buffers
    wgt_bytes = 4 * (9 * Cp * Cp * 2 + Cp * 4)             # 1-buffered w + bias
    est = pad_bytes + cat_bytes + live_f32 + io_bytes + wgt_bytes

    try:
        vmem_cap = pltpu.get_tpu_info().vmem_capacity_bytes
    except Exception:                       # pragma: no cover
        vmem_cap = 64 * 1024 * 1024         # conservative (v7x per-TC) fallback
    usable = (vmem_cap * 3) // 4            # headroom for compiler scratch
    vmem_limit = int(min(max(est * 3 // 2, 32 * 1024 * 1024), usable))

    cost = pl.CostEstimate(
        flops=2 * B * len(DILATIONS) * H * Wp * (9 * Cp) * Cp,
        bytes_accessed=2 * B * H * Wp * Cp * 4 + 4 * (9 * Cp * Cp * 2 + Cp * 4),
        transcendentals=0)

    out = pl.pallas_call(
        kernel,
        out_shape=jax.ShapeDtypeStruct((B, H, Wp, Cp), x.dtype),
        grid=(B,),
        in_specs=in_specs,
        out_specs=pl.BlockSpec((1, H, Wp, Cp), lambda b: (b, 0, 0, 0)),
        scratch_shapes=[
            pltpu.VMEM((H + 2 * M, Wp + 2 * M, Cp), jnp.float32),
        ],
        input_output_aliases={0: 0},
        compiler_params=pltpu.CompilerParams(
            dimension_semantics=("parallel",),
            vmem_limit_bytes=vmem_limit),
        cost_estimate=cost,
    )(*args)

    out = out[:, :, :W, :C]
    return jnp.transpose(out, (0, 3, 1, 2))   # -> NCHW


def dblock_reference(x_nchw, params):
    """Pure-JAX reference (lax.conv_general_dilated, f32) for verification."""
    x = jnp.transpose(x_nchw, (0, 2, 3, 1))
    acc = x
    cur = x
    for (w, bias), d in zip(params, DILATIONS):
        conv = lax.conv_general_dilated(
            cur, w, window_strides=(1, 1), padding=[(d, d), (d, d)],
            rhs_dilation=(d, d), dimension_numbers=("NHWC", "HWIO", "NHWC"))
        cur = jnp.maximum(conv + bias[0], 0.0)
        acc = acc + cur
    return jnp.transpose(acc, (0, 3, 1, 2))


def init_dblock_params(key, ch):
    """Deterministic Kaiming-normal (relu) init, zero bias, as in Dblock._init."""
    params = []
    fan_in = ch * 3 * 3
    std = (2.0 / fan_in) ** 0.5
    for _ in DILATIONS:
        key, wk = jax.random.split(key)
        w = jax.random.normal(wk, (3, 3, ch, ch), jnp.float32) * std
        b = jnp.zeros((1, ch), jnp.float32)
        params.append((w, b))
    return params


if __name__ == "__main__":
    B, C, H, W = 2, 4, 16, 16

    key = jax.random.PRNGKey(0)
    key, xk = jax.random.split(key)
    x = jax.random.normal(xk, (B, C, H, W), jnp.float32)

    params = init_dblock_params(key, C)

    fwd = jax.jit(dblock_forward)
    out = jax.block_until_ready(fwd(x, params))

    ref = dblock_reference(x, params)
    assert out.shape == (B, C, H, W)
    # bf16 MXU inputs with f32 accumulation across 4 chained convs.
    assert jnp.allclose(out, ref, atol=2e-1, rtol=2e-2), "mismatch vs reference"

    print("KERNEL_OK")
</pallas_src>

<mosaic_0001>
module attributes {stable_mosaic.version = 11 : i64} {
  func.func @kernel(%arg0: i32, %arg1: memref<1x16x16x128xf32, #tpu.memory_space<vmem>>, %arg2: memref<1152x128xbf16, #tpu.memory_space<vmem>>, %arg3: memref<1x128xf32, #tpu.memory_space<vmem>>, %arg4: memref<1152x128xbf16, #tpu.memory_space<vmem>>, %arg5: memref<1x128xf32, #tpu.memory_space<vmem>>, %arg6: memref<1152x128xbf16, #tpu.memory_space<vmem>>, %arg7: memref<1x128xf32, #tpu.memory_space<vmem>>, %arg8: memref<1152x128xbf16, #tpu.memory_space<vmem>>, %arg9: memref<1x128xf32, #tpu.memory_space<vmem>>, %arg10: memref<1x16x16x128xf32, #tpu.memory_space<vmem>>, %arg11: memref<32x32x128xf32, #tpu.memory_space<vmem>>) attributes {dimension_semantics = [#tpu.dimension_semantics<parallel>], iteration_bounds = array<i64: 2>, scalar_prefetch = 0 : i64, scratch_operands = 1 : i64, tpu.core_type = #tpu.core_type<tc>, window_params = [{transform_indices = @transform_0, window_bounds = array<i64: 1, 16, 16, 128>}, {pipeline_mode = #tpu.pipeline_mode<synchronous>, transform_indices = @transform_1, window_bounds = array<i64: 1152, 128>}, {pipeline_mode = #tpu.pipeline_mode<synchronous>, transform_indices = @transform_2, window_bounds = array<i64: 1, 128>}, {pipeline_mode = #tpu.pipeline_mode<synchronous>, transform_indices = @transform_3, window_bounds = array<i64: 1152, 128>}, {pipeline_mode = #tpu.pipeline_mode<synchronous>, transform_indices = @transform_4, window_bounds = array<i64: 1, 128>}, {pipeline_mode = #tpu.pipeline_mode<synchronous>, transform_indices = @transform_5, window_bounds = array<i64: 1152, 128>}, {pipeline_mode = #tpu.pipeline_mode<synchronous>, transform_indices = @transform_6, window_bounds = array<i64: 1, 128>}, {pipeline_mode = #tpu.pipeline_mode<synchronous>, transform_indices = @transform_7, window_bounds = array<i64: 1152, 128>}, {pipeline_mode = #tpu.pipeline_mode<synchronous>, transform_indices = @transform_8, window_bounds = array<i64: 1, 128>}, {transform_indices = @transform_9, window_bounds = array<i64: 1, 16, 16, 128>}]} {
    %cst = arith.constant 0.000000e+00 : f32
    %0 = vector.broadcast %cst : f32 to vector<8x32x128xf32>
    %c0 = arith.constant 0 : index
    %c0_0 = arith.constant 0 : index
    %c0_1 = arith.constant 0 : index
    %1 = vector.load %arg11[%c0, %c0_0, %c0_1] : memref<32x32x128xf32, #tpu.memory_space<vmem>>, vector<8x32x128xf32>
    tpu.vector_store %arg11[%c0, %c0_0, %c0_1], %0 {strides = array<i32>} : memref<32x32x128xf32, #tpu.memory_space<vmem>>, vector<8x32x128xf32>,
    %cst_2 = arith.constant 0.000000e+00 : f32
    %2 = vector.broadcast %cst_2 : f32 to vector<8x32x128xf32>
    %c24 = arith.constant 24 : index
    %c0_3 = arith.constant 0 : index
    %c0_4 = arith.constant 0 : index
    %3 = vector.load %arg11[%c24, %c0_3, %c0_4] : memref<32x32x128xf32, #tpu.memory_space<vmem>>, vector<8x32x128xf32>
    tpu.vector_store %arg11[%c24, %c0_3, %c0_4], %2 {strides = array<i32>} : memref<32x32x128xf32, #tpu.memory_space<vmem>>, vector<8x32x128xf32>,
    %cst_5 = arith.constant 0.000000e+00 : f32
    %4 = vector.broadcast %cst_5 : f32 to vector<16x8x128xf32>
    %c8 = arith.constant 8 : index
    %c0_6 = arith.constant 0 : index
    %c0_7 = arith.constant 0 : index
    %5 = vector.load %arg11[%c8, %c0_6, %c0_7] : memref<32x32x128xf32, #tpu.memory_space<vmem>>, vector<16x8x128xf32>
    tpu.vector_store %arg11[%c8, %c0_6, %c0_7], %4 {strides = array<i32>} : memref<32x32x128xf32, #tpu.memory_space<vmem>>, vector<16x8x128xf32>,
    %cst_8 = arith.constant 0.000000e+00 : f32
    %6 = vector.broadcast %cst_8 : f32 to vector<16x8x128xf32>
    %c8_9 = arith.constant 8 : index
    %c24_10 = arith.constant 24 : index
    %c0_11 = arith.constant 0 : index
    %7 = vector.load %arg11[%c8_9, %c24_10, %c0_11] : memref<32x32x128xf32, #tpu.memory_space<vmem>>, vector<16x8x128xf32>
    tpu.vector_store %arg11[%c8_9, %c24_10, %c0_11], %6 {strides = array<i32>} : memref<32x32x128xf32, #tpu.memory_space<vmem>>, vector<16x8x128xf32>,
    %c0_12 = arith.constant 0 : index
    %c0_13 = arith.constant 0 : index
    %c0_14 = arith.constant 0 : index
    %c0_15 = arith.constant 0 : index
    %8 = vector.load %arg1[%c0_12, %c0_13, %c0_14, %c0_15] : memref<1x16x16x128xf32, #tpu.memory_space<vmem>>, vector<1x16x16x128xf32>
    %9 = vector.shape_cast %8 : vector<1x16x16x128xf32> to vector<16x16x128xf32>
    %c8_16 = arith.constant 8 : index
    %c8_17 = arith.constant 8 : index
    %c0_18 = arith.constant 0 : index
    %10 = vector.load %arg11[%c8_16, %c8_17, %c0_18] : memref<32x32x128xf32, #tpu.memory_space<vmem>>, vector<16x16x128xf32>
    tpu.vector_store %arg11[%c8_16, %c8_17, %c0_18], %9 {strides = array<i32>} : memref<32x32x128xf32, #tpu.memory_space<vmem>>, vector<16x16x128xf32>,
    %c7 = arith.constant 7 : index
    %c7_19 = arith.constant 7 : index
    %c0_20 = arith.constant 0 : index
    %11 = vector.load %arg11[%c7, %c7_19, %c0_20] : memref<32x32x128xf32, #tpu.memory_space<vmem>>, vector<18x16x128xf32>
    %12 = arith.truncf %11 : vector<18x16x128xf32> to vector<18x16x128xbf16>
    %c7_21 = arith.constant 7 : index
    %c8_22 = arith.constant 8 : index
    %c0_23 = arith.constant 0 : index
    %13 = vector.load %arg11[%c7_21, %c8_22, %c0_23] : memref<32x32x128xf32, #tpu.memory_space<vmem>>, vector<18x16x128xf32>
    %14 = arith.truncf %13 : vector<18x16x128xf32> to vector<18x16x128xbf16>
    %c7_24 = arith.constant 7 : index
    %c9 = arith.constant 9 : index
    %c0_25 = arith.constant 0 : index
    %15 = vector.load %arg11[%c7_24, %c9, %c0_25] : memref<32x32x128xf32, #tpu.memory_space<vmem>>, vector<18x16x128xf32>
    %16 = arith.truncf %15 : vector<18x16x128xf32> to vector<18x16x128xbf16>
    %17 = tpu.concatenate %12, %14, %16 in 2 : vector<18x16x128xbf16>, vector<18x16x128xbf16>, vector<18x16x128xbf16> -> vector<18x16x384xbf16>
    %c0_26 = arith.constant 0 : index
    %c0_27 = arith.constant 0 : index
    %18 = vector.load %arg3[%c0_26, %c0_27] : memref<1x128xf32, #tpu.memory_space<vmem>>, vector<1x128xf32>
    %19 = vector.shape_cast %18 : vector<1x128xf32> to vector<1x128xf32>
    %20 = vector.broadcast %19 : vector<1x128xf32> to vector<256x128xf32>
    %21 = vector.extract_strided_slice %17 {offsets = [0, 0, 0], sizes = [16, 16, 384], strides = [1, 1, 1]} : vector<18x16x384xbf16> to vector<16x16x384xbf16>
    %22 = vector.shape_cast %21 : vector<16x16x384xbf16> to vector<256x384xbf16>
    %c0_28 = arith.constant 0 : index
    %c0_29 = arith.constant 0 : index
    %23 = vector.load %arg2[%c0_28, %c0_29] : memref<1152x128xbf16, #tpu.memory_space<vmem>>, vector<384x128xbf16>
    %cst_30 = arith.constant dense<0.000000e+00> : vector<256x128xf32>
    %24 = tpu.matmul %22, %23, %cst_30 {dimension_numbers = #tpu.dot_dimension_numbers<[1], [0], [0], [1], [0, 0, 1, 1], [], []>} : vector<256x384xbf16>, vector<384x128xbf16>, vector<256x128xf32> -> vector<256x128xf32>
    %25 = arith.addf %20, %24 : vector<256x128xf32>
    %26 = vector.extract_strided_slice %17 {offsets = [1, 0, 0], sizes = [16, 16, 384], strides = [1, 1, 1]} : vector<18x16x384xbf16> to vector<16x16x384xbf16>
    %27 = vector.shape_cast %26 : vector<16x16x384xbf16> to vector<256x384xbf16>
    %c384 = arith.constant 384 : index
    %c0_31 = arith.constant 0 : index
    %28 = vector.load %arg2[%c384, %c0_31] : memref<1152x128xbf16, #tpu.memory_space<vmem>>, vector<384x128xbf16>
    %cst_32 = arith.constant dense<0.000000e+00> : vector<256x128xf32>
    %29 = tpu.matmul %27, %28, %cst_32 {dimension_numbers = #tpu.dot_dimension_numbers<[1], [0], [0], [1], [0, 0, 1, 1], [], []>} : vector<256x384xbf16>, vector<384x128xbf16>, vector<256x128xf32> -> vector<256x128xf32>
    %30 = arith.addf %25, %29 : vector<256x128xf32>
    %31 = vector.extract_strided_slice %17 {offsets = [2, 0, 0], sizes = [16, 16, 384], strides = [1, 1, 1]} : vector<18x16x384xbf16> to vector<16x16x384xbf16>
    %32 = vector.shape_cast %31 : vector<16x16x384xbf16> to vector<256x384xbf16>
    %c768 = arith.constant 768 : index
    %c0_33 = arith.constant 0 : index
    %33 = vector.load %arg2[%c768, %c0_33] : memref<1152x128xbf16, #tpu.memory_space<vmem>>, vector<384x128xbf16>
    %cst_34 = arith.constant dense<0.000000e+00> : vector<256x128xf32>
    %34 = tpu.matmul %32, %33, %cst_34 {dimension_numbers = #tpu.dot_dimension_numbers<[1], [0], [0], [1], [0, 0, 1, 1], [], []>} : vector<256x384xbf16>, vector<384x128xbf16>, vector<256x128xf32> -> vector<256x128xf32>
    %35 = arith.addf %30, %34 : vector<256x128xf32>
    %36 = vector.shape_cast %35 : vector<256x128xf32> to vector<16x16x128xf32>
    %cst_35 = arith.constant 0.000000e+00 : f32
    %37 = vector.broadcast %cst_35 : f32 to vector<16x16x128xf32>
    %38 = arith.maximumf %36, %37 : vector<16x16x128xf32>
    %39 = arith.addf %9, %38 : vector<16x16x128xf32>
    %c8_36 = arith.constant 8 : index
    %c8_37 = arith.constant 8 : index
    %c0_38 = arith.constant 0 : index
    %40 = vector.load %arg11[%c8_36, %c8_37, %c0_38] : memref<32x32x128xf32, #tpu.memory_space<vmem>>, vector<16x16x128xf32>
    tpu.vector_store %arg11[%c8_36, %c8_37, %c0_38], %38 {strides = array<i32>} : memref<32x32x128xf32, #tpu.memory_space<vmem>>, vector<16x16x128xf32>,
    %c6 = arith.constant 6 : index
    %c6_39 = arith.constant 6 : index
    %c0_40 = arith.constant 0 : index
    %41 = vector.load %arg11[%c6, %c6_39, %c0_40] : memref<32x32x128xf32, #tpu.memory_space<vmem>>, vector<20x16x128xf32>
    %42 = arith.truncf %41 : vector<20x16x128xf32> to vector<20x16x128xbf16>
    %c6_41 = arith.constant 6 : index
    %c8_42 = arith.constant 8 : index
    %c0_43 = arith.constant 0 : index
    %43 = vector.load %arg11[%c6_41, %c8_42, %c0_43] : memref<32x32x128xf32, #tpu.memory_space<vmem>>, vector<20x16x128xf32>
    %44 = arith.truncf %43 : vector<20x16x128xf32> to vector<20x16x128xbf16>
    %c6_44 = arith.constant 6 : index
    %c10 = arith.constant 10 : index
    %c0_45 = arith.constant 0 : index
    %45 = vector.load %arg11[%c6_44, %c10, %c0_45] : memref<32x32x128xf32, #tpu.memory_space<vmem>>, vector<20x16x128xf32>
    %46 = arith.truncf %45 : vector<20x16x128xf32> to vector<20x16x128xbf16>
    %47 = tpu.concatenate %42, %44, %46 in 2 : vector<20x16x128xbf16>, vector<20x16x128xbf16>, vector<20x16x128xbf16> -> vector<20x16x384xbf16>
    %c0_46 = arith.constant 0 : index
    %c0_47 = arith.constant 0 : index
    %48 = vector.load %arg5[%c0_46, %c0_47] : memref<1x128xf32, #tpu.memory_space<vmem>>, vector<1x128xf32>
    %49 = vector.shape_cast %48 : vector<1x128xf32> to vector<1x128xf32>
    %50 = vector.broadcast %49 : vector<1x128xf32> to vector<256x128xf32>
    %51 = vector.extract_strided_slice %47 {offsets = [0, 0, 0], sizes = [16, 16, 384], strides = [1, 1, 1]} : vector<20x16x384xbf16> to vector<16x16x384xbf16>
    %52 = vector.shape_cast %51 : vector<16x16x384xbf16> to vector<256x384xbf16>
    %c0_48 = arith.constant 0 : index
    %c0_49 = arith.constant 0 : index
    %53 = vector.load %arg4[%c0_48, %c0_49] : memref<1152x128xbf16, #tpu.memory_space<vmem>>, vector<384x128xbf16>
    %cst_50 = arith.constant dense<0.000000e+00> : vector<256x128xf32>
    %54 = tpu.matmul %52, %53, %cst_50 {dimension_numbers = #tpu.dot_dimension_numbers<[1], [0], [0], [1], [0, 0, 1, 1], [], []>} : vector<256x384xbf16>, vector<384x128xbf16>, vector<256x128xf32> -> vector<256x128xf32>
    %55 = arith.addf %50, %54 : vector<256x128xf32>
    %56 = vector.extract_strided_slice %47 {offsets = [2, 0, 0], sizes = [16, 16, 384], strides = [1, 1, 1]} : vector<20x16x384xbf16> to vector<16x16x384xbf16>
    %57 = vector.shape_cast %56 : vector<16x16x384xbf16> to vector<256x384xbf16>
    %c384_51 = arith.constant 384 : index
    %c0_52 = arith.constant 0 : index
    %58 = vector.load %arg4[%c384_51, %c0_52] : memref<1152x128xbf16, #tpu.memory_space<vmem>>, vector<384x128xbf16>
    %cst_53 = arith.constant dense<0.000000e+00> : vector<256x128xf32>
    %59 = tpu.matmul %57, %58, %cst_53 {dimension_numbers = #tpu.dot_dimension_numbers<[1], [0], [0], [1], [0, 0, 1, 1], [], []>} : vector<256x384xbf16>, vector<384x128xbf16>, vector<256x128xf32> -> vector<256x128xf32>
    %60 = arith.addf %55, %59 : vector<256x128xf32>
    %61 = vector.extract_strided_slice %47 {offsets = [4, 0, 0], sizes = [16, 16, 384], strides = [1, 1, 1]} : vector<20x16x384xbf16> to vector<16x16x384xbf16>
    %62 = vector.shape_cast %61 : vector<16x16x384xbf16> to vector<256x384xbf16>
    %c768_54 = arith.constant 768 : index
    %c0_55 = arith.constant 0 : index
    %63 = vector.load %arg4[%c768_54, %c0_55] : memref<1152x128xbf16, #tpu.memory_space<vmem>>, vector<384x128xbf16>
    %cst_56 = arith.constant dense<0.000000e+00> : vector<256x128xf32>
    %64 = tpu.matmul %62, %63, %cst_56 {dimension_numbers = #tpu.dot_dimension_numbers<[1], [0], [0], [1], [0, 0, 1, 1], [], []>} : vector<256x384xbf16>, vector<384x128xbf16>, vector<256x128xf32> -> vector<256x128xf32>
    %65 = arith.addf %60, %64 : vector<256x128xf32>
    %66 = vector.shape_cast %65 : vector<256x128xf32> to vector<16x16x128xf32>
    %cst_57 = arith.constant 0.000000e+00 : f32
    %67 = vector.broadcast %cst_57 : f32 to vector<16x16x128xf32>
    %68 = arith.maximumf %66, %67 : vector<16x16x128xf32>
    %69 = arith.addf %39, %68 : vector<16x16x128xf32>
    %c8_58 = arith.constant 8 : index
    %c8_59 = arith.constant 8 : index
    %c0_60 = arith.constant 0 : index
    %70 = vector.load %arg11[%c8_58, %c8_59, %c0_60] : memref<32x32x128xf32, #tpu.memory_space<vmem>>, vector<16x16x128xf32>
    tpu.vector_store %arg11[%c8_58, %c8_59, %c0_60], %68 {strides = array<i32>} : memref<32x32x128xf32, #tpu.memory_space<vmem>>, vector<16x16x128xf32>,
    %c4 = arith.constant 4 : index
    %c4_61 = arith.constant 4 : index
    %c0_62 = arith.constant 0 : index
    %71 = vector.load %arg11[%c4, %c4_61, %c0_62] : memref<32x32x128xf32, #tpu.memory_space<vmem>>, vector<24x16x128xf32>
    %72 = arith.truncf %71 : vector<24x16x128xf32> to vector<24x16x128xbf16>
    %c4_63 = arith.constant 4 : index
    %c8_64 = arith.constant 8 : index
    %c0_65 = arith.constant 0 : index
    %73 = vector.load %arg11[%c4_63, %c8_64, %c0_65] : memref<32x32x128xf32, #tpu.memory_space<vmem>>, vector<24x16x128xf32>
    %74 = arith.truncf %73 : vector<24x16x128xf32> to vector<24x16x128xbf16>
    %c4_66 = arith.constant 4 : index
    %c12 = arith.constant 12 : index
    %c0_67 = arith.constant 0 : index
    %75 = vector.load %arg11[%c4_66, %c12, %c0_67] : memref<32x32x128xf32, #tpu.memory_space<vmem>>, vector<24x16x128xf32>
    %76 = arith.truncf %75 : vector<24x16x128xf32> to vector<24x16x128xbf16>
    %77 = tpu.concatenate %72, %74, %76 in 2 : vector<24x16x128xbf16>, vector<24x16x128xbf16>, vector<24x16x128xbf16> -> vector<24x16x384xbf16>
    %c0_68 = arith.constant 0 : index
    %c0_69 = arith.constant 0 : index
    %78 = vector.load %arg7[%c0_68, %c0_69] : memref<1x128xf32, #tpu.memory_space<vmem>>, vector<1x128xf32>
    %79 = vector.shape_cast %78 : vector<1x128xf32> to vector<1x128xf32>
    %80 = vector.broadcast %79 : vector<1x128xf32> to vector<256x128xf32>
    %81 = vector.extract_strided_slice %77 {offsets = [0, 0, 0], sizes = [16, 16, 384], strides = [1, 1, 1]} : vector<24x16x384xbf16> to vector<16x16x384xbf16>
    %82 = vector.shape_cast %81 : vector<16x16x384xbf16> to vector<256x384xbf16>
    %c0_70 = arith.constant 0 : index
    %c0_71 = arith.constant 0 : index
    %83 = vector.load %arg6[%c0_70, %c0_71] : memref<1152x128xbf16, #tpu.memory_space<vmem>>, vector<384x128xbf16>
    %cst_72 = arith.constant dense<0.000000e+00> : vector<256x128xf32>
    %84 = tpu.matmul %82, %83, %cst_72 {dimension_numbers = #tpu.dot_dimension_numbers<[1], [0], [0], [1], [0, 0, 1, 1], [], []>} : vector<256x384xbf16>, vector<384x128xbf16>, vector<256x128xf32> -> vector<256x128xf32>
    %85 = arith.addf %80, %84 : vector<256x128xf32>
    %86 = vector.extract_strided_slice %77 {offsets = [4, 0, 0], sizes = [16, 16, 384], strides = [1, 1, 1]} : vector<24x16x384xbf16> to vector<16x16x384xbf16>
    %87 = vector.shape_cast %86 : vector<16x16x384xbf16> to vector<256x384xbf16>
    %c384_73 = arith.constant 384 : index
    %c0_74 = arith.constant 0 : index
    %88 = vector.load %arg6[%c384_73, %c0_74] : memref<1152x128xbf16, #tpu.memory_space<vmem>>, vector<384x128xbf16>
    %cst_75 = arith.constant dense<0.000000e+00> : vector<256x128xf32>
    %89 = tpu.matmul %87, %88, %cst_75 {dimension_numbers = #tpu.dot_dimension_numbers<[1], [0], [0], [1], [0, 0, 1, 1], [], []>} : vector<256x384xbf16>, vector<384x128xbf16>, vector<256x128xf32> -> vector<256x128xf32>
    %90 = arith.addf %85, %89 : vector<256x128xf32>
    %91 = vector.extract_strided_slice %77 {offsets = [8, 0, 0], sizes = [16, 16, 384], strides = [1, 1, 1]} : vector<24x16x384xbf16> to vector<16x16x384xbf16>
    %92 = vector.shape_cast %91 : vector<16x16x384xbf16> to vector<256x384xbf16>
    %c768_76 = arith.constant 768 : index
    %c0_77 = arith.constant 0 : index
    %93 = vector.load %arg6[%c768_76, %c0_77] : memref<1152x128xbf16, #tpu.memory_space<vmem>>, vector<384x128xbf16>
    %cst_78 = arith.constant dense<0.000000e+00> : vector<256x128xf32>
    %94 = tpu.matmul %92, %93, %cst_78 {dimension_numbers = #tpu.dot_dimension_numbers<[1], [0], [0], [1], [0, 0, 1, 1], [], []>} : vector<256x384xbf16>, vector<384x128xbf16>, vector<256x128xf32> -> vector<256x128xf32>
    %95 = arith.addf %90, %94 : vector<256x128xf32>
    %96 = vector.shape_cast %95 : vector<256x128xf32> to vector<16x16x128xf32>
    %cst_79 = arith.constant 0.000000e+00 : f32
    %97 = vector.broadcast %cst_79 : f32 to vector<16x16x128xf32>
    %98 = arith.maximumf %96, %97 : vector<16x16x128xf32>
    %99 = arith.addf %69, %98 : vector<16x16x128xf32>
    %c8_80 = arith.constant 8 : index
    %c8_81 = arith.constant 8 : index
    %c0_82 = arith.constant 0 : index
    %100 = vector.load %arg11[%c8_80, %c8_81, %c0_82] : memref<32x32x128xf32, #tpu.memory_space<vmem>>, vector<16x16x128xf32>
    tpu.vector_store %arg11[%c8_80, %c8_81, %c0_82], %98 {strides = array<i32>} : memref<32x32x128xf32, #tpu.memory_space<vmem>>, vector<16x16x128xf32>,
    %c0_83 = arith.constant 0 : index
    %c0_84 = arith.constant 0 : index
    %c0_85 = arith.constant 0 : index
    %101 = vector.load %arg11[%c0_83, %c0_84, %c0_85] : memref<32x32x128xf32, #tpu.memory_space<vmem>>, vector<32x16x128xf32>
    %102 = arith.truncf %101 : vector<32x16x128xf32> to vector<32x16x128xbf16>
    %c0_86 = arith.constant 0 : index
    %c8_87 = arith.constant 8 : index
    %c0_88 = arith.constant 0 : index
    %103 = vector.load %arg11[%c0_86, %c8_87, %c0_88] : memref<32x32x128xf32, #tpu.memory_space<vmem>>, vector<32x16x128xf32>
    %104 = arith.truncf %103 : vector<32x16x128xf32> to vector<32x16x128xbf16>
    %c0_89 = arith.constant 0 : index
    %c16 = arith.constant 16 : index
    %c0_90 = arith.constant 0 : index
    %105 = vector.load %arg11[%c0_89, %c16, %c0_90] : memref<32x32x128xf32, #tpu.memory_space<vmem>>, vector<32x16x128xf32>
    %106 = arith.truncf %105 : vector<32x16x128xf32> to vector<32x16x128xbf16>
    %107 = tpu.concatenate %102, %104, %106 in 2 : vector<32x16x128xbf16>, vector<32x16x128xbf16>, vector<32x16x128xbf16> -> vector<32x16x384xbf16>
    %c0_91 = arith.constant 0 : index
    %c0_92 = arith.constant 0 : index
    %108 = vector.load %arg9[%c0_91, %c0_92] : memref<1x128xf32, #tpu.memory_space<vmem>>, vector<1x128xf32>
    %109 = vector.shape_cast %108 : vector<1x128xf32> to vector<1x128xf32>
    %110 = vector.broadcast %109 : vector<1x128xf32> to vector<256x128xf32>
    %111 = vector.extract_strided_slice %107 {offsets = [0, 0, 0], sizes = [16, 16, 384], strides = [1, 1, 1]} : vector<32x16x384xbf16> to vector<16x16x384xbf16>
    %112 = vector.shape_cast %111 : vector<16x16x384xbf16> to vector<256x384xbf16>
    %c0_93 = arith.constant 0 : index
    %c0_94 = arith.constant 0 : index
    %113 = vector.load %arg8[%c0_93, %c0_94] : memref<1152x128xbf16, #tpu.memory_space<vmem>>, vector<384x128xbf16>
    %cst_95 = arith.constant dense<0.000000e+00> : vector<256x128xf32>
    %114 = tpu.matmul %112, %113, %cst_95 {dimension_numbers = #tpu.dot_dimension_numbers<[1], [0], [0], [1], [0, 0, 1, 1], [], []>} : vector<256x384xbf16>, vector<384x128xbf16>, vector<256x128xf32> -> vector<256x128xf32>
    %115 = arith.addf %110, %114 : vector<256x128xf32>
    %116 = vector.extract_strided_slice %107 {offsets = [8, 0, 0], sizes = [16, 16, 384], strides = [1, 1, 1]} : vector<32x16x384xbf16> to vector<16x16x384xbf16>
    %117 = vector.shape_cast %116 : vector<16x16x384xbf16> to vector<256x384xbf16>
    %c384_96 = arith.constant 384 : index
    %c0_97 = arith.constant 0 : index
    %118 = vector.load %arg8[%c384_96, %c0_97] : memref<1152x128xbf16, #tpu.memory_space<vmem>>, vector<384x128xbf16>
    %cst_98 = arith.constant dense<0.000000e+00> : vector<256x128xf32>
    %119 = tpu.matmul %117, %118, %cst_98 {dimension_numbers = #tpu.dot_dimension_numbers<[1], [0], [0], [1], [0, 0, 1, 1], [], []>} : vector<256x384xbf16>, vector<384x128xbf16>, vector<256x128xf32> -> vector<256x128xf32>
    %120 = arith.addf %115, %119 : vector<256x128xf32>
    %121 = vector.extract_strided_slice %107 {offsets = [16, 0, 0], sizes = [16, 16, 384], strides = [1, 1, 1]} : vector<32x16x384xbf16> to vector<16x16x384xbf16>
    %122 = vector.shape_cast %121 : vector<16x16x384xbf16> to vector<256x384xbf16>
    %c768_99 = arith.constant 768 : index
    %c0_100 = arith.constant 0 : index
    %123 = vector.load %arg8[%c768_99, %c0_100] : memref<1152x128xbf16, #tpu.memory_space<vmem>>, vector<384x128xbf16>
    %cst_101 = arith.constant dense<0.000000e+00> : vector<256x128xf32>
    %124 = tpu.matmul %122, %123, %cst_101 {dimension_numbers = #tpu.dot_dimension_numbers<[1], [0], [0], [1], [0, 0, 1, 1], [], []>} : vector<256x384xbf16>, vector<384x128xbf16>, vector<256x128xf32> -> vector<256x128xf32>
    %125 = arith.addf %120, %124 : vector<256x128xf32>
    %126 = vector.shape_cast %125 : vector<256x128xf32> to vector<16x16x128xf32>
    %cst_102 = arith.constant 0.000000e+00 : f32
    %127 = vector.broadcast %cst_102 : f32 to vector<16x16x128xf32>
    %128 = arith.maximumf %126, %127 : vector<16x16x128xf32>
    %129 = arith.addf %99, %128 : vector<16x16x128xf32>
    %c0_103 = arith.constant 0 : index
    %c0_104 = arith.constant 0 : index
    %c0_105 = arith.constant 0 : index
    %c0_106 = arith.constant 0 : index
    %130 = vector.load %arg10[%c0_103, %c0_104, %c0_105, %c0_106] : memref<1x16x16x128xf32, #tpu.memory_space<vmem>>, vector<1x16x16x128xf32>
    %131 = vector.shape_cast %130 : vector<1x16x16x128xf32> to vector<16x16x128xf32>
    %132 = vector.shape_cast %129 : vector<16x16x128xf32> to vector<1x16x16x128xf32>
    tpu.vector_store %arg10[%c0_103, %c0_104, %c0_105, %c0_106], %132 {strides = array<i32>} : memref<1x16x16x128xf32, #tpu.memory_space<vmem>>, vector<1x16x16x128xf32>,
    return
  }
  func.func @transform_0(%arg0: i32) -> (i32, i32, i32, i32) {
    %c0_i32 = arith.constant 0 : i32
    %c0_i32_0 = arith.constant 0 : i32
    %c0_i32_1 = arith.constant 0 : i32
    %c0_i32_2 = arith.constant 0 : i32
    return %arg0, %c0_i32, %c0_i32_0, %c0_i32_1 : i32, i32, i32, i32
  }
  func.func @transform_1(%arg0: i32) -> (i32, i32) {
    %c0_i32 = arith.constant 0 : i32
    %c0_i32_0 = arith.constant 0 : i32
    %c0_i32_1 = arith.constant 0 : i32
    return %c0_i32, %c0_i32_0 : i32, i32
  }
  func.func @transform_2(%arg0: i32) -> (i32, i32) {
    %c0_i32 = arith.constant 0 : i32
    %c0_i32_0 = arith.constant 0 : i32
    %c0_i32_1 = arith.constant 0 : i32
    return %c0_i32, %c0_i32_0 : i32, i32
  }
  func.func @transform_3(%arg0: i32) -> (i32, i32) {
    %c0_i32 = arith.constant 0 : i32
    %c0_i32_0 = arith.constant 0 : i32
    %c0_i32_1 = arith.constant 0 : i32
    return %c0_i32, %c0_i32_0 : i32, i32
  }
  func.func @transform_4(%arg0: i32) -> (i32, i32) {
    %c0_i32 = arith.constant 0 : i32
    %c0_i32_0 = arith.constant 0 : i32
    %c0_i32_1 = arith.constant 0 : i32
    return %c0_i32, %c0_i32_0 : i32, i32
  }
  func.func @transform_5(%arg0: i32) -> (i32, i32) {
    %c0_i32 = arith.constant 0 : i32
    %c0_i32_0 = arith.constant 0 : i32
    %c0_i32_1 = arith.constant 0 : i32
    return %c0_i32, %c0_i32_0 : i32, i32
  }
  func.func @transform_6(%arg0: i32) -> (i32, i32) {
    %c0_i32 = arith.constant 0 : i32
    %c0_i32_0 = arith.constant 0 : i32
    %c0_i32_1 = arith.constant 0 : i32
    return %c0_i32, %c0_i32_0 : i32, i32
  }
  func.func @transform_7(%arg0: i32) -> (i32, i32) {
    %c0_i32 = arith.constant 0 : i32
    %c0_i32_0 = arith.constant 0 : i32
    %c0_i32_1 = arith.constant 0 : i32
    return %c0_i32, %c0_i32_0 : i32, i32
  }
  func.func @transform_8(%arg0: i32) -> (i32, i32) {
    %c0_i32 = arith.constant 0 : i32
    %c0_i32_0 = arith.constant 0 : i32
    %c0_i32_1 = arith.constant 0 : i32
    return %c0_i32, %c0_i32_0 : i32, i32
  }
  func.func @transform_9(%arg0: i32) -> (i32, i32, i32, i32) {
    %c0_i32 = arith.constant 0 : i32
    %c0_i32_0 = arith.constant 0 : i32
    %c0_i32_1 = arith.constant 0 : i32
    %c0_i32_2 = arith.constant 0 : i32
    return %arg0, %c0_i32, %c0_i32_0, %c0_i32_1 : i32, i32, i32, i32
  }
}

</mosaic_0001>

<llo_original>
// kernel: dblock_forward.1
$region0: #{dblock_forward.1}
  #allocation0 [shape = 'u32[]', space=smem, size = 0x4, offset = 0x4, fixed_abs, tag = 'smem constant byte address 0x4 - core index']
  #allocation1 [shape = 'u32[144,128]{1,0:T(1,128)}', space=vmem, size = 0x12000, scoped, tag = 'internal scratch']
  #allocation2 [shape = 'f32[32,32,128]{2,1,0:T(8,128)}', space=vmem, size = 0x80000, scoped, tag = 'scratch operand']
  %s0 = inlined_call_operand.vmem [shape: f32[2,16,16,128], index: 0, kind: input, shape index: {}, may-alias: {0,9}]
  %s1 = inlined_call_operand.vmem [shape: bf16[1152,128], index: 1, kind: input, shape index: {}]
  %s2 = inlined_call_operand.vmem [shape: f32[1,128], index: 2, kind: input, shape index: {}]
  %s3 = inlined_call_operand.vmem [shape: bf16[1152,128], index: 3, kind: input, shape index: {}]
  %s4 = inlined_call_operand.vmem [shape: f32[1,128], index: 4, kind: input, shape index: {}]
  %s5 = inlined_call_operand.vmem [shape: bf16[1152,128], index: 5, kind: input, shape index: {}]
  %s6 = inlined_call_operand.vmem [shape: f32[1,128], index: 6, kind: input, shape index: {}]
  %s7 = inlined_call_operand.vmem [shape: bf16[1152,128], index: 7, kind: input, shape index: {}]
  %s8 = inlined_call_operand.vmem [shape: f32[1,128], index: 8, kind: input, shape index: {}]
  %s9 = inlined_call_operand.vmem [shape: f32[2,16,16,128], index: 9, kind: output, shape index: {}, may-alias: {0,9}]
  %s10 = sld [smem:[#allocation0]]
  $region69: #{dblock_forward.1} parent=0
    _
  %s12 = ssub.s32 1, %s10
  %s13 = scalar_select 0, %s12, %s10
  loop: start=0, step=1, limit=4
  $region2: #{dblock_forward.1} parent=0 // loop_pre_header
    _
  $region3: #{dblock_forward.1} parent=0 // loop_header
    %s15 = sphi 0, %s19
    %p16 = scmp.ge.s32.totalorder %s15, 4
    %s25 = sphi 0, %s27
    %s28 = sphi 0, %s25
    %s29 = sphi 0, %s28
    %s45 = sphi 0, %s29
    %s49 = sphi 0, %s49
    %s51 = sphi 0, %s49
    %s52 = sphi 0, %s51
    %s66 = sphi 0, %s52
    %s70 = sphi 0, %s70
    %s72 = sphi 0, %s70
    %s73 = sphi 0, %s72
    %s87 = sphi 0, %s73
    %s91 = sphi 0, %s91
    %s93 = sphi 0, %s91
    %s94 = sphi 0, %s93
    %s108 = sphi 0, %s94
    %s112 = sphi 0, %s112
    %s114 = sphi 0, %s112
    %s115 = sphi 0, %s114
    %s129 = sphi 0, %s115
    %s133 = sphi 0, %s133
    %s135 = sphi 0, %s133
    %s136 = sphi 0, %s135
    %s150 = sphi 0, %s136
    %s154 = sphi 0, %s154
    %s156 = sphi 0, %s154
    %s157 = sphi 0, %s156
    %s171 = sphi 0, %s157
    %s175 = sphi 0, %s175
    %s177 = sphi 0, %s175
    %s178 = sphi 0, %s177
    %s192 = sphi 0, %s178
    %s196 = sphi 0, %s196
    %s198 = sphi 0, %s196
    %s199 = sphi 0, %s198
    %s213 = sphi 0, %s199
    %s219 = sphi 0, %s221
    %s222 = sphi 0, %s219
    %s223 = sphi 0, %s222
    %s239 = sphi 0, %s223
  $region4: #{dblock_forward.1} parent=0 // loop_header_branch
    %18 = sbr.rel (%p16) target = $region8
  $region5: #{dblock_forward.1} parent=0 // loop_body
    %s20 = ssub.s32 %s15, 1
    %s21 = ssub.s32 %s15, 2
    %s22 = sadd.s32 %s15, 1
    %s23 = ssub.s32 %s15, %s22
    %p24 = scmp.eq.s32.totalorder %s23, 0
    %s26 = sadd.s32 %s25, 1
    %s27 = scalar_select %p24, %s25, %s26
    %p30 = pneg %p24
    %p31 = scmp.eq.s32.totalorder %s15, 1
    %p32 = por %p30, %p31
    %p33 = scmp.ne.s32.totalorder %s25, %s28
    %p34 = scmp.eq.s32.totalorder %s15, 0
    %p35 = por %p33, %p34
    %p36 = scmp.ne.s32.totalorder %s25, %s28
    %p37 = scmp.eq.s32.totalorder %s20, 1
    %p38 = por %p36, %p37
    %p39 = scmp.ne.s32.totalorder %s28, %s29
    %p40 = scmp.eq.s32.totalorder %s20, 0
    %p41 = por %p39, %p40
    %p42 = scmp.ne.s32.totalorder %s28, %s29
    %p43 = scmp.eq.s32.totalorder %s21, 1
    %p44 = por %p42, %p43
    %p46 = scmp.ne.s32.totalorder %s29, %s45
    %p47 = scmp.eq.s32.totalorder %s21, 0
    %p48 = por %p46, %p47
    %s50 = sadd.s32 %s49, 1
    %p53 = scmp.eq.s32.totalorder %s15, 1
    %p54 = scmp.ne.s32.totalorder %s49, %s51
    %p55 = scmp.eq.s32.totalorder %s15, 0
    %p56 = por %p54, %p55
    %p57 = scmp.ne.s32.totalorder %s49, %s51
    %p58 = scmp.eq.s32.totalorder %s20, 1
    %p59 = por %p57, %p58
    %p60 = scmp.ne.s32.totalorder %s51, %s52
    %p61 = scmp.eq.s32.totalorder %s20, 0
    %p62 = por %p60, %p61
    %p63 = scmp.ne.s32.totalorder %s51, %s52
    %p64 = scmp.eq.s32.totalorder %s21, 1
    %p65 = por %p63, %p64
    %p67 = scmp.ne.s32.totalorder %s52, %s66
    %p68 = scmp.eq.s32.totalorder %s21, 0
    %p69 = por %p67, %p68
    %s71 = sadd.s32 %s70, 1
    %p74 = scmp.eq.s32.totalorder %s15, 1
    %p75 = scmp.ne.s32.totalorder %s70, %s72
    %p76 = scmp.eq.s32.totalorder %s15, 0
    %p77 = por %p75, %p76
    %p78 = scmp.ne.s32.totalorder %s70, %s72
    %p79 = scmp.eq.s32.totalorder %s20, 1
    %p80 = por %p78, %p79
    %p81 = scmp.ne.s32.totalorder %s72, %s73
    %p82 = scmp.eq.s32.totalorder %s20, 0
    %p83 = por %p81, %p82
    %p84 = scmp.ne.s32.totalorder %s72, %s73
    %p85 = scmp.eq.s32.totalorder %s21, 1
    %p86 = por %p84, %p85
    %p88 = scmp.ne.s32.totalorder %s73, %s87
    %p89 = scmp.eq.s32.totalorder %s21, 0
    %p90 = por %p88, %p89
    %s92 = sadd.s32 %s91, 1
    %p95 = scmp.eq.s32.totalorder %s15, 1
    %p96 = scmp.ne.s32.totalorder %s91, %s93
    %p97 = scmp.eq.s32.totalorder %s15, 0
    %p98 = por %p96, %p97
    %p99 = scmp.ne.s32.totalorder %s91, %s93
    %p100 = scmp.eq.s32.totalorder %s20, 1
    %p101 = por %p99, %p100
    %p102 = scmp.ne.s32.totalorder %s93, %s94
    %p103 = scmp.eq.s32.totalorder %s20, 0
    %p104 = por %p102, %p103
    %p105 = scmp.ne.s32.totalorder %s93, %s94
    %p106 = scmp.eq.s32.totalorder %s21, 1
    %p107 = por %p105, %p106
    %p109 = scmp.ne.s32.totalorder %s94, %s108
    %p110 = scmp.eq.s32.totalorder %s21, 0
    %p111 = por %p109, %p110
    %s113 = sadd.s32 %s112, 1
    %p116 = scmp.eq.s32.totalorder %s15, 1
    %p117 = scmp.ne.s32.totalorder %s112, %s114
    %p118 = scmp.eq.s32.totalorder %s15, 0
    %p119 = por %p117, %p118
    %p120 = scmp.ne.s32.totalorder %s112, %s114
    %p121 = scmp.eq.s32.totalorder %s20, 1
    %p122 = por %p120, %p121
    %p123 = scmp.ne.s32.totalorder %s114, %s115
    %p124 = scmp.eq.s32.totalorder %s20, 0
    %p125 = por %p123, %p124
    %p126 = scmp.ne.s32.totalorder %s114, %s115
    %p127 = scmp.eq.s32.totalorder %s21, 1
    %p128 = por %p126, %p127
    %p130 = scmp.ne.s32.totalorder %s115, %s129
    %p131 = scmp.eq.s32.totalorder %s21, 0
    %p132 = por %p130, %p131
    %s134 = sadd.s32 %s133, 1
    %p137 = scmp.eq.s32.totalorder %s15, 1
    %p138 = scmp.ne.s32.totalorder %s133, %s135
    %p139 = scmp.eq.s32.totalorder %s15, 0
    %p140 = por %p138, %p139
    %p141 = scmp.ne.s32.totalorder %s133, %s135
    %p142 = scmp.eq.s32.totalorder %s20, 1
    %p143 = por %p141, %p142
    %p144 = scmp.ne.s32.totalorder %s135, %s136
    %p145 = scmp.eq.s32.totalorder %s20, 0
    %p146 = por %p144, %p145
    %p147 = scmp.ne.s32.totalorder %s135, %s136
    %p148 = scmp.eq.s32.totalorder %s21, 1
    %p149 = por %p147, %p148
    %p151 = scmp.ne.s32.totalorder %s136, %s150
    %p152 = scmp.eq.s32.totalorder %s21, 0
    %p153 = por %p151, %p152
    %s155 = sadd.s32 %s154, 1
    %p158 = scmp.eq.s32.totalorder %s15, 1
    %p159 = scmp.ne.s32.totalorder %s154, %s156
    %p160 = scmp.eq.s32.totalorder %s15, 0
    %p161 = por %p159, %p160
    %p162 = scmp.ne.s32.totalorder %s154, %s156
    %p163 = scmp.eq.s32.totalorder %s20, 1
    %p164 = por %p162, %p163
    %p165 = scmp.ne.s32.totalorder %s156, %s157
    %p166 = scmp.eq.s32.totalorder %s20, 0
    %p167 = por %p165, %p166
    %p168 = scmp.ne.s32.totalorder %s156, %s157
    %p169 = scmp.eq.s32.totalorder %s21, 1
    %p170 = por %p168, %p169
    %p172 = scmp.ne.s32.totalorder %s157, %s171
    %p173 = scmp.eq.s32.totalorder %s21, 0
    %p174 = por %p172, %p173
    %s176 = sadd.s32 %s175, 1
    %p179 = scmp.eq.s32.totalorder %s15, 1
    %p180 = scmp.ne.s32.totalorder %s175, %s177
    %p181 = scmp.eq.s32.totalorder %s15, 0
    %p182 = por %p180, %p181
    %p183 = scmp.ne.s32.totalorder %s175, %s177
    %p184 = scmp.eq.s32.totalorder %s20, 1
    %p185 = por %p183, %p184
    %p186 = scmp.ne.s32.totalorder %s177, %s178
    %p187 = scmp.eq.s32.totalorder %s20, 0
    %p188 = por %p186, %p187
    %p189 = scmp.ne.s32.totalorder %s177, %s178
    %p190 = scmp.eq.s32.totalorder %s21, 1
    %p191 = por %p189, %p190
    %p193 = scmp.ne.s32.totalorder %s178, %s192
    %p194 = scmp.eq.s32.totalorder %s21, 0
    %p195 = por %p193, %p194
    %s197 = sadd.s32 %s196, 1
    %p200 = scmp.eq.s32.totalorder %s15, 1
    %p201 = scmp.ne.s32.totalorder %s196, %s198
    %p202 = scmp.eq.s32.totalorder %s15, 0
    %p203 = por %p201, %p202
    %p204 = scmp.ne.s32.totalorder %s196, %s198
    %p205 = scmp.eq.s32.totalorder %s20, 1
    %p206 = por %p204, %p205
    %p207 = scmp.ne.s32.totalorder %s198, %s199
    %p208 = scmp.eq.s32.totalorder %s20, 0
    %p209 = por %p207, %p208
    %p210 = scmp.ne.s32.totalorder %s198, %s199
    %p211 = scmp.eq.s32.totalorder %s21, 1
    %p212 = por %p210, %p211
    %p214 = scmp.ne.s32.totalorder %s199, %s213
    %p215 = scmp.eq.s32.totalorder %s21, 0
    %p216 = por %p214, %p215
    %s217 = ssub.s32 %s15, %s22
    %p218 = scmp.eq.s32.totalorder %s217, 0
    %s220 = sadd.s32 %s219, 1
    %s221 = scalar_select %p218, %s219, %s220
    %p224 = pneg %p218
    %p225 = scmp.eq.s32.totalorder %s15, 1
    %p226 = por %p224, %p225
    %p227 = scmp.ne.s32.totalorder %s219, %s222
    %p228 = scmp.eq.s32.totalorder %s15, 0
    %p229 = por %p227, %p228
    %p230 = scmp.ne.s32.totalorder %s219, %s222
    %p231 = scmp.eq.s32.totalorder %s20, 1
    %p232 = por %p230, %p231
    %p233 = scmp.ne.s32.totalorder %s222, %s223
    %p234 = scmp.eq.s32.totalorder %s20, 0
    %p235 = por %p233, %p234
    %p236 = scmp.ne.s32.totalorder %s222, %s223
    %p237 = scmp.eq.s32.totalorder %s21, 1
    %p238 = por %p236, %p237
    %p240 = scmp.ne.s32.totalorder %s223, %s239
    %p241 = scmp.eq.s32.totalorder %s21, 0
    %p242 = por %p240, %p241
    %p243 = scmp.le.s32.totalorder 1, %s15
    %p244 = scmp.lt.s32.totalorder %s15, 3
    %p245 = pnand %p243, %p244
    %p246 = pneg %p245
    // Predicated region
    $region9: #{dblock_forward.1} parent=5 // pred_check
      _
    $region10: #{dblock_forward.1} parent=5 // pred_check_branch
      %248 = sbr.rel (%p245) target = $region12
    $region11: #{dblock_forward.1} parent=5 // pred_region
      %s249 = ssub.s32 %s15, 1
      // Predicated region
      $region13: #{dblock_forward.1} parent=11 // pred_check
        %p250 = pneg %p62
      $region14: #{dblock_forward.1} parent=11 // pred_check_branch
        %252 = sbr.rel (%p250) target = $region16
      $region15: #{dblock_forward.1} parent=11 // pred_region
        _
      $region16: #{dblock_forward.1} parent=11 // pred_fallthru
        _
      // Predicated region
      $region17: #{dblock_forward.1} parent=11 // pred_check
        %p253 = pneg %p83
      $region18: #{dblock_forward.1} parent=11 // pred_check_branch
        %255 = sbr.rel (%p253) target = $region20
      $region19: #{dblock_forward.1} parent=11 // pred_region
        _
      $region20: #{dblock_forward.1} parent=11 // pred_fallthru
        _
      // Predicated region
      $region21: #{dblock_forward.1} parent=11 // pred_check
        %p256 = pneg %p104
      $region22: #{dblock_forward.1} parent=11 // pred_check_branch
        %258 = sbr.rel (%p256) target = $region24
      $region23: #{dblock_forward.1} parent=11 // pred_region
        _
      $region24: #{dblock_forward.1} parent=11 // pred_fallthru
        _
      // Predicated region
      $region25: #{dblock_forward.1} parent=11 // pred_check
        %p259 = pneg %p125
      $region26: #{dblock_forward.1} parent=11 // pred_check_branch
        %261 = sbr.rel (%p259) target = $region28
      $region27: #{dblock_forward.1} parent=11 // pred_region
        _
      $region28: #{dblock_forward.1} parent=11 // pred_fallthru
        _
      // Predicated region
      $region29: #{dblock_forward.1} parent=11 // pred_check
        %p262 = pneg %p146
      $region30: #{dblock_forward.1} parent=11 // pred_check_branch
        %264 = sbr.rel (%p262) target = $region32
      $region31: #{dblock_forward.1} parent=11 // pred_region
        _
      $region32: #{dblock_forward.1} parent=11 // pred_fallthru
        _
      // Predicated region
      $region33: #{dblock_forward.1} parent=11 // pred_check
        %p265 = pneg %p167
      $region34: #{dblock_forward.1} parent=11 // pred_check_branch
        %267 = sbr.rel (%p265) target = $region36
      $region35: #{dblock_forward.1} parent=11 // pred_region
        _
      $region36: #{dblock_forward.1} parent=11 // pred_fallthru
        _
      // Predicated region
      $region37: #{dblock_forward.1} parent=11 // pred_check
        %p268 = pneg %p188
      $region38: #{dblock_forward.1} parent=11 // pred_check_branch
        %270 = sbr.rel (%p268) target = $region40
      $region39: #{dblock_forward.1} parent=11 // pred_region
        _
      $region40: #{dblock_forward.1} parent=11 // pred_fallthru
        _
      // Predicated region
      $region41: #{dblock_forward.1} parent=11 // pred_check
        %p271 = pneg %p209
      $region42: #{dblock_forward.1} parent=11 // pred_check_branch
        %273 = sbr.rel (%p271) target = $region44
      $region43: #{dblock_forward.1} parent=11 // pred_region
        _
      $region44: #{dblock_forward.1} parent=11 // pred_fallthru
        _
    $region12: #{dblock_forward.1} parent=5 // pred_fallthru
      _
    %p274 = scmp.lt.s32.totalorder %s15, 2
    // Predicated region
    $region45: #{dblock_forward.1} parent=5 // pred_check
      %p275 = pneg %p274
    $region46: #{dblock_forward.1} parent=5 // pred_check_branch
      %277 = sbr.rel (%p275) target = $region48
    $region47: #{dblock_forward.1} parent=5 // pred_region
      // Predicated region
      $region49: #{dblock_forward.1} parent=47 // pred_check
        %p278 = pneg %p35
      $region50: #{dblock_forward.1} parent=47 // pred_check_branch
        %280 = sbr.rel (%p278) target = $region52
      $region51: #{dblock_forward.1} parent=47 // pred_region
        %p281 = scmp.lt.s32.totalorder %s15, 1
        %s282 = scalar_select %p281, %s15, 1
        %s283 = smul.addr %s282, 32
        %s284 = smul.addr %s283, 8
        %s285 = scalar_lea.vmem %s0, %s284
      $region52: #{dblock_forward.1} parent=47 // pred_fallthru
        _
    $region48: #{dblock_forward.1} parent=5 // pred_fallthru
      _
    %p286 = scmp.le.s32.totalorder 1, %s15
    %p287 = scmp.lt.s32.totalorder %s15, 3
    %p288 = pnand %p286, %p287
    %p289 = pneg %p288
    // Predicated region
    $region53: #{dblock_forward.1} parent=5 // pred_check
      _
    $region54: #{dblock_forward.1} parent=5 // pred_check_branch
      %291 = sbr.rel (%p288) target = $region56
    $region55: #{dblock_forward.1} parent=5 // pred_region
      %s292 = ssub.s32 %s15, 1
      %p293 = scmp.lt.s32.totalorder %s20, 1
      %s294 = scalar_select %p293, %s20, 1
      %s295 = smul.addr %s294, 32
      %s296 = smul.addr %s295, 8
      %s297 = scalar_lea.vmem %s0, %s296
      %p298 = pneg %p41
      %p299 = pneg %p38
      %p300 = pneg %p62
      %p301 = pneg %p59
      %p302 = pneg %p83
      %p303 = pneg %p80
      %p304 = pneg %p104
      %p305 = pneg %p101
      %p306 = pneg %p125
      %p307 = pneg %p122
      %p308 = pneg %p146
      %p309 = pneg %p143
      %p310 = pneg %p167
      %p311 = pneg %p164
      %p312 = pneg %p188
      %p313 = pneg %p185
      %p314 = pneg %p209
      %p315 = pneg %p206
      %p316 = pneg %p235
      %p317 = pneg %p232
      %p318 = scmp.lt.s32.totalorder %s20, 1
      %s319 = scalar_select %p318, %s20, 1
      %s320 = smul.addr %s319, 32
      %s321 = smul.addr %s320, 8
      %s322 = scalar_lea.vmem %s9, %s321
      %p323 = scmp.lt.s32.totalorder %s20, 1
      %s324 = scalar_select %p323, %s20, 1
      %s325 = smul.addr %s324, 32
      %s326 = smul.addr %s325, 8
      %s327 = scalar_lea.vmem %s0, %s326
      %p328 = scmp.lt.s32.totalorder %s20, 1
      %s329 = scalar_select %p328, %s20, 1
      %s330 = smul.addr %s329, 32
      %s331 = smul.addr %s330, 8
      %s332 = scalar_lea.vmem %s9, %s331
      %334 = vst [vmem:[#allocation2] sm:$0xff] 0.0
      %335 = vst [vmem:[#allocation2 + $0x8] sm:$0xff] 0.0
      %336 = vst [vmem:[#allocation2 + $0x10] sm:$0xff] 0.0
      %337 = vst [vmem:[#allocation2 + $0x18] sm:$0xff] 0.0
      %338 = vst [vmem:[#allocation2 + $0x20] sm:$0xff] 0.0
      %339 = vst [vmem:[#allocation2 + $0x28] sm:$0xff] 0.0
      %340 = vst [vmem:[#allocation2 + $0x30] sm:$0xff] 0.0
      %341 = vst [vmem:[#allocation2 + $0x38] sm:$0xff] 0.0
      %342 = vst [vmem:[#allocation2 + $0x40] sm:$0xff] 0.0
      %343 = vst [vmem:[#allocation2 + $0x48] sm:$0xff] 0.0
      %344 = vst [vmem:[#allocation2 + $0x50] sm:$0xff] 0.0
      %345 = vst [vmem:[#allocation2 + $0x58] sm:$0xff] 0.0
      %346 = vst [vmem:[#allocation2 + $0x60] sm:$0xff] 0.0
      %347 = vst [vmem:[#allocation2 + $0x68] sm:$0xff] 0.0
      %348 = vst [vmem:[#allocation2 + $0x70] sm:$0xff] 0.0
      %349 = vst [vmem:[#allocation2 + $0x78] sm:$0xff] 0.0
      %350 = vst [vmem:[#allocation2 + $0x80] sm:$0xff] 0.0
      %351 = vst [vmem:[#allocation2 + $0x88] sm:$0xff] 0.0
      %352 = vst [vmem:[#allocation2 + $0x90] sm:$0xff] 0.0
      %353 = vst [vmem:[#allocation2 + $0x98] sm:$0xff] 0.0
      %354 = vst [vmem:[#allocation2 + $0xa0] sm:$0xff] 0.0
      %355 = vst [vmem:[#allocation2 + $0xa8] sm:$0xff] 0.0
      %356 = vst [vmem:[#allocation2 + $0xb0] sm:$0xff] 0.0
      %357 = vst [vmem:[#allocation2 + $0xb8] sm:$0xff] 0.0
      %358 = vst [vmem:[#allocation2 + $0xc0] sm:$0xff] 0.0
      %359 = vst [vmem:[#allocation2 + $0xc8] sm:$0xff] 0.0
      %360 = vst [vmem:[#allocation2 + $0xd0] sm:$0xff] 0.0
      %361 = vst [vmem:[#allocation2 + $0xd8] sm:$0xff] 0.0
      %362 = vst [vmem:[#allocation2 + $0xe0] sm:$0xff] 0.0
      %363 = vst [vmem:[#allocation2 + $0xe8] sm:$0xff] 0.0
      %364 = vst [vmem:[#allocation2 + $0xf0] sm:$0xff] 0.0
      %365 = vst [vmem:[#allocation2 + $0xf8] sm:$0xff] 0.0
      %s366 = scalar_lea.vmem [#allocation2], 768
      %367 = vst [vmem:[%s366] sm:$0xff] 0.0
      %368 = vst [vmem:[%s366 + $0x8] sm:$0xff] 0.0
      %369 = vst [vmem:[%s366 + $0x10] sm:$0xff] 0.0
      %370 = vst [vmem:[%s366 + $0x18] sm:$0xff] 0.0
      %371 = vst [vmem:[%s366 + $0x20] sm:$0xff] 0.0
      %372 = vst [vmem:[%s366 + $0x28] sm:$0xff] 0.0
      %373 = vst [vmem:[%s366 + $0x30] sm:$0xff] 0.0
      %374 = vst [vmem:[%s366 + $0x38] sm:$0xff] 0.0
      %375 = vst [vmem:[%s366 + $0x40] sm:$0xff] 0.0
      %376 = vst [vmem:[%s366 + $0x48] sm:$0xff] 0.0
      %377 = vst [vmem:[%s366 + $0x50] sm:$0xff] 0.0
      %378 = vst [vmem:[%s366 + $0x58] sm:$0xff] 0.0
      %379 = vst [vmem:[%s366 + $0x60] sm:$0xff] 0.0
      %380 = vst [vmem:[%s366 + $0x68] sm:$0xff] 0.0
      %381 = vst [vmem:[%s366 + $0x70] sm:$0xff] 0.0
      %382 = vst [vmem:[%s366 + $0x78] sm:$0xff] 0.0
      %383 = vst [vmem:[%s366 + $0x80] sm:$0xff] 0.0
      %384 = vst [vmem:[%s366 + $0x88] sm:$0xff] 0.0
      %385 = vst [vmem:[%s366 + $0x90] sm:$0xff] 0.0
      %386 = vst [vmem:[%s366 + $0x98] sm:$0xff] 0.0
      %387 = vst [vmem:[%s366 + $0xa0] sm:$0xff] 0.0
      %388 = vst [vmem:[%s366 + $0xa8] sm:$0xff] 0.0
      %389 = vst [vmem:[%s366 + $0xb0] sm:$0xff] 0.0
      %390 = vst [vmem:[%s366 + $0xb8] sm:$0xff] 0.0
      %391 = vst [vmem:[%s366 + $0xc0] sm:$0xff] 0.0
      %392 = vst [vmem:[%s366 + $0xc8] sm:$0xff] 0.0
      %393 = vst [vmem:[%s366 + $0xd0] sm:$0xff] 0.0
      %394 = vst [vmem:[%s366 + $0xd8] sm:$0xff] 0.0
      %395 = vst [vmem:[%s366 + $0xe0] sm:$0xff] 0.0
      %396 = vst [vmem:[%s366 + $0xe8] sm:$0xff] 0.0
      %397 = vst [vmem:[%s366 + $0xf0] sm:$0xff] 0.0
      %398 = vst [vmem:[%s366 + $0xf8] sm:$0xff] 0.0
      %s399 = scalar_lea.vmem [#allocation2], 256
      %400 = vst [vmem:[%s399] sm:$0xff] 0.0
      %401 = vst [vmem:[%s399 + $0x20] sm:$0xff] 0.0
      %402 = vst [vmem:[%s399 + $0x40] sm:$0xff] 0.0
      %403 = vst [vmem:[%s399 + $0x60] sm:$0xff] 0.0
      %404 = vst [vmem:[%s399 + $0x80] sm:$0xff] 0.0
      %405 = vst [vmem:[%s399 + $0xa0] sm:$0xff] 0.0
      %406 = vst [vmem:[%s399 + $0xc0] sm:$0xff] 0.0
      %407 = vst [vmem:[%s399 + $0xe0] sm:$0xff] 0.0
      %408 = vst [vmem:[%s399 + $0x100] sm:$0xff] 0.0
      %409 = vst [vmem:[%s399 + $0x120] sm:$0xff] 0.0
      %410 = vst [vmem:[%s399 + $0x140] sm:$0xff] 0.0
      %411 = vst [vmem:[%s399 + $0x160] sm:$0xff] 0.0
      %412 = vst [vmem:[%s399 + $0x180] sm:$0xff] 0.0
      %413 = vst [vmem:[%s399 + $0x1a0] sm:$0xff] 0.0
      %414 = vst [vmem:[%s399 + $0x1c0] sm:$0xff] 0.0
      %415 = vst [vmem:[%s399 + $0x1e0] sm:$0xff] 0.0
      %416 = vst [vmem:[%s399 + $0x18] sm:$0xff] 0.0
      %417 = vst [vmem:[%s399 + $0x38] sm:$0xff] 0.0
      %418 = vst [vmem:[%s399 + $0x58] sm:$0xff] 0.0
      %419 = vst [vmem:[%s399 + $0x78] sm:$0xff] 0.0
      %420 = vst [vmem:[%s399 + $0x98] sm:$0xff] 0.0
      %421 = vst [vmem:[%s399 + $0xb8] sm:$0xff] 0.0
      %422 = vst [vmem:[%s399 + $0xd8] sm:$0xff] 0.0
      %423 = vst [vmem:[%s399 + $0xf8] sm:$0xff] 0.0
      %424 = vst [vmem:[%s399 + $0x118] sm:$0xff] 0.0
      %425 = vst [vmem:[%s399 + $0x138] sm:$0xff] 0.0
      %426 = vst [vmem:[%s399 + $0x158] sm:$0xff] 0.0
      %427 = vst [vmem:[%s399 + $0x178] sm:$0xff] 0.0
      %428 = vst [vmem:[%s399 + $0x198] sm:$0xff] 0.0
      %429 = vst [vmem:[%s399 + $0x1b8] sm:$0xff] 0.0
      %430 = vst [vmem:[%s399 + $0x1d8] sm:$0xff] 0.0
      %431 = vst [vmem:[%s399 + $0x1f8] sm:$0xff] 0.0
      %v432 = vld [vmem:[%s327] sm:$0xff]
      %v433 = vld [vmem:[%s327 + $0x8] sm:$0xff]
      %v434 = vld [vmem:[%s327 + $0x10] sm:$0xff]
      %v435 = vld [vmem:[%s327 + $0x18] sm:$0xff]
      %v436 = vld [vmem:[%s327 + $0x20] sm:$0xff]
      %v437 = vld [vmem:[%s327 + $0x28] sm:$0xff]
      %v438 = vld [vmem:[%s327 + $0x30] sm:$0xff]
      %v439 = vld [vmem:[%s327 + $0x38] sm:$0xff]
      %v440 = vld [vmem:[%s327 + $0x40] sm:$0xff]
      %v441 = vld [vmem:[%s327 + $0x48] sm:$0xff]
      %v442 = vld [vmem:[%s327 + $0x50] sm:$0xff]
      %v443 = vld [vmem:[%s327 + $0x58] sm:$0xff]
      %v444 = vld [vmem:[%s327 + $0x60] sm:$0xff]
      %v445 = vld [vmem:[%s327 + $0x68] sm:$0xff]
      %v446 = vld [vmem:[%s327 + $0x70] sm:$0xff]
      %v447 = vld [vmem:[%s327 + $0x78] sm:$0xff]
      %v448 = vld [vmem:[%s327 + $0x80] sm:$0xff]
      %v449 = vld [vmem:[%s327 + $0x88] sm:$0xff]
      %v450 = vld [vmem:[%s327 + $0x90] sm:$0xff]
      %v451 = vld [vmem:[%s327 + $0x98] sm:$0xff]
      %v452 = vld [vmem:[%s327 + $0xa0] sm:$0xff]
      %v453 = vld [vmem:[%s327 + $0xa8] sm:$0xff]
      %v454 = vld [vmem:[%s327 + $0xb0] sm:$0xff]
      %v455 = vld [vmem:[%s327 + $0xb8] sm:$0xff]
      %v456 = vld [vmem:[%s327 + $0xc0] sm:$0xff]
      %v457 = vld [vmem:[%s327 + $0xc8] sm:$0xff]
      %v458 = vld [vmem:[%s327 + $0xd0] sm:$0xff]
      %v459 = vld [vmem:[%s327 + $0xd8] sm:$0xff]
      %v460 = vld [vmem:[%s327 + $0xe0] sm:$0xff]
      %v461 = vld [vmem:[%s327 + $0xe8] sm:$0xff]
      %v462 = vld [vmem:[%s327 + $0xf0] sm:$0xff]
      %v463 = vld [vmem:[%s327 + $0xf8] sm:$0xff]
      %464 = vst [vmem:[%s399 + $0x8] sm:$0xff] %v432
      %465 = vst [vmem:[%s399 + $0x10] sm:$0xff] %v433
      %466 = vst [vmem:[%s399 + $0x28] sm:$0xff] %v434
      %467 = vst [vmem:[%s399 + $0x30] sm:$0xff] %v435
      %468 = vst [vmem:[%s399 + $0x48] sm:$0xff] %v436
      %469 = vst [vmem:[%s399 + $0x50] sm:$0xff] %v437
      %470 = vst [vmem:[%s399 + $0x68] sm:$0xff] %v438
      %471 = vst [vmem:[%s399 + $0x70] sm:$0xff] %v439
      %472 = vst [vmem:[%s399 + $0x88] sm:$0xff] %v440
      %473 = vst [vmem:[%s399 + $0x90] sm:$0xff] %v441
      %474 = vst [vmem:[%s399 + $0xa8] sm:$0xff] %v442
      %475 = vst [vmem:[%s399 + $0xb0] sm:$0xff] %v443
      %476 = vst [vmem:[%s399 + $0xc8] sm:$0xff] %v444
      %477 = vst [vmem:[%s399 + $0xd0] sm:$0xff] %v445
      %478 = vst [vmem:[%s399 + $0xe8] sm:$0xff] %v446
      %479 = vst [vmem:[%s399 + $0xf0] sm:$0xff] %v447
      %480 = vst [vmem:[%s399 + $0x108] sm:$0xff] %v448
      %481 = vst [vmem:[%s399 + $0x110] sm:$0xff] %v449
      %482 = vst [vmem:[%s399 + $0x128] sm:$0xff] %v450
      %483 = vst [vmem:[%s399 + $0x130] sm:$0xff] %v451
      %484 = vst [vmem:[%s399 + $0x148] sm:$0xff] %v452
      %485 = vst [vmem:[%s399 + $0x150] sm:$0xff] %v453
      %486 = vst [vmem:[%s399 + $0x168] sm:$0xff] %v454
      %487 = vst [vmem:[%s399 + $0x170] sm:$0xff] %v455
      %488 = vst [vmem:[%s399 + $0x188] sm:$0xff] %v456
      %489 = vst [vmem:[%s399 + $0x190] sm:$0xff] %v457
      %490 = vst [vmem:[%s399 + $0x1a8] sm:$0xff] %v458
      %491 = vst [vmem:[%s399 + $0x1b0] sm:$0xff] %v459
      %492 = vst [vmem:[%s399 + $0x1c8] sm:$0xff] %v460
      %493 = vst [vmem:[%s399 + $0x1d0] sm:$0xff] %v461
      %494 = vst [vmem:[%s399 + $0x1e8] sm:$0xff] %v462
      %495 = vst [vmem:[%s399 + $0x1f0] sm:$0xff] %v463
      %s496 = scalar_lea.vmem [#allocation2], 224
      %v497 = vld [vmem:[%s496 + $0x7] sm:$0xff]
      %v498 = vld [vmem:[%s496 + $0xf] sm:$0xff]
      %v499 = vld [vmem:[%s496 + $0x27] sm:$0xff]
      %v500 = vld [vmem:[%s496 + $0x2f] sm:$0xff]
      %v501 = vld [vmem:[%s496 + $0x47] sm:$0xff]
      %v502 = vld [vmem:[%s496 + $0x4f] sm:$0xff]
      %v503 = vld [vmem:[%s496 + $0x67] sm:$0xff]
      %v504 = vld [vmem:[%s496 + $0x6f] sm:$0xff]
      %v505 = vld [vmem:[%s496 + $0x87] sm:$0xff]
      %v506 = vld [vmem:[%s496 + $0x8f] sm:$0xff]
      %v507 = vld [vmem:[%s496 + $0xa7] sm:$0xff]
      %v508 = vld [vmem:[%s496 + $0xaf] sm:$0xff]
      %v509 = vld [vmem:[%s496 + $0xc7] sm:$0xff]
      %v510 = vld [vmem:[%s496 + $0xcf] sm:$0xff]
      %v511 = vld [vmem:[%s496 + $0xe7] sm:$0xff]
      %v512 = vld [vmem:[%s496 + $0xef] sm:$0xff]
      %v513 = vld [vmem:[%s496 + $0x107] sm:$0xff]
      %v514 = vld [vmem:[%s496 + $0x10f] sm:$0xff]
      %v515 = vld [vmem:[%s496 + $0x127] sm:$0xff]
      %v516 = vld [vmem:[%s496 + $0x12f] sm:$0xff]
      %v517 = vld [vmem:[%s496 + $0x147] sm:$0xff]
      %v518 = vld [vmem:[%s496 + $0x14f] sm:$0xff]
      %v519 = vld [vmem:[%s496 + $0x167] sm:$0xff]
      %v520 = vld [vmem:[%s496 + $0x16f] sm:$0xff]
      %v521 = vld [vmem:[%s496 + $0x187] sm:$0xff]
      %v522 = vld [vmem:[%s496 + $0x18f] sm:$0xff]
      %v523 = vld [vmem:[%s496 + $0x1a7] sm:$0xff]
      %v524 = vld [vmem:[%s496 + $0x1af] sm:$0xff]
      %v525 = vld [vmem:[%s496 + $0x1c7] sm:$0xff]
      %v526 = vld [vmem:[%s496 + $0x1cf] sm:$0xff]
      %v527 = vld [vmem:[%s496 + $0x1e7] sm:$0xff]
      %v528 = vld [vmem:[%s496 + $0x1ef] sm:$0xff]
      %v529 = vld [vmem:[%s496 + $0x207] sm:$0xff]
      %v530 = vld [vmem:[%s496 + $0x20f] sm:$0xff]
      %v531 = vld [vmem:[%s496 + $0x227] sm:$0xff]
      %v532 = vld [vmem:[%s496 + $0x22f] sm:$0xff]
      %v533 = vpack.c.bf16 %v498, %v497
      %v534 = vpack.c.bf16 %v500, %v499
      %v535 = vpack.c.bf16 %v502, %v501
      %v536 = vpack.c.bf16 %v504, %v503
      %v537 = vpack.c.bf16 %v506, %v505
      %v538 = vpack.c.bf16 %v508, %v507
      %v539 = vpack.c.bf16 %v510, %v509
      %v540 = vpack.c.bf16 %v512, %v511
      %v541 = vpack.c.bf16 %v514, %v513
      %v542 = vpack.c.bf16 %v516, %v515
      %v543 = vpack.c.bf16 %v518, %v517
      %v544 = vpack.c.bf16 %v520, %v519
      %v545 = vpack.c.bf16 %v522, %v521
      %v546 = vpack.c.bf16 %v524, %v523
      %v547 = vpack.c.bf16 %v526, %v525
      %v548 = vpack.c.bf16 %v528, %v527
      %v549 = vpack.c.bf16 %v530, %v529
      %v550 = vpack.c.bf16 %v532, %v531
      %v551 = vld [vmem:[%s496 + $0x8] sm:$0xff]
      %v552 = vld [vmem:[%s496 + $0x10] sm:$0xff]
      %v553 = vld [vmem:[%s496 + $0x28] sm:$0xff]
      %v554 = vld [vmem:[%s496 + $0x30] sm:$0xff]
      %v555 = vld [vmem:[%s496 + $0x48] sm:$0xff]
      %v556 = vld [vmem:[%s496 + $0x50] sm:$0xff]
      %v557 = vld [vmem:[%s496 + $0x68] sm:$0xff]
      %v558 = vld [vmem:[%s496 + $0x70] sm:$0xff]
      %v559 = vld [vmem:[%s496 + $0x88] sm:$0xff]
      %v560 = vld [vmem:[%s496 + $0x90] sm:$0xff]
      %v561 = vld [vmem:[%s496 + $0xa8] sm:$0xff]
      %v562 = vld [vmem:[%s496 + $0xb0] sm:$0xff]
      %v563 = vld [vmem:[%s496 + $0xc8] sm:$0xff]
      %v564 = vld [vmem:[%s496 + $0xd0] sm:$0xff]
      %v565 = vld [vmem:[%s496 + $0xe8] sm:$0xff]
      %v566 = vld [vmem:[%s496 + $0xf0] sm:$0xff]
      %v567 = vld [vmem:[%s496 + $0x108] sm:$0xff]
      %v568 = vld [vmem:[%s496 + $0x110] sm:$0xff]
      %v569 = vld [vmem:[%s496 + $0x128] sm:$0xff]
      %v570 = vld [vmem:[%s496 + $0x130] sm:$0xff]
      %v571 = vld [vmem:[%s496 + $0x148] sm:$0xff]
      %v572 = vld [vmem:[%s496 + $0x150] sm:$0xff]
      %v573 = vld [vmem:[%s496 + $0x168] sm:$0xff]
      %v574 = vld [vmem:[%s496 + $0x170] sm:$0xff]
      %v575 = vld [vmem:[%s496 + $0x188] sm:$0xff]
      %v576 = vld [vmem:[%s496 + $0x190] sm:$0xff]
      %v577 = vld [vmem:[%s496 + $0x1a8] sm:$0xff]
      %v578 = vld [vmem:[%s496 + $0x1b0] sm:$0xff]
      %v579 = vld [vmem:[%s496 + $0x1c8] sm:$0xff]
      %v580 = vld [vmem:[%s496 + $0x1d0] sm:$0xff]
      %v581 = vld [vmem:[%s496 + $0x1e8] sm:$0xff]
      %v582 = vld [vmem:[%s496 + $0x1f0] sm:$0xff]
      %v583 = vld [vmem:[%s496 + $0x208] sm:$0xff]
      %v584 = vld [vmem:[%s496 + $0x210] sm:$0xff]
      %v585 = vld [vmem:[%s496 + $0x228] sm:$0xff]
      %v586 = vld [vmem:[%s496 + $0x230] sm:$0xff]
      %v587 = vpack.c.bf16 %v552, %v551
      %v588 = vpack.c.bf16 %v554, %v553
      %v589 = vpack.c.bf16 %v556, %v555
      %v590 = vpack.c.bf16 %v558, %v557
      %v591 = vpack.c.bf16 %v560, %v559
      %v592 = vpack.c.bf16 %v562, %v561
      %v593 = vpack.c.bf16 %v564, %v563
      %v594 = vpack.c.bf16 %v566, %v565
      %v595 = vpack.c.bf16 %v568, %v567
      %v596 = vpack.c.bf16 %v570, %v569
      %v597 = vpack.c.bf16 %v572, %v571
      %v598 = vpack.c.bf16 %v574, %v573
      %v599 = vpack.c.bf16 %v576, %v575
      %v600 = vpack.c.bf16 %v578, %v577
      %v601 = vpack.c.bf16 %v580, %v579
      %v602 = vpack.c.bf16 %v582, %v581
      %v603 = vpack.c.bf16 %v584, %v583
      %v604 = vpack.c.bf16 %v586, %v585
      %v605 = vld [vmem:[%s496 + $0x9] sm:$0xff]
      %v606 = vld [vmem:[%s496 + $0x11] sm:$0xff]
      %v607 = vld [vmem:[%s496 + $0x29] sm:$0xff]
      %v608 = vld [vmem:[%s496 + $0x31] sm:$0xff]
      %v609 = vld [vmem:[%s496 + $0x49] sm:$0xff]
      %v610 = vld [vmem:[%s496 + $0x51] sm:$0xff]
      %v611 = vld [vmem:[%s496 + $0x69] sm:$0xff]
      %v612 = vld [vmem:[%s496 + $0x71] sm:$0xff]
      %v613 = vld [vmem:[%s496 + $0x89] sm:$0xff]
      %v614 = vld [vmem:[%s496 + $0x91] sm:$0xff]
      %v615 = vld [vmem:[%s496 + $0xa9] sm:$0xff]
      %v616 = vld [vmem:[%s496 + $0xb1] sm:$0xff]
      %v617 = vld [vmem:[%s496 + $0xc9] sm:$0xff]
      %v618 = vld [vmem:[%s496 + $0xd1] sm:$0xff]
      %v619 = vld [vmem:[%s496 + $0xe9] sm:$0xff]
      %v620 = vld [vmem:[%s496 + $0xf1] sm:$0xff]
      %v621 = vld [vmem:[%s496 + $0x109] sm:$0xff]
      %v622 = vld [vmem:[%s496 + $0x111] sm:$0xff]
      %v623 = vld [vmem:[%s496 + $0x129] sm:$0xff]
      %v624 = vld [vmem:[%s496 + $0x131] sm:$0xff]
      %v625 = vld [vmem:[%s496 + $0x149] sm:$0xff]
      %v626 = vld [vmem:[%s496 + $0x151] sm:$0xff]
      %v627 = vld [vmem:[%s496 + $0x169] sm:$0xff]
      %v628 = vld [vmem:[%s496 + $0x171] sm:$0xff]
      %v629 = vld [vmem:[%s496 + $0x189] sm:$0xff]
      %v630 = vld [vmem:[%s496 + $0x191] sm:$0xff]
      %v631 = vld [vmem:[%s496 + $0x1a9] sm:$0xff]
      %v632 = vld [vmem:[%s496 + $0x1b1] sm:$0xff]
      %v633 = vld [vmem:[%s496 + $0x1c9] sm:$0xff]
      %v634 = vld [vmem:[%s496 + $0x1d1] sm:$0xff]
      %v635 = vld [vmem:[%s496 + $0x1e9] sm:$0xff]
      %v636 = vld [vmem:[%s496 + $0x1f1] sm:$0xff]
      %v637 = vld [vmem:[%s496 + $0x209] sm:$0xff]
      %v638 = vld [vmem:[%s496 + $0x211] sm:$0xff]
      %v639 = vld [vmem:[%s496 + $0x229] sm:$0xff]
      %v640 = vld [vmem:[%s496 + $0x231] sm:$0xff]
      %v641 = vpack.c.bf16 %v606, %v605
      %v642 = vpack.c.bf16 %v608, %v607
      %v643 = vpack.c.bf16 %v610, %v609
      %v644 = vpack.c.bf16 %v612, %v611
      %v645 = vpack.c.bf16 %v614, %v613
      %v646 = vpack.c.bf16 %v616, %v615
      %v647 = vpack.c.bf16 %v618, %v617
      %v648 = vpack.c.bf16 %v620, %v619
      %v649 = vpack.c.bf16 %v622, %v621
      %v650 = vpack.c.bf16 %v624, %v623
      %v651 = vpack.c.bf16 %v626, %v625
      %v652 = vpack.c.bf16 %v628, %v627
      %v653 = vpack.c.bf16 %v630, %v629
      %v654 = vpack.c.bf16 %v632, %v631
      %v655 = vpack.c.bf16 %v634, %v633
      %v656 = vpack.c.bf16 %v636, %v635
      %v657 = vpack.c.bf16 %v638, %v637
      %v658 = vpack.c.bf16 %v640, %v639
      %v659 = vld [vmem:[%s2] sm:$0x1]
      %v661 = vlaneseq
      %v662 = vshrl.u32 %v661, 7
      %v663 = vsub.s32 0, %v662
      %v664 = vrot.slane %v659, %v663
      %v666 = vld [vmem:[%s1] sm:$0xf]
      %v667 = vld [vmem:[%s1 + $0x4] sm:$0xf]
      %v668 = vld [vmem:[%s1 + $0x8] sm:$0xf]
      %v669 = vld [vmem:[%s1 + $0xc] sm:$0xf]
      %v670 = vld [vmem:[%s1 + $0x10] sm:$0xf]
      %v671 = vld [vmem:[%s1 + $0x14] sm:$0xf]
      %v672 = vld [vmem:[%s1 + $0x18] sm:$0xf]
      %v673 = vld [vmem:[%s1 + $0x1c] sm:$0xf]
      %v674 = vld [vmem:[%s1 + $0x20] sm:$0xf]
      %v675 = vld [vmem:[%s1 + $0x24] sm:$0xf]
      %v676 = vld [vmem:[%s1 + $0x28] sm:$0xf]
      %v677 = vld [vmem:[%s1 + $0x2c] sm:$0xf]
      %v678 = vld [vmem:[%s1 + $0x30] sm:$0xf]
      %v679 = vld [vmem:[%s1 + $0x34] sm:$0xf]
      %v680 = vld [vmem:[%s1 + $0x38] sm:$0xf]
      %v681 = vld [vmem:[%s1 + $0x3c] sm:$0xf]
      %v682 = vld [vmem:[%s1 + $0x40] sm:$0xf]
      %v683 = vld [vmem:[%s1 + $0x44] sm:$0xf]
      %v684 = vld [vmem:[%s1 + $0x48] sm:$0xf]
      %v685 = vld [vmem:[%s1 + $0x4c] sm:$0xf]
      %v686 = vld [vmem:[%s1 + $0x50] sm:$0xf]
      %v687 = vld [vmem:[%s1 + $0x54] sm:$0xf]
      %v688 = vld [vmem:[%s1 + $0x58] sm:$0xf]
      %v689 = vld [vmem:[%s1 + $0x5c] sm:$0xf]
      %v690 = vld [vmem:[%s1 + $0x60] sm:$0xf]
      %v691 = vld [vmem:[%s1 + $0x64] sm:$0xf]
      %v692 = vld [vmem:[%s1 + $0x68] sm:$0xf]
      %v693 = vld [vmem:[%s1 + $0x6c] sm:$0xf]
      %v694 = vld [vmem:[%s1 + $0x70] sm:$0xf]
      %v695 = vld [vmem:[%s1 + $0x74] sm:$0xf]
      %v696 = vld [vmem:[%s1 + $0x78] sm:$0xf]
      %v697 = vld [vmem:[%s1 + $0x7c] sm:$0xf]
      %v698 = vld [vmem:[%s1 + $0x80] sm:$0xf]
      %v699 = vld [vmem:[%s1 + $0x84] sm:$0xf]
      %v700 = vld [vmem:[%s1 + $0x88] sm:$0xf]
      %v701 = vld [vmem:[%s1 + $0x8c] sm:$0xf]
      %v702 = vld [vmem:[%s1 + $0x90] sm:$0xf]
      %v703 = vld [vmem:[%s1 + $0x94] sm:$0xf]
      %v704 = vld [vmem:[%s1 + $0x98] sm:$0xf]
      %v705 = vld [vmem:[%s1 + $0x9c] sm:$0xf]
      %v706 = vld [vmem:[%s1 + $0xa0] sm:$0xf]
      %v707 = vld [vmem:[%s1 + $0xa4] sm:$0xf]
      %v708 = vld [vmem:[%s1 + $0xa8] sm:$0xf]
      %v709 = vld [vmem:[%s1 + $0xac] sm:$0xf]
      %v710 = vld [vmem:[%s1 + $0xb0] sm:$0xf]
      %v711 = vld [vmem:[%s1 + $0xb4] sm:$0xf]
      %v712 = vld [vmem:[%s1 + $0xb8] sm:$0xf]
      %v713 = vld [vmem:[%s1 + $0xbc] sm:$0xf]
      %v762 = vunpack.c.l.b16 %v666
      %v763 = vunpack.c.l.b16 %v667
      %v764 = vunpack.c.l.b16 %v668
      %v765 = vunpack.c.l.b16 %v669
      %v766 = vunpack.c.l.b16 %v670
      %v767 = vunpack.c.l.b16 %v671
      %v768 = vunpack.c.l.b16 %v672
      %v769 = vunpack.c.l.b16 %v673
      %v770 = vunpack.c.l.b16 %v674
      %v771 = vunpack.c.l.b16 %v675
      %v772 = vunpack.c.l.b16 %v676
      %v773 = vunpack.c.l.b16 %v677
      %v774 = vunpack.c.l.b16 %v678
      %v775 = vunpack.c.l.b16 %v679
      %v776 = vunpack.c.l.b16 %v680
      %v777 = vunpack.c.l.b16 %v681
      %v778 = vunpack.c.l.b16 %v682
      %v779 = vunpack.c.l.b16 %v683
      %v780 = vunpack.c.l.b16 %v684
      %v781 = vunpack.c.l.b16 %v685
      %v782 = vunpack.c.l.b16 %v686
      %v783 = vunpack.c.l.b16 %v687
      %v784 = vunpack.c.l.b16 %v688
      %v785 = vunpack.c.l.b16 %v689
      %v786 = vunpack.c.l.b16 %v690
      %v787 = vunpack.c.l.b16 %v691
      %v788 = vunpack.c.l.b16 %v692
      %v789 = vunpack.c.l.b16 %v693
      %v790 = vunpack.c.l.b16 %v694
      %v791 = vunpack.c.l.b16 %v695
      %v792 = vunpack.c.l.b16 %v696
      %v793 = vunpack.c.l.b16 %v697
      %v794 = vunpack.c.l.b16 %v698
      %v795 = vunpack.c.l.b16 %v699
      %v796 = vunpack.c.l.b16 %v700
      %v797 = vunpack.c.l.b16 %v701
      %v798 = vunpack.c.l.b16 %v702
      %v799 = vunpack.c.l.b16 %v703
      %v800 = vunpack.c.l.b16 %v704
      %v801 = vunpack.c.l.b16 %v705
      %v802 = vunpack.c.l.b16 %v706
      %v803 = vunpack.c.l.b16 %v707
      %v804 = vunpack.c.l.b16 %v708
      %v805 = vunpack.c.l.b16 %v709
      %v806 = vunpack.c.l.b16 %v710
      %v807 = vunpack.c.l.b16 %v711
      %v808 = vunpack.c.l.b16 %v712
      %v809 = vunpack.c.l.b16 %v713
      %v810 = vpack.c.b16 %v763, %v762
      %v811 = vpack.c.b16 %v765, %v764
      %v812 = vpack.c.b16 %v767, %v766
      %v813 = vpack.c.b16 %v769, %v768
      %v814 = vpack.c.b16 %v771, %v770
      %v815 = vpack.c.b16 %v773, %v772
      %v816 = vpack.c.b16 %v775, %v774
      %v817 = vpack.c.b16 %v777, %v776
      %v818 = vpack.c.b16 %v779, %v778
      %v819 = vpack.c.b16 %v781, %v780
      %v820 = vpack.c.b16 %v783, %v782
      %v821 = vpack.c.b16 %v785, %v784
      %v822 = vpack.c.b16 %v787, %v786
      %v823 = vpack.c.b16 %v789, %v788
      %v824 = vpack.c.b16 %v791, %v790
      %v825 = vpack.c.b16 %v793, %v792
      %v826 = vpack.c.b16 %v795, %v794
      %v827 = vpack.c.b16 %v797, %v796
      %v828 = vpack.c.b16 %v799, %v798
      %v829 = vpack.c.b16 %v801, %v800
      %v830 = vpack.c.b16 %v803, %v802
      %v831 = vpack.c.b16 %v805, %v804
      %v832 = vpack.c.b16 %v807, %v806
      %v833 = vpack.c.b16 %v809, %v808
      %858 = vmatprep.subr.bf16.mxu0 0
      %859 = vmatpush1.bf16.msra.mxu0 %v810
      %860 = vmatprep.subr.bf16.mxu0 0
      %861 = vmatpush1.bf16.msra.mxu0 %v811
      %862 = vmatprep.subr.bf16.mxu0 0
      %863 = vmatpush1.bf16.msra.mxu0 %v812
      %864 = vmatprep.subr.bf16.mxu0 0
      %865 = vmatpush1.bf16.msra.mxu0 %v813
      %866 = vmatprep.subr.bf16.mxu0 0
      %867 = vmatpush1.bf16.msra.mxu0 %v814
      %868 = vmatprep.subr.bf16.mxu0 0
      %869 = vmatpush1.bf16.msra.mxu0 %v815
      %870 = vmatprep.subr.bf16.mxu0 0
      %871 = vmatpush1.bf16.msra.mxu0 %v816
      %872 = vmatprep.subr.bf16.mxu0 0
      %873 = vmatpush1.bf16.msra.mxu0 %v817
      %874 = vmatprep.subr.bf16.mxu0 0
      %875 = vmatpush1.bf16.msra.mxu0 %v818
      %876 = vmatprep.subr.bf16.mxu0 0
      %877 = vmatpush1.bf16.msra.mxu0 %v819
      %878 = vmatprep.subr.bf16.mxu0 0
      %879 = vmatpush1.bf16.msra.mxu0 %v820
      %880 = vmatprep.subr.bf16.mxu0 0
      %881 = vmatpush1.bf16.msra.mxu0 %v821
      %882 = vmatprep.subr.bf16.mxu0 0
      %883 = vmatpush1.bf16.msra.mxu0 %v822
      %884 = vmatprep.subr.bf16.mxu0 0
      %885 = vmatpush1.bf16.msra.mxu0 %v823
      %886 = vmatprep.subr.bf16.mxu0 0
      %887 = vmatpush1.bf16.msra.mxu0 %v824
      %888 = vmatprep.subr.bf16.mxu0 0
      %889 = vmatpush1.bf16.msra.mxu0 %v825
      %890 = vmatprep.mubr.bf16.mxu0 %v587
      %891 = vmatmul.mubr.bf16.gmra.mrb[0].mxu0 %v533
      %v892 = vpop.f32.mrb[0].mxu0
      %v893 = vadd.f32 0.0, %v892
      %v894 = vpop.f32.mrb[0].mxu0
      %v895 = vpop.f32.mrb[0].mxu0
      %v896 = vadd.f32 0.0, %v895
      %v897 = vpop.f32.mrb[0].mxu0
      %898 = vmatprep.mubr.bf16.mxu0 %v588
      %899 = vmatmul.mubr.bf16.gmra.mrb[0].mxu0 %v534
      %v900 = vpop.f32.mrb[0].mxu0
      %v901 = vadd.f32 0.0, %v900
      %v902 = vpop.f32.mrb[0].mxu0
      %v903 = vpop.f32.mrb[0].mxu0
      %v904 = vadd.f32 0.0, %v903
      %v905 = vpop.f32.mrb[0].mxu0
      %906 = vmatprep.mubr.bf16.mxu0 %v589
      %907 = vmatmul.mubr.bf16.gmra.mrb[0].mxu0 %v535
      %v908 = vpop.f32.mrb[0].mxu0
      %v909 = vadd.f32 0.0, %v908
      %v910 = vpop.f32.mrb[0].mxu0
      %v911 = vpop.f32.mrb[0].mxu0
      %v912 = vadd.f32 0.0, %v911
      %v913 = vpop.f32.mrb[0].mxu0
      %914 = vmatprep.mubr.bf16.mxu0 %v590
      %915 = vmatmul.mubr.bf16.gmra.mrb[0].mxu0 %v536
      %v916 = vpop.f32.mrb[0].mxu0
      %v917 = vadd.f32 0.0, %v916
      %v918 = vpop.f32.mrb[0].mxu0
      %v919 = vpop.f32.mrb[0].mxu0
      %v920 = vadd.f32 0.0, %v919
      %v921 = vpop.f32.mrb[0].mxu0
      %922 = vmatprep.mubr.bf16.mxu0 %v591
      %923 = vmatmul.mubr.bf16.gmra.mrb[0].mxu0 %v537
      %v924 = vpop.f32.mrb[0].mxu0
      %v925 = vadd.f32 0.0, %v924
      %v926 = vpop.f32.mrb[0].mxu0
      %v927 = vpop.f32.mrb[0].mxu0
      %v928 = vadd.f32 0.0, %v927
      %v929 = vpop.f32.mrb[0].mxu0
      %930 = vmatprep.mubr.bf16.mxu0 %v592
      %931 = vmatmul.mubr.bf16.gmra.mrb[0].mxu0 %v538
      %v932 = vpop.f32.mrb[0].mxu0
      %v933 = vadd.f32 0.0, %v932
      %v934 = vpop.f32.mrb[0].mxu0
      %v935 = vpop.f32.mrb[0].mxu0
      %v936 = vadd.f32 0.0, %v935
      %v937 = vpop.f32.mrb[0].mxu0
      %938 = vmatprep.mubr.bf16.mxu0 %v593
      %939 = vmatmul.mubr.bf16.gmra.mrb[0].mxu0 %v539
      %v940 = vpop.f32.mrb[0].mxu0
      %v941 = vadd.f32 0.0, %v940
      %v942 = vpop.f32.mrb[0].mxu0
      %v943 = vpop.f32.mrb[0].mxu0
      %v944 = vadd.f32 0.0, %v943
      %v945 = vpop.f32.mrb[0].mxu0
      %946 = vmatprep.mubr.bf16.mxu0 %v594
      %947 = vmatmul.mubr.bf16.gmra.mrb[0].mxu0 %v540
      %v948 = vpop.f32.mrb[0].mxu0
      %v949 = vadd.f32 0.0, %v948
      %v950 = vpop.f32.mrb[0].mxu0
      %v951 = vpop.f32.mrb[0].mxu0
      %v952 = vadd.f32 0.0, %v951
      %v953 = vpop.f32.mrb[0].mxu0
      %954 = vmatprep.mubr.bf16.mxu0 %v595
      %955 = vmatmul.mubr.bf16.gmra.mrb[0].mxu0 %v541
      %v956 = vpop.f32.mrb[0].mxu0
      %v957 = vadd.f32 0.0, %v956
      %v958 = vpop.f32.mrb[0].mxu0
      %v959 = vpop.f32.mrb[0].mxu0
      %v960 = vadd.f32 0.0, %v959
      %v961 = vpop.f32.mrb[0].mxu0
      %962 = vmatprep.mubr.bf16.mxu0 %v596
      %963 = vmatmul.mubr.bf16.gmra.mrb[0].mxu0 %v542
      %v964 = vpop.f32.mrb[0].mxu0
      %v965 = vadd.f32 0.0, %v964
      %v966 = vpop.f32.mrb[0].mxu0
      %v967 = vpop.f32.mrb[0].mxu0
      %v968 = vadd.f32 0.0, %v967
      %v969 = vpop.f32.mrb[0].mxu0
      %970 = vmatprep.mubr.bf16.mxu0 %v597
      %971 = vmatmul.mubr.bf16.gmra.mrb[0].mxu0 %v543
      %v972 = vpop.f32.mrb[0].mxu0
      %v973 = vadd.f32 0.0, %v972
      %v974 = vpop.f32.mrb[0].mxu0
      %v975 = vpop.f32.mrb[0].mxu0
      %v976 = vadd.f32 0.0, %v975
      %v977 = vpop.f32.mrb[0].mxu0
      %978 = vmatprep.mubr.bf16.mxu0 %v598
      %979 = vmatmul.mubr.bf16.gmra.mrb[0].mxu0 %v544
      %v980 = vpop.f32.mrb[0].mxu0
      %v981 = vadd.f32 0.0, %v980
      %v982 = vpop.f32.mrb[0].mxu0
      %v983 = vpop.f32.mrb[0].mxu0
      %v984 = vadd.f32 0.0, %v983
      %v985 = vpop.f32.mrb[0].mxu0
      %986 = vmatprep.mubr.bf16.mxu0 %v599
      %987 = vmatmul.mubr.bf16.gmra.mrb[0].mxu0 %v545
      %v988 = vpop.f32.mrb[0].mxu0
      %v989 = vadd.f32 0.0, %v988
      %v990 = vpop.f32.mrb[0].mxu0
      %v991 = vpop.f32.mrb[0].mxu0
      %v992 = vadd.f32 0.0, %v991
      %v993 = vpop.f32.mrb[0].mxu0
      %994 = vmatprep.mubr.bf16.mxu0 %v600
      %995 = vmatmul.mubr.bf16.gmra.mrb[0].mxu0 %v546
      %v996 = vpop.f32.mrb[0].mxu0
      %v997 = vadd.f32 0.0, %v996
      %v998 = vpop.f32.mrb[0].mxu0
      %v999 = vpop.f32.mrb[0].mxu0
      %v1000 = vadd.f32 0.0, %v999
      %v1001 = vpop.f32.mrb[0].mxu0
      %1002 = vmatprep.mubr.bf16.mxu0 %v601
      %1003 = vmatmul.mubr.bf16.gmra.mrb[0].mxu0 %v547
      %v1004 = vpop.f32.mrb[0].mxu0
      %v1005 = vadd.f32 0.0, %v1004
      %v1006 = vpop.f32.mrb[0].mxu0
      %v1007 = vpop.f32.mrb[0].mxu0
      %v1008 = vadd.f32 0.0, %v1007
      %v1009 = vpop.f32.mrb[0].mxu0
      %1010 = vmatprep.mubr.bf16.mxu0 %v602
      %1011 = vmatmul.mubr.bf16.gmra.mrb[0].mxu0 %v548
      %v1012 = vpop.f32.mrb[0].mxu0
      %v1013 = vadd.f32 0.0, %v1012
      %v1014 = vpop.f32.mrb[0].mxu0
      %v1015 = vpop.f32.mrb[0].mxu0
      %v1016 = vadd.f32 0.0, %v1015
      %v1017 = vpop.f32.mrb[0].mxu0
      %1018 = vdwg.mxu0
      %1019 = vmatprep.subr.bf16.mxu0 0
      %1020 = vmatpush1.bf16.msra.mxu0 %v826
      %1021 = vmatprep.subr.bf16.mxu0 0
      %1022 = vmatpush1.bf16.msra.mxu0 %v827
      %1023 = vmatprep.subr.bf16.mxu0 0
      %1024 = vmatpush1.bf16.msra.mxu0 %v828
      %1025 = vmatprep.subr.bf16.mxu0 0
      %1026 = vmatpush1.bf16.msra.mxu0 %v829
      %1027 = vmatprep.subr.bf16.mxu0 0
      %1028 = vmatpush1.bf16.msra.mxu0 %v830
      %1029 = vmatprep.subr.bf16.mxu0 0
      %1030 = vmatpush1.bf16.msra.mxu0 %v831
      %1031 = vmatprep.subr.bf16.mxu0 0
      %1032 = vmatpush1.bf16.msra.mxu0 %v832
      %1033 = vmatprep.subr.bf16.mxu0 0
      %1034 = vmatpush1.bf16.msra.mxu0 %v833
      %1035 = vmatprep.subr.bf16.mxu0 0
      %1036 = vmatpush1.bf16.msra.mxu0 0
      %1037 = vmatprep.subr.bf16.mxu0 0
      %1038 = vmatpush1.bf16.msra.mxu0 0
      %1039 = vmatprep.subr.bf16.mxu0 0
      %1040 = vmatpush1.bf16.msra.mxu0 0
      %1041 = vmatprep.subr.bf16.mxu0 0
      %1042 = vmatpush1.bf16.msra.mxu0 0
      %1043 = vmatprep.subr.bf16.mxu0 0
      %1044 = vmatpush1.bf16.msra.mxu0 0
      %1045 = vmatprep.subr.bf16.mxu0 0
      %1046 = vmatpush1.bf16.msra.mxu0 0
      %1047 = vmatprep.subr.bf16.mxu0 0
      %1048 = vmatpush1.bf16.msra.mxu0 0
      %1049 = vmatprep.subr.bf16.mxu0 0
      %1050 = vmatpush1.bf16.msra.mxu0 0
      %1051 = vmatprep.mubr.bf16.mxu0 0
      %1052 = vmatmul.mubr.bf16.gmra.mrb[0].mxu0 %v641
      %v1053 = vpop.f32.mrb[0].mxu0
      %v1054 = vadd.f32 %v893, %v1053
      %v1055 = vpop.f32.mrb[0].mxu0
      %v1056 = vpop.f32.mrb[0].mxu0
      %v1057 = vadd.f32 %v896, %v1056
      %v1058 = vpop.f32.mrb[0].mxu0
      %1059 = vmatprep.mubr.bf16.mxu0 0
      %1060 = vmatmul.mubr.bf16.gmra.mrb[0].mxu0 %v642
      %v1061 = vpop.f32.mrb[0].mxu0
      %v1062 = vadd.f32 %v901, %v1061
      %v1063 = vpop.f32.mrb[0].mxu0
      %v1064 = vpop.f32.mrb[0].mxu0
      %v1065 = vadd.f32 %v904, %v1064
      %v1066 = vpop.f32.mrb[0].mxu0
      %1067 = vmatprep.mubr.bf16.mxu0 0
      %1068 = vmatmul.mubr.bf16.gmra.mrb[0].mxu0 %v643
      %v1069 = vpop.f32.mrb[0].mxu0
      %v1070 = vadd.f32 %v909, %v1069
      %v1071 = vpop.f32.mrb[0].mxu0
      %v1072 = vpop.f32.mrb[0].mxu0
      %v1073 = vadd.f32 %v912, %v1072
      %v1074 = vpop.f32.mrb[0].mxu0
      %1075 = vmatprep.mubr.bf16.mxu0 0
      %1076 = vmatmul.mubr.bf16.gmra.mrb[0].mxu0 %v644
      %v1077 = vpop.f32.mrb[0].mxu0
      %v1078 = vadd.f32 %v917, %v1077
      %v1079 = vpop.f32.mrb[0].mxu0
      %v1080 = vpop.f32.mrb[0].mxu0
      %v1081 = vadd.f32 %v920, %v1080
      %v1082 = vpop.f32.mrb[0].mxu0
      %1083 = vmatprep.mubr.bf16.mxu0 0
      %1084 = vmatmul.mubr.bf16.gmra.mrb[0].mxu0 %v645
      %v1085 = vpop.f32.mrb[0].mxu0
      %v1086 = vadd.f32 %v925, %v1085
      %v1087 = vpop.f32.mrb[0].mxu0
      %v1088 = vpop.f32.mrb[0].mxu0
      %v1089 = vadd.f32 %v928, %v1088
      %v1090 = vpop.f32.mrb[0].mxu0
      %1091 = vmatprep.mubr.bf16.mxu0 0
      %1092 = vmatmul.mubr.bf16.gmra.mrb[0].mxu0 %v646
      %v1093 = vpop.f32.mrb[0].mxu0
      %v1094 = vadd.f32 %v933, %v1093
      %v1095 = vpop.f32.mrb[0].mxu0
      %v1096 = vpop.f32.mrb[0].mxu0
      %v1097 = vadd.f32 %v936, %v1096
      %v1098 = vpop.f32.mrb[0].mxu0
      %1099 = vmatprep.mubr.bf16.mxu0 0
      %1100 = vmatmul.mubr.bf16.gmra.mrb[0].mxu0 %v647
      %v1101 = vpop.f32.mrb[0].mxu0
      %v1102 = vadd.f32 %v941, %v1101
      %v1103 = vpop.f32.mrb[0].mxu0
      %v1104 = vpop.f32.mrb[0].mxu0
      %v1105 = vadd.f32 %v944, %v1104
      %v1106 = vpop.f32.mrb[0].mxu0
      %1107 = vmatprep.mubr.bf16.mxu0 0
      %1108 = vmatmul.mubr.bf16.gmra.mrb[0].mxu0 %v648
      %v1109 = vpop.f32.mrb[0].mxu0
      %v1110 = vadd.f32 %v949, %v1109
      %v1111 = vpop.f32.mrb[0].mxu0
      %v1112 = vpop.f32.mrb[0].mxu0
      %v1113 = vadd.f32 %v952, %v1112
      %v1114 = vpop.f32.mrb[0].mxu0
      %1115 = vmatprep.mubr.bf16.mxu0 0
      %1116 = vmatmul.mubr.bf16.gmra.mrb[0].mxu0 %v649
      %v1117 = vpop.f32.mrb[0].mxu0
      %v1118 = vadd.f32 %v957, %v1117
      %v1119 = vpop.f32.mrb[0].mxu0
      %v1120 = vpop.f32.mrb[0].mxu0
      %v1121 = vadd.f32 %v960, %v1120
      %v1122 = vpop.f32.mrb[0].mxu0
      %1123 = vmatprep.mubr.bf16.mxu0 0
      %1124 = vmatmul.mubr.bf16.gmra.mrb[0].mxu0 %v650
      %v1125 = vpop.f32.mrb[0].mxu0
      %v1126 = vadd.f32 %v965, %v1125
      %v1127 = vpop.f32.mrb[0].mxu0
      %v1128 = vpop.f32.mrb[0].mxu0
      %v1129 = vadd.f32 %v968, %v1128
      %v1130 = vpop.f32.mrb[0].mxu0
      %1131 = vmatprep.mubr.bf16.mxu0 0
      %1132 = vmatmul.mubr.bf16.gmra.mrb[0].mxu0 %v651
      %v1133 = vpop.f32.mrb[0].mxu0
      %v1134 = vadd.f32 %v973, %v1133
      %v1135 = vpop.f32.mrb[0].mxu0
      %v1136 = vpop.f32.mrb[0].mxu0
      %v1137 = vadd.f32 %v976, %v1136
      %v1138 = vpop.f32.mrb[0].mxu0
      %1139 = vmatprep.mubr.bf16.mxu0 0
      %1140 = vmatmul.mubr.bf16.gmra.mrb[0].mxu0 %v652
      %v1141 = vpop.f32.mrb[0].mxu0
      %v1142 = vadd.f32 %v981, %v1141
      %v1143 = vpop.f32.mrb[0].mxu0
      %v1144 = vpop.f32.mrb[0].mxu0
      %v1145 = vadd.f32 %v984, %v1144
      %v1146 = vpop.f32.mrb[0].mxu0
      %1147 = vmatprep.mubr.bf16.mxu0 0
      %1148 = vmatmul.mubr.bf16.gmra.mrb[0].mxu0 %v653
      %v1149 = vpop.f32.mrb[0].mxu0
      %v1150 = vadd.f32 %v989, %v1149
      %v1151 = vpop.f32.mrb[0].mxu0
      %v1152 = vpop.f32.mrb[0].mxu0
      %v1153 = vadd.f32 %v992, %v1152
      %v1154 = vpop.f32.mrb[0].mxu0
      %1155 = vmatprep.mubr.bf16.mxu0 0
      %1156 = vmatmul.mubr.bf16.gmra.mrb[0].mxu0 %v654
      %v1157 = vpop.f32.mrb[0].mxu0
      %v1158 = vadd.f32 %v997, %v1157
      %v1159 = vpop.f32.mrb[0].mxu0
      %v1160 = vpop.f32.mrb[0].mxu0
      %v1161 = vadd.f32 %v1000, %v1160
      %v1162 = vpop.f32.mrb[0].mxu0
      %1163 = vmatprep.mubr.bf16.mxu0 0
      %1164 = vmatmul.mubr.bf16.gmra.mrb[0].mxu0 %v655
      %v1165 = vpop.f32.mrb[0].mxu0
      %v1166 = vadd.f32 %v1005, %v1165
      %v1167 = vpop.f32.mrb[0].mxu0
      %v1168 = vpop.f32.mrb[0].mxu0
      %v1169 = vadd.f32 %v1008, %v1168
      %v1170 = vpop.f32.mrb[0].mxu0
      %1171 = vmatprep.mubr.bf16.mxu0 0
      %1172 = vmatmul.mubr.bf16.gmra.mrb[0].mxu0 %v656
      %v1173 = vpop.f32.mrb[0].mxu0
      %v1174 = vadd.f32 %v1013, %v1173
      %v1175 = vpop.f32.mrb[0].mxu0
      %v1176 = vpop.f32.mrb[0].mxu0
      %v1177 = vadd.f32 %v1016, %v1176
      %v1178 = vpop.f32.mrb[0].mxu0
      %1179 = vdwg.mxu0
      %v1180 = vadd.f32 %v664, %v1054
      %v1181 = vadd.f32 %v664, %v1057
      %v1182 = vadd.f32 %v664, %v1062
      %v1183 = vadd.f32 %v664, %v1065
      %v1184 = vadd.f32 %v664, %v1070
      %v1185 = vadd.f32 %v664, %v1073
      %v1186 = vadd.f32 %v664, %v1078
      %v1187 = vadd.f32 %v664, %v1081
      %v1188 = vadd.f32 %v664, %v1086
      %v1189 = vadd.f32 %v664, %v1089
      %v1190 = vadd.f32 %v664, %v1094
      %v1191 = vadd.f32 %v664, %v1097
      %v1192 = vadd.f32 %v664, %v1102
      %v1193 = vadd.f32 %v664, %v1105
      %v1194 = vadd.f32 %v664, %v1110
      %v1195 = vadd.f32 %v664, %v1113
      %v1196 = vadd.f32 %v664, %v1118
      %v1197 = vadd.f32 %v664, %v1121
      %v1198 = vadd.f32 %v664, %v1126
      %v1199 = vadd.f32 %v664, %v1129
      %v1200 = vadd.f32 %v664, %v1134
      %v1201 = vadd.f32 %v664, %v1137
      %v1202 = vadd.f32 %v664, %v1142
      %v1203 = vadd.f32 %v664, %v1145
      %v1204 = vadd.f32 %v664, %v1150
      %v1205 = vadd.f32 %v664, %v1153
      %v1206 = vadd.f32 %v664, %v1158
      %v1207 = vadd.f32 %v664, %v1161
      %v1208 = vadd.f32 %v664, %v1166
      %v1209 = vadd.f32 %v664, %v1169
      %v1210 = vadd.f32 %v664, %v1174
      %v1211 = vadd.f32 %v664, %v1177
      %v1212 = vld [vmem:[%s1 + $0xc0] sm:$0xf]
      %v1213 = vld [vmem:[%s1 + $0xc4] sm:$0xf]
      %v1214 = vld [vmem:[%s1 + $0xc8] sm:$0xf]
      %v1215 = vld [vmem:[%s1 + $0xcc] sm:$0xf]
      %v1216 = vld [vmem:[%s1 + $0xd0] sm:$0xf]
      %v1217 = vld [vmem:[%s1 + $0xd4] sm:$0xf]
      %v1218 = vld [vmem:[%s1 + $0xd8] sm:$0xf]
      %v1219 = vld [vmem:[%s1 + $0xdc] sm:$0xf]
      %v1220 = vld [vmem:[%s1 + $0xe0] sm:$0xf]
      %v1221 = vld [vmem:[%s1 + $0xe4] sm:$0xf]
      %v1222 = vld [vmem:[%s1 + $0xe8] sm:$0xf]
      %v1223 = vld [vmem:[%s1 + $0xec] sm:$0xf]
      %v1224 = vld [vmem:[%s1 + $0xf0] sm:$0xf]
      %v1225 = vld [vmem:[%s1 + $0xf4] sm:$0xf]
      %v1226 = vld [vmem:[%s1 + $0xf8] sm:$0xf]
      %v1227 = vld [vmem:[%s1 + $0xfc] sm:$0xf]
      %v1228 = vld [vmem:[%s1 + $0x100] sm:$0xf]
      %v1229 = vld [vmem:[%s1 + $0x104] sm:$0xf]
      %v1230 = vld [vmem:[%s1 + $0x108] sm:$0xf]
      %v1231 = vld [vmem:[%s1 + $0x10c] sm:$0xf]
      %v1232 = vld [vmem:[%s1 + $0x110] sm:$0xf]
      %v1233 = vld [vmem:[%s1 + $0x114] sm:$0xf]
      %v1234 = vld [vmem:[%s1 + $0x118] sm:$0xf]
      %v1235 = vld [vmem:[%s1 + $0x11c] sm:$0xf]
      %v1236 = vld [vmem:[%s1 + $0x120] sm:$0xf]
      %v1237 = vld [vmem:[%s1 + $0x124] sm:$0xf]
      %v1238 = vld [vmem:[%s1 + $0x128] sm:$0xf]
      %v1239 = vld [vmem:[%s1 + $0x12c] sm:$0xf]
      %v1240 = vld [vmem:[%s1 + $0x130] sm:$0xf]
      %v1241 = vld [vmem:[%s1 + $0x134] sm:$0xf]
      %v1242 = vld [vmem:[%s1 + $0x138] sm:$0xf]
      %v1243 = vld [vmem:[%s1 + $0x13c] sm:$0xf]
      %v1244 = vld [vmem:[%s1 + $0x140] sm:$0xf]
      %v1245 = vld [vmem:[%s1 + $0x144] sm:$0xf]
      %v1246 = vld [vmem:[%s1 + $0x148] sm:$0xf]
      %v1247 = vld [vmem:[%s1 + $0x14c] sm:$0xf]
      %v1248 = vld [vmem:[%s1 + $0x150] sm:$0xf]
      %v1249 = vld [vmem:[%s1 + $0x154] sm:$0xf]
      %v1250 = vld [vmem:[%s1 + $0x158] sm:$0xf]
      %v1251 = vld [vmem:[%s1 + $0x15c] sm:$0xf]
      %v1252 = vld [vmem:[%s1 + $0x160] sm:$0xf]
      %v1253 = vld [vmem:[%s1 + $0x164] sm:$0xf]
      %v1254 = vld [vmem:[%s1 + $0x168] sm:$0xf]
      %v1255 = vld [vmem:[%s1 + $0x16c] sm:$0xf]
      %v1256 = vld [vmem:[%s1 + $0x170] sm:$0xf]
      %v1257 = vld [vmem:[%s1 + $0x174] sm:$0xf]
      %v1258 = vld [vmem:[%s1 + $0x178] sm:$0xf]
      %v1259 = vld [vmem:[%s1 + $0x17c] sm:$0xf]
      %v1308 = vunpack.c.l.b16 %v1212
      %v1309 = vunpack.c.l.b16 %v1213
      %v1310 = vunpack.c.l.b16 %v1214
      %v1311 = vunpack.c.l.b16 %v1215
      %v1312 = vunpack.c.l.b16 %v1216
      %v1313 = vunpack.c.l.b16 %v1217
      %v1314 = vunpack.c.l.b16 %v1218
      %v1315 = vunpack.c.l.b16 %v1219
      %v1316 = vunpack.c.l.b16 %v1220
      %v1317 = vunpack.c.l.b16 %v1221
      %v1318 = vunpack.c.l.b16 %v1222
      %v1319 = vunpack.c.l.b16 %v1223
      %v1320 = vunpack.c.l.b16 %v1224
      %v1321 = vunpack.c.l.b16 %v1225
      %v1322 = vunpack.c.l.b16 %v1226
      %v1323 = vunpack.c.l.b16 %v1227
      %v1324 = vunpack.c.l.b16 %v1228
      %v1325 = vunpack.c.l.b16 %v1229
      %v1326 = vunpack.c.l.b16 %v1230
      %v1327 = vunpack.c.l.b16 %v1231
      %v1328 = vunpack.c.l.b16 %v1232
      %v1329 = vunpack.c.l.b16 %v1233
      %v1330 = vunpack.c.l.b16 %v1234
      %v1331 = vunpack.c.l.b16 %v1235
      %v1332 = vunpack.c.l.b16 %v1236
      %v1333 = vunpack.c.l.b16 %v1237
      %v1334 = vunpack.c.l.b16 %v1238
      %v1335 = vunpack.c.l.b16 %v1239
      %v1336 = vunpack.c.l.b16 %v1240
      %v1337 = vunpack.c.l.b16 %v1241
      %v1338 = vunpack.c.l.b16 %v1242
      %v1339 = vunpack.c.l.b16 %v1243
      %v1340 = vunpack.c.l.b16 %v1244
      %v1341 = vunpack.c.l.b16 %v1245
      %v1342 = vunpack.c.l.b16 %v1246
      %v1343 = vunpack.c.l.b16 %v1247
      %v1344 = vunpack.c.l.b16 %v1248
      %v1345 = vunpack.c.l.b16 %v1249
      %v1346 = vunpack.c.l.b16 %v1250
      %v1347 = vunpack.c.l.b16 %v1251
      %v1348 = vunpack.c.l.b16 %v1252
      %v1349 = vunpack.c.l.b16 %v1253
      %v1350 = vunpack.c.l.b16 %v1254
      %v1351 = vunpack.c.l.b16 %v1255
      %v1352 = vunpack.c.l.b16 %v1256
      %v1353 = vunpack.c.l.b16 %v1257
      %v1354 = vunpack.c.l.b16 %v1258
      %v1355 = vunpack.c.l.b16 %v1259
      %v1356 = vpack.c.b16 %v1309, %v1308
      %v1357 = vpack.c.b16 %v1311, %v1310
      %v1358 = vpack.c.b16 %v1313, %v1312
      %v1359 = vpack.c.b16 %v1315, %v1314
      %v1360 = vpack.c.b16 %v1317, %v1316
      %v1361 = vpack.c.b16 %v1319, %v1318
      %v1362 = vpack.c.b16 %v1321, %v1320
      %v1363 = vpack.c.b16 %v1323, %v1322
      %v1364 = vpack.c.b16 %v1325, %v1324
      %v1365 = vpack.c.b16 %v1327, %v1326
      %v1366 = vpack.c.b16 %v1329, %v1328
      %v1367 = vpack.c.b16 %v1331, %v1330
      %v1368 = vpack.c.b16 %v1333, %v1332
      %v1369 = vpack.c.b16 %v1335, %v1334
      %v1370 = vpack.c.b16 %v1337, %v1336
      %v1371 = vpack.c.b16 %v1339, %v1338
      %v1372 = vpack.c.b16 %v1341, %v1340
      %v1373 = vpack.c.b16 %v1343, %v1342
      %v1374 = vpack.c.b16 %v1345, %v1344
      %v1375 = vpack.c.b16 %v1347, %v1346
      %v1376 = vpack.c.b16 %v1349, %v1348
      %v1377 = vpack.c.b16 %v1351, %v1350
      %v1378 = vpack.c.b16 %v1353, %v1352
      %v1379 = vpack.c.b16 %v1355, %v1354
      %1404 = vmatprep.subr.bf16.mxu0 0
      %1405 = vmatpush1.bf16.msra.mxu0 %v1356
      %1406 = vmatprep.subr.bf16.mxu0 0
      %1407 = vmatpush1.bf16.msra.mxu0 %v1357
      %1408 = vmatprep.subr.bf16.mxu0 0
      %1409 = vmatpush1.bf16.msra.mxu0 %v1358
      %1410 = vmatprep.subr.bf16.mxu0 0
      %1411 = vmatpush1.bf16.msra.mxu0 %v1359
      %1412 = vmatprep.subr.bf16.mxu0 0
      %1413 = vmatpush1.bf16.msra.mxu0 %v1360
      %1414 = vmatprep.subr.bf16.mxu0 0
      %1415 = vmatpush1.bf16.msra.mxu0 %v1361
      %1416 = vmatprep.subr.bf16.mxu0 0
      %1417 = vmatpush1.bf16.msra.mxu0 %v1362
      %1418 = vmatprep.subr.bf16.mxu0 0
      %1419 = vmatpush1.bf16.msra.mxu0 %v1363
      %1420 = vmatprep.subr.bf16.mxu0 0
      %1421 = vmatpush1.bf16.msra.mxu0 %v1364
      %1422 = vmatprep.subr.bf16.mxu0 0
      %1423 = vmatpush1.bf16.msra.mxu0 %v1365
      %1424 = vmatprep.subr.bf16.mxu0 0
      %1425 = vmatpush1.bf16.msra.mxu0 %v1366
      %1426 = vmatprep.subr.bf16.mxu0 0
      %1427 = vmatpush1.bf16.msra.mxu0 %v1367
      %1428 = vmatprep.subr.bf16.mxu0 0
      %1429 = vmatpush1.bf16.msra.mxu0 %v1368
      %1430 = vmatprep.subr.bf16.mxu0 0
      %1431 = vmatpush1.bf16.msra.mxu0 %v1369
      %1432 = vmatprep.subr.bf16.mxu0 0
      %1433 = vmatpush1.bf16.msra.mxu0 %v1370
      %1434 = vmatprep.subr.bf16.mxu0 0
      %1435 = vmatpush1.bf16.msra.mxu0 %v1371
      %1436 = vmatprep.mubr.bf16.mxu0 %v588
      %1437 = vmatmul.mubr.bf16.gmra.mrb[0].mxu0 %v534
      %v1438 = vpop.f32.mrb[0].mxu0
      %v1439 = vadd.f32 0.0, %v1438
      %v1440 = vpop.f32.mrb[0].mxu0
      %v1441 = vpop.f32.mrb[0].mxu0
      %v1442 = vadd.f32 0.0, %v1441
      %v1443 = vpop.f32.mrb[0].mxu0
      %1444 = vmatprep.mubr.bf16.mxu0 %v589
      %1445 = vmatmul.mubr.bf16.gmra.mrb[0].mxu0 %v535
      %v1446 = vpop.f32.mrb[0].mxu0
      %v1447 = vadd.f32 0.0, %v1446
      %v1448 = vpop.f32.mrb[0].mxu0
      %v1449 = vpop.f32.mrb[0].mxu0
      %v1450 = vadd.f32 0.0, %v1449
      %v1451 = vpop.f32.mrb[0].mxu0
      %1452 = vmatprep.mubr.bf16.mxu0 %v590
      %1453 = vmatmul.mubr.bf16.gmra.mrb[0].mxu0 %v536
      %v1454 = vpop.f32.mrb[0].mxu0
      %v1455 = vadd.f32 0.0, %v1454
      %v1456 = vpop.f32.mrb[0].mxu0
      %v1457 = vpop.f32.mrb[0].mxu0
      %v1458 = vadd.f32 0.0, %v1457
      %v1459 = vpop.f32.mrb[0].mxu0
      %1460 = vmatprep.mubr.bf16.mxu0 %v591
      %1461 = vmatmul.mubr.bf16.gmra.mrb[0].mxu0 %v537
      %v1462 = vpop.f32.mrb[0].mxu0
      %v1463 = vadd.f32 0.0, %v1462
      %v1464 = vpop.f32.mrb[0].mxu0
      %v1465 = vpop.f32.mrb[0].mxu0
      %v1466 = vadd.f32 0.0, %v1465
      %v1467 = vpop.f32.mrb[0].mxu0
      %1468 = vmatprep.mubr.bf16.mxu0 %v592
      %1469 = vmatmul.mubr.bf16.gmra.mrb[0].mxu0 %v538
      %v1470 = vpop.f32.mrb[0].mxu0
      %v1471 = vadd.f32 0.0, %v1470
      %v1472 = vpop.f32.mrb[0].mxu0
      %v1473 = vpop.f32.mrb[0].mxu0
      %v1474 = vadd.f32 0.0, %v1473
      %v1475 = vpop.f32.mrb[0].mxu0
      %1476 = vmatprep.mubr.bf16.mxu0 %v593
      %1477 = vmatmul.mubr.bf16.gmra.mrb[0].mxu0 %v539
      %v1478 = vpop.f32.mrb[0].mxu0
      %v1479 = vadd.f32 0.0, %v1478
      %v1480 = vpop.f32.mrb[0].mxu0
      %v1481 = vpop.f32.mrb[0].mxu0
      %v1482 = vadd.f32 0.0, %v1481
      %v1483 = vpop.f32.mrb[0].mxu0
      %1484 = vmatprep.mubr.bf16.mxu0 %v594
      %1485 = vmatmul.mubr.bf16.gmra.mrb[0].mxu0 %v540
      %v1486 = vpop.f32.mrb[0].mxu0
      %v1487 = vadd.f32 0.0, %v1486
      %v1488 = vpop.f32.mrb[0].mxu0
      %v1489 = vpop.f32.mrb[0].mxu0
      %v1490 = vadd.f32 0.0, %v1489
      %v1491 = vpop.f32.mrb[0].mxu0
      %1492 = vmatprep.mubr.bf16.mxu0 %v595
      %1493 = vmatmul.mubr.bf16.gmra.mrb[0].mxu0 %v541
      %v1494 = vpop.f32.mrb[0].mxu0
      %v1495 = vadd.f32 0.0, %v1494
      %v1496 = vpop.f32.mrb[0].mxu0
      %v1497 = vpop.f32.mrb[0].mxu0
      %v1498 = vadd.f32 0.0, %v1497
      %v1499 = vpop.f32.mrb[0].mxu0
      %1500 = vmatprep.mubr.bf16.mxu0 %v596
      %1501 = vmatmul.mubr.bf16.gmra.mrb[0].mxu0 %v542
      %v1502 = vpop.f32.mrb[0].mxu0
      %v1503 = vadd.f32 0.0, %v1502
      %v1504 = vpop.f32.mrb[0].mxu0
      %v1505 = vpop.f32.mrb[0].mxu0
      %v1506 = vadd.f32 0.0, %v1505
      %v1507 = vpop.f32.mrb[0].mxu0
      %1508 = vmatprep.mubr.bf16.mxu0 %v597
      %1509 = vmatmul.mubr.bf16.gmra.mrb[0].mxu0 %v543
      %v1510 = vpop.f32.mrb[0].mxu0
      %v1511 = vadd.f32 0.0, %v1510
      %v1512 = vpop.f32.mrb[0].mxu0
      %v1513 = vpop.f32.mrb[0].mxu0
      %v1514 = vadd.f32 0.0, %v1513
      %v1515 = vpop.f32.mrb[0].mxu0
      %1516 = vmatprep.mubr.bf16.mxu0 %v598
      %1517 = vmatmul.mubr.bf16.gmra.mrb[0].mxu0 %v544
      %v1518 = vpop.f32.mrb[0].mxu0
      %v1519 = vadd.f32 0.0, %v1518
      %v1520 = vpop.f32.mrb[0].mxu0
      %v1521 = vpop.f32.mrb[0].mxu0
      %v1522 = vadd.f32 0.0, %v1521
      %v1523 = vpop.f32.mrb[0].mxu0
      %1524 = vmatprep.mubr.bf16.mxu0 %v599
      %1525 = vmatmul.mubr.bf16.gmra.mrb[0].mxu0 %v545
      %v1526 = vpop.f32.mrb[0].mxu0
      %v1527 = vadd.f32 0.0, %v1526
      %v1528 = vpop.f32.mrb[0].mxu0
      %v1529 = vpop.f32.mrb[0].mxu0
      %v1530 = vadd.f32 0.0, %v1529
      %v1531 = vpop.f32.mrb[0].mxu0
      %1532 = vmatprep.mubr.bf16.mxu0 %v600
      %1533 = vmatmul.mubr.bf16.gmra.mrb[0].mxu0 %v546
      %v1534 = vpop.f32.mrb[0].mxu0
      %v1535 = vadd.f32 0.0, %v1534
      %v1536 = vpop.f32.mrb[0].mxu0
      %v1537 = vpop.f32.mrb[0].mxu0
      %v1538 = vadd.f32 0.0, %v1537
      %v1539 = vpop.f32.mrb[0].mxu0
      %1540 = vmatprep.mubr.bf16.mxu0 %v601
      %1541 = vmatmul.mubr.bf16.gmra.mrb[0].mxu0 %v547
      %v1542 = vpop.f32.mrb[0].mxu0
      %v1543 = vadd.f32 0.0, %v1542
      %v1544 = vpop.f32.mrb[0].mxu0
      %v1545 = vpop.f32.mrb[0].mxu0
      %v1546 = vadd.f32 0.0, %v1545
      %v1547 = vpop.f32.mrb[0].mxu0
      %1548 = vmatprep.mubr.bf16.mxu0 %v602
      %1549 = vmatmul.mubr.bf16.gmra.mrb[0].mxu0 %v548
      %v1550 = vpop.f32.mrb[0].mxu0
      %v1551 = vadd.f32 0.0, %v1550
      %v1552 = vpop.f32.mrb[0].mxu0
      %v1553 = vpop.f32.mrb[0].mxu0
      %v1554 = vadd.f32 0.0, %v1553
      %v1555 = vpop.f32.mrb[0].mxu0
      %1556 = vmatprep.mubr.bf16.mxu0 %v603
      %1557 = vmatmul.mubr.bf16.gmra.mrb[0].mxu0 %v549
      %v1558 = vpop.f32.mrb[0].mxu0
      %v1559 = vadd.f32 0.0, %v1558
      %v1560 = vpop.f32.mrb[0].mxu0
      %v1561 = vpop.f32.mrb[0].mxu0
      %v1562 = vadd.f32 0.0, %v1561
      %v1563 = vpop.f32.mrb[0].mxu0
      %1564 = vdwg.mxu0
      %1565 = vmatprep.subr.bf16.mxu0 0
      %1566 = vmatpush1.bf16.msra.mxu0 %v1372
      %1567 = vmatprep.subr.bf16.mxu0 0
      %1568 = vmatpush1.bf16.msra.mxu0 %v1373
      %1569 = vmatprep.subr.bf16.mxu0 0
      %1570 = vmatpush1.bf16.msra.mxu0 %v1374
      %1571 = vmatprep.subr.bf16.mxu0 0
      %1572 = vmatpush1.bf16.msra.mxu0 %v1375
      %1573 = vmatprep.subr.bf16.mxu0 0
      %1574 = vmatpush1.bf16.msra.mxu0 %v1376
      %1575 = vmatprep.subr.bf16.mxu0 0
      %1576 = vmatpush1.bf16.msra.mxu0 %v1377
      %1577 = vmatprep.subr.bf16.mxu0 0
      %1578 = vmatpush1.bf16.msra.mxu0 %v1378
      %1579 = vmatprep.subr.bf16.mxu0 0
      %1580 = vmatpush1.bf16.msra.mxu0 %v1379
      %1581 = vmatprep.subr.bf16.mxu0 0
      %1582 = vmatpush1.bf16.msra.mxu0 0
      %1583 = vmatprep.subr.bf16.mxu0 0
      %1584 = vmatpush1.bf16.msra.mxu0 0
      %1585 = vmatprep.subr.bf16.mxu0 0
      %1586 = vmatpush1.bf16.msra.mxu0 0
      %1587 = vmatprep.subr.bf16.mxu0 0
      %1588 = vmatpush1.bf16.msra.mxu0 0
      %1589 = vmatprep.subr.bf16.mxu0 0
      %1590 = vmatpush1.bf16.msra.mxu0 0
      %1591 = vmatprep.subr.bf16.mxu0 0
      %1592 = vmatpush1.bf16.msra.mxu0 0
      %1593 = vmatprep.subr.bf16.mxu0 0
      %1594 = vmatpush1.bf16.msra.mxu0 0
      %1595 = vmatprep.subr.bf16.mxu0 0
      %1596 = vmatpush1.bf16.msra.mxu0 0
      %1597 = vmatprep.mubr.bf16.mxu0 0
      %1598 = vmatmul.mubr.bf16.gmra.mrb[0].mxu0 %v642
      %v1599 = vpop.f32.mrb[0].mxu0
      %v1600 = vadd.f32 %v1439, %v1599
      %v1601 = vpop.f32.mrb[0].mxu0
      %v1602 = vpop.f32.mrb[0].mxu0
      %v1603 = vadd.f32 %v1442, %v1602
      %v1604 = vpop.f32.mrb[0].mxu0
      %1605 = vmatprep.mubr.bf16.mxu0 0
      %1606 = vmatmul.mubr.bf16.gmra.mrb[0].mxu0 %v643
      %v1607 = vpop.f32.mrb[0].mxu0
      %v1608 = vadd.f32 %v1447, %v1607
      %v1609 = vpop.f32.mrb[0].mxu0
      %v1610 = vpop.f32.mrb[0].mxu0
      %v1611 = vadd.f32 %v1450, %v1610
      %v1612 = vpop.f32.mrb[0].mxu0
      %1613 = vmatprep.mubr.bf16.mxu0 0
      %1614 = vmatmul.mubr.bf16.gmra.mrb[0].mxu0 %v644
      %v1615 = vpop.f32.mrb[0].mxu0
      %v1616 = vadd.f32 %v1455, %v1615
      %v1617 = vpop.f32.mrb[0].mxu0
      %v1618 = vpop.f32.mrb[0].mxu0
      %v1619 = vadd.f32 %v1458, %v1618
      %v1620 = vpop.f32.mrb[0].mxu0
      %1621 = vmatprep.mubr.bf16.mxu0 0
      %1622 = vmatmul.mubr.bf16.gmra.mrb[0].mxu0 %v645
      %v1623 = vpop.f32.mrb[0].mxu0
      %v1624 = vadd.f32 %v1463, %v1623
      %v1625 = vpop.f32.mrb[0].mxu0
      %v1626 = vpop.f32.mrb[0].mxu0
      %v1627 = vadd.f32 %v1466, %v1626
      %v1628 = vpop.f32.mrb[0].mxu0
      %1629 = vmatprep.mubr.bf16.mxu0 0
      %1630 = vmatmul.mubr.bf16.gmra.mrb[0].mxu0 %v646
      %v1631 = vpop.f32.mrb[0].mxu0
      %v1632 = vadd.f32 %v1471, %v1631
      %v1633 = vpop.f32.mrb[0].mxu0
      %v1634 = vpop.f32.mrb[0].mxu0
      %v1635 = vadd.f32 %v1474, %v1634
      %v1636 = vpop.f32.mrb[0].mxu0
      %1637 = vmatprep.mubr.bf16.mxu0 0
      %1638 = vmatmul.mubr.bf16.gmra.mrb[0].mxu0 %v647
      %v1639 = vpop.f32.mrb[0].mxu0
      %v1640 = vadd.f32 %v1479, %v1639
      %v1641 = vpop.f32.mrb[0].mxu0
      %v1642 = vpop.f32.mrb[0].mxu0
      %v1643 = vadd.f32 %v1482, %v1642
      %v1644 = vpop.f32.mrb[0].mxu0
      %1645 = vmatprep.mubr.bf16.mxu0 0
      %1646 = vmatmul.mubr.bf16.gmra.mrb[0].mxu0 %v648
      %v1647 = vpop.f32.mrb[0].mxu0
      %v1648 = vadd.f32 %v1487, %v1647
      %v1649 = vpop.f32.mrb[0].mxu0
      %v1650 = vpop.f32.mrb[0].mxu0
      %v1651 = vadd.f32 %v1490, %v1650
      %v1652 = vpop.f32.mrb[0].mxu0
      %1653 = vmatprep.mubr.bf16.mxu0 0
      %1654 = vmatmul.mubr.bf16.gmra.mrb[0].mxu0 %v649
      %v1655 = vpop.f32.mrb[0].mxu0
      %v1656 = vadd.f32 %v1495, %v1655
      %v1657 = vpop.f32.mrb[0].mxu0
      %v1658 = vpop.f32.mrb[0].mxu0
      %v1659 = vadd.f32 %v1498, %v1658
      %v1660 = vpop.f32.mrb[0].mxu0
      %1661 = vmatprep.mubr.bf16.mxu0 0
      %1662 = vmatmul.mubr.bf16.gmra.mrb[0].mxu0 %v650
      %v1663 = vpop.f32.mrb[0].mxu0
      %v1664 = vadd.f32 %v1503, %v1663
      %v1665 = vpop.f32.mrb[0].mxu0
      %v1666 = vpop.f32.mrb[0].mxu0
      %v1667 = vadd.f32 %v1506, %v1666
      %v1668 = vpop.f32.mrb[0].mxu0
      %1669 = vmatprep.mubr.bf16.mxu0 0
      %1670 = vmatmul.mubr.bf16.gmra.mrb[0].mxu0 %v651
      %v1671 = vpop.f32.mrb[0].mxu0
      %v1672 = vadd.f32 %v1511, %v1671
      %v1673 = vpop.f32.mrb[0].mxu0
      %v1674 = vpop.f32.mrb[0].mxu0
      %v1675 = vadd.f32 %v1514, %v1674
      %v1676 = vpop.f32.mrb[0].mxu0
      %1677 = vmatprep.mubr.bf16.mxu0 0
      %1678 = vmatmul.mubr.bf16.gmra.mrb[0].mxu0 %v652
      %v1679 = vpop.f32.mrb[0].mxu0
      %v1680 = vadd.f32 %v1519, %v1679
      %v1681 = vpop.f32.mrb[0].mxu0
      %v1682 = vpop.f32.mrb[0].mxu0
      %v1683 = vadd.f32 %v1522, %v1682
      %v1684 = vpop.f32.mrb[0].mxu0
      %1685 = vmatprep.mubr.bf16.mxu0 0
      %1686 = vmatmul.mubr.bf16.gmra.mrb[0].mxu0 %v653
      %v1687 = vpop.f32.mrb[0].mxu0
      %v1688 = vadd.f32 %v1527, %v1687
      %v1689 = vpop.f32.mrb[0].mxu0
      %v1690 = vpop.f32.mrb[0].mxu0
      %v1691 = vadd.f32 %v1530, %v1690
      %v1692 = vpop.f32.mrb[0].mxu0
      %1693 = vmatprep.mubr.bf16.mxu0 0
      %1694 = vmatmul.mubr.bf16.gmra.mrb[0].mxu0 %v654
      %v1695 = vpop.f32.mrb[0].mxu0
      %v1696 = vadd.f32 %v1535, %v1695
      %v1697 = vpop.f32.mrb[0].mxu0
      %v1698 = vpop.f32.mrb[0].mxu0
      %v1699 = vadd.f32 %v1538, %v1698
      %v1700 = vpop.f32.mrb[0].mxu0
      %1701 = vmatprep.mubr.bf16.mxu0 0
      %1702 = vmatmul.mubr.bf16.gmra.mrb[0].mxu0 %v655
      %v1703 = vpop.f32.mrb[0].mxu0
      %v1704 = vadd.f32 %v1543, %v1703
      %v1705 = vpop.f32.mrb[0].mxu0
      %v1706 = vpop.f32.mrb[0].mxu0
      %v1707 = vadd.f32 %v1546, %v1706
      %v1708 = vpop.f32.mrb[0].mxu0
      %1709 = vmatprep.mubr.bf16.mxu0 0
      %1710 = vmatmul.mubr.bf16.gmra.mrb[0].mxu0 %v656
      %v1711 = vpop.f32.mrb[0].mxu0
      %v1712 = vadd.f32 %v1551, %v1711
      %v1713 = vpop.f32.mrb[0].mxu0
      %v1714 = vpop.f32.mrb[0].mxu0
      %v1715 = vadd.f32 %v1554, %v1714
      %v1716 = vpop.f32.mrb[0].mxu0
      %1717 = vmatprep.mubr.bf16.mxu0 0
      %1718 = vmatmul.mubr.bf16.gmra.mrb[0].mxu0 %v657
      %v1719 = vpop.f32.mrb[0].mxu0
      %v1720 = vadd.f32 %v1559, %v1719
      %v1721 = vpop.f32.mrb[0].mxu0
      %v1722 = vpop.f32.mrb[0].mxu0
      %v1723 = vadd.f32 %v1562, %v1722
      %v1724 = vpop.f32.mrb[0].mxu0
      %1725 = vdwg.mxu0
      %v1726 = vadd.f32 %v1180, %v1600
      %v1727 = vadd.f32 %v1181, %v1603
      %v1728 = vadd.f32 %v1182, %v1608
      %v1729 = vadd.f32 %v1183, %v1611
      %v1730 = vadd.f32 %v1184, %v1616
      %v1731 = vadd.f32 %v1185, %v1619
      %v1732 = vadd.f32 %v1186, %v1624
      %v1733 = vadd.f32 %v1187, %v1627
      %v1734 = vadd.f32 %v1188, %v1632
      %v1735 = vadd.f32 %v1189, %v1635
      %v1736 = vadd.f32 %v1190, %v1640
      %v1737 = vadd.f32 %v1191, %v1643
      %v1738 = vadd.f32 %v1192, %v1648
      %v1739 = vadd.f32 %v1193, %v1651
      %v1740 = vadd.f32 %v1194, %v1656
      %v1741 = vadd.f32 %v1195, %v1659
      %v1742 = vadd.f32 %v1196, %v1664
      %v1743 = vadd.f32 %v1197, %v1667
      %v1744 = vadd.f32 %v1198, %v1672
      %v1745 = vadd.f32 %v1199, %v1675
      %v1746 = vadd.f32 %v1200, %v1680
      %v1747 = vadd.f32 %v1201, %v1683
      %v1748 = vadd.f32 %v1202, %v1688
      %v1749 = vadd.f32 %v1203, %v1691
      %v1750 = vadd.f32 %v1204, %v1696
      %v1751 = vadd.f32 %v1205, %v1699
      %v1752 = vadd.f32 %v1206, %v1704
      %v1753 = vadd.f32 %v1207, %v1707
      %v1754 = vadd.f32 %v1208, %v1712
      %v1755 = vadd.f32 %v1209, %v1715
      %v1756 = vadd.f32 %v1210, %v1720
      %v1757 = vadd.f32 %v1211, %v1723
      %v1758 = vld [vmem:[%s1 + $0x180] sm:$0xf]
      %v1759 = vld [vmem:[%s1 + $0x184] sm:$0xf]
      %v1760 = vld [vmem:[%s1 + $0x188] sm:$0xf]
      %v1761 = vld [vmem:[%s1 + $0x18c] sm:$0xf]
      %v1762 = vld [vmem:[%s1 + $0x190] sm:$0xf]
      %v1763 = vld [vmem:[%s1 + $0x194] sm:$0xf]
      %v1764 = vld [vmem:[%s1 + $0x198] sm:$0xf]
      %v1765 = vld [vmem:[%s1 + $0x19c] sm:$0xf]
      %v1766 = vld [vmem:[%s1 + $0x1a0] sm:$0xf]
      %v1767 = vld [vmem:[%s1 + $0x1a4] sm:$0xf]
      %v1768 = vld [vmem:[%s1 + $0x1a8] sm:$0xf]
      %v1769 = vld [vmem:[%s1 + $0x1ac] sm:$0xf]
      %v1770 = vld [vmem:[%s1 + $0x1b0] sm:$0xf]
      %v1771 = vld [vmem:[%s1 + $0x1b4] sm:$0xf]
      %v1772 = vld [vmem:[%s1 + $0x1b8] sm:$0xf]
      %v1773 = vld [vmem:[%s1 + $0x1bc] sm:$0xf]
      %v1774 = vld [vmem:[%s1 + $0x1c0] sm:$0xf]
      %v1775 = vld [vmem:[%s1 + $0x1c4] sm:$0xf]
      %v1776 = vld [vmem:[%s1 + $0x1c8] sm:$0xf]
      %v1777 = vld [vmem:[%s1 + $0x1cc] sm:$0xf]
      %v1778 = vld [vmem:[%s1 + $0x1d0] sm:$0xf]
      %v1779 = vld [vmem:[%s1 + $0x1d4] sm:$0xf]
      %v1780 = vld [vmem:[%s1 + $0x1d8] sm:$0xf]
      %v1781 = vld [vmem:[%s1 + $0x1dc] sm:$0xf]
      %v1782 = vld [vmem:[%s1 + $0x1e0] sm:$0xf]
      %v1783 = vld [vmem:[%s1 + $0x1e4] sm:$0xf]
      %v1784 = vld [vmem:[%s1 + $0x1e8] sm:$0xf]
      %v1785 = vld [vmem:[%s1 + $0x1ec] sm:$0xf]
      %v1786 = vld [vmem:[%s1 + $0x1f0] sm:$0xf]
      %v1787 = vld [vmem:[%s1 + $0x1f4] sm:$0xf]
      %v1788 = vld [vmem:[%s1 + $0x1f8] sm:$0xf]
      %v1789 = vld [vmem:[%s1 + $0x1fc] sm:$0xf]
      %v1790 = vld [vmem:[%s1 + $0x200] sm:$0xf]
      %v1791 = vld [vmem:[%s1 + $0x204] sm:$0xf]
      %v1792 = vld [vmem:[%s1 + $0x208] sm:$0xf]
      %v1793 = vld [vmem:[%s1 + $0x20c] sm:$0xf]
      %v1794 = vld [vmem:[%s1 + $0x210] sm:$0xf]
      %v1795 = vld [vmem:[%s1 + $0x214] sm:$0xf]
      %v1796 = vld [vmem:[%s1 + $0x218] sm:$0xf]
      %v1797 = vld [vmem:[%s1 + $0x21c] sm:$0xf]
      %v1798 = vld [vmem:[%s1 + $0x220] sm:$0xf]
      %v1799 = vld [vmem:[%s1 + $0x224] sm:$0xf]
      %v1800 = vld [vmem:[%s1 + $0x228] sm:$0xf]
      %v1801 = vld [vmem:[%s1 + $0x22c] sm:$0xf]
      %v1802 = vld [vmem:[%s1 + $0x230] sm:$0xf]
      %v1803 = vld [vmem:[%s1 + $0x234] sm:$0xf]
      %v1804 = vld [vmem:[%s1 + $0x238] sm:$0xf]
      %v1805 = vld [vmem:[%s1 + $0x23c] sm:$0xf]
      %v1854 = vunpack.c.l.b16 %v1758
      %v1855 = vunpack.c.l.b16 %v1759
      %v1856 = vunpack.c.l.b16 %v1760
      %v1857 = vunpack.c.l.b16 %v1761
      %v1858 = vunpack.c.l.b16 %v1762
      %v1859 = vunpack.c.l.b16 %v1763
      %v1860 = vunpack.c.l.b16 %v1764
      %v1861 = vunpack.c.l.b16 %v1765
      %v1862 = vunpack.c.l.b16 %v1766
      %v1863 = vunpack.c.l.b16 %v1767
      %v1864 = vunpack.c.l.b16 %v1768
      %v1865 = vunpack.c.l.b16 %v1769
      %v1866 = vunpack.c.l.b16 %v1770
      %v1867 = vunpack.c.l.b16 %v1771
      %v1868 = vunpack.c.l.b16 %v1772
      %v1869 = vunpack.c.l.b16 %v1773
      %v1870 = vunpack.c.l.b16 %v1774
      %v1871 = vunpack.c.l.b16 %v1775
      %v1872 = vunpack.c.l.b16 %v1776
      %v1873 = vunpack.c.l.b16 %v1777
      %v1874 = vunpack.c.l.b16 %v1778
      %v1875 = vunpack.c.l.b16 %v1779
      %v1876 = vunpack.c.l.b16 %v1780
      %v1877 = vunpack.c.l.b16 %v1781
      %v1878 = vunpack.c.l.b16 %v1782
      %v1879 = vunpack.c.l.b16 %v1783
      %v1880 = vunpack.c.l.b16 %v1784
      %v1881 = vunpack.c.l.b16 %v1785
      %v1882 = vunpack.c.l.b16 %v1786
      %v1883 = vunpack.c.l.b16 %v1787
      %v1884 = vunpack.c.l.b16 %v1788
      %v1885 = vunpack.c.l.b16 %v1789
      %v1886 = vunpack.c.l.b16 %v1790
      %v1887 = vunpack.c.l.b16 %v1791
      %v1888 = vunpack.c.l.b16 %v1792
      %v1889 = vunpack.c.l.b16 %v1793
      %v1890 = vunpack.c.l.b16 %v1794
      %v1891 = vunpack.c.l.b16 %v1795
      %v1892 = vunpack.c.l.b16 %v1796
      %v1893 = vunpack.c.l.b16 %v1797
      %v1894 = vunpack.c.l.b16 %v1798
      %v1895 = vunpack.c.l.b16 %v1799
      %v1896 = vunpack.c.l.b16 %v1800
      %v1897 = vunpack.c.l.b16 %v1801
      %v1898 = vunpack.c.l.b16 %v1802
      %v1899 = vunpack.c.l.b16 %v1803
      %v1900 = vunpack.c.l.b16 %v1804
      %v1901 = vunpack.c.l.b16 %v1805
      %v1902 = vpack.c.b16 %v1855, %v1854
      %v1903 = vpack.c.b16 %v1857, %v1856
      %v1904 = vpack.c.b16 %v1859, %v1858
      %v1905 = vpack.c.b16 %v1861, %v1860
      %v1906 = vpack.c.b16 %v1863, %v1862
      %v1907 = vpack.c.b16 %v1865, %v1864
      %v1908 = vpack.c.b16 %v1867, %v1866
      %v1909 = vpack.c.b16 %v1869, %v1868
      %v1910 = vpack.c.b16 %v1871, %v1870
      %v1911 = vpack.c.b16 %v1873, %v1872
      %v1912 = vpack.c.b16 %v1875, %v1874
      %v1913 = vpack.c.b16 %v1877, %v1876
      %v1914 = vpack.c.b16 %v1879, %v1878
      %v1915 = vpack.c.b16 %v1881, %v1880
      %v1916 = vpack.c.b16 %v1883, %v1882
      %v1917 = vpack.c.b16 %v1885, %v1884
      %v1918 = vpack.c.b16 %v1887, %v1886
      %v1919 = vpack.c.b16 %v1889, %v1888
      %v1920 = vpack.c.b16 %v1891, %v1890
      %v1921 = vpack.c.b16 %v1893, %v1892
      %v1922 = vpack.c.b16 %v1895, %v1894
      %v1923 = vpack.c.b16 %v1897, %v1896
      %v1924 = vpack.c.b16 %v1899, %v1898
      %v1925 = vpack.c.b16 %v1901, %v1900
      %1950 = vmatprep.subr.bf16.mxu0 0
      %1951 = vmatpush1.bf16.msra.mxu0 %v1902
      %1952 = vmatprep.subr.bf16.mxu0 0
      %1953 = vmatpush1.bf16.msra.mxu0 %v1903
      %1954 = vmatprep.subr.bf16.mxu0 0
      %1955 = vmatpush1.bf16.msra.mxu0 %v1904
      %1956 = vmatprep.subr.bf16.mxu0 0
      %1957 = vmatpush1.bf16.msra.mxu0 %v1905
      %1958 = vmatprep.subr.bf16.mxu0 0
      %1959 = vmatpush1.bf16.msra.mxu0 %v1906
      %1960 = vmatprep.subr.bf16.mxu0 0
      %1961 = vmatpush1.bf16.msra.mxu0 %v1907
      %1962 = vmatprep.subr.bf16.mxu0 0
      %1963 = vmatpush1.bf16.msra.mxu0 %v1908
      %1964 = vmatprep.subr.bf16.mxu0 0
      %1965 = vmatpush1.bf16.msra.mxu0 %v1909
      %1966 = vmatprep.subr.bf16.mxu0 0
      %1967 = vmatpush1.bf16.msra.mxu0 %v1910
      %1968 = vmatprep.subr.bf16.mxu0 0
      %1969 = vmatpush1.bf16.msra.mxu0 %v1911
      %1970 = vmatprep.subr.bf16.mxu0 0
      %1971 = vmatpush1.bf16.msra.mxu0 %v1912
      %1972 = vmatprep.subr.bf16.mxu0 0
      %1973 = vmatpush1.bf16.msra.mxu0 %v1913
      %1974 = vmatprep.subr.bf16.mxu0 0
      %1975 = vmatpush1.bf16.msra.mxu0 %v1914
      %1976 = vmatprep.subr.bf16.mxu0 0
      %1977 = vmatpush1.bf16.msra.mxu0 %v1915
      %1978 = vmatprep.subr.bf16.mxu0 0
      %1979 = vmatpush1.bf16.msra.mxu0 %v1916
      %1980 = vmatprep.subr.bf16.mxu0 0
      %1981 = vmatpush1.bf16.msra.mxu0 %v1917
      %1982 = vmatprep.mubr.bf16.mxu0 %v589
      %1983 = vmatmul.mubr.bf16.gmra.mrb[0].mxu0 %v535
      %v1984 = vpop.f32.mrb[0].mxu0
      %v1985 = vadd.f32 0.0, %v1984
      %v1986 = vpop.f32.mrb[0].mxu0
      %v1987 = vpop.f32.mrb[0].mxu0
      %v1988 = vadd.f32 0.0, %v1987
      %v1989 = vpop.f32.mrb[0].mxu0
      %1990 = vmatprep.mubr.bf16.mxu0 %v590
      %1991 = vmatmul.mubr.bf16.gmra.mrb[0].mxu0 %v536
      %v1992 = vpop.f32.mrb[0].mxu0
      %v1993 = vadd.f32 0.0, %v1992
      %v1994 = vpop.f32.mrb[0].mxu0
      %v1995 = vpop.f32.mrb[0].mxu0
      %v1996 = vadd.f32 0.0, %v1995
      %v1997 = vpop.f32.mrb[0].mxu0
      %1998 = vmatprep.mubr.bf16.mxu0 %v591
      %1999 = vmatmul.mubr.bf16.gmra.mrb[0].mxu0 %v537
      %v2000 = vpop.f32.mrb[0].mxu0
      %v2001 = vadd.f32 0.0, %v2000
      %v2002 = vpop.f32.mrb[0].mxu0
      %v2003 = vpop.f32.mrb[0].mxu0
      %v2004 = vadd.f32 0.0, %v2003
      %v2005 = vpop.f32.mrb[0].mxu0
      %2006 = vmatprep.mubr.bf16.mxu0 %v592
      %2007 = vmatmul.mubr.bf16.gmra.mrb[0].mxu0 %v538
      %v2008 = vpop.f32.mrb[0].mxu0
      %v2009 = vadd.f32 0.0, %v2008
      %v2010 = vpop.f32.mrb[0].mxu0
      %v2011 = vpop.f32.mrb[0].mxu0
      %v2012 = vadd.f32 0.0, %v2011
      %v2013 = vpop.f32.mrb[0].mxu0
      %2014 = vmatprep.mubr.bf16.mxu0 %v593
      %2015 = vmatmul.mubr.bf16.gmra.mrb[0].mxu0 %v539
      %v2016 = vpop.f32.mrb[0].mxu0
      %v2017 = vadd.f32 0.0, %v2016
      %v2018 = vpop.f32.mrb[0].mxu0
      %v2019 = vpop.f32.mrb[0].mxu0
      %v2020 = vadd.f32 0.0, %v2019
      %v2021 = vpop.f32.mrb[0].mxu0
      %2022 = vmatprep.mubr.bf16.mxu0 %v594
      %2023 = vmatmul.mubr.bf16.gmra.mrb[0].mxu0 %v540
      %v2024 = vpop.f32.mrb[0].mxu0
      %v2025 = vadd.f32 0.0, %v2024
      %v2026 = vpop.f32.mrb[0].mxu0
      %v2027 = vpop.f32.mrb[0].mxu0
      %v2028 = vadd.f32 0.0, %v2027
      %v2029 = vpop.f32.mrb[0].mxu0
      %2030 = vmatprep.mubr.bf16.mxu0 %v595
      %2031 = vmatmul.mubr.bf16.gmra.mrb[0].mxu0 %v541
      %v2032 = vpop.f32.mrb[0].mxu0
      %v2033 = vadd.f32 0.0, %v2032
      %v2034 = vpop.f32.mrb[0].mxu0
      %v2035 = vpop.f32.mrb[0].mxu0
      %v2036 = vadd.f32 0.0, %v2035
      %v2037 = vpop.f32.mrb[0].mxu0
      %2038 = vmatprep.mubr.bf16.mxu0 %v596
      %2039 = vmatmul.mubr.bf16.gmra.mrb[0].mxu0 %v542
      %v2040 = vpop.f32.mrb[0].mxu0
      %v2041 = vadd.f32 0.0, %v2040
      %v2042 = vpop.f32.mrb[0].mxu0
      %v2043 = vpop.f32.mrb[0].mxu0
      %v2044 = vadd.f32 0.0, %v2043
      %v2045 = vpop.f32.mrb[0].mxu0
      %2046 = vmatprep.mubr.bf16.mxu0 %v597
      %2047 = vmatmul.mubr.bf16.gmra.mrb[0].mxu0 %v543
      %v2048 = vpop.f32.mrb[0].mxu0
      %v2049 = vadd.f32 0.0, %v2048
      %v2050 = vpop.f32.mrb[0].mxu0
      %v2051 = vpop.f32.mrb[0].mxu0
      %v2052 = vadd.f32 0.0, %v2051
      %v2053 = vpop.f32.mrb[0].mxu0
      %2054 = vmatprep.mubr.bf16.mxu0 %v598
      %2055 = vmatmul.mubr.bf16.gmra.mrb[0].mxu0 %v544
      %v2056 = vpop.f32.mrb[0].mxu0
      %v2057 = vadd.f32 0.0, %v2056
      %v2058 = vpop.f32.mrb[0].mxu0
      %v2059 = vpop.f32.mrb[0].mxu0
      %v2060 = vadd.f32 0.0, %v2059
      %v2061 = vpop.f32.mrb[0].mxu0
      %2062 = vmatprep.mubr.bf16.mxu0 %v599
      %2063 = vmatmul.mubr.bf16.gmra.mrb[0].mxu0 %v545
      %v2064 = vpop.f32.mrb[0].mxu0
      %v2065 = vadd.f32 0.0, %v2064
      %v2066 = vpop.f32.mrb[0].mxu0
      %v2067 = vpop.f32.mrb[0].mxu0
      %v2068 = vadd.f32 0.0, %v2067
      %v2069 = vpop.f32.mrb[0].mxu0
      %2070 = vmatprep.mubr.bf16.mxu0 %v600
      %2071 = vmatmul.mubr.bf16.gmra.mrb[0].mxu0 %v546
      %v2072 = vpop.f32.mrb[0].mxu0
      %v2073 = vadd.f32 0.0, %v2072
      %v2074 = vpop.f32.mrb[0].mxu0
      %v2075 = vpop.f32.mrb[0].mxu0
      %v2076 = vadd.f32 0.0, %v2075
      %v2077 = vpop.f32.mrb[0].mxu0
      %2078 = vmatprep.mubr.bf16.mxu0 %v601
      %2079 = vmatmul.mubr.bf16.gmra.mrb[0].mxu0 %v547
      %v2080 = vpop.f32.mrb[0].mxu0
      %v2081 = vadd.f32 0.0, %v2080
      %v2082 = vpop.f32.mrb[0].mxu0
      %v2083 = vpop.f32.mrb[0].mxu0
      %v2084 = vadd.f32 0.0, %v2083
      %v2085 = vpop.f32.mrb[0].mxu0
      %2086 = vmatprep.mubr.bf16.mxu0 %v602
      %2087 = vmatmul.mubr.bf16.gmra.mrb[0].mxu0 %v548
      %v2088 = vpop.f32.mrb[0].mxu0
      %v2089 = vadd.f32 0.0, %v2088
      %v2090 = vpop.f32.mrb[0].mxu0
      %v2091 = vpop.f32.mrb[0].mxu0
      %v2092 = vadd.f32 0.0, %v2091
      %v2093 = vpop.f32.mrb[0].mxu0
      %2094 = vmatprep.mubr.bf16.mxu0 %v603
      %2095 = vmatmul.mubr.bf16.gmra.mrb[0].mxu0 %v549
      %v2096 = vpop.f32.mrb[0].mxu0
      %v2097 = vadd.f32 0.0, %v2096
      %v2098 = vpop.f32.mrb[0].mxu0
      %v2099 = vpop.f32.mrb[0].mxu0
      %v2100 = vadd.f32 0.0, %v2099
      %v2101 = vpop.f32.mrb[0].mxu0
      %2102 = vmatprep.mubr.bf16.mxu0 %v604
      %2103 = vmatmul.mubr.bf16.gmra.mrb[0].mxu0 %v550
      %v2104 = vpop.f32.mrb[0].mxu0
      %v2105 = vadd.f32 0.0, %v2104
      %v2106 = vpop.f32.mrb[0].mxu0
      %v2107 = vpop.f32.mrb[0].mxu0
      %v2108 = vadd.f32 0.0, %v2107
      %v2109 = vpop.f32.mrb[0].mxu0
      %2110 = vdwg.mxu0
      %2111 = vmatprep.subr.bf16.mxu0 0
      %2112 = vmatpush1.bf16.msra.mxu0 %v1918
      %2113 = vmatprep.subr.bf16.mxu0 0
      %2114 = vmatpush1.bf16.msra.mxu0 %v1919
      %2115 = vmatprep.subr.bf16.mxu0 0
      %2116 = vmatpush1.bf16.msra.mxu0 %v1920
      %2117 = vmatprep.subr.bf16.mxu0 0
      %2118 = vmatpush1.bf16.msra.mxu0 %v1921
      %2119 = vmatprep.subr.bf16.mxu0 0
      %2120 = vmatpush1.bf16.msra.mxu0 %v1922
      %2121 = vmatprep.subr.bf16.mxu0 0
      %2122 = vmatpush1.bf16.msra.mxu0 %v1923
      %2123 = vmatprep.subr.bf16.mxu0 0
      %2124 = vmatpush1.bf16.msra.mxu0 %v1924
      %2125 = vmatprep.subr.bf16.mxu0 0
      %2126 = vmatpush1.bf16.msra.mxu0 %v1925
      %2127 = vmatprep.subr.bf16.mxu0 0
      %2128 = vmatpush1.bf16.msra.mxu0 0
      %2129 = vmatprep.subr.bf16.mxu0 0
      %2130 = vmatpush1.bf16.msra.mxu0 0
      %2131 = vmatprep.subr.bf16.mxu0 0
      %2132 = vmatpush1.bf16.msra.mxu0 0
      %2133 = vmatprep.subr.bf16.mxu0 0
      %2134 = vmatpush1.bf16.msra.mxu0 0
      %2135 = vmatprep.subr.bf16.mxu0 0
      %2136 = vmatpush1.bf16.msra.mxu0 0
      %2137 = vmatprep.subr.bf16.mxu0 0
      %2138 = vmatpush1.bf16.msra.mxu0 0
      %2139 = vmatprep.subr.bf16.mxu0 0
      %2140 = vmatpush1.bf16.msra.mxu0 0
      %2141 = vmatprep.subr.bf16.mxu0 0
      %2142 = vmatpush1.bf16.msra.mxu0 0
      %2143 = vmatprep.mubr.bf16.mxu0 0
      %2144 = vmatmul.mubr.bf16.gmra.mrb[0].mxu0 %v643
      %v2145 = vpop.f32.mrb[0].mxu0
      %v2146 = vadd.f32 %v1985, %v2145
      %v2147 = vpop.f32.mrb[0].mxu0
      %v2148 = vpop.f32.mrb[0].mxu0
      %v2149 = vadd.f32 %v1988, %v2148
      %v2150 = vpop.f32.mrb[0].mxu0
      %2151 = vmatprep.mubr.bf16.mxu0 0
      %2152 = vmatmul.mubr.bf16.gmra.mrb[0].mxu0 %v644
      %v2153 = vpop.f32.mrb[0].mxu0
      %v2154 = vadd.f32 %v1993, %v2153
      %v2155 = vpop.f32.mrb[0].mxu0
      %v2156 = vpop.f32.mrb[0].mxu0
      %v2157 = vadd.f32 %v1996, %v2156
      %v2158 = vpop.f32.mrb[0].mxu0
      %2159 = vmatprep.mubr.bf16.mxu0 0
      %2160 = vmatmul.mubr.bf16.gmra.mrb[0].mxu0 %v645
      %v2161 = vpop.f32.mrb[0].mxu0
      %v2162 = vadd.f32 %v2001, %v2161
      %v2163 = vpop.f32.mrb[0].mxu0
      %v2164 = vpop.f32.mrb[0].mxu0
      %v2165 = vadd.f32 %v2004, %v2164
      %v2166 = vpop.f32.mrb[0].mxu0
      %2167 = vmatprep.mubr.bf16.mxu0 0
      %2168 = vmatmul.mubr.bf16.gmra.mrb[0].mxu0 %v646
      %v2169 = vpop.f32.mrb[0].mxu0
      %v2170 = vadd.f32 %v2009, %v2169
      %v2171 = vpop.f32.mrb[0].mxu0
      %v2172 = vpop.f32.mrb[0].mxu0
      %v2173 = vadd.f32 %v2012, %v2172
      %v2174 = vpop.f32.mrb[0].mxu0
      %2175 = vmatprep.mubr.bf16.mxu0 0
      %2176 = vmatmul.mubr.bf16.gmra.mrb[0].mxu0 %v647
      %v2177 = vpop.f32.mrb[0].mxu0
      %v2178 = vadd.f32 %v2017, %v2177
      %v2179 = vpop.f32.mrb[0].mxu0
      %v2180 = vpop.f32.mrb[0].mxu0
      %v2181 = vadd.f32 %v2020, %v2180
      %v2182 = vpop.f32.mrb[0].mxu0
      %2183 = vmatprep.mubr.bf16.mxu0 0
      %2184 = vmatmul.mubr.bf16.gmra.mrb[0].mxu0 %v648
      %v2185 = vpop.f32.mrb[0].mxu0
      %v2186 = vadd.f32 %v2025, %v2185
      %v2187 = vpop.f32.mrb[0].mxu0
      %v2188 = vpop.f32.mrb[0].mxu0
      %v2189 = vadd.f32 %v2028, %v2188
      %v2190 = vpop.f32.mrb[0].mxu0
      %2191 = vmatprep.mubr.bf16.mxu0 0
      %2192 = vmatmul.mubr.bf16.gmra.mrb[0].mxu0 %v649
      %v2193 = vpop.f32.mrb[0].mxu0
      %v2194 = vadd.f32 %v2033, %v2193
      %v2195 = vpop.f32.mrb[0].mxu0
      %v2196 = vpop.f32.mrb[0].mxu0
      %v2197 = vadd.f32 %v2036, %v2196
      %v2198 = vpop.f32.mrb[0].mxu0
      %2199 = vmatprep.mubr.bf16.mxu0 0
      %2200 = vmatmul.mubr.bf16.gmra.mrb[0].mxu0 %v650
      %v2201 = vpop.f32.mrb[0].mxu0
      %v2202 = vadd.f32 %v2041, %v2201
      %v2203 = vpop.f32.mrb[0].mxu0
      %v2204 = vpop.f32.mrb[0].mxu0
      %v2205 = vadd.f32 %v2044, %v2204
      %v2206 = vpop.f32.mrb[0].mxu0
      %2207 = vmatprep.mubr.bf16.mxu0 0
      %2208 = vmatmul.mubr.bf16.gmra.mrb[0].mxu0 %v651
      %v2209 = vpop.f32.mrb[0].mxu0
      %v2210 = vadd.f32 %v2049, %v2209
      %v2211 = vpop.f32.mrb[0].mxu0
      %v2212 = vpop.f32.mrb[0].mxu0
      %v2213 = vadd.f32 %v2052, %v2212
      %v2214 = vpop.f32.mrb[0].mxu0
      %2215 = vmatprep.mubr.bf16.mxu0 0
      %2216 = vmatmul.mubr.bf16.gmra.mrb[0].mxu0 %v652
      %v2217 = vpop.f32.mrb[0].mxu0
      %v2218 = vadd.f32 %v2057, %v2217
      %v2219 = vpop.f32.mrb[0].mxu0
      %v2220 = vpop.f32.mrb[0].mxu0
      %v2221 = vadd.f32 %v2060, %v2220
      %v2222 = vpop.f32.mrb[0].mxu0
      %2223 = vmatprep.mubr.bf16.mxu0 0
      %2224 = vmatmul.mubr.bf16.gmra.mrb[0].mxu0 %v653
      %v2225 = vpop.f32.mrb[0].mxu0
      %v2226 = vadd.f32 %v2065, %v2225
      %v2227 = vpop.f32.mrb[0].mxu0
      %v2228 = vpop.f32.mrb[0].mxu0
      %v2229 = vadd.f32 %v2068, %v2228
      %v2230 = vpop.f32.mrb[0].mxu0
      %2231 = vmatprep.mubr.bf16.mxu0 0
      %2232 = vmatmul.mubr.bf16.gmra.mrb[0].mxu0 %v654
      %v2233 = vpop.f32.mrb[0].mxu0
      %v2234 = vadd.f32 %v2073, %v2233
      %v2235 = vpop.f32.mrb[0].mxu0
      %v2236 = vpop.f32.mrb[0].mxu0
      %v2237 = vadd.f32 %v2076, %v2236
      %v2238 = vpop.f32.mrb[0].mxu0
      %2239 = vmatprep.mubr.bf16.mxu0 0
      %2240 = vmatmul.mubr.bf16.gmra.mrb[0].mxu0 %v655
      %v2241 = vpop.f32.mrb[0].mxu0
      %v2242 = vadd.f32 %v2081, %v2241
      %v2243 = vpop.f32.mrb[0].mxu0
      %v2244 = vpop.f32.mrb[0].mxu0
      %v2245 = vadd.f32 %v2084, %v2244
      %v2246 = vpop.f32.mrb[0].mxu0
      %2247 = vmatprep.mubr.bf16.mxu0 0
      %2248 = vmatmul.mubr.bf16.gmra.mrb[0].mxu0 %v656
      %v2249 = vpop.f32.mrb[0].mxu0
      %v2250 = vadd.f32 %v2089, %v2249
      %v2251 = vpop.f32.mrb[0].mxu0
      %v2252 = vpop.f32.mrb[0].mxu0
      %v2253 = vadd.f32 %v2092, %v2252
      %v2254 = vpop.f32.mrb[0].mxu0
      %2255 = vmatprep.mubr.bf16.mxu0 0
      %2256 = vmatmul.mubr.bf16.gmra.mrb[0].mxu0 %v657
      %v2257 = vpop.f32.mrb[0].mxu0
      %v2258 = vadd.f32 %v2097, %v2257
      %v2259 = vpop.f32.mrb[0].mxu0
      %v2260 = vpop.f32.mrb[0].mxu0
      %v2261 = vadd.f32 %v2100, %v2260
      %v2262 = vpop.f32.mrb[0].mxu0
      %2263 = vmatprep.mubr.bf16.mxu0 0
      %2264 = vmatmul.mubr.bf16.gmra.mrb[0].mxu0 %v658
      %v2265 = vpop.f32.mrb[0].mxu0
      %v2266 = vadd.f32 %v2105, %v2265
      %v2267 = vpop.f32.mrb[0].mxu0
      %v2268 = vpop.f32.mrb[0].mxu0
      %v2269 = vadd.f32 %v2108, %v2268
      %v2270 = vpop.f32.mrb[0].mxu0
      %2271 = vdwg.mxu0
      %v2272 = vadd.f32 %v1726, %v2146
      %v2273 = vadd.f32 %v1727, %v2149
      %v2274 = vadd.f32 %v1728, %v2154
      %v2275 = vadd.f32 %v1729, %v2157
      %v2276 = vadd.f32 %v1730, %v2162
      %v2277 = vadd.f32 %v1731, %v2165
      %v2278 = vadd.f32 %v1732, %v2170
      %v2279 = vadd.f32 %v1733, %v2173
      %v2280 = vadd.f32 %v1734, %v2178
      %v2281 = vadd.f32 %v1735, %v2181
      %v2282 = vadd.f32 %v1736, %v2186
      %v2283 = vadd.f32 %v1737, %v2189
      %v2284 = vadd.f32 %v1738, %v2194
      %v2285 = vadd.f32 %v1739, %v2197
      %v2286 = vadd.f32 %v1740, %v2202
      %v2287 = vadd.f32 %v1741, %v2205
      %v2288 = vadd.f32 %v1742, %v2210
      %v2289 = vadd.f32 %v1743, %v2213
      %v2290 = vadd.f32 %v1744, %v2218
      %v2291 = vadd.f32 %v1745, %v2221
      %v2292 = vadd.f32 %v1746, %v2226
      %v2293 = vadd.f32 %v1747, %v2229
      %v2294 = vadd.f32 %v1748, %v2234
      %v2295 = vadd.f32 %v1749, %v2237
      %v2296 = vadd.f32 %v1750, %v2242
      %v2297 = vadd.f32 %v1751, %v2245
      %v2298 = vadd.f32 %v1752, %v2250
      %v2299 = vadd.f32 %v1753, %v2253
      %v2300 = vadd.f32 %v1754, %v2258
      %v2301 = vadd.f32 %v1755, %v2261
      %v2302 = vadd.f32 %v1756, %v2266
      %v2303 = vadd.f32 %v1757, %v2269
      %v2304 = vmax.f32 %v2272, 0.0
      %v2305 = vmax.f32 %v2273, 0.0
      %v2306 = vmax.f32 %v2274, 0.0
      %v2307 = vmax.f32 %v2275, 0.0
      %v2308 = vmax.f32 %v2276, 0.0
      %v2309 = vmax.f32 %v2277, 0.0
      %v2310 = vmax.f32 %v2278, 0.0
      %v2311 = vmax.f32 %v2279, 0.0
      %v2312 = vmax.f32 %v2280, 0.0
      %v2313 = vmax.f32 %v2281, 0.0
      %v2314 = vmax.f32 %v2282, 0.0
      %v2315 = vmax.f32 %v2283, 0.0
      %v2316 = vmax.f32 %v2284, 0.0
      %v2317 = vmax.f32 %v2285, 0.0
      %v2318 = vmax.f32 %v2286, 0.0
      %v2319 = vmax.f32 %v2287, 0.0
      %v2320 = vmax.f32 %v2288, 0.0
      %v2321 = vmax.f32 %v2289, 0.0
      %v2322 = vmax.f32 %v2290, 0.0
      %v2323 = vmax.f32 %v2291, 0.0
      %v2324 = vmax.f32 %v2292, 0.0
      %v2325 = vmax.f32 %v2293, 0.0
      %v2326 = vmax.f32 %v2294, 0.0
      %v2327 = vmax.f32 %v2295, 0.0
      %v2328 = vmax.f32 %v2296, 0.0
      %v2329 = vmax.f32 %v2297, 0.0
      %v2330 = vmax.f32 %v2298, 0.0
      %v2331 = vmax.f32 %v2299, 0.0
      %v2332 = vmax.f32 %v2300, 0.0
      %v2333 = vmax.f32 %v2301, 0.0
      %v2334 = vmax.f32 %v2302, 0.0
      %v2335 = vmax.f32 %v2303, 0.0
      %v2336 = vadd.f32 %v432, %v2304
      %v2337 = vadd.f32 %v433, %v2305
      %v2338 = vadd.f32 %v434, %v2306
      %v2339 = vadd.f32 %v435, %v2307
      %v2340 = vadd.f32 %v436, %v2308
      %v2341 = vadd.f32 %v437, %v2309
      %v2342 = vadd.f32 %v438, %v2310
      %v2343 = vadd.f32 %v439, %v2311
      %v2344 = vadd.f32 %v440, %v2312
      %v2345 = vadd.f32 %v441, %v2313
      %v2346 = vadd.f32 %v442, %v2314
      %v2347 = vadd.f32 %v443, %v2315
      %v2348 = vadd.f32 %v444, %v2316
      %v2349 = vadd.f32 %v445, %v2317
      %v2350 = vadd.f32 %v446, %v2318
      %v2351 = vadd.f32 %v447, %v2319
      %v2352 = vadd.f32 %v448, %v2320
      %v2353 = vadd.f32 %v449, %v2321
      %v2354 = vadd.f32 %v450, %v2322
      %v2355 = vadd.f32 %v451, %v2323
      %v2356 = vadd.f32 %v452, %v2324
      %v2357 = vadd.f32 %v453, %v2325
      %v2358 = vadd.f32 %v454, %v2326
      %v2359 = vadd.f32 %v455, %v2327
      %v2360 = vadd.f32 %v456, %v2328
      %v2361 = vadd.f32 %v457, %v2329
      %v2362 = vadd.f32 %v458, %v2330
      %v2363 = vadd.f32 %v459, %v2331
      %v2364 = vadd.f32 %v460, %v2332
      %v2365 = vadd.f32 %v461, %v2333
      %v2366 = vadd.f32 %v462, %v2334
      %v2367 = vadd.f32 %v463, %v2335
      %2368 = vst [vmem:[%s399 + $0x8] sm:$0xff] %v2304
      %2369 = vst [vmem:[%s399 + $0x10] sm:$0xff] %v2305
      %2370 = vst [vmem:[%s399 + $0x28] sm:$0xff] %v2306
      %2371 = vst [vmem:[%s399 + $0x30] sm:$0xff] %v2307
      %2372 = vst [vmem:[%s399 + $0x48] sm:$0xff] %v2308
      %2373 = vst [vmem:[%s399 + $0x50] sm:$0xff] %v2309
      %2374 = vst [vmem:[%s399 + $0x68] sm:$0xff] %v2310
      %2375 = vst [vmem:[%s399 + $0x70] sm:$0xff] %v2311
      %2376 = vst [vmem:[%s399 + $0x88] sm:$0xff] %v2312
      %2377 = vst [vmem:[%s399 + $0x90] sm:$0xff] %v2313
      %2378 = vst [vmem:[%s399 + $0xa8] sm:$0xff] %v2314
      %2379 = vst [vmem:[%s399 + $0xb0] sm:$0xff] %v2315
      %2380 = vst [vmem:[%s399 + $0xc8] sm:$0xff] %v2316
      %2381 = vst [vmem:[%s399 + $0xd0] sm:$0xff] %v2317
      %2382 = vst [vmem:[%s399 + $0xe8] sm:$0xff] %v2318
      %2383 = vst [vmem:[%s399 + $0xf0] sm:$0xff] %v2319
      %2384 = vst [vmem:[%s399 + $0x108] sm:$0xff] %v2320
      %2385 = vst [vmem:[%s399 + $0x110] sm:$0xff] %v2321
      %2386 = vst [vmem:[%s399 + $0x128] sm:$0xff] %v2322
      %2387 = vst [vmem:[%s399 + $0x130] sm:$0xff] %v2323
      %2388 = vst [vmem:[%s399 + $0x148] sm:$0xff] %v2324
      %2389 = vst [vmem:[%s399 + $0x150] sm:$0xff] %v2325
      %2390 = vst [vmem:[%s399 + $0x168] sm:$0xff] %v2326
      %2391 = vst [vmem:[%s399 + $0x170] sm:$0xff] %v2327
      %2392 = vst [vmem:[%s399 + $0x188] sm:$0xff] %v2328
      %2393 = vst [vmem:[%s399 + $0x190] sm:$0xff] %v2329
      %2394 = vst [vmem:[%s399 + $0x1a8] sm:$0xff] %v2330
      %2395 = vst [vmem:[%s399 + $0x1b0] sm:$0xff] %v2331
      %2396 = vst [vmem:[%s399 + $0x1c8] sm:$0xff] %v2332
      %2397 = vst [vmem:[%s399 + $0x1d0] sm:$0xff] %v2333
      %2398 = vst [vmem:[%s399 + $0x1e8] sm:$0xff] %v2334
      %2399 = vst [vmem:[%s399 + $0x1f0] sm:$0xff] %v2335
      %s2400 = scalar_lea.vmem [#allocation2], 192
      %v2401 = vld [vmem:[%s2400 + $0x6] sm:$0xff]
      %v2402 = vld [vmem:[%s2400 + $0xe] sm:$0xff]
      %v2403 = vld [vmem:[%s2400 + $0x26] sm:$0xff]
      %v2404 = vld [vmem:[%s2400 + $0x2e] sm:$0xff]
      %v2405 = vld [vmem:[%s2400 + $0x46] sm:$0xff]
      %v2406 = vld [vmem:[%s2400 + $0x4e] sm:$0xff]
      %v2407 = vld [vmem:[%s2400 + $0x66] sm:$0xff]
      %v2408 = vld [vmem:[%s2400 + $0x6e] sm:$0xff]
      %v2409 = vld [vmem:[%s2400 + $0x86] sm:$0xff]
      %v2410 = vld [vmem:[%s2400 + $0x8e] sm:$0xff]
      %v2411 = vld [vmem:[%s2400 + $0xa6] sm:$0xff]
      %v2412 = vld [vmem:[%s2400 + $0xae] sm:$0xff]
      %v2413 = vld [vmem:[%s2400 + $0xc6] sm:$0xff]
      %v2414 = vld [vmem:[%s2400 + $0xce] sm:$0xff]
      %v2415 = vld [vmem:[%s2400 + $0xe6] sm:$0xff]
      %v2416 = vld [vmem:[%s2400 + $0xee] sm:$0xff]
      %v2417 = vld [vmem:[%s2400 + $0x106] sm:$0xff]
      %v2418 = vld [vmem:[%s2400 + $0x10e] sm:$0xff]
      %v2419 = vld [vmem:[%s2400 + $0x126] sm:$0xff]
      %v2420 = vld [vmem:[%s2400 + $0x12e] sm:$0xff]
      %v2421 = vld [vmem:[%s2400 + $0x146] sm:$0xff]
      %v2422 = vld [vmem:[%s2400 + $0x14e] sm:$0xff]
      %v2423 = vld [vmem:[%s2400 + $0x166] sm:$0xff]
      %v2424 = vld [vmem:[%s2400 + $0x16e] sm:$0xff]
      %v2425 = vld [vmem:[%s2400 + $0x186] sm:$0xff]
      %v2426 = vld [vmem:[%s2400 + $0x18e] sm:$0xff]
      %v2427 = vld [vmem:[%s2400 + $0x1a6] sm:$0xff]
      %v2428 = vld [vmem:[%s2400 + $0x1ae] sm:$0xff]
      %v2429 = vld [vmem:[%s2400 + $0x1c6] sm:$0xff]
      %v2430 = vld [vmem:[%s2400 + $0x1ce] sm:$0xff]
      %v2431 = vld [vmem:[%s2400 + $0x1e6] sm:$0xff]
      %v2432 = vld [vmem:[%s2400 + $0x1ee] sm:$0xff]
      %v2433 = vld [vmem:[%s2400 + $0x206] sm:$0xff]
      %v2434 = vld [vmem:[%s2400 + $0x20e] sm:$0xff]
      %v2435 = vld [vmem:[%s2400 + $0x226] sm:$0xff]
      %v2436 = vld [vmem:[%s2400 + $0x22e] sm:$0xff]
      %v2437 = vld [vmem:[%s2400 + $0x246] sm:$0xff]
      %v2438 = vld [vmem:[%s2400 + $0x24e] sm:$0xff]
      %v2439 = vld [vmem:[%s2400 + $0x266] sm:$0xff]
      %v2440 = vld [vmem:[%s2400 + $0x26e] sm:$0xff]
      %v2441 = vpack.c.bf16 %v2402, %v2401
      %v2442 = vpack.c.bf16 %v2404, %v2403
      %v2443 = vpack.c.bf16 %v2406, %v2405
      %v2444 = vpack.c.bf16 %v2408, %v2407
      %v2445 = vpack.c.bf16 %v2410, %v2409
      %v2446 = vpack.c.bf16 %v2412, %v2411
      %v2447 = vpack.c.bf16 %v2414, %v2413
      %v2448 = vpack.c.bf16 %v2416, %v2415
      %v2449 = vpack.c.bf16 %v2418, %v2417
      %v2450 = vpack.c.bf16 %v2420, %v2419
      %v2451 = vpack.c.bf16 %v2422, %v2421
      %v2452 = vpack.c.bf16 %v2424, %v2423
      %v2453 = vpack.c.bf16 %v2426, %v2425
      %v2454 = vpack.c.bf16 %v2428, %v2427
      %v2455 = vpack.c.bf16 %v2430, %v2429
      %v2456 = vpack.c.bf16 %v2432, %v2431
      %v2457 = vpack.c.bf16 %v2434, %v2433
      %v2458 = vpack.c.bf16 %v2436, %v2435
      %v2459 = vpack.c.bf16 %v2438, %v2437
      %v2460 = vpack.c.bf16 %v2440, %v2439
      %v2461 = vld [vmem:[%s2400 + $0x8] sm:$0xff]
      %v2462 = vld [vmem:[%s2400 + $0x10] sm:$0xff]
      %v2463 = vld [vmem:[%s2400 + $0x28] sm:$0xff]
      %v2464 = vld [vmem:[%s2400 + $0x30] sm:$0xff]
      %v2465 = vld [vmem:[%s2400 + $0x48] sm:$0xff]
      %v2466 = vld [vmem:[%s2400 + $0x50] sm:$0xff]
      %v2467 = vld [vmem:[%s2400 + $0x68] sm:$0xff]
      %v2468 = vld [vmem:[%s2400 + $0x70] sm:$0xff]
      %v2469 = vld [vmem:[%s2400 + $0x88] sm:$0xff]
      %v2470 = vld [vmem:[%s2400 + $0x90] sm:$0xff]
      %v2471 = vld [vmem:[%s2400 + $0xa8] sm:$0xff]
      %v2472 = vld [vmem:[%s2400 + $0xb0] sm:$0xff]
      %v2473 = vld [vmem:[%s2400 + $0xc8] sm:$0xff]
      %v2474 = vld [vmem:[%s2400 + $0xd0] sm:$0xff]
      %v2475 = vld [vmem:[%s2400 + $0xe8] sm:$0xff]
      %v2476 = vld [vmem:[%s2400 + $0xf0] sm:$0xff]
      %v2477 = vld [vmem:[%s2400 + $0x108] sm:$0xff]
      %v2478 = vld [vmem:[%s2400 + $0x110] sm:$0xff]
      %v2479 = vld [vmem:[%s2400 + $0x128] sm:$0xff]
      %v2480 = vld [vmem:[%s2400 + $0x130] sm:$0xff]
      %v2481 = vld [vmem:[%s2400 + $0x148] sm:$0xff]
      %v2482 = vld [vmem:[%s2400 + $0x150] sm:$0xff]
      %v2483 = vld [vmem:[%s2400 + $0x168] sm:$0xff]
      %v2484 = vld [vmem:[%s2400 + $0x170] sm:$0xff]
      %v2485 = vld [vmem:[%s2400 + $0x188] sm:$0xff]
      %v2486 = vld [vmem:[%s2400 + $0x190] sm:$0xff]
      %v2487 = vld [vmem:[%s2400 + $0x1a8] sm:$0xff]
      %v2488 = vld [vmem:[%s2400 + $0x1b0] sm:$0xff]
      %v2489 = vld [vmem:[%s2400 + $0x1c8] sm:$0xff]
      %v2490 = vld [vmem:[%s2400 + $0x1d0] sm:$0xff]
      %v2491 = vld [vmem:[%s2400 + $0x1e8] sm:$0xff]
      %v2492 = vld [vmem:[%s2400 + $0x1f0] sm:$0xff]
      %v2493 = vld [vmem:[%s2400 + $0x208] sm:$0xff]
      %v2494 = vld [vmem:[%s2400 + $0x210] sm:$0xff]
      %v2495 = vld [vmem:[%s2400 + $0x228] sm:$0xff]
      %v2496 = vld [vmem:[%s2400 + $0x230] sm:$0xff]
      %v2497 = vld [vmem:[%s2400 + $0x248] sm:$0xff]
      %v2498 = vld [vmem:[%s2400 + $0x250] sm:$0xff]
      %v2499 = vld [vmem:[%s2400 + $0x268] sm:$0xff]
      %v2500 = vld [vmem:[%s2400 + $0x270] sm:$0xff]
      %v2501 = vpack.c.bf16 %v2462, %v2461
      %v2502 = vpack.c.bf16 %v2464, %v2463
      %v2503 = vpack.c.bf16 %v2466, %v2465
      %v2504 = vpack.c.bf16 %v2468, %v2467
      %v2505 = vpack.c.bf16 %v2470, %v2469
      %v2506 = vpack.c.bf16 %v2472, %v2471
      %v2507 = vpack.c.bf16 %v2474, %v2473
      %v2508 = vpack.c.bf16 %v2476, %v2475
      %v2509 = vpack.c.bf16 %v2478, %v2477
      %v2510 = vpack.c.bf16 %v2480, %v2479
      %v2511 = vpack.c.bf16 %v2482, %v2481
      %v2512 = vpack.c.bf16 %v2484, %v2483
      %v2513 = vpack.c.bf16 %v2486, %v2485
      %v2514 = vpack.c.bf16 %v2488, %v2487
      %v2515 = vpack.c.bf16 %v2490, %v2489
      %v2516 = vpack.c.bf16 %v2492, %v2491
      %v2517 = vpack.c.bf16 %v2494, %v2493
      %v2518 = vpack.c.bf16 %v2496, %v2495
      %v2519 = vpack.c.bf16 %v2498, %v2497
      %v2520 = vpack.c.bf16 %v2500, %v2499
      %v2521 = vld [vmem:[%s2400 + $0xa] sm:$0xff]
      %v2522 = vld [vmem:[%s2400 + $0x12] sm:$0xff]
      %v2523 = vld [vmem:[%s2400 + $0x2a] sm:$0xff]
      %v2524 = vld [vmem:[%s2400 + $0x32] sm:$0xff]
      %v2525 = vld [vmem:[%s2400 + $0x4a] sm:$0xff]
      %v2526 = vld [vmem:[%s2400 + $0x52] sm:$0xff]
      %v2527 = vld [vmem:[%s2400 + $0x6a] sm:$0xff]
      %v2528 = vld [vmem:[%s2400 + $0x72] sm:$0xff]
      %v2529 = vld [vmem:[%s2400 + $0x8a] sm:$0xff]
      %v2530 = vld [vmem:[%s2400 + $0x92] sm:$0xff]
      %v2531 = vld [vmem:[%s2400 + $0xaa] sm:$0xff]
      %v2532 = vld [vmem:[%s2400 + $0xb2] sm:$0xff]
      %v2533 = vld [vmem:[%s2400 + $0xca] sm:$0xff]
      %v2534 = vld [vmem:[%s2400 + $0xd2] sm:$0xff]
      %v2535 = vld [vmem:[%s2400 + $0xea] sm:$0xff]
      %v2536 = vld [vmem:[%s2400 + $0xf2] sm:$0xff]
      %v2537 = vld [vmem:[%s2400 + $0x10a] sm:$0xff]
      %v2538 = vld [vmem:[%s2400 + $0x112] sm:$0xff]
      %v2539 = vld [vmem:[%s2400 + $0x12a] sm:$0xff]
      %v2540 = vld [vmem:[%s2400 + $0x132] sm:$0xff]
      %v2541 = vld [vmem:[%s2400 + $0x14a] sm:$0xff]
      %v2542 = vld [vmem:[%s2400 + $0x152] sm:$0xff]
      %v2543 = vld [vmem:[%s2400 + $0x16a] sm:$0xff]
      %v2544 = vld [vmem:[%s2400 + $0x172] sm:$0xff]
      %v2545 = vld [vmem:[%s2400 + $0x18a] sm:$0xff]
      %v2546 = vld [vmem:[%s2400 + $0x192] sm:$0xff]
      %v2547 = vld [vmem:[%s2400 + $0x1aa] sm:$0xff]
      %v2548 = vld [vmem:[%s2400 + $0x1b2] sm:$0xff]
      %v2549 = vld [vmem:[%s2400 + $0x1ca] sm:$0xff]
      %v2550 = vld [vmem:[%s2400 + $0x1d2] sm:$0xff]
      %v2551 = vld [vmem:[%s2400 + $0x1ea] sm:$0xff]
      %v2552 = vld [vmem:[%s2400 + $0x1f2] sm:$0xff]
      %v2553 = vld [vmem:[%s2400 + $0x20a] sm:$0xff]
      %v2554 = vld [vmem:[%s2400 + $0x212] sm:$0xff]
      %v2555 = vld [vmem:[%s2400 + $0x22a] sm:$0xff]
      %v2556 = vld [vmem:[%s2400 + $0x232] sm:$0xff]
      %v2557 = vld [vmem:[%s2400 + $0x24a] sm:$0xff]
      %v2558 = vld [vmem:[%s2400 + $0x252] sm:$0xff]
      %v2559 = vld [vmem:[%s2400 + $0x26a] sm:$0xff]
      %v2560 = vld [vmem:[%s2400 + $0x272] sm:$0xff]
      %v2561 = vpack.c.bf16 %v2522, %v2521
      %v2562 = vpack.c.bf16 %v2524, %v2523
      %v2563 = vpack.c.bf16 %v2526, %v2525
      %v2564 = vpack.c.bf16 %v2528, %v2527
      %v2565 = vpack.c.bf16 %v2530, %v2529
      %v2566 = vpack.c.bf16 %v2532, %v2531
      %v2567 = vpack.c.bf16 %v2534, %v2533
      %v2568 = vpack.c.bf16 %v2536, %v2535
      %v2569 = vpack.c.bf16 %v2538, %v2537
      %v2570 = vpack.c.bf16 %v2540, %v2539
      %v2571 = vpack.c.bf16 %v2542, %v2541
      %v2572 = vpack.c.bf16 %v2544, %v2543
      %v2573 = vpack.c.bf16 %v2546, %v2545
      %v2574 = vpack.c.bf16 %v2548, %v2547
      %v2575 = vpack.c.bf16 %v2550, %v2549
      %v2576 = vpack.c.bf16 %v2552, %v2551
      %v2577 = vpack.c.bf16 %v2554, %v2553
      %v2578 = vpack.c.bf16 %v2556, %v2555
      %v2579 = vpack.c.bf16 %v2558, %v2557
      %v2580 = vpack.c.bf16 %v2560, %v2559
      %v2581 = vld [vmem:[%s4] sm:$0x1]
      %v2583 = vlaneseq
      %v2584 = vshrl.u32 %v2583, 7
      %v2585 = vsub.s32 0, %v2584
      %v2586 = vrot.slane %v2581, %v2585
      %v2588 = vld [vmem:[%s3] sm:$0xf]
      %v2589 = vld [vmem:[%s3 + $0x4] sm:$0xf]
      %v2590 = vld [vmem:[%s3 + $0x8] sm:$0xf]
      %v2591 = vld [vmem:[%s3 + $0xc] sm:$0xf]
      %v2592 = vld [vmem:[%s3 + $0x10] sm:$0xf]
      %v2593 = vld [vmem:[%s3 + $0x14] sm:$0xf]
      %v2594 = vld [vmem:[%s3 + $0x18] sm:$0xf]
      %v2595 = vld [vmem:[%s3 + $0x1c] sm:$0xf]
      %v2596 = vld [vmem:[%s3 + $0x20] sm:$0xf]
      %v2597 = vld [vmem:[%s3 + $0x24] sm:$0xf]
      %v2598 = vld [vmem:[%s3 + $0x28] sm:$0xf]
      %v2599 = vld [vmem:[%s3 + $0x2c] sm:$0xf]
      %v2600 = vld [vmem:[%s3 + $0x30] sm:$0xf]
      %v2601 = vld [vmem:[%s3 + $0x34] sm:$0xf]
      %v2602 = vld [vmem:[%s3 + $0x38] sm:$0xf]
      %v2603 = vld [vmem:[%s3 + $0x3c] sm:$0xf]
      %v2604 = vld [vmem:[%s3 + $0x40] sm:$0xf]
      %v2605 = vld [vmem:[%s3 + $0x44] sm:$0xf]
      %v2606 = vld [vmem:[%s3 + $0x48] sm:$0xf]
      %v2607 = vld [vmem:[%s3 + $0x4c] sm:$0xf]
      %v2608 = vld [vmem:[%s3 + $0x50] sm:$0xf]
      %v2609 = vld [vmem:[%s3 + $0x54] sm:$0xf]
      %v2610 = vld [vmem:[%s3 + $0x58] sm:$0xf]
      %v2611 = vld [vmem:[%s3 + $0x5c] sm:$0xf]
      %v2612 = vld [vmem:[%s3 + $0x60] sm:$0xf]
      %v2613 = vld [vmem:[%s3 + $0x64] sm:$0xf]
      %v2614 = vld [vmem:[%s3 + $0x68] sm:$0xf]
      %v2615 = vld [vmem:[%s3 + $0x6c] sm:$0xf]
      %v2616 = vld [vmem:[%s3 + $0x70] sm:$0xf]
      %v2617 = vld [vmem:[%s3 + $0x74] sm:$0xf]
      %v2618 = vld [vmem:[%s3 + $0x78] sm:$0xf]
      %v2619 = vld [vmem:[%s3 + $0x7c] sm:$0xf]
      %v2620 = vld [vmem:[%s3 + $0x80] sm:$0xf]
      %v2621 = vld [vmem:[%s3 + $0x84] sm:$0xf]
      %v2622 = vld [vmem:[%s3 + $0x88] sm:$0xf]
      %v2623 = vld [vmem:[%s3 + $0x8c] sm:$0xf]
      %v2624 = vld [vmem:[%s3 + $0x90] sm:$0xf]
      %v2625 = vld [vmem:[%s3 + $0x94] sm:$0xf]
      %v2626 = vld [vmem:[%s3 + $0x98] sm:$0xf]
      %v2627 = vld [vmem:[%s3 + $0x9c] sm:$0xf]
      %v2628 = vld [vmem:[%s3 + $0xa0] sm:$0xf]
      %v2629 = vld [vmem:[%s3 + $0xa4] sm:$0xf]
      %v2630 = vld [vmem:[%s3 + $0xa8] sm:$0xf]
      %v2631 = vld [vmem:[%s3 + $0xac] sm:$0xf]
      %v2632 = vld [vmem:[%s3 + $0xb0] sm:$0xf]
      %v2633 = vld [vmem:[%s3 + $0xb4] sm:$0xf]
      %v2634 = vld [vmem:[%s3 + $0xb8] sm:$0xf]
      %v2635 = vld [vmem:[%s3 + $0xbc] sm:$0xf]
      %v2684 = vunpack.c.l.b16 %v2588
      %v2685 = vunpack.c.l.b16 %v2589
      %v2686 = vunpack.c.l.b16 %v2590
      %v2687 = vunpack.c.l.b16 %v2591
      %v2688 = vunpack.c.l.b16 %v2592
      %v2689 = vunpack.c.l.b16 %v2593
      %v2690 = vunpack.c.l.b16 %v2594
      %v2691 = vunpack.c.l.b16 %v2595
      %v2692 = vunpack.c.l.b16 %v2596
      %v2693 = vunpack.c.l.b16 %v2597
      %v2694 = vunpack.c.l.b16 %v2598
      %v2695 = vunpack.c.l.b16 %v2599
      %v2696 = vunpack.c.l.b16 %v2600
      %v2697 = vunpack.c.l.b16 %v2601
      %v2698 = vunpack.c.l.b16 %v2602
      %v2699 = vunpack.c.l.b16 %v2603
      %v2700 = vunpack.c.l.b16 %v2604
      %v2701 = vunpack.c.l.b16 %v2605
      %v2702 = vunpack.c.l.b16 %v2606
      %v2703 = vunpack.c.l.b16 %v2607
      %v2704 = vunpack.c.l.b16 %v2608
      %v2705 = vunpack.c.l.b16 %v2609
      %v2706 = vunpack.c.l.b16 %v2610
      %v2707 = vunpack.c.l.b16 %v2611
      %v2708 = vunpack.c.l.b16 %v2612
      %v2709 = vunpack.c.l.b16 %v2613
      %v2710 = vunpack.c.l.b16 %v2614
      %v2711 = vunpack.c.l.b16 %v2615
      %v2712 = vunpack.c.l.b16 %v2616
      %v2713 = vunpack.c.l.b16 %v2617
      %v2714 = vunpack.c.l.b16 %v2618
      %v2715 = vunpack.c.l.b16 %v2619
      %v2716 = vunpack.c.l.b16 %v2620
      %v2717 = vunpack.c.l.b16 %v2621
      %v2718 = vunpack.c.l.b16 %v2622
      %v2719 = vunpack.c.l.b16 %v2623
      %v2720 = vunpack.c.l.b16 %v2624
      %v2721 = vunpack.c.l.b16 %v2625
      %v2722 = vunpack.c.l.b16 %v2626
      %v2723 = vunpack.c.l.b16 %v2627
      %v2724 = vunpack.c.l.b16 %v2628
      %v2725 = vunpack.c.l.b16 %v2629
      %v2726 = vunpack.c.l.b16 %v2630
      %v2727 = vunpack.c.l.b16 %v2631
      %v2728 = vunpack.c.l.b16 %v2632
      %v2729 = vunpack.c.l.b16 %v2633
      %v2730 = vunpack.c.l.b16 %v2634
      %v2731 = vunpack.c.l.b16 %v2635
      %v2732 = vpack.c.b16 %v2685, %v2684
      %v2733 = vpack.c.b16 %v2687, %v2686
      %v2734 = vpack.c.b16 %v2689, %v2688
      %v2735 = vpack.c.b16 %v2691, %v2690
      %v2736 = vpack.c.b16 %v2693, %v2692
      %v2737 = vpack.c.b16 %v2695, %v2694
      %v2738 = vpack.c.b16 %v2697, %v2696
      %v2739 = vpack.c.b16 %v2699, %v2698
      %v2740 = vpack.c.b16 %v2701, %v2700
      %v2741 = vpack.c.b16 %v2703, %v2702
      %v2742 = vpack.c.b16 %v2705, %v2704
      %v2743 = vpack.c.b16 %v2707, %v2706
      %v2744 = vpack.c.b16 %v2709, %v2708
      %v2745 = vpack.c.b16 %v2711, %v2710
      %v2746 = vpack.c.b16 %v2713, %v2712
      %v2747 = vpack.c.b16 %v2715, %v2714
      %v2748 = vpack.c.b16 %v2717, %v2716
      %v2749 = vpack.c.b16 %v2719, %v2718
      %v2750 = vpack.c.b16 %v2721, %v2720
      %v2751 = vpack.c.b16 %v2723, %v2722
      %v2752 = vpack.c.b16 %v2725, %v2724
      %v2753 = vpack.c.b16 %v2727, %v2726
      %v2754 = vpack.c.b16 %v2729, %v2728
      %v2755 = vpack.c.b16 %v2731, %v2730
      %2780 = vmatprep.subr.bf16.mxu0 0
      %2781 = vmatpush1.bf16.msra.mxu0 %v2732
      %2782 = vmatprep.subr.bf16.mxu0 0
      %2783 = vmatpush1.bf16.msra.mxu0 %v2733
      %2784 = vmatprep.subr.bf16.mxu0 0
      %2785 = vmatpush1.bf16.msra.mxu0 %v2734
      %2786 = vmatprep.subr.bf16.mxu0 0
      %2787 = vmatpush1.bf16.msra.mxu0 %v2735
      %2788 = vmatprep.subr.bf16.mxu0 0
      %2789 = vmatpush1.bf16.msra.mxu0 %v2736
      %2790 = vmatprep.subr.bf16.mxu0 0
      %2791 = vmatpush1.bf16.msra.mxu0 %v2737
      %2792 = vmatprep.subr.bf16.mxu0 0
      %2793 = vmatpush1.bf16.msra.mxu0 %v2738
      %2794 = vmatprep.subr.bf16.mxu0 0
      %2795 = vmatpush1.bf16.msra.mxu0 %v2739
      %2796 = vmatprep.subr.bf16.mxu0 0
      %2797 = vmatpush1.bf16.msra.mxu0 %v2740
      %2798 = vmatprep.subr.bf16.mxu0 0
      %2799 = vmatpush1.bf16.msra.mxu0 %v2741
      %2800 = vmatprep.subr.bf16.mxu0 0
      %2801 = vmatpush1.bf16.msra.mxu0 %v2742
      %2802 = vmatprep.subr.bf16.mxu0 0
      %2803 = vmatpush1.bf16.msra.mxu0 %v2743
      %2804 = vmatprep.subr.bf16.mxu0 0
      %2805 = vmatpush1.bf16.msra.mxu0 %v2744
      %2806 = vmatprep.subr.bf16.mxu0 0
      %2807 = vmatpush1.bf16.msra.mxu0 %v2745
      %2808 = vmatprep.subr.bf16.mxu0 0
      %2809 = vmatpush1.bf16.msra.mxu0 %v2746
      %2810 = vmatprep.subr.bf16.mxu0 0
      %2811 = vmatpush1.bf16.msra.mxu0 %v2747
      %2812 = vmatprep.mubr.bf16.mxu0 %v2501
      %2813 = vmatmul.mubr.bf16.gmra.mrb[0].mxu0 %v2441
      %v2814 = vpop.f32.mrb[0].mxu0
      %v2815 = vadd.f32 0.0, %v2814
      %v2816 = vpop.f32.mrb[0].mxu0
      %v2817 = vpop.f32.mrb[0].mxu0
      %v2818 = vadd.f32 0.0, %v2817
      %v2819 = vpop.f32.mrb[0].mxu0
      %2820 = vmatprep.mubr.bf16.mxu0 %v2502
      %2821 = vmatmul.mubr.bf16.gmra.mrb[0].mxu0 %v2442
      %v2822 = vpop.f32.mrb[0].mxu0
      %v2823 = vadd.f32 0.0, %v2822
      %v2824 = vpop.f32.mrb[0].mxu0
      %v2825 = vpop.f32.mrb[0].mxu0
      %v2826 = vadd.f32 0.0, %v2825
      %v2827 = vpop.f32.mrb[0].mxu0
      %2828 = vmatprep.mubr.bf16.mxu0 %v2503
      %2829 = vmatmul.mubr.bf16.gmra.mrb[0].mxu0 %v2443
      %v2830 = vpop.f32.mrb[0].mxu0
      %v2831 = vadd.f32 0.0, %v2830
      %v2832 = vpop.f32.mrb[0].mxu0
      %v2833 = vpop.f32.mrb[0].mxu0
      %v2834 = vadd.f32 0.0, %v2833
      %v2835 = vpop.f32.mrb[0].mxu0
      %2836 = vmatprep.mubr.bf16.mxu0 %v2504
      %2837 = vmatmul.mubr.bf16.gmra.mrb[0].mxu0 %v2444
      %v2838 = vpop.f32.mrb[0].mxu0
      %v2839 = vadd.f32 0.0, %v2838
      %v2840 = vpop.f32.mrb[0].mxu0
      %v2841 = vpop.f32.mrb[0].mxu0
      %v2842 = vadd.f32 0.0, %v2841
      %v2843 = vpop.f32.mrb[0].mxu0
      %2844 = vmatprep.mubr.bf16.mxu0 %v2505
      %2845 = vmatmul.mubr.bf16.gmra.mrb[0].mxu0 %v2445
      %v2846 = vpop.f32.mrb[0].mxu0
      %v2847 = vadd.f32 0.0, %v2846
      %v2848 = vpop.f32.mrb[0].mxu0
      %v2849 = vpop.f32.mrb[0].mxu0
      %v2850 = vadd.f32 0.0, %v2849
      %v2851 = vpop.f32.mrb[0].mxu0
      %2852 = vmatprep.mubr.bf16.mxu0 %v2506
      %2853 = vmatmul.mubr.bf16.gmra.mrb[0].mxu0 %v2446
      %v2854 = vpop.f32.mrb[0].mxu0
      %v2855 = vadd.f32 0.0, %v2854
      %v2856 = vpop.f32.mrb[0].mxu0
      %v2857 = vpop.f32.mrb[0].mxu0
      %v2858 = vadd.f32 0.0, %v2857
      %v2859 = vpop.f32.mrb[0].mxu0
      %2860 = vmatprep.mubr.bf16.mxu0 %v2507
      %2861 = vmatmul.mubr.bf16.gmra.mrb[0].mxu0 %v2447
      %v2862 = vpop.f32.mrb[0].mxu0
      %v2863 = vadd.f32 0.0, %v2862
      %v2864 = vpop.f32.mrb[0].mxu0
      %v2865 = vpop.f32.mrb[0].mxu0
      %v2866 = vadd.f32 0.0, %v2865
      %v2867 = vpop.f32.mrb[0].mxu0
      %2868 = vmatprep.mubr.bf16.mxu0 %v2508
      %2869 = vmatmul.mubr.bf16.gmra.mrb[0].mxu0 %v2448
      %v2870 = vpop.f32.mrb[0].mxu0
      %v2871 = vadd.f32 0.0, %v2870
      %v2872 = vpop.f32.mrb[0].mxu0
      %v2873 = vpop.f32.mrb[0].mxu0
      %v2874 = vadd.f32 0.0, %v2873
      %v2875 = vpop.f32.mrb[0].mxu0
      %2876 = vmatprep.mubr.bf16.mxu0 %v2509
      %2877 = vmatmul.mubr.bf16.gmra.mrb[0].mxu0 %v2449
      %v2878 = vpop.f32.mrb[0].mxu0
      %v2879 = vadd.f32 0.0, %v2878
      %v2880 = vpop.f32.mrb[0].mxu0
      %v2881 = vpop.f32.mrb[0].mxu0
      %v2882 = vadd.f32 0.0, %v2881
      %v2883 = vpop.f32.mrb[0].mxu0
      %2884 = vmatprep.mubr.bf16.mxu0 %v2510
      %2885 = vmatmul.mubr.bf16.gmra.mrb[0].mxu0 %v2450
      %v2886 = vpop.f32.mrb[0].mxu0
      %v2887 = vadd.f32 0.0, %v2886
      %v2888 = vpop.f32.mrb[0].mxu0
      %v2889 = vpop.f32.mrb[0].mxu0
      %v2890 = vadd.f32 0.0, %v2889
      %v2891 = vpop.f32.mrb[0].mxu0
      %2892 = vmatprep.mubr.bf16.mxu0 %v2511
      %2893 = vmatmul.mubr.bf16.gmra.mrb[0].mxu0 %v2451
      %v2894 = vpop.f32.mrb[0].mxu0
      %v2895 = vadd.f32 0.0, %v2894
      %v2896 = vpop.f32.mrb[0].mxu0
      %v2897 = vpop.f32.mrb[0].mxu0
      %v2898 = vadd.f32 0.0, %v2897
      %v2899 = vpop.f32.mrb[0].mxu0
      %2900 = vmatprep.mubr.bf16.mxu0 %v2512
      %2901 = vmatmul.mubr.bf16.gmra.mrb[0].mxu0 %v2452
      %v2902 = vpop.f32.mrb[0].mxu0
      %v2903 = vadd.f32 0.0, %v2902
      %v2904 = vpop.f32.mrb[0].mxu0
      %v2905 = vpop.f32.mrb[0].mxu0
      %v2906 = vadd.f32 0.0, %v2905
      %v2907 = vpop.f32.mrb[0].mxu0
      %2908 = vmatprep.mubr.bf16.mxu0 %v2513
      %2909 = vmatmul.mubr.bf16.gmra.mrb[0].mxu0 %v2453
      %v2910 = vpop.f32.mrb[0].mxu0
      %v2911 = vadd.f32 0.0, %v2910
      %v2912 = vpop.f32.mrb[0].mxu0
      %v2913 = vpop.f32.mrb[0].mxu0
      %v2914 = vadd.f32 0.0, %v2913
      %v2915 = vpop.f32.mrb[0].mxu0
      %2916 = vmatprep.mubr.bf16.mxu0 %v2514
      %2917 = vmatmul.mubr.bf16.gmra.mrb[0].mxu0 %v2454
      %v2918 = vpop.f32.mrb[0].mxu0
      %v2919 = vadd.f32 0.0, %v2918
      %v2920 = vpop.f32.mrb[0].mxu0
      %v2921 = vpop.f32.mrb[0].mxu0
      %v2922 = vadd.f32 0.0, %v2921
      %v2923 = vpop.f32.mrb[0].mxu0
      %2924 = vmatprep.mubr.bf16.mxu0 %v2515
      %2925 = vmatmul.mubr.bf16.gmra.mrb[0].mxu0 %v2455
      %v2926 = vpop.f32.mrb[0].mxu0
      %v2927 = vadd.f32 0.0, %v2926
      %v2928 = vpop.f32.mrb[0].mxu0
      %v2929 = vpop.f32.mrb[0].mxu0
      %v2930 = vadd.f32 0.0, %v2929
      %v2931 = vpop.f32.mrb[0].mxu0
      %2932 = vmatprep.mubr.bf16.mxu0 %v2516
      %2933 = vmatmul.mubr.bf16.gmra.mrb[0].mxu0 %v2456
      %v2934 = vpop.f32.mrb[0].mxu0
      %v2935 = vadd.f32 0.0, %v2934
      %v2936 = vpop.f32.mrb[0].mxu0
      %v2937 = vpop.f32.mrb[0].mxu0
      %v2938 = vadd.f32 0.0, %v2937
      %v2939 = vpop.f32.mrb[0].mxu0
      %2940 = vdwg.mxu0
      %2941 = vmatprep.subr.bf16.mxu0 0
      %2942 = vmatpush1.bf16.msra.mxu0 %v2748
      %2943 = vmatprep.subr.bf16.mxu0 0
      %2944 = vmatpush1.bf16.msra.mxu0 %v2749
      %2945 = vmatprep.subr.bf16.mxu0 0
      %2946 = vmatpush1.bf16.msra.mxu0 %v2750
      %2947 = vmatprep.subr.bf16.mxu0 0
      %2948 = vmatpush1.bf16.msra.mxu0 %v2751
      %2949 = vmatprep.subr.bf16.mxu0 0
      %2950 = vmatpush1.bf16.msra.mxu0 %v2752
      %2951 = vmatprep.subr.bf16.mxu0 0
      %2952 = vmatpush1.bf16.msra.mxu0 %v2753
      %2953 = vmatprep.subr.bf16.mxu0 0
      %2954 = vmatpush1.bf16.msra.mxu0 %v2754
      %2955 = vmatprep.subr.bf16.mxu0 0
      %2956 = vmatpush1.bf16.msra.mxu0 %v2755
      %2957 = vmatprep.subr.bf16.mxu0 0
      %2958 = vmatpush1.bf16.msra.mxu0 0
      %2959 = vmatprep.subr.bf16.mxu0 0
      %2960 = vmatpush1.bf16.msra.mxu0 0
      %2961 = vmatprep.subr.bf16.mxu0 0
      %2962 = vmatpush1.bf16.msra.mxu0 0
      %2963 = vmatprep.subr.bf16.mxu0 0
      %2964 = vmatpush1.bf16.msra.mxu0 0
      %2965 = vmatprep.subr.bf16.mxu0 0
      %2966 = vmatpush1.bf16.msra.mxu0 0
      %2967 = vmatprep.subr.bf16.mxu0 0
      %2968 = vmatpush1.bf16.msra.mxu0 0
      %2969 = vmatprep.subr.bf16.mxu0 0
      %2970 = vmatpush1.bf16.msra.mxu0 0
      %2971 = vmatprep.subr.bf16.mxu0 0
      %2972 = vmatpush1.bf16.msra.mxu0 0
      %2973 = vmatprep.mubr.bf16.mxu0 0
      %2974 = vmatmul.mubr.bf16.gmra.mrb[0].mxu0 %v2561
      %v2975 = vpop.f32.mrb[0].mxu0
      %v2976 = vadd.f32 %v2815, %v2975
      %v2977 = vpop.f32.mrb[0].mxu0
      %v2978 = vpop.f32.mrb[0].mxu0
      %v2979 = vadd.f32 %v2818, %v2978
      %v2980 = vpop.f32.mrb[0].mxu0
      %2981 = vmatprep.mubr.bf16.mxu0 0
      %2982 = vmatmul.mubr.bf16.gmra.mrb[0].mxu0 %v2562
      %v2983 = vpop.f32.mrb[0].mxu0
      %v2984 = vadd.f32 %v2823, %v2983
      %v2985 = vpop.f32.mrb[0].mxu0
      %v2986 = vpop.f32.mrb[0].mxu0
      %v2987 = vadd.f32 %v2826, %v2986
      %v2988 = vpop.f32.mrb[0].mxu0
      %2989 = vmatprep.mubr.bf16.mxu0 0
      %2990 = vmatmul.mubr.bf16.gmra.mrb[0].mxu0 %v2563
      %v2991 = vpop.f32.mrb[0].mxu0
      %v2992 = vadd.f32 %v2831, %v2991
      %v2993 = vpop.f32.mrb[0].mxu0
      %v2994 = vpop.f32.mrb[0].mxu0
      %v2995 = vadd.f32 %v2834, %v2994
      %v2996 = vpop.f32.mrb[0].mxu0
      %2997 = vmatprep.mubr.bf16.mxu0 0
      %2998 = vmatmul.mubr.bf16.gmra.mrb[0].mxu0 %v2564
      %v2999 = vpop.f32.mrb[0].mxu0
      %v3000 = vadd.f32 %v2839, %v2999
      %v3001 = vpop.f32.mrb[0].mxu0
      %v3002 = vpop.f32.mrb[0].mxu0
      %v3003 = vadd.f32 %v2842, %v3002
      %v3004 = vpop.f32.mrb[0].mxu0
      %3005 = vmatprep.mubr.bf16.mxu0 0
      %3006 = vmatmul.mubr.bf16.gmra.mrb[0].mxu0 %v2565
      %v3007 = vpop.f32.mrb[0].mxu0
      %v3008 = vadd.f32 %v2847, %v3007
      %v3009 = vpop.f32.mrb[0].mxu0
      %v3010 = vpop.f32.mrb[0].mxu0
      %v3011 = vadd.f32 %v2850, %v3010
      %v3012 = vpop.f32.mrb[0].mxu0
      %3013 = vmatprep.mubr.bf16.mxu0 0
      %3014 = vmatmul.mubr.bf16.gmra.mrb[0].mxu0 %v2566
      %v3015 = vpop.f32.mrb[0].mxu0
      %v3016 = vadd.f32 %v2855, %v3015
      %v3017 = vpop.f32.mrb[0].mxu0
      %v3018 = vpop.f32.mrb[0].mxu0
      %v3019 = vadd.f32 %v2858, %v3018
      %v3020 = vpop.f32.mrb[0].mxu0
      %3021 = vmatprep.mubr.bf16.mxu0 0
      %3022 = vmatmul.mubr.bf16.gmra.mrb[0].mxu0 %v2567
      %v3023 = vpop.f32.mrb[0].mxu0
      %v3024 = vadd.f32 %v2863, %v3023
      %v3025 = vpop.f32.mrb[0].mxu0
      %v3026 = vpop.f32.mrb[0].mxu0
      %v3027 = vadd.f32 %v2866, %v3026
      %v3028 = vpop.f32.mrb[0].mxu0
      %3029 = vmatprep.mubr.bf16.mxu0 0
      %3030 = vmatmul.mubr.bf16.gmra.mrb[0].mxu0 %v2568
      %v3031 = vpop.f32.mrb[0].mxu0
      %v3032 = vadd.f32 %v2871, %v3031
      %v3033 = vpop.f32.mrb[0].mxu0
      %v3034 = vpop.f32.mrb[0].mxu0
      %v3035 = vadd.f32 %v2874, %v3034
      %v3036 = vpop.f32.mrb[0].mxu0
      %3037 = vmatprep.mubr.bf16.mxu0 0
      %3038 = vmatmul.mubr.bf16.gmra.mrb[0].mxu0 %v2569
      %v3039 = vpop.f32.mrb[0].mxu0
      %v3040 = vadd.f32 %v2879, %v3039
      %v3041 = vpop.f32.mrb[0].mxu0
      %v3042 = vpop.f32.mrb[0].mxu0
      %v3043 = vadd.f32 %v2882, %v3042
      %v3044 = vpop.f32.mrb[0].mxu0
      %3045 = vmatprep.mubr.bf16.mxu0 0
      %3046 = vmatmul.mubr.bf16.gmra.mrb[0].mxu0 %v2570
      %v3047 = vpop.f32.mrb[0].mxu0
      %v3048 = vadd.f32 %v2887, %v3047
      %v3049 = vpop.f32.mrb[0].mxu0
      %v3050 = vpop.f32.mrb[0].mxu0
      %v3051 = vadd.f32 %v2890, %v3050
      %v3052 = vpop.f32.mrb[0].mxu0
      %3053 = vmatprep.mubr.bf16.mxu0 0
      %3054 = vmatmul.mubr.bf16.gmra.mrb[0].mxu0 %v2571
      %v3055 = vpop.f32.mrb[0].mxu0
      %v3056 = vadd.f32 %v2895, %v3055
      %v3057 = vpop.f32.mrb[0].mxu0
      %v3058 = vpop.f32.mrb[0].mxu0
      %v3059 = vadd.f32 %v2898, %v3058
      %v3060 = vpop.f32.mrb[0].mxu0
      %3061 = vmatprep.mubr.bf16.mxu0 0
      %3062 = vmatmul.mubr.bf16.gmra.mrb[0].mxu0 %v2572
      %v3063 = vpop.f32.mrb[0].mxu0
      %v3064 = vadd.f32 %v2903, %v3063
      %v3065 = vpop.f32.mrb[0].mxu0
      %v3066 = vpop.f32.mrb[0].mxu0
      %v3067 = vadd.f32 %v2906, %v3066
      %v3068 = vpop.f32.mrb[0].mxu0
      %3069 = vmatprep.mubr.bf16.mxu0 0
      %3070 = vmatmul.mubr.bf16.gmra.mrb[0].mxu0 %v2573
      %v3071 = vpop.f32.mrb[0].mxu0
      %v3072 = vadd.f32 %v2911, %v3071
      %v3073 = vpop.f32.mrb[0].mxu0
      %v3074 = vpop.f32.mrb[0].mxu0
      %v3075 = vadd.f32 %v2914, %v3074
      %v3076 = vpop.f32.mrb[0].mxu0
      %3077 = vmatprep.mubr.bf16.mxu0 0
      %3078 = vmatmul.mubr.bf16.gmra.mrb[0].mxu0 %v2574
      %v3079 = vpop.f32.mrb[0].mxu0
      %v3080 = vadd.f32 %v2919, %v3079
      %v3081 = vpop.f32.mrb[0].mxu0
      %v3082 = vpop.f32.mrb[0].mxu0
      %v3083 = vadd.f32 %v2922, %v3082
      %v3084 = vpop.f32.mrb[0].mxu0
      %3085 = vmatprep.mubr.bf16.mxu0 0
      %3086 = vmatmul.mubr.bf16.gmra.mrb[0].mxu0 %v2575
      %v3087 = vpop.f32.mrb[0].mxu0
      %v3088 = vadd.f32 %v2927, %v3087
      %v3089 = vpop.f32.mrb[0].mxu0
      %v3090 = vpop.f32.mrb[0].mxu0
      %v3091 = vadd.f32 %v2930, %v3090
      %v3092 = vpop.f32.mrb[0].mxu0
      %3093 = vmatprep.mubr.bf16.mxu0 0
      %3094 = vmatmul.mubr.bf16.gmra.mrb[0].mxu0 %v2576
      %v3095 = vpop.f32.mrb[0].mxu0
      %v3096 = vadd.f32 %v2935, %v3095
      %v3097 = vpop.f32.mrb[0].mxu0
      %v3098 = vpop.f32.mrb[0].mxu0
      %v3099 = vadd.f32 %v2938, %v3098
      %v3100 = vpop.f32.mrb[0].mxu0
      %3101 = vdwg.mxu0
      %v3102 = vadd.f32 %v2586, %v2976
      %v3103 = vadd.f32 %v2586, %v2979
      %v3104 = vadd.f32 %v2586, %v2984
      %v3105 = vadd.f32 %v2586, %v2987
      %v3106 = vadd.f32 %v2586, %v2992
      %v3107 = vadd.f32 %v2586, %v2995
      %v3108 = vadd.f32 %v2586, %v3000
      %v3109 = vadd.f32 %v2586, %v3003
      %v3110 = vadd.f32 %v2586, %v3008
      %v3111 = vadd.f32 %v2586, %v3011
      %v3112 = vadd.f32 %v2586, %v3016
      %v3113 = vadd.f32 %v2586, %v3019
      %v3114 = vadd.f32 %v2586, %v3024
      %v3115 = vadd.f32 %v2586, %v3027
      %v3116 = vadd.f32 %v2586, %v3032
      %v3117 = vadd.f32 %v2586, %v3035
      %v3118 = vadd.f32 %v2586, %v3040
      %v3119 = vadd.f32 %v2586, %v3043
      %v3120 = vadd.f32 %v2586, %v3048
      %v3121 = vadd.f32 %v2586, %v3051
      %v3122 = vadd.f32 %v2586, %v3056
      %v3123 = vadd.f32 %v2586, %v3059
      %v3124 = vadd.f32 %v2586, %v3064
      %v3125 = vadd.f32 %v2586, %v3067
      %v3126 = vadd.f32 %v2586, %v3072
      %v3127 = vadd.f32 %v2586, %v3075
      %v3128 = vadd.f32 %v2586, %v3080
      %v3129 = vadd.f32 %v2586, %v3083
      %v3130 = vadd.f32 %v2586, %v3088
      %v3131 = vadd.f32 %v2586, %v3091
      %v3132 = vadd.f32 %v2586, %v3096
      %v3133 = vadd.f32 %v2586, %v3099
      %v3134 = vld [vmem:[%s3 + $0xc0] sm:$0xf]
      %v3135 = vld [vmem:[%s3 + $0xc4] sm:$0xf]
      %v3136 = vld [vmem:[%s3 + $0xc8] sm:$0xf]
      %v3137 = vld [vmem:[%s3 + $0xcc] sm:$0xf]
      %v3138 = vld [vmem:[%s3 + $0xd0] sm:$0xf]
      %v3139 = vld [vmem:[%s3 + $0xd4] sm:$0xf]
      %v3140 = vld [vmem:[%s3 + $0xd8] sm:$0xf]
      %v3141 = vld [vmem:[%s3 + $0xdc] sm:$0xf]
      %v3142 = vld [vmem:[%s3 + $0xe0] sm:$0xf]
      %v3143 = vld [vmem:[%s3 + $0xe4] sm:$0xf]
      %v3144 = vld [vmem:[%s3 + $0xe8] sm:$0xf]
      %v3145 = vld [vmem:[%s3 + $0xec] sm:$0xf]
      %v3146 = vld [vmem:[%s3 + $0xf0] sm:$0xf]
      %v3147 = vld [vmem:[%s3 + $0xf4] sm:$0xf]
      %v3148 = vld [vmem:[%s3 + $0xf8] sm:$0xf]
      %v3149 = vld [vmem:[%s3 + $0xfc] sm:$0xf]
      %v3150 = vld [vmem:[%s3 + $0x100] sm:$0xf]
      %v3151 = vld [vmem:[%s3 + $0x104] sm:$0xf]
      %v3152 = vld [vmem:[%s3 + $0x108] sm:$0xf]
      %v3153 = vld [vmem:[%s3 + $0x10c] sm:$0xf]
      %v3154 = vld [vmem:[%s3 + $0x110] sm:$0xf]
      %v3155 = vld [vmem:[%s3 + $0x114] sm:$0xf]
      %v3156 = vld [vmem:[%s3 + $0x118] sm:$0xf]
      %v3157 = vld [vmem:[%s3 + $0x11c] sm:$0xf]
      %v3158 = vld [vmem:[%s3 + $0x120] sm:$0xf]
      %v3159 = vld [vmem:[%s3 + $0x124] sm:$0xf]
      %v3160 = vld [vmem:[%s3 + $0x128] sm:$0xf]
      %v3161 = vld [vmem:[%s3 + $0x12c] sm:$0xf]
      %v3162 = vld [vmem:[%s3 + $0x130] sm:$0xf]
      %v3163 = vld [vmem:[%s3 + $0x134] sm:$0xf]
      %v3164 = vld [vmem:[%s3 + $0x138] sm:$0xf]
      %v3165 = vld [vmem:[%s3 + $0x13c] sm:$0xf]
      %v3166 = vld [vmem:[%s3 + $0x140] sm:$0xf]
      %v3167 = vld [vmem:[%s3 + $0x144] sm:$0xf]
      %v3168 = vld [vmem:[%s3 + $0x148] sm:$0xf]
      %v3169 = vld [vmem:[%s3 + $0x14c] sm:$0xf]
      %v3170 = vld [vmem:[%s3 + $0x150] sm:$0xf]
      %v3171 = vld [vmem:[%s3 + $0x154] sm:$0xf]
      %v3172 = vld [vmem:[%s3 + $0x158] sm:$0xf]
      %v3173 = vld [vmem:[%s3 + $0x15c] sm:$0xf]
      %v3174 = vld [vmem:[%s3 + $0x160] sm:$0xf]
      %v3175 = vld [vmem:[%s3 + $0x164] sm:$0xf]
      %v3176 = vld [vmem:[%s3 + $0x168] sm:$0xf]
      %v3177 = vld [vmem:[%s3 + $0x16c] sm:$0xf]
      %v3178 = vld [vmem:[%s3 + $0x170] sm:$0xf]
      %v3179 = vld [vmem:[%s3 + $0x174] sm:$0xf]
      %v3180 = vld [vmem:[%s3 + $0x178] sm:$0xf]
      %v3181 = vld [vmem:[%s3 + $0x17c] sm:$0xf]
      %v3230 = vunpack.c.l.b16 %v3134
      %v3231 = vunpack.c.l.b16 %v3135
      %v3232 = vunpack.c.l.b16 %v3136
      %v3233 = vunpack.c.l.b16 %v3137
      %v3234 = vunpack.c.l.b16 %v3138
      %v3235 = vunpack.c.l.b16 %v3139
      %v3236 = vunpack.c.l.b16 %v3140
      %v3237 = vunpack.c.l.b16 %v3141
      %v3238 = vunpack.c.l.b16 %v3142
      %v3239 = vunpack.c.l.b16 %v3143
      %v3240 = vunpack.c.l.b16 %v3144
      %v3241 = vunpack.c.l.b16 %v3145
      %v3242 = vunpack.c.l.b16 %v3146
      %v3243 = vunpack.c.l.b16 %v3147
      %v3244 = vunpack.c.l.b16 %v3148
      %v3245 = vunpack.c.l.b16 %v3149
      %v3246 = vunpack.c.l.b16 %v3150
      %v3247 = vunpack.c.l.b16 %v3151
      %v3248 = vunpack.c.l.b16 %v3152
      %v3249 = vunpack.c.l.b16 %v3153
      %v3250 = vunpack.c.l.b16 %v3154
      %v3251 = vunpack.c.l.b16 %v3155
      %v3252 = vunpack.c.l.b16 %v3156
      %v3253 = vunpack.c.l.b16 %v3157
      %v3254 = vunpack.c.l.b16 %v3158
      %v3255 = vunpack.c.l.b16 %v3159
      %v3256 = vunpack.c.l.b16 %v3160
      %v3257 = vunpack.c.l.b16 %v3161
      %v3258 = vunpack.c.l.b16 %v3162
      %v3259 = vunpack.c.l.b16 %v3163
      %v3260 = vunpack.c.l.b16 %v3164
      %v3261 = vunpack.c.l.b16 %v3165
      %v3262 = vunpack.c.l.b16 %v3166
      %v3263 = vunpack.c.l.b16 %v3167
      %v3264 = vunpack.c.l.b16 %v3168
      %v3265 = vunpack.c.l.b16 %v3169
      %v3266 = vunpack.c.l.b16 %v3170
      %v3267 = vunpack.c.l.b16 %v3171
      %v3268 = vunpack.c.l.b16 %v3172
      %v3269 = vunpack.c.l.b16 %v3173
      %v3270 = vunpack.c.l.b16 %v3174
      %v3271 = vunpack.c.l.b16 %v3175
      %v3272 = vunpack.c.l.b16 %v3176
      %v3273 = vunpack.c.l.b16 %v3177
      %v3274 = vunpack.c.l.b16 %v3178
      %v3275 = vunpack.c.l.b16 %v3179
      %v3276 = vunpack.c.l.b16 %v3180
      %v3277 = vunpack.c.l.b16 %v3181
      %v3278 = vpack.c.b16 %v3231, %v3230
      %v3279 = vpack.c.b16 %v3233, %v3232
      %v3280 = vpack.c.b16 %v3235, %v3234
      %v3281 = vpack.c.b16 %v3237, %v3236
      %v3282 = vpack.c.b16 %v3239, %v3238
      %v3283 = vpack.c.b16 %v3241, %v3240
      %v3284 = vpack.c.b16 %v3243, %v3242
      %v3285 = vpack.c.b16 %v3245, %v3244
      %v3286 = vpack.c.b16 %v3247, %v3246
      %v3287 = vpack.c.b16 %v3249, %v3248
      %v3288 = vpack.c.b16 %v3251, %v3250
      %v3289 = vpack.c.b16 %v3253, %v3252
      %v3290 = vpack.c.b16 %v3255, %v3254
      %v3291 = vpack.c.b16 %v3257, %v3256
      %v3292 = vpack.c.b16 %v3259, %v3258
      %v3293 = vpack.c.b16 %v3261, %v3260
      %v3294 = vpack.c.b16 %v3263, %v3262
      %v3295 = vpack.c.b16 %v3265, %v3264
      %v3296 = vpack.c.b16 %v3267, %v3266
      %v3297 = vpack.c.b16 %v3269, %v3268
      %v3298 = vpack.c.b16 %v3271, %v3270
      %v3299 = vpack.c.b16 %v3273, %v3272
      %v3300 = vpack.c.b16 %v3275, %v3274
      %v3301 = vpack.c.b16 %v3277, %v3276
      %3326 = vmatprep.subr.bf16.mxu0 0
      %3327 = vmatpush1.bf16.msra.mxu0 %v3278
      %3328 = vmatprep.subr.bf16.mxu0 0
      %3329 = vmatpush1.bf16.msra.mxu0 %v3279
      %3330 = vmatprep.subr.bf16.mxu0 0
      %3331 = vmatpush1.bf16.msra.mxu0 %v3280
      %3332 = vmatprep.subr.bf16.mxu0 0
      %3333 = vmatpush1.bf16.msra.mxu0 %v3281
      %3334 = vmatprep.subr.bf16.mxu0 0
      %3335 = vmatpush1.bf16.msra.mxu0 %v3282
      %3336 = vmatprep.subr.bf16.mxu0 0
      %3337 = vmatpush1.bf16.msra.mxu0 %v3283
      %3338 = vmatprep.subr.bf16.mxu0 0
      %3339 = vmatpush1.bf16.msra.mxu0 %v3284
      %3340 = vmatprep.subr.bf16.mxu0 0
      %3341 = vmatpush1.bf16.msra.mxu0 %v3285
      %3342 = vmatprep.subr.bf16.mxu0 0
      %3343 = vmatpush1.bf16.msra.mxu0 %v3286
      %3344 = vmatprep.subr.bf16.mxu0 0
      %3345 = vmatpush1.bf16.msra.mxu0 %v3287
      %3346 = vmatprep.subr.bf16.mxu0 0
      %3347 = vmatpush1.bf16.msra.mxu0 %v3288
      %3348 = vmatprep.subr.bf16.mxu0 0
      %3349 = vmatpush1.bf16.msra.mxu0 %v3289
      %3350 = vmatprep.subr.bf16.mxu0 0
      %3351 = vmatpush1.bf16.msra.mxu0 %v3290
      %3352 = vmatprep.subr.bf16.mxu0 0
      %3353 = vmatpush1.bf16.msra.mxu0 %v3291
      %3354 = vmatprep.subr.bf16.mxu0 0
      %3355 = vmatpush1.bf16.msra.mxu0 %v3292
      %3356 = vmatprep.subr.bf16.mxu0 0
      %3357 = vmatpush1.bf16.msra.mxu0 %v3293
      %3358 = vmatprep.mubr.bf16.mxu0 %v2503
      %3359 = vmatmul.mubr.bf16.gmra.mrb[0].mxu0 %v2443
      %v3360 = vpop.f32.mrb[0].mxu0
      %v3361 = vadd.f32 0.0, %v3360
      %v3362 = vpop.f32.mrb[0].mxu0
      %v3363 = vpop.f32.mrb[0].mxu0
      %v3364 = vadd.f32 0.0, %v3363
      %v3365 = vpop.f32.mrb[0].mxu0
      %3366 = vmatprep.mubr.bf16.mxu0 %v2504
      %3367 = vmatmul.mubr.bf16.gmra.mrb[0].mxu0 %v2444
      %v3368 = vpop.f32.mrb[0].mxu0
      %v3369 = vadd.f32 0.0, %v3368
      %v3370 = vpop.f32.mrb[0].mxu0
      %v3371 = vpop.f32.mrb[0].mxu0
      %v3372 = vadd.f32 0.0, %v3371
      %v3373 = vpop.f32.mrb[0].mxu0
      %3374 = vmatprep.mubr.bf16.mxu0 %v2505
      %3375 = vmatmul.mubr.bf16.gmra.mrb[0].mxu0 %v2445
      %v3376 = vpop.f32.mrb[0].mxu0
      %v3377 = vadd.f32 0.0, %v3376
      %v3378 = vpop.f32.mrb[0].mxu0
      %v3379 = vpop.f32.mrb[0].mxu0
      %v3380 = vadd.f32 0.0, %v3379
      %v3381 = vpop.f32.mrb[0].mxu0
      %3382 = vmatprep.mubr.bf16.mxu0 %v2506
      %3383 = vmatmul.mubr.bf16.gmra.mrb[0].mxu0 %v2446
      %v3384 = vpop.f32.mrb[0].mxu0
      %v3385 = vadd.f32 0.0, %v3384
      %v3386 = vpop.f32.mrb[0].mxu0
      %v3387 = vpop.f32.mrb[0].mxu0
      %v3388 = vadd.f32 0.0, %v3387
      %v3389 = vpop.f32.mrb[0].mxu0
      %3390 = vmatprep.mubr.bf16.mxu0 %v2507
      %3391 = vmatmul.mubr.bf16.gmra.mrb[0].mxu0 %v2447
      %v3392 = vpop.f32.mrb[0].mxu0
      %v3393 = vadd.f32 0.0, %v3392
      %v3394 = vpop.f32.mrb[0].mxu0
      %v3395 = vpop.f32.mrb[0].mxu0
      %v3396 = vadd.f32 0.0, %v3395
      %v3397 = vpop.f32.mrb[0].mxu0
      %3398 = vmatprep.mubr.bf16.mxu0 %v2508
      %3399 = vmatmul.mubr.bf16.gmra.mrb[0].mxu0 %v2448
      %v3400 = vpop.f32.mrb[0].mxu0
      %v3401 = vadd.f32 0.0, %v3400
      %v3402 = vpop.f32.mrb[0].mxu0
      %v3403 = vpop.f32.mrb[0].mxu0
      %v3404 = vadd.f32 0.0, %v3403
      %v3405 = vpop.f32.mrb[0].mxu0
      %3406 = vmatprep.mubr.bf16.mxu0 %v2509
      %3407 = vmatmul.mubr.bf16.gmra.mrb[0].mxu0 %v2449
      %v3408 = vpop.f32.mrb[0].mxu0
      %v3409 = vadd.f32 0.0, %v3408
      %v3410 = vpop.f32.mrb[0].mxu0
      %v3411 = vpop.f32.mrb[0].mxu0
      %v3412 = vadd.f32 0.0, %v3411
      %v3413 = vpop.f32.mrb[0].mxu0
      %3414 = vmatprep.mubr.bf16.mxu0 %v2510
      %3415 = vmatmul.mubr.bf16.gmra.mrb[0].mxu0 %v2450
      %v3416 = vpop.f32.mrb[0].mxu0
      %v3417 = vadd.f32 0.0, %v3416
      %v3418 = vpop.f32.mrb[0].mxu0
      %v3419 = vpop.f32.mrb[0].mxu0
      %v3420 = vadd.f32 0.0, %v3419
      %v3421 = vpop.f32.mrb[0].mxu0
      %3422 = vmatprep.mubr.bf16.mxu0 %v2511
      %3423 = vmatmul.mubr.bf16.gmra.mrb[0].mxu0 %v2451
      %v3424 = vpop.f32.mrb[0].mxu0
      %v3425 = vadd.f32 0.0, %v3424
      %v3426 = vpop.f32.mrb[0].mxu0
      %v3427 = vpop.f32.mrb[0].mxu0
      %v3428 = vadd.f32 0.0, %v3427
      %v3429 = vpop.f32.mrb[0].mxu0
      %3430 = vmatprep.mubr.bf16.mxu0 %v2512
      %3431 = vmatmul.mubr.bf16.gmra.mrb[0].mxu0 %v2452
      %v3432 = vpop.f32.mrb[0].mxu0
      %v3433 = vadd.f32 0.0, %v3432
      %v3434 = vpop.f32.mrb[0].mxu0
      %v3435 = vpop.f32.mrb[0].mxu0
      %v3436 = vadd.f32 0.0, %v3435
      %v3437 = vpop.f32.mrb[0].mxu0
      %3438 = vmatprep.mubr.bf16.mxu0 %v2513
      %3439 = vmatmul.mubr.bf16.gmra.mrb[0].mxu0 %v2453
      %v3440 = vpop.f32.mrb[0].mxu0
      %v3441 = vadd.f32 0.0, %v3440
      %v3442 = vpop.f32.mrb[0].mxu0
      %v3443 = vpop.f32.mrb[0].mxu0
      %v3444 = vadd.f32 0.0, %v3443
      %v3445 = vpop.f32.mrb[0].mxu0
      %3446 = vmatprep.mubr.bf16.mxu0 %v2514
      %3447 = vmatmul.mubr.bf16.gmra.mrb[0].mxu0 %v2454
      %v3448 = vpop.f32.mrb[0].mxu0
      %v3449 = vadd.f32 0.0, %v3448
      %v3450 = vpop.f32.mrb[0].mxu0
      %v3451 = vpop.f32.mrb[0].mxu0
      %v3452 = vadd.f32 0.0, %v3451
      %v3453 = vpop.f32.mrb[0].mxu0
      %3454 = vmatprep.mubr.bf16.mxu0 %v2515
      %3455 = vmatmul.mubr.bf16.gmra.mrb[0].mxu0 %v2455
      %v3456 = vpop.f32.mrb[0].mxu0
      %v3457 = vadd.f32 0.0, %v3456
      %v3458 = vpop.f32.mrb[0].mxu0
      %v3459 = vpop.f32.mrb[0].mxu0
      %v3460 = vadd.f32 0.0, %v3459
      %v3461 = vpop.f32.mrb[0].mxu0
      %3462 = vmatprep.mubr.bf16.mxu0 %v2516
      %3463 = vmatmul.mubr.bf16.gmra.mrb[0].mxu0 %v2456
      %v3464 = vpop.f32.mrb[0].mxu0
      %v3465 = vadd.f32 0.0, %v3464
      %v3466 = vpop.f32.mrb[0].mxu0
      %v3467 = vpop.f32.mrb[0].mxu0
      %v3468 = vadd.f32 0.0, %v3467
      %v3469 = vpop.f32.mrb[0].mxu0
      %3470 = vmatprep.mubr.bf16.mxu0 %v2517
      %3471 = vmatmul.mubr.bf16.gmra.mrb[0].mxu0 %v2457
      %v3472 = vpop.f32.mrb[0].mxu0
      %v3473 = vadd.f32 0.0, %v3472
      %v3474 = vpop.f32.mrb[0].mxu0
      %v3475 = vpop.f32.mrb[0].mxu0
      %v3476 = vadd.f32 0.0, %v3475
      %v3477 = vpop.f32.mrb[0].mxu0
      %3478 = vmatprep.mubr.bf16.mxu0 %v2518
      %3479 = vmatmul.mubr.bf16.gmra.mrb[0].mxu0 %v2458
      %v3480 = vpop.f32.mrb[0].mxu0
      %v3481 = vadd.f32 0.0, %v3480
      %v3482 = vpop.f32.mrb[0].mxu0
      %v3483 = vpop.f32.mrb[0].mxu0
      %v3484 = vadd.f32 0.0, %v3483
      %v3485 = vpop.f32.mrb[0].mxu0
      %3486 = vdwg.mxu0
      %3487 = vmatprep.subr.bf16.mxu0 0
      %3488 = vmatpush1.bf16.msra.mxu0 %v3294
      %3489 = vmatprep.subr.bf16.mxu0 0
      %3490 = vmatpush1.bf16.msra.mxu0 %v3295
      %3491 = vmatprep.subr.bf16.mxu0 0
      %3492 = vmatpush1.bf16.msra.mxu0 %v3296
      %3493 = vmatprep.subr.bf16.mxu0 0
      %3494 = vmatpush1.bf16.msra.mxu0 %v3297
      %3495 = vmatprep.subr.bf16.mxu0 0
      %3496 = vmatpush1.bf16.msra.mxu0 %v3298
      %3497 = vmatprep.subr.bf16.mxu0 0
      %3498 = vmatpush1.bf16.msra.mxu0 %v3299
      %3499 = vmatprep.subr.bf16.mxu0 0
      %3500 = vmatpush1.bf16.msra.mxu0 %v3300
      %3501 = vmatprep.subr.bf16.mxu0 0
      %3502 = vmatpush1.bf16.msra.mxu0 %v3301
      %3503 = vmatprep.subr.bf16.mxu0 0
      %3504 = vmatpush1.bf16.msra.mxu0 0
      %3505 = vmatprep.subr.bf16.mxu0 0
      %3506 = vmatpush1.bf16.msra.mxu0 0
      %3507 = vmatprep.subr.bf16.mxu0 0
      %3508 = vmatpush1.bf16.msra.mxu0 0
      %3509 = vmatprep.subr.bf16.mxu0 0
      %3510 = vmatpush1.bf16.msra.mxu0 0
      %3511 = vmatprep.subr.bf16.mxu0 0
      %3512 = vmatpush1.bf16.msra.mxu0 0
      %3513 = vmatprep.subr.bf16.mxu0 0
      %3514 = vmatpush1.bf16.msra.mxu0 0
      %3515 = vmatprep.subr.bf16.mxu0 0
      %3516 = vmatpush1.bf16.msra.mxu0 0
      %3517 = vmatprep.subr.bf16.mxu0 0
      %3518 = vmatpush1.bf16.msra.mxu0 0
      %3519 = vmatprep.mubr.bf16.mxu0 0
      %3520 = vmatmul.mubr.bf16.gmra.mrb[0].mxu0 %v2563
      %v3521 = vpop.f32.mrb[0].mxu0
      %v3522 = vadd.f32 %v3361, %v3521
      %v3523 = vpop.f32.mrb[0].mxu0
      %v3524 = vpop.f32.mrb[0].mxu0
      %v3525 = vadd.f32 %v3364, %v3524
      %v3526 = vpop.f32.mrb[0].mxu0
      %3527 = vmatprep.mubr.bf16.mxu0 0
      %3528 = vmatmul.mubr.bf16.gmra.mrb[0].mxu0 %v2564
      %v3529 = vpop.f32.mrb[0].mxu0
      %v3530 = vadd.f32 %v3369, %v3529
      %v3531 = vpop.f32.mrb[0].mxu0
      %v3532 = vpop.f32.mrb[0].mxu0
      %v3533 = vadd.f32 %v3372, %v3532
      %v3534 = vpop.f32.mrb[0].mxu0
      %3535 = vmatprep.mubr.bf16.mxu0 0
      %3536 = vmatmul.mubr.bf16.gmra.mrb[0].mxu0 %v2565
      %v3537 = vpop.f32.mrb[0].mxu0
      %v3538 = vadd.f32 %v3377, %v3537
      %v3539 = vpop.f32.mrb[0].mxu0
      %v3540 = vpop.f32.mrb[0].mxu0
      %v3541 = vadd.f32 %v3380, %v3540
      %v3542 = vpop.f32.mrb[0].mxu0
      %3543 = vmatprep.mubr.bf16.mxu0 0
      %3544 = vmatmul.mubr.bf16.gmra.mrb[0].mxu0 %v2566
      %v3545 = vpop.f32.mrb[0].mxu0
      %v3546 = vadd.f32 %v3385, %v3545
      %v3547 = vpop.f32.mrb[0].mxu0
      %v3548 = vpop.f32.mrb[0].mxu0
      %v3549 = vadd.f32 %v3388, %v3548
      %v3550 = vpop.f32.mrb[0].mxu0
      %3551 = vmatprep.mubr.bf16.mxu0 0
      %3552 = vmatmul.mubr.bf16.gmra.mrb[0].mxu0 %v2567
      %v3553 = vpop.f32.mrb[0].mxu0
      %v3554 = vadd.f32 %v3393, %v3553
      %v3555 = vpop.f32.mrb[0].mxu0
      %v3556 = vpop.f32.mrb[0].mxu0
      %v3557 = vadd.f32 %v3396, %v3556
      %v3558 = vpop.f32.mrb[0].mxu0
      %3559 = vmatprep.mubr.bf16.mxu0 0
      %3560 = vmatmul.mubr.bf16.gmra.mrb[0].mxu0 %v2568
      %v3561 = vpop.f32.mrb[0].mxu0
      %v3562 = vadd.f32 %v3401, %v3561
      %v3563 = vpop.f32.mrb[0].mxu0
      %v3564 = vpop.f32.mrb[0].mxu0
      %v3565 = vadd.f32 %v3404, %v3564
      %v3566 = vpop.f32.mrb[0].mxu0
      %3567 = vmatprep.mubr.bf16.mxu0 0
      %3568 = vmatmul.mubr.bf16.gmra.mrb[0].mxu0 %v2569
      %v3569 = vpop.f32.mrb[0].mxu0
      %v3570 = vadd.f32 %v3409, %v3569
      %v3571 = vpop.f32.mrb[0].mxu0
      %v3572 = vpop.f32.mrb[0].mxu0
      %v3573 = vadd.f32 %v3412, %v3572
      %v3574 = vpop.f32.mrb[0].mxu0
      %3575 = vmatprep.mubr.bf16.mxu0 0
      %3576 = vmatmul.mubr.bf16.gmra.mrb[0].mxu0 %v2570
      %v3577 = vpop.f32.mrb[0].mxu0
      %v3578 = vadd.f32 %v3417, %v3577
      %v3579 = vpop.f32.mrb[0].mxu0
      %v3580 = vpop.f32.mrb[0].mxu0
      %v3581 = vadd.f32 %v3420, %v3580
      %v3582 = vpop.f32.mrb[0].mxu0
      %3583 = vmatprep.mubr.bf16.mxu0 0
      %3584 = vmatmul.mubr.bf16.gmra.mrb[0].mxu0 %v2571
      %v3585 = vpop.f32.mrb[0].mxu0
      %v3586 = vadd.f32 %v3425, %v3585
      %v3587 = vpop.f32.mrb[0].mxu0
      %v3588 = vpop.f32.mrb[0].mxu0
      %v3589 = vadd.f32 %v3428, %v3588
      %v3590 = vpop.f32.mrb[0].mxu0
      %3591 = vmatprep.mubr.bf16.mxu0 0
      %3592 = vmatmul.mubr.bf16.gmra.mrb[0].mxu0 %v2572
      %v3593 = vpop.f32.mrb[0].mxu0
      %v3594 = vadd.f32 %v3433, %v3593
      %v3595 = vpop.f32.mrb[0].mxu0
      %v3596 = vpop.f32.mrb[0].mxu0
      %v3597 = vadd.f32 %v3436, %v3596
      %v3598 = vpop.f32.mrb[0].mxu0
      %3599 = vmatprep.mubr.bf16.mxu0 0
      %3600 = vmatmul.mubr.bf16.gmra.mrb[0].mxu0 %v2573
      %v3601 = vpop.f32.mrb[0].mxu0
      %v3602 = vadd.f32 %v3441, %v3601
      %v3603 = vpop.f32.mrb[0].mxu0
      %v3604 = vpop.f32.mrb[0].mxu0
      %v3605 = vadd.f32 %v3444, %v3604
      %v3606 = vpop.f32.mrb[0].mxu0
      %3607 = vmatprep.mubr.bf16.mxu0 0
      %3608 = vmatmul.mubr.bf16.gmra.mrb[0].mxu0 %v2574
      %v3609 = vpop.f32.mrb[0].mxu0
      %v3610 = vadd.f32 %v3449, %v3609
      %v3611 = vpop.f32.mrb[0].mxu0
      %v3612 = vpop.f32.mrb[0].mxu0
      %v3613 = vadd.f32 %v3452, %v3612
      %v3614 = vpop.f32.mrb[0].mxu0
      %3615 = vmatprep.mubr.bf16.mxu0 0
      %3616 = vmatmul.mubr.bf16.gmra.mrb[0].mxu0 %v2575
      %v3617 = vpop.f32.mrb[0].mxu0
      %v3618 = vadd.f32 %v3457, %v3617
      %v3619 = vpop.f32.mrb[0].mxu0
      %v3620 = vpop.f32.mrb[0].mxu0
      %v3621 = vadd.f32 %v3460, %v3620
      %v3622 = vpop.f32.mrb[0].mxu0
      %3623 = vmatprep.mubr.bf16.mxu0 0
      %3624 = vmatmul.mubr.bf16.gmra.mrb[0].mxu0 %v2576
      %v3625 = vpop.f32.mrb[0].mxu0
      %v3626 = vadd.f32 %v3465, %v3625
      %v3627 = vpop.f32.mrb[0].mxu0
      %v3628 = vpop.f32.mrb[0].mxu0
      %v3629 = vadd.f32 %v3468, %v3628
      %v3630 = vpop.f32.mrb[0].mxu0
      %3631 = vmatprep.mubr.bf16.mxu0 0
      %3632 = vmatmul.mubr.bf16.gmra.mrb[0].mxu0 %v2577
      %v3633 = vpop.f32.mrb[0].mxu0
      %v3634 = vadd.f32 %v3473, %v3633
      %v3635 = vpop.f32.mrb[0].mxu0
      %v3636 = vpop.f32.mrb[0].mxu0
      %v3637 = vadd.f32 %v3476, %v3636
      %v3638 = vpop.f32.mrb[0].mxu0
      %3639 = vmatprep.mubr.bf16.mxu0 0
      %3640 = vmatmul.mubr.bf16.gmra.mrb[0].mxu0 %v2578
      %v3641 = vpop.f32.mrb[0].mxu0
      %v3642 = vadd.f32 %v3481, %v3641
      %v3643 = vpop.f32.mrb[0].mxu0
      %v3644 = vpop.f32.mrb[0].mxu0
      %v3645 = vadd.f32 %v3484, %v3644
      %v3646 = vpop.f32.mrb[0].mxu0
      %3647 = vdwg.mxu0
      %v3648 = vadd.f32 %v3102, %v3522
      %v3649 = vadd.f32 %v3103, %v3525
      %v3650 = vadd.f32 %v3104, %v3530
      %v3651 = vadd.f32 %v3105, %v3533
      %v3652 = vadd.f32 %v3106, %v3538
      %v3653 = vadd.f32 %v3107, %v3541
      %v3654 = vadd.f32 %v3108, %v3546
      %v3655 = vadd.f32 %v3109, %v3549
      %v3656 = vadd.f32 %v3110, %v3554
      %v3657 = vadd.f32 %v3111, %v3557
      %v3658 = vadd.f32 %v3112, %v3562
      %v3659 = vadd.f32 %v3113, %v3565
      %v3660 = vadd.f32 %v3114, %v3570
      %v3661 = vadd.f32 %v3115, %v3573
      %v3662 = vadd.f32 %v3116, %v3578
      %v3663 = vadd.f32 %v3117, %v3581
      %v3664 = vadd.f32 %v3118, %v3586
      %v3665 = vadd.f32 %v3119, %v3589
      %v3666 = vadd.f32 %v3120, %v3594
      %v3667 = vadd.f32 %v3121, %v3597
      %v3668 = vadd.f32 %v3122, %v3602
      %v3669 = vadd.f32 %v3123, %v3605
      %v3670 = vadd.f32 %v3124, %v3610
      %v3671 = vadd.f32 %v3125, %v3613
      %v3672 = vadd.f32 %v3126, %v3618
      %v3673 = vadd.f32 %v3127, %v3621
      %v3674 = vadd.f32 %v3128, %v3626
      %v3675 = vadd.f32 %v3129, %v3629
      %v3676 = vadd.f32 %v3130, %v3634
      %v3677 = vadd.f32 %v3131, %v3637
      %v3678 = vadd.f32 %v3132, %v3642
      %v3679 = vadd.f32 %v3133, %v3645
      %v3680 = vld [vmem:[%s3 + $0x180] sm:$0xf]
      %v3681 = vld [vmem:[%s3 + $0x184] sm:$0xf]
      %v3682 = vld [vmem:[%s3 + $0x188] sm:$0xf]
      %v3683 = vld [vmem:[%s3 + $0x18c] sm:$0xf]
      %v3684 = vld [vmem:[%s3 + $0x190] sm:$0xf]
      %v3685 = vld [vmem:[%s3 + $0x194] sm:$0xf]
      %v3686 = vld [vmem:[%s3 + $0x198] sm:$0xf]
      %v3687 = vld [vmem:[%s3 + $0x19c] sm:$0xf]
      %v3688 = vld [vmem:[%s3 + $0x1a0] sm:$0xf]
      %v3689 = vld [vmem:[%s3 + $0x1a4] sm:$0xf]
      %v3690 = vld [vmem:[%s3 + $0x1a8] sm:$0xf]
      %v3691 = vld [vmem:[%s3 + $0x1ac] sm:$0xf]
      %v3692 = vld [vmem:[%s3 + $0x1b0] sm:$0xf]
      %v3693 = vld [vmem:[%s3 + $0x1b4] sm:$0xf]
      %v3694 = vld [vmem:[%s3 + $0x1b8] sm:$0xf]
      %v3695 = vld [vmem:[%s3 + $0x1bc] sm:$0xf]
      %v3696 = vld [vmem:[%s3 + $0x1c0] sm:$0xf]
      %v3697 = vld [vmem:[%s3 + $0x1c4] sm:$0xf]
      %v3698 = vld [vmem:[%s3 + $0x1c8] sm:$0xf]
      %v3699 = vld [vmem:[%s3 + $0x1cc] sm:$0xf]
      %v3700 = vld [vmem:[%s3 + $0x1d0] sm:$0xf]
      %v3701 = vld [vmem:[%s3 + $0x1d4] sm:$0xf]
      %v3702 = vld [vmem:[%s3 + $0x1d8] sm:$0xf]
      %v3703 = vld [vmem:[%s3 + $0x1dc] sm:$0xf]
      %v3704 = vld [vmem:[%s3 + $0x1e0] sm:$0xf]
      %v3705 = vld [vmem:[%s3 + $0x1e4] sm:$0xf]
      %v3706 = vld [vmem:[%s3 + $0x1e8] sm:$0xf]
      %v3707 = vld [vmem:[%s3 + $0x1ec] sm:$0xf]
      %v3708 = vld [vmem:[%s3 + $0x1f0] sm:$0xf]
      %v3709 = vld [vmem:[%s3 + $0x1f4] sm:$0xf]
      %v3710 = vld [vmem:[%s3 + $0x1f8] sm:$0xf]
      %v3711 = vld [vmem:[%s3 + $0x1fc] sm:$0xf]
      %v3712 = vld [vmem:[%s3 + $0x200] sm:$0xf]
      %v3713 = vld [vmem:[%s3 + $0x204] sm:$0xf]
      %v3714 = vld [vmem:[%s3 + $0x208] sm:$0xf]
      %v3715 = vld [vmem:[%s3 + $0x20c] sm:$0xf]
      %v3716 = vld [vmem:[%s3 + $0x210] sm:$0xf]
      %v3717 = vld [vmem:[%s3 + $0x214] sm:$0xf]
      %v3718 = vld [vmem:[%s3 + $0x218] sm:$0xf]
      %v3719 = vld [vmem:[%s3 + $0x21c] sm:$0xf]
      %v3720 = vld [vmem:[%s3 + $0x220] sm:$0xf]
      %v3721 = vld [vmem:[%s3 + $0x224] sm:$0xf]
      %v3722 = vld [vmem:[%s3 + $0x228] sm:$0xf]
      %v3723 = vld [vmem:[%s3 + $0x22c] sm:$0xf]
      %v3724 = vld [vmem:[%s3 + $0x230] sm:$0xf]
      %v3725 = vld [vmem:[%s3 + $0x234] sm:$0xf]
      %v3726 = vld [vmem:[%s3 + $0x238] sm:$0xf]
      %v3727 = vld [vmem:[%s3 + $0x23c] sm:$0xf]
      %v3776 = vunpack.c.l.b16 %v3680
      %v3777 = vunpack.c.l.b16 %v3681
      %v3778 = vunpack.c.l.b16 %v3682
      %v3779 = vunpack.c.l.b16 %v3683
      %v3780 = vunpack.c.l.b16 %v3684
      %v3781 = vunpack.c.l.b16 %v3685
      %v3782 = vunpack.c.l.b16 %v3686
      %v3783 = vunpack.c.l.b16 %v3687
      %v3784 = vunpack.c.l.b16 %v3688
      %v3785 = vunpack.c.l.b16 %v3689
      %v3786 = vunpack.c.l.b16 %v3690
      %v3787 = vunpack.c.l.b16 %v3691
      %v3788 = vunpack.c.l.b16 %v3692
      %v3789 = vunpack.c.l.b16 %v3693
      %v3790 = vunpack.c.l.b16 %v3694
      %v3791 = vunpack.c.l.b16 %v3695
      %v3792 = vunpack.c.l.b16 %v3696
      %v3793 = vunpack.c.l.b16 %v3697
      %v3794 = vunpack.c.l.b16 %v3698
      %v3795 = vunpack.c.l.b16 %v3699
      %v3796 = vunpack.c.l.b16 %v3700
      %v3797 = vunpack.c.l.b16 %v3701
      %v3798 = vunpack.c.l.b16 %v3702
      %v3799 = vunpack.c.l.b16 %v3703
      %v3800 = vunpack.c.l.b16 %v3704
      %v3801 = vunpack.c.l.b16 %v3705
      %v3802 = vunpack.c.l.b16 %v3706
      %v3803 = vunpack.c.l.b16 %v3707
      %v3804 = vunpack.c.l.b16 %v3708
      %v3805 = vunpack.c.l.b16 %v3709
      %v3806 = vunpack.c.l.b16 %v3710
      %v3807 = vunpack.c.l.b16 %v3711
      %v3808 = vunpack.c.l.b16 %v3712
      %v3809 = vunpack.c.l.b16 %v3713
      %v3810 = vunpack.c.l.b16 %v3714
      %v3811 = vunpack.c.l.b16 %v3715
      %v3812 = vunpack.c.l.b16 %v3716
      %v3813 = vunpack.c.l.b16 %v3717
      %v3814 = vunpack.c.l.b16 %v3718
      %v3815 = vunpack.c.l.b16 %v3719
      %v3816 = vunpack.c.l.b16 %v3720
      %v3817 = vunpack.c.l.b16 %v3721
      %v3818 = vunpack.c.l.b16 %v3722
      %v3819 = vunpack.c.l.b16 %v3723
      %v3820 = vunpack.c.l.b16 %v3724
      %v3821 = vunpack.c.l.b16 %v3725
      %v3822 = vunpack.c.l.b16 %v3726
      %v3823 = vunpack.c.l.b16 %v3727
      %v3824 = vpack.c.b16 %v3777, %v3776
      %v3825 = vpack.c.b16 %v3779, %v3778
      %v3826 = vpack.c.b16 %v3781, %v3780
      %v3827 = vpack.c.b16 %v3783, %v3782
      %v3828 = vpack.c.b16 %v3785, %v3784
      %v3829 = vpack.c.b16 %v3787, %v3786
      %v3830 = vpack.c.b16 %v3789, %v3788
      %v3831 = vpack.c.b16 %v3791, %v3790
      %v3832 = vpack.c.b16 %v3793, %v3792
      %v3833 = vpack.c.b16 %v3795, %v3794
      %v3834 = vpack.c.b16 %v3797, %v3796
      %v3835 = vpack.c.b16 %v3799, %v3798
      %v3836 = vpack.c.b16 %v3801, %v3800
      %v3837 = vpack.c.b16 %v3803, %v3802
      %v3838 = vpack.c.b16 %v3805, %v3804
      %v3839 = vpack.c.b16 %v3807, %v3806
      %v3840 = vpack.c.b16 %v3809, %v3808
      %v3841 = vpack.c.b16 %v3811, %v3810
      %v3842 = vpack.c.b16 %v3813, %v3812
      %v3843 = vpack.c.b16 %v3815, %v3814
      %v3844 = vpack.c.b16 %v3817, %v3816
      %v3845 = vpack.c.b16 %v3819, %v3818
      %v3846 = vpack.c.b16 %v3821, %v3820
      %v3847 = vpack.c.b16 %v3823, %v3822
      %3872 = vmatprep.subr.bf16.mxu0 0
      %3873 = vmatpush1.bf16.msra.mxu0 %v3824
      %3874 = vmatprep.subr.bf16.mxu0 0
      %3875 = vmatpush1.bf16.msra.mxu0 %v3825
      %3876 = vmatprep.subr.bf16.mxu0 0
      %3877 = vmatpush1.bf16.msra.mxu0 %v3826
      %3878 = vmatprep.subr.bf16.mxu0 0
      %3879 = vmatpush1.bf16.msra.mxu0 %v3827
      %3880 = vmatprep.subr.bf16.mxu0 0
      %3881 = vmatpush1.bf16.msra.mxu0 %v3828
      %3882 = vmatprep.subr.bf16.mxu0 0
      %3883 = vmatpush1.bf16.msra.mxu0 %v3829
      %3884 = vmatprep.subr.bf16.mxu0 0
      %3885 = vmatpush1.bf16.msra.mxu0 %v3830
      %3886 = vmatprep.subr.bf16.mxu0 0
      %3887 = vmatpush1.bf16.msra.mxu0 %v3831
      %3888 = vmatprep.subr.bf16.mxu0 0
      %3889 = vmatpush1.bf16.msra.mxu0 %v3832
      %3890 = vmatprep.subr.bf16.mxu0 0
      %3891 = vmatpush1.bf16.msra.mxu0 %v3833
      %3892 = vmatprep.subr.bf16.mxu0 0
      %3893 = vmatpush1.bf16.msra.mxu0 %v3834
      %3894 = vmatprep.subr.bf16.mxu0 0
      %3895 = vmatpush1.bf16.msra.mxu0 %v3835
      %3896 = vmatprep.subr.bf16.mxu0 0
      %3897 = vmatpush1.bf16.msra.mxu0 %v3836
      %3898 = vmatprep.subr.bf16.mxu0 0
      %3899 = vmatpush1.bf16.msra.mxu0 %v3837
      %3900 = vmatprep.subr.bf16.mxu0 0
      %3901 = vmatpush1.bf16.msra.mxu0 %v3838
      %3902 = vmatprep.subr.bf16.mxu0 0
      %3903 = vmatpush1.bf16.msra.mxu0 %v3839
      %3904 = vmatprep.mubr.bf16.mxu0 %v2505
      %3905 = vmatmul.mubr.bf16.gmra.mrb[0].mxu0 %v2445
      %v3906 = vpop.f32.mrb[0].mxu0
      %v3907 = vadd.f32 0.0, %v3906
      %v3908 = vpop.f32.mrb[0].mxu0
      %v3909 = vpop.f32.mrb[0].mxu0
      %v3910 = vadd.f32 0.0, %v3909
      %v3911 = vpop.f32.mrb[0].mxu0
      %3912 = vmatprep.mubr.bf16.mxu0 %v2506
      %3913 = vmatmul.mubr.bf16.gmra.mrb[0].mxu0 %v2446
      %v3914 = vpop.f32.mrb[0].mxu0
      %v3915 = vadd.f32 0.0, %v3914
      %v3916 = vpop.f32.mrb[0].mxu0
      %v3917 = vpop.f32.mrb[0].mxu0
      %v3918 = vadd.f32 0.0, %v3917
      %v3919 = vpop.f32.mrb[0].mxu0
      %3920 = vmatprep.mubr.bf16.mxu0 %v2507
      %3921 = vmatmul.mubr.bf16.gmra.mrb[0].mxu0 %v2447
      %v3922 = vpop.f32.mrb[0].mxu0
      %v3923 = vadd.f32 0.0, %v3922
      %v3924 = vpop.f32.mrb[0].mxu0
      %v3925 = vpop.f32.mrb[0].mxu0
      %v3926 = vadd.f32 0.0, %v3925
      %v3927 = vpop.f32.mrb[0].mxu0
      %3928 = vmatprep.mubr.bf16.mxu0 %v2508
      %3929 = vmatmul.mubr.bf16.gmra.mrb[0].mxu0 %v2448
      %v3930 = vpop.f32.mrb[0].mxu0
      %v3931 = vadd.f32 0.0, %v3930
      %v3932 = vpop.f32.mrb[0].mxu0
      %v3933 = vpop.f32.mrb[0].mxu0
      %v3934 = vadd.f32 0.0, %v3933
      %v3935 = vpop.f32.mrb[0].mxu0
      %3936 = vmatprep.mubr.bf16.mxu0 %v2509
      %3937 = vmatmul.mubr.bf16.gmra.mrb[0].mxu0 %v2449
      %v3938 = vpop.f32.mrb[0].mxu0
      %v3939 = vadd.f32 0.0, %v3938
      %v3940 = vpop.f32.mrb[0].mxu0
      %v3941 = vpop.f32.mrb[0].mxu0
      %v3942 = vadd.f32 0.0, %v3941
      %v3943 = vpop.f32.mrb[0].mxu0
      %3944 = vmatprep.mubr.bf16.mxu0 %v2510
      %3945 = vmatmul.mubr.bf16.gmra.mrb[0].mxu0 %v2450
      %v3946 = vpop.f32.mrb[0].mxu0
      %v3947 = vadd.f32 0.0, %v3946
      %v3948 = vpop.f32.mrb[0].mxu0
      %v3949 = vpop.f32.mrb[0].mxu0
      %v3950 = vadd.f32 0.0, %v3949
      %v3951 = vpop.f32.mrb[0].mxu0
      %3952 = vmatprep.mubr.bf16.mxu0 %v2511
      %3953 = vmatmul.mubr.bf16.gmra.mrb[0].mxu0 %v2451
      %v3954 = vpop.f32.mrb[0].mxu0
      %v3955 = vadd.f32 0.0, %v3954
      %v3956 = vpop.f32.mrb[0].mxu0
      %v3957 = vpop.f32.mrb[0].mxu0
      %v3958 = vadd.f32 0.0, %v3957
      %v3959 = vpop.f32.mrb[0].mxu0
      %3960 = vmatprep.mubr.bf16.mxu0 %v2512
      %3961 = vmatmul.mubr.bf16.gmra.mrb[0].mxu0 %v2452
      %v3962 = vpop.f32.mrb[0].mxu0
      %v3963 = vadd.f32 0.0, %v3962
      %v3964 = vpop.f32.mrb[0].mxu0
      %v3965 = vpop.f32.mrb[0].mxu0
      %v3966 = vadd.f32 0.0, %v3965
      %v3967 = vpop.f32.mrb[0].mxu0
      %3968 = vmatprep.mubr.bf16.mxu0 %v2513
      %3969 = vmatmul.mubr.bf16.gmra.mrb[0].mxu0 %v2453
      %v3970 = vpop.f32.mrb[0].mxu0
      %v3971 = vadd.f32 0.0, %v3970
      %v3972 = vpop.f32.mrb[0].mxu0
      %v3973 = vpop.f32.mrb[0].mxu0
      %v3974 = vadd.f32 0.0, %v3973
      %v3975 = vpop.f32.mrb[0].mxu0
      %3976 = vmatprep.mubr.bf16.mxu0 %v2514
      %3977 = vmatmul.mubr.bf16.gmra.mrb[0].mxu0 %v2454
      %v3978 = vpop.f32.mrb[0].mxu0
      %v3979 = vadd.f32 0.0, %v3978
      %v3980 = vpop.f32.mrb[0].mxu0
      %v3981 = vpop.f32.mrb[0].mxu0
      %v3982 = vadd.f32 0.0, %v3981
      %v3983 = vpop.f32.mrb[0].mxu0
      %3984 = vmatprep.mubr.bf16.mxu0 %v2515
      %3985 = vmatmul.mubr.bf16.gmra.mrb[0].mxu0 %v2455
      %v3986 = vpop.f32.mrb[0].mxu0
      %v3987 = vadd.f32 0.0, %v3986
      %v3988 = vpop.f32.mrb[0].mxu0
      %v3989 = vpop.f32.mrb[0].mxu0
      %v3990 = vadd.f32 0.0, %v3989
      %v3991 = vpop.f32.mrb[0].mxu0
      %3992 = vmatprep.mubr.bf16.mxu0 %v2516
      %3993 = vmatmul.mubr.bf16.gmra.mrb[0].mxu0 %v2456
      %v3994 = vpop.f32.mrb[0].mxu0
      %v3995 = vadd.f32 0.0, %v3994
      %v3996 = vpop.f32.mrb[0].mxu0
      %v3997 = vpop.f32.mrb[0].mxu0
      %v3998 = vadd.f32 0.0, %v3997
      %v3999 = vpop.f32.mrb[0].mxu0
      %4000 = vmatprep.mubr.bf16.mxu0 %v2517
      %4001 = vmatmul.mubr.bf16.gmra.mrb[0].mxu0 %v2457
      %v4002 = vpop.f32.mrb[0].mxu0
      %v4003 = vadd.f32 0.0, %v4002
      %v4004 = vpop.f32.mrb[0].mxu0
      %v4005 = vpop.f32.mrb[0].mxu0
      %v4006 = vadd.f32 0.0, %v4005
      %v4007 = vpop.f32.mrb[0].mxu0
      %4008 = vmatprep.mubr.bf16.mxu0 %v2518
      %4009 = vmatmul.mubr.bf16.gmra.mrb[0].mxu0 %v2458
      %v4010 = vpop.f32.mrb[0].mxu0
      %v4011 = vadd.f32 0.0, %v4010
      %v4012 = vpop.f32.mrb[0].mxu0
      %v4013 = vpop.f32.mrb[0].mxu0
      %v4014 = vadd.f32 0.0, %v4013
      %v4015 = vpop.f32.mrb[0].mxu0
      %4016 = vmatprep.mubr.bf16.mxu0 %v2519
      %4017 = vmatmul.mubr.bf16.gmra.mrb[0].mxu0 %v2459
      %v4018 = vpop.f32.mrb[0].mxu0
      %v4019 = vadd.f32 0.0, %v4018
      %v4020 = vpop.f32.mrb[0].mxu0
      %v4021 = vpop.f32.mrb[0].mxu0
      %v4022 = vadd.f32 0.0, %v4021
      %v4023 = vpop.f32.mrb[0].mxu0
      %4024 = vmatprep.mubr.bf16.mxu0 %v2520
      %4025 = vmatmul.mubr.bf16.gmra.mrb[0].mxu0 %v2460
      %v4026 = vpop.f32.mrb[0].mxu0
      %v4027 = vadd.f32 0.0, %v4026
      %v4028 = vpop.f32.mrb[0].mxu0
      %v4029 = vpop.f32.mrb[0].mxu0
      %v4030 = vadd.f32 0.0, %v4029
      %v4031 = vpop.f32.mrb[0].mxu0
      %4032 = vdwg.mxu0
      %4033 = vmatprep.subr.bf16.mxu0 0
      %4034 = vmatpush1.bf16.msra.mxu0 %v3840
      %4035 = vmatprep.subr.bf16.mxu0 0
      %4036 = vmatpush1.bf16.msra.mxu0 %v3841
      %4037 = vmatprep.subr.bf16.mxu0 0
      %4038 = vmatpush1.bf16.msra.mxu0 %v3842
      %4039 = vmatprep.subr.bf16.mxu0 0
      %4040 = vmatpush1.bf16.msra.mxu0 %v3843
      %4041 = vmatprep.subr.bf16.mxu0 0
      %4042 = vmatpush1.bf16.msra.mxu0 %v3844
      %4043 = vmatprep.subr.bf16.mxu0 0
      %4044 = vmatpush1.bf16.msra.mxu0 %v3845
      %4045 = vmatprep.subr.bf16.mxu0 0
      %4046 = vmatpush1.bf16.msra.mxu0 %v3846
      %4047 = vmatprep.subr.bf16.mxu0 0
      %4048 = vmatpush1.bf16.msra.mxu0 %v3847
      %4049 = vmatprep.subr.bf16.mxu0 0
      %4050 = vmatpush1.bf16.msra.mxu0 0
      %4051 = vmatprep.subr.bf16.mxu0 0
      %4052 = vmatpush1.bf16.msra.mxu0 0
      %4053 = vmatprep.subr.bf16.mxu0 0
      %4054 = vmatpush1.bf16.msra.mxu0 0
      %4055 = vmatprep.subr.bf16.mxu0 0
      %4056 = vmatpush1.bf16.msra.mxu0 0
      %4057 = vmatprep.subr.bf16.mxu0 0
      %4058 = vmatpush1.bf16.msra.mxu0 0
      %4059 = vmatprep.subr.bf16.mxu0 0
      %4060 = vmatpush1.bf16.msra.mxu0 0
      %4061 = vmatprep.subr.bf16.mxu0 0
      %4062 = vmatpush1.bf16.msra.mxu0 0
      %4063 = vmatprep.subr.bf16.mxu0 0
      %4064 = vmatpush1.bf16.msra.mxu0 0
      %4065 = vmatprep.mubr.bf16.mxu0 0
      %4066 = vmatmul.mubr.bf16.gmra.mrb[0].mxu0 %v2565
      %v4067 = vpop.f32.mrb[0].mxu0
      %v4068 = vadd.f32 %v3907, %v4067
      %v4069 = vpop.f32.mrb[0].mxu0
      %v4070 = vpop.f32.mrb[0].mxu0
      %v4071 = vadd.f32 %v3910, %v4070
      %v4072 = vpop.f32.mrb[0].mxu0
      %4073 = vmatprep.mubr.bf16.mxu0 0
      %4074 = vmatmul.mubr.bf16.gmra.mrb[0].mxu0 %v2566
      %v4075 = vpop.f32.mrb[0].mxu0
      %v4076 = vadd.f32 %v3915, %v4075
      %v4077 = vpop.f32.mrb[0].mxu0
      %v4078 = vpop.f32.mrb[0].mxu0
      %v4079 = vadd.f32 %v3918, %v4078
      %v4080 = vpop.f32.mrb[0].mxu0
      %4081 = vmatprep.mubr.bf16.mxu0 0
      %4082 = vmatmul.mubr.bf16.gmra.mrb[0].mxu0 %v2567
      %v4083 = vpop.f32.mrb[0].mxu0
      %v4084 = vadd.f32 %v3923, %v4083
      %v4085 = vpop.f32.mrb[0].mxu0
      %v4086 = vpop.f32.mrb[0].mxu0
      %v4087 = vadd.f32 %v3926, %v4086
      %v4088 = vpop.f32.mrb[0].mxu0
      %4089 = vmatprep.mubr.bf16.mxu0 0
      %4090 = vmatmul.mubr.bf16.gmra.mrb[0].mxu0 %v2568
      %v4091 = vpop.f32.mrb[0].mxu0
      %v4092 = vadd.f32 %v3931, %v4091
      %v4093 = vpop.f32.mrb[0].mxu0
      %v4094 = vpop.f32.mrb[0].mxu0
      %v4095 = vadd.f32 %v3934, %v4094
      %v4096 = vpop.f32.mrb[0].mxu0
      %4097 = vmatprep.mubr.bf16.mxu0 0
      %4098 = vmatmul.mubr.bf16.gmra.mrb[0].mxu0 %v2569
      %v4099 = vpop.f32.mrb[0].mxu0
      %v4100 = vadd.f32 %v3939, %v4099
      %v4101 = vpop.f32.mrb[0].mxu0
      %v4102 = vpop.f32.mrb[0].mxu0
      %v4103 = vadd.f32 %v3942, %v4102
      %v4104 = vpop.f32.mrb[0].mxu0
      %4105 = vmatprep.mubr.bf16.mxu0 0
      %4106 = vmatmul.mubr.bf16.gmra.mrb[0].mxu0 %v2570
      %v4107 = vpop.f32.mrb[0].mxu0
      %v4108 = vadd.f32 %v3947, %v4107
      %v4109 = vpop.f32.mrb[0].mxu0
      %v4110 = vpop.f32.mrb[0].mxu0
      %v4111 = vadd.f32 %v3950, %v4110
      %v4112 = vpop.f32.mrb[0].mxu0
      %4113 = vmatprep.mubr.bf16.mxu0 0
      %4114 = vmatmul.mubr.bf16.gmra.mrb[0].mxu0 %v2571
      %v4115 = vpop.f32.mrb[0].mxu0
      %v4116 = vadd.f32 %v3955, %v4115
      %v4117 = vpop.f32.mrb[0].mxu0
      %v4118 = vpop.f32.mrb[0].mxu0
      %v4119 = vadd.f32 %v3958, %v4118
      %v4120 = vpop.f32.mrb[0].mxu0
      %4121 = vmatprep.mubr.bf16.mxu0 0
      %4122 = vmatmul.mubr.bf16.gmra.mrb[0].mxu0 %v2572
      %v4123 = vpop.f32.mrb[0].mxu0
      %v4124 = vadd.f32 %v3963, %v4123
      %v4125 = vpop.f32.mrb[0].mxu0
      %v4126 = vpop.f32.mrb[0].mxu0
      %v4127 = vadd.f32 %v3966, %v4126
      %v4128 = vpop.f32.mrb[0].mxu0
      %4129 = vmatprep.mubr.bf16.mxu0 0
      %4130 = vmatmul.mubr.bf16.gmra.mrb[0].mxu0 %v2573
      %v4131 = vpop.f32.mrb[0].mxu0
      %v4132 = vadd.f32 %v3971, %v4131
      %v4133 = vpop.f32.mrb[0].mxu0
      %v4134 = vpop.f32.mrb[0].mxu0
      %v4135 = vadd.f32 %v3974, %v4134
      %v4136 = vpop.f32.mrb[0].mxu0
      %4137 = vmatprep.mubr.bf16.mxu0 0
      %4138 = vmatmul.mubr.bf16.gmra.mrb[0].mxu0 %v2574
      %v4139 = vpop.f32.mrb[0].mxu0
      %v4140 = vadd.f32 %v3979, %v4139
      %v4141 = vpop.f32.mrb[0].mxu0
      %v4142 = vpop.f32.mrb[0].mxu0
      %v4143 = vadd.f32 %v3982, %v4142
      %v4144 = vpop.f32.mrb[0].mxu0
      %4145 = vmatprep.mubr.bf16.mxu0 0
      %4146 = vmatmul.mubr.bf16.gmra.mrb[0].mxu0 %v2575
      %v4147 = vpop.f32.mrb[0].mxu0
      %v4148 = vadd.f32 %v3987, %v4147
      %v4149 = vpop.f32.mrb[0].mxu0
      %v4150 = vpop.f32.mrb[0].mxu0
      %v4151 = vadd.f32 %v3990, %v4150
      %v4152 = vpop.f32.mrb[0].mxu0
      %4153 = vmatprep.mubr.bf16.mxu0 0
      %4154 = vmatmul.mubr.bf16.gmra.mrb[0].mxu0 %v2576
      %v4155 = vpop.f32.mrb[0].mxu0
      %v4156 = vadd.f32 %v3995, %v4155
      %v4157 = vpop.f32.mrb[0].mxu0
      %v4158 = vpop.f32.mrb[0].mxu0
      %v4159 = vadd.f32 %v3998, %v4158
      %v4160 = vpop.f32.mrb[0].mxu0
      %4161 = vmatprep.mubr.bf16.mxu0 0
      %4162 = vmatmul.mubr.bf16.gmra.mrb[0].mxu0 %v2577
      %v4163 = vpop.f32.mrb[0].mxu0
      %v4164 = vadd.f32 %v4003, %v4163
      %v4165 = vpop.f32.mrb[0].mxu0
      %v4166 = vpop.f32.mrb[0].mxu0
      %v4167 = vadd.f32 %v4006, %v4166
      %v4168 = vpop.f32.mrb[0].mxu0
      %4169 = vmatprep.mubr.bf16.mxu0 0
      %4170 = vmatmul.mubr.bf16.gmra.mrb[0].mxu0 %v2578
      %v4171 = vpop.f32.mrb[0].mxu0
      %v4172 = vadd.f32 %v4011, %v4171
      %v4173 = vpop.f32.mrb[0].mxu0
      %v4174 = vpop.f32.mrb[0].mxu0
      %v4175 = vadd.f32 %v4014, %v4174
      %v4176 = vpop.f32.mrb[0].mxu0
      %4177 = vmatprep.mubr.bf16.mxu0 0
      %4178 = vmatmul.mubr.bf16.gmra.mrb[0].mxu0 %v2579
      %v4179 = vpop.f32.mrb[0].mxu0
      %v4180 = vadd.f32 %v4019, %v4179
      %v4181 = vpop.f32.mrb[0].mxu0
      %v4182 = vpop.f32.mrb[0].mxu0
      %v4183 = vadd.f32 %v4022, %v4182
      %v4184 = vpop.f32.mrb[0].mxu0
      %4185 = vmatprep.mubr.bf16.mxu0 0
      %4186 = vmatmul.mubr.bf16.gmra.mrb[0].mxu0 %v2580
      %v4187 = vpop.f32.mrb[0].mxu0
      %v4188 = vadd.f32 %v4027, %v4187
      %v4189 = vpop.f32.mrb[0].mxu0
      %v4190 = vpop.f32.mrb[0].mxu0
      %v4191 = vadd.f32 %v4030, %v4190
      %v4192 = vpop.f32.mrb[0].mxu0
      %4193 = vdwg.mxu0
      %v4194 = vadd.f32 %v3648, %v4068
      %v4195 = vadd.f32 %v3649, %v4071
      %v4196 = vadd.f32 %v3650, %v4076
      %v4197 = vadd.f32 %v3651, %v4079
      %v4198 = vadd.f32 %v3652, %v4084
      %v4199 = vadd.f32 %v3653, %v4087
      %v4200 = vadd.f32 %v3654, %v4092
      %v4201 = vadd.f32 %v3655, %v4095
      %v4202 = vadd.f32 %v3656, %v4100
      %v4203 = vadd.f32 %v3657, %v4103
      %v4204 = vadd.f32 %v3658, %v4108
      %v4205 = vadd.f32 %v3659, %v4111
      %v4206 = vadd.f32 %v3660, %v4116
      %v4207 = vadd.f32 %v3661, %v4119
      %v4208 = vadd.f32 %v3662, %v4124
      %v4209 = vadd.f32 %v3663, %v4127
      %v4210 = vadd.f32 %v3664, %v4132
      %v4211 = vadd.f32 %v3665, %v4135
      %v4212 = vadd.f32 %v3666, %v4140
      %v4213 = vadd.f32 %v3667, %v4143
      %v4214 = vadd.f32 %v3668, %v4148
      %v4215 = vadd.f32 %v3669, %v4151
      %v4216 = vadd.f32 %v3670, %v4156
      %v4217 = vadd.f32 %v3671, %v4159
      %v4218 = vadd.f32 %v3672, %v4164
      %v4219 = vadd.f32 %v3673, %v4167
      %v4220 = vadd.f32 %v3674, %v4172
      %v4221 = vadd.f32 %v3675, %v4175
      %v4222 = vadd.f32 %v3676, %v4180
      %v4223 = vadd.f32 %v3677, %v4183
      %v4224 = vadd.f32 %v3678, %v4188
      %v4225 = vadd.f32 %v3679, %v4191
      %v4226 = vmax.f32 %v4194, 0.0
      %v4227 = vmax.f32 %v4195, 0.0
      %v4228 = vmax.f32 %v4196, 0.0
      %v4229 = vmax.f32 %v4197, 0.0
      %v4230 = vmax.f32 %v4198, 0.0
      %v4231 = vmax.f32 %v4199, 0.0
      %v4232 = vmax.f32 %v4200, 0.0
      %v4233 = vmax.f32 %v4201, 0.0
      %v4234 = vmax.f32 %v4202, 0.0
      %v4235 = vmax.f32 %v4203, 0.0
      %v4236 = vmax.f32 %v4204, 0.0
      %v4237 = vmax.f32 %v4205, 0.0
      %v4238 = vmax.f32 %v4206, 0.0
      %v4239 = vmax.f32 %v4207, 0.0
      %v4240 = vmax.f32 %v4208, 0.0
      %v4241 = vmax.f32 %v4209, 0.0
      %v4242 = vmax.f32 %v4210, 0.0
      %v4243 = vmax.f32 %v4211, 0.0
      %v4244 = vmax.f32 %v4212, 0.0
      %v4245 = vmax.f32 %v4213, 0.0
      %v4246 = vmax.f32 %v4214, 0.0
      %v4247 = vmax.f32 %v4215, 0.0
      %v4248 = vmax.f32 %v4216, 0.0
      %v4249 = vmax.f32 %v4217, 0.0
      %v4250 = vmax.f32 %v4218, 0.0
      %v4251 = vmax.f32 %v4219, 0.0
      %v4252 = vmax.f32 %v4220, 0.0
      %v4253 = vmax.f32 %v4221, 0.0
      %v4254 = vmax.f32 %v4222, 0.0
      %v4255 = vmax.f32 %v4223, 0.0
      %v4256 = vmax.f32 %v4224, 0.0
      %v4257 = vmax.f32 %v4225, 0.0
      %v4258 = vadd.f32 %v2336, %v4226
      %v4259 = vadd.f32 %v2337, %v4227
      %v4260 = vadd.f32 %v2338, %v4228
      %v4261 = vadd.f32 %v2339, %v4229
      %v4262 = vadd.f32 %v2340, %v4230
      %v4263 = vadd.f32 %v2341, %v4231
      %v4264 = vadd.f32 %v2342, %v4232
      %v4265 = vadd.f32 %v2343, %v4233
      %v4266 = vadd.f32 %v2344, %v4234
      %v4267 = vadd.f32 %v2345, %v4235
      %v4268 = vadd.f32 %v2346, %v4236
      %v4269 = vadd.f32 %v2347, %v4237
      %v4270 = vadd.f32 %v2348, %v4238
      %v4271 = vadd.f32 %v2349, %v4239
      %v4272 = vadd.f32 %v2350, %v4240
      %v4273 = vadd.f32 %v2351, %v4241
      %v4274 = vadd.f32 %v2352, %v4242
      %v4275 = vadd.f32 %v2353, %v4243
      %v4276 = vadd.f32 %v2354, %v4244
      %v4277 = vadd.f32 %v2355, %v4245
      %v4278 = vadd.f32 %v2356, %v4246
      %v4279 = vadd.f32 %v2357, %v4247
      %v4280 = vadd.f32 %v2358, %v4248
      %v4281 = vadd.f32 %v2359, %v4249
      %v4282 = vadd.f32 %v2360, %v4250
      %v4283 = vadd.f32 %v2361, %v4251
      %v4284 = vadd.f32 %v2362, %v4252
      %v4285 = vadd.f32 %v2363, %v4253
      %v4286 = vadd.f32 %v2364, %v4254
      %v4287 = vadd.f32 %v2365, %v4255
      %v4288 = vadd.f32 %v2366, %v4256
      %v4289 = vadd.f32 %v2367, %v4257
      %4290 = vst [vmem:[%s399 + $0x8] sm:$0xff] %v4226
      %4291 = vst [vmem:[%s399 + $0x10] sm:$0xff] %v4227
      %4292 = vst [vmem:[%s399 + $0x28] sm:$0xff] %v4228
      %4293 = vst [vmem:[%s399 + $0x30] sm:$0xff] %v4229
      %4294 = vst [vmem:[%s399 + $0x48] sm:$0xff] %v4230
      %4295 = vst [vmem:[%s399 + $0x50] sm:$0xff] %v4231
      %4296 = vst [vmem:[%s399 + $0x68] sm:$0xff] %v4232
      %4297 = vst [vmem:[%s399 + $0x70] sm:$0xff] %v4233
      %4298 = vst [vmem:[%s399 + $0x88] sm:$0xff] %v4234
      %4299 = vst [vmem:[%s399 + $0x90] sm:$0xff] %v4235
      %4300 = vst [vmem:[%s399 + $0xa8] sm:$0xff] %v4236
      %4301 = vst [vmem:[%s399 + $0xb0] sm:$0xff] %v4237
      %4302 = vst [vmem:[%s399 + $0xc8] sm:$0xff] %v4238
      %4303 = vst [vmem:[%s399 + $0xd0] sm:$0xff] %v4239
      %4304 = vst [vmem:[%s399 + $0xe8] sm:$0xff] %v4240
      %4305 = vst [vmem:[%s399 + $0xf0] sm:$0xff] %v4241
      %4306 = vst [vmem:[%s399 + $0x108] sm:$0xff] %v4242
      %4307 = vst [vmem:[%s399 + $0x110] sm:$0xff] %v4243
      %4308 = vst [vmem:[%s399 + $0x128] sm:$0xff] %v4244
      %4309 = vst [vmem:[%s399 + $0x130] sm:$0xff] %v4245
      %4310 = vst [vmem:[%s399 + $0x148] sm:$0xff] %v4246
      %4311 = vst [vmem:[%s399 + $0x150] sm:$0xff] %v4247
      %4312 = vst [vmem:[%s399 + $0x168] sm:$0xff] %v4248
      %4313 = vst [vmem:[%s399 + $0x170] sm:$0xff] %v4249
      %4314 = vst [vmem:[%s399 + $0x188] sm:$0xff] %v4250
      %4315 = vst [vmem:[%s399 + $0x190] sm:$0xff] %v4251
      %4316 = vst [vmem:[%s399 + $0x1a8] sm:$0xff] %v4252
      %4317 = vst [vmem:[%s399 + $0x1b0] sm:$0xff] %v4253
      %4318 = vst [vmem:[%s399 + $0x1c8] sm:$0xff] %v4254
      %4319 = vst [vmem:[%s399 + $0x1d0] sm:$0xff] %v4255
      %4320 = vst [vmem:[%s399 + $0x1e8] sm:$0xff] %v4256
      %4321 = vst [vmem:[%s399 + $0x1f0] sm:$0xff] %v4257
      %s4322 = scalar_lea.vmem [#allocation2], 128
      %v4323 = vld [vmem:[%s4322 + $0x4] sm:$0xff]
      %v4324 = vld [vmem:[%s4322 + $0xc] sm:$0xff]
      %v4325 = vld [vmem:[%s4322 + $0x24] sm:$0xff]
      %v4326 = vld [vmem:[%s4322 + $0x2c] sm:$0xff]
      %v4327 = vld [vmem:[%s4322 + $0x44] sm:$0xff]
      %v4328 = vld [vmem:[%s4322 + $0x4c] sm:$0xff]
      %v4329 = vld [vmem:[%s4322 + $0x64] sm:$0xff]
      %v4330 = vld [vmem:[%s4322 + $0x6c] sm:$0xff]
      %v4331 = vld [vmem:[%s4322 + $0x84] sm:$0xff]
      %v4332 = vld [vmem:[%s4322 + $0x8c] sm:$0xff]
      %v4333 = vld [vmem:[%s4322 + $0xa4] sm:$0xff]
      %v4334 = vld [vmem:[%s4322 + $0xac] sm:$0xff]
      %v4335 = vld [vmem:[%s4322 + $0xc4] sm:$0xff]
      %v4336 = vld [vmem:[%s4322 + $0xcc] sm:$0xff]
      %v4337 = vld [vmem:[%s4322 + $0xe4] sm:$0xff]
      %v4338 = vld [vmem:[%s4322 + $0xec] sm:$0xff]
      %v4339 = vld [vmem:[%s4322 + $0x104] sm:$0xff]
      %v4340 = vld [vmem:[%s4322 + $0x10c] sm:$0xff]
      %v4341 = vld [vmem:[%s4322 + $0x124] sm:$0xff]
      %v4342 = vld [vmem:[%s4322 + $0x12c] sm:$0xff]
      %v4343 = vld [vmem:[%s4322 + $0x144] sm:$0xff]
      %v4344 = vld [vmem:[%s4322 + $0x14c] sm:$0xff]
      %v4345 = vld [vmem:[%s4322 + $0x164] sm:$0xff]
      %v4346 = vld [vmem:[%s4322 + $0x16c] sm:$0xff]
      %v4347 = vld [vmem:[%s4322 + $0x184] sm:$0xff]
      %v4348 = vld [vmem:[%s4322 + $0x18c] sm:$0xff]
      %v4349 = vld [vmem:[%s4322 + $0x1a4] sm:$0xff]
      %v4350 = vld [vmem:[%s4322 + $0x1ac] sm:$0xff]
      %v4351 = vld [vmem:[%s4322 + $0x1c4] sm:$0xff]
      %v4352 = vld [vmem:[%s4322 + $0x1cc] sm:$0xff]
      %v4353 = vld [vmem:[%s4322 + $0x1e4] sm:$0xff]
      %v4354 = vld [vmem:[%s4322 + $0x1ec] sm:$0xff]
      %v4355 = vld [vmem:[%s4322 + $0x204] sm:$0xff]
      %v4356 = vld [vmem:[%s4322 + $0x20c] sm:$0xff]
      %v4357 = vld [vmem:[%s4322 + $0x224] sm:$0xff]
      %v4358 = vld [vmem:[%s4322 + $0x22c] sm:$0xff]
      %v4359 = vld [vmem:[%s4322 + $0x244] sm:$0xff]
      %v4360 = vld [vmem:[%s4322 + $0x24c] sm:$0xff]
      %v4361 = vld [vmem:[%s4322 + $0x264] sm:$0xff]
      %v4362 = vld [vmem:[%s4322 + $0x26c] sm:$0xff]
      %v4363 = vld [vmem:[%s4322 + $0x284] sm:$0xff]
      %v4364 = vld [vmem:[%s4322 + $0x28c] sm:$0xff]
      %v4365 = vld [vmem:[%s4322 + $0x2a4] sm:$0xff]
      %v4366 = vld [vmem:[%s4322 + $0x2ac] sm:$0xff]
      %v4367 = vld [vmem:[%s4322 + $0x2c4] sm:$0xff]
      %v4368 = vld [vmem:[%s4322 + $0x2cc] sm:$0xff]
      %v4369 = vld [vmem:[%s4322 + $0x2e4] sm:$0xff]
      %v4370 = vld [vmem:[%s4322 + $0x2ec] sm:$0xff]
      %v4371 = vpack.c.bf16 %v4324, %v4323
      %v4372 = vpack.c.bf16 %v4326, %v4325
      %v4373 = vpack.c.bf16 %v4328, %v4327
      %v4374 = vpack.c.bf16 %v4330, %v4329
      %v4375 = vpack.c.bf16 %v4332, %v4331
      %v4376 = vpack.c.bf16 %v4334, %v4333
      %v4377 = vpack.c.bf16 %v4336, %v4335
      %v4378 = vpack.c.bf16 %v4338, %v4337
      %v4379 = vpack.c.bf16 %v4340, %v4339
      %v4380 = vpack.c.bf16 %v4342, %v4341
      %v4381 = vpack.c.bf16 %v4344, %v4343
      %v4382 = vpack.c.bf16 %v4346, %v4345
      %v4383 = vpack.c.bf16 %v4348, %v4347
      %v4384 = vpack.c.bf16 %v4350, %v4349
      %v4385 = vpack.c.bf16 %v4352, %v4351
      %v4386 = vpack.c.bf16 %v4354, %v4353
      %v4387 = vpack.c.bf16 %v4356, %v4355
      %v4388 = vpack.c.bf16 %v4358, %v4357
      %v4389 = vpack.c.bf16 %v4360, %v4359
      %v4390 = vpack.c.bf16 %v4362, %v4361
      %v4391 = vpack.c.bf16 %v4364, %v4363
      %v4392 = vpack.c.bf16 %v4366, %v4365
      %v4393 = vpack.c.bf16 %v4368, %v4367
      %v4394 = vpack.c.bf16 %v4370, %v4369
      %v4395 = vld [vmem:[%s4322 + $0x8] sm:$0xff]
      %v4396 = vld [vmem:[%s4322 + $0x10] sm:$0xff]
      %v4397 = vld [vmem:[%s4322 + $0x28] sm:$0xff]
      %v4398 = vld [vmem:[%s4322 + $0x30] sm:$0xff]
      %v4399 = vld [vmem:[%s4322 + $0x48] sm:$0xff]
      %v4400 = vld [vmem:[%s4322 + $0x50] sm:$0xff]
      %v4401 = vld [vmem:[%s4322 + $0x68] sm:$0xff]
      %v4402 = vld [vmem:[%s4322 + $0x70] sm:$0xff]
      %v4403 = vld [vmem:[%s4322 + $0x88] sm:$0xff]
      %v4404 = vld [vmem:[%s4322 + $0x90] sm:$0xff]
      %v4405 = vld [vmem:[%s4322 + $0xa8] sm:$0xff]
      %v4406 = vld [vmem:[%s4322 + $0xb0] sm:$0xff]
      %v4407 = vld [vmem:[%s4322 + $0xc8] sm:$0xff]
      %v4408 = vld [vmem:[%s4322 + $0xd0] sm:$0xff]
      %v4409 = vld [vmem:[%s4322 + $0xe8] sm:$0xff]
      %v4410 = vld [vmem:[%s4322 + $0xf0] sm:$0xff]
      %v4411 = vld [vmem:[%s4322 + $0x108] sm:$0xff]
      %v4412 = vld [vmem:[%s4322 + $0x110] sm:$0xff]
      %v4413 = vld [vmem:[%s4322 + $0x128] sm:$0xff]
      %v4414 = vld [vmem:[%s4322 + $0x130] sm:$0xff]
      %v4415 = vld [vmem:[%s4322 + $0x148] sm:$0xff]
      %v4416 = vld [vmem:[%s4322 + $0x150] sm:$0xff]
      %v4417 = vld [vmem:[%s4322 + $0x168] sm:$0xff]
      %v4418 = vld [vmem:[%s4322 + $0x170] sm:$0xff]
      %v4419 = vld [vmem:[%s4322 + $0x188] sm:$0xff]
      %v4420 = vld [vmem:[%s4322 + $0x190] sm:$0xff]
      %v4421 = vld [vmem:[%s4322 + $0x1a8] sm:$0xff]
      %v4422 = vld [vmem:[%s4322 + $0x1b0] sm:$0xff]
      %v4423 = vld [vmem:[%s4322 + $0x1c8] sm:$0xff]
      %v4424 = vld [vmem:[%s4322 + $0x1d0] sm:$0xff]
      %v4425 = vld [vmem:[%s4322 + $0x1e8] sm:$0xff]
      %v4426 = vld [vmem:[%s4322 + $0x1f0] sm:$0xff]
      %v4427 = vld [vmem:[%s4322 + $0x208] sm:$0xff]
      %v4428 = vld [vmem:[%s4322 + $0x210] sm:$0xff]
      %v4429 = vld [vmem:[%s4322 + $0x228] sm:$0xff]
      %v4430 = vld [vmem:[%s4322 + $0x230] sm:$0xff]
      %v4431 = vld [vmem:[%s4322 + $0x248] sm:$0xff]
      %v4432 = vld [vmem:[%s4322 + $0x250] sm:$0xff]
      %v4433 = vld [vmem:[%s4322 + $0x268] sm:$0xff]
      %v4434 = vld [vmem:[%s4322 + $0x270] sm:$0xff]
      %v4435 = vld [vmem:[%s4322 + $0x288] sm:$0xff]
      %v4436 = vld [vmem:[%s4322 + $0x290] sm:$0xff]
      %v4437 = vld [vmem:[%s4322 + $0x2a8] sm:$0xff]
      %v4438 = vld [vmem:[%s4322 + $0x2b0] sm:$0xff]
      %v4439 = vld [vmem:[%s4322 + $0x2c8] sm:$0xff]
      %v4440 = vld [vmem:[%s4322 + $0x2d0] sm:$0xff]
      %v4441 = vld [vmem:[%s4322 + $0x2e8] sm:$0xff]
      %v4442 = vld [vmem:[%s4322 + $0x2f0] sm:$0xff]
      %v4443 = vpack.c.bf16 %v4396, %v4395
      %v4444 = vpack.c.bf16 %v4398, %v4397
      %v4445 = vpack.c.bf16 %v4400, %v4399
      %v4446 = vpack.c.bf16 %v4402, %v4401
      %v4447 = vpack.c.bf16 %v4404, %v4403
      %v4448 = vpack.c.bf16 %v4406, %v4405
      %v4449 = vpack.c.bf16 %v4408, %v4407
      %v4450 = vpack.c.bf16 %v4410, %v4409
      %v4451 = vpack.c.bf16 %v4412, %v4411
      %v4452 = vpack.c.bf16 %v4414, %v4413
      %v4453 = vpack.c.bf16 %v4416, %v4415
      %v4454 = vpack.c.bf16 %v4418, %v4417
      %v4455 = vpack.c.bf16 %v4420, %v4419
      %v4456 = vpack.c.bf16 %v4422, %v4421
      %v4457 = vpack.c.bf16 %v4424, %v4423
      %v4458 = vpack.c.bf16 %v4426, %v4425
      %v4459 = vpack.c.bf16 %v4428, %v4427
      %v4460 = vpack.c.bf16 %v4430, %v4429
      %v4461 = vpack.c.bf16 %v4432, %v4431
      %v4462 = vpack.c.bf16 %v4434, %v4433
      %v4463 = vpack.c.bf16 %v4436, %v4435
      %v4464 = vpack.c.bf16 %v4438, %v4437
      %v4465 = vpack.c.bf16 %v4440, %v4439
      %v4466 = vpack.c.bf16 %v4442, %v4441
      %v4467 = vld [vmem:[%s4322 + $0x14] sm:$0xff]
      %v4468 = vld [vmem:[%s4322 + $0x34] sm:$0xff]
      %v4469 = vld [vmem:[%s4322 + $0x54] sm:$0xff]
      %v4470 = vld [vmem:[%s4322 + $0x74] sm:$0xff]
      %v4471 = vld [vmem:[%s4322 + $0x94] sm:$0xff]
      %v4472 = vld [vmem:[%s4322 + $0xb4] sm:$0xff]
      %v4473 = vld [vmem:[%s4322 + $0xd4] sm:$0xff]
      %v4474 = vld [vmem:[%s4322 + $0xf4] sm:$0xff]
      %v4475 = vld [vmem:[%s4322 + $0x114] sm:$0xff]
      %v4476 = vld [vmem:[%s4322 + $0x134] sm:$0xff]
      %v4477 = vld [vmem:[%s4322 + $0x154] sm:$0xff]
      %v4478 = vld [vmem:[%s4322 + $0x174] sm:$0xff]
      %v4479 = vld [vmem:[%s4322 + $0x194] sm:$0xff]
      %v4480 = vld [vmem:[%s4322 + $0x1b4] sm:$0xff]
      %v4481 = vld [vmem:[%s4322 + $0x1d4] sm:$0xff]
      %v4482 = vld [vmem:[%s4322 + $0x1f4] sm:$0xff]
      %v4483 = vld [vmem:[%s4322 + $0x214] sm:$0xff]
      %v4484 = vld [vmem:[%s4322 + $0x234] sm:$0xff]
      %v4485 = vld [vmem:[%s4322 + $0x254] sm:$0xff]
      %v4486 = vld [vmem:[%s4322 + $0x274] sm:$0xff]
      %v4487 = vld [vmem:[%s4322 + $0x294] sm:$0xff]
      %v4488 = vld [vmem:[%s4322 + $0x2b4] sm:$0xff]
      %v4489 = vld [vmem:[%s4322 + $0x2d4] sm:$0xff]
      %v4490 = vld [vmem:[%s4322 + $0x2f4] sm:$0xff]
      %v4491 = vpack.c.bf16 %v4467, %v4324
      %v4492 = vpack.c.bf16 %v4468, %v4326
      %v4493 = vpack.c.bf16 %v4469, %v4328
      %v4494 = vpack.c.bf16 %v4470, %v4330
      %v4495 = vpack.c.bf16 %v4471, %v4332
      %v4496 = vpack.c.bf16 %v4472, %v4334
      %v4497 = vpack.c.bf16 %v4473, %v4336
      %v4498 = vpack.c.bf16 %v4474, %v4338
      %v4499 = vpack.c.bf16 %v4475, %v4340
      %v4500 = vpack.c.bf16 %v4476, %v4342
      %v4501 = vpack.c.bf16 %v4477, %v4344
      %v4502 = vpack.c.bf16 %v4478, %v4346
      %v4503 = vpack.c.bf16 %v4479, %v4348
      %v4504 = vpack.c.bf16 %v4480, %v4350
      %v4505 = vpack.c.bf16 %v4481, %v4352
      %v4506 = vpack.c.bf16 %v4482, %v4354
      %v4507 = vpack.c.bf16 %v4483, %v4356
      %v4508 = vpack.c.bf16 %v4484, %v4358
      %v4509 = vpack.c.bf16 %v4485, %v4360
      %v4510 = vpack.c.bf16 %v4486, %v4362
      %v4511 = vpack.c.bf16 %v4487, %v4364
      %v4512 = vpack.c.bf16 %v4488, %v4366
      %v4513 = vpack.c.bf16 %v4489, %v4368
      %v4514 = vpack.c.bf16 %v4490, %v4370
      %v4515 = vld [vmem:[%s6] sm:$0x1]
      %v4517 = vlaneseq
      %v4518 = vshrl.u32 %v4517, 7
      %v4519 = vsub.s32 0, %v4518
      %v4520 = vrot.slane %v4515, %v4519
      %v4522 = vld [vmem:[%s5] sm:$0xf]
      %v4523 = vld [vmem:[%s5 + $0x4] sm:$0xf]
      %v4524 = vld [vmem:[%s5 + $0x8] sm:$0xf]
      %v4525 = vld [vmem:[%s5 + $0xc] sm:$0xf]
      %v4526 = vld [vmem:[%s5 + $0x10] sm:$0xf]
      %v4527 = vld [vmem:[%s5 + $0x14] sm:$0xf]
      %v4528 = vld [vmem:[%s5 + $0x18] sm:$0xf]
      %v4529 = vld [vmem:[%s5 + $0x1c] sm:$0xf]
      %v4530 = vld [vmem:[%s5 + $0x20] sm:$0xf]
      %v4531 = vld [vmem:[%s5 + $0x24] sm:$0xf]
      %v4532 = vld [vmem:[%s5 + $0x28] sm:$0xf]
      %v4533 = vld [vmem:[%s5 + $0x2c] sm:$0xf]
      %v4534 = vld [vmem:[%s5 + $0x30] sm:$0xf]
      %v4535 = vld [vmem:[%s5 + $0x34] sm:$0xf]
      %v4536 = vld [vmem:[%s5 + $0x38] sm:$0xf]
      %v4537 = vld [vmem:[%s5 + $0x3c] sm:$0xf]
      %v4538 = vld [vmem:[%s5 + $0x40] sm:$0xf]
      %v4539 = vld [vmem:[%s5 + $0x44] sm:$0xf]
      %v4540 = vld [vmem:[%s5 + $0x48] sm:$0xf]
      %v4541 = vld [vmem:[%s5 + $0x4c] sm:$0xf]
      %v4542 = vld [vmem:[%s5 + $0x50] sm:$0xf]
      %v4543 = vld [vmem:[%s5 + $0x54] sm:$0xf]
      %v4544 = vld [vmem:[%s5 + $0x58] sm:$0xf]
      %v4545 = vld [vmem:[%s5 + $0x5c] sm:$0xf]
      %v4546 = vld [vmem:[%s5 + $0x60] sm:$0xf]
      %v4547 = vld [vmem:[%s5 + $0x64] sm:$0xf]
      %v4548 = vld [vmem:[%s5 + $0x68] sm:$0xf]
      %v4549 = vld [vmem:[%s5 + $0x6c] sm:$0xf]
      %v4550 = vld [vmem:[%s5 + $0x70] sm:$0xf]
      %v4551 = vld [vmem:[%s5 + $0x74] sm:$0xf]
      %v4552 = vld [vmem:[%s5 + $0x78] sm:$0xf]
      %v4553 = vld [vmem:[%s5 + $0x7c] sm:$0xf]
      %v4554 = vld [vmem:[%s5 + $0x80] sm:$0xf]
      %v4555 = vld [vmem:[%s5 + $0x84] sm:$0xf]
      %v4556 = vld [vmem:[%s5 + $0x88] sm:$0xf]
      %v4557 = vld [vmem:[%s5 + $0x8c] sm:$0xf]
      %v4558 = vld [vmem:[%s5 + $0x90] sm:$0xf]
      %v4559 = vld [vmem:[%s5 + $0x94] sm:$0xf]
      %v4560 = vld [vmem:[%s5 + $0x98] sm:$0xf]
      %v4561 = vld [vmem:[%s5 + $0x9c] sm:$0xf]
      %v4562 = vld [vmem:[%s5 + $0xa0] sm:$0xf]
      %v4563 = vld [vmem:[%s5 + $0xa4] sm:$0xf]
      %v4564 = vld [vmem:[%s5 + $0xa8] sm:$0xf]
      %v4565 = vld [vmem:[%s5 + $0xac] sm:$0xf]
      %v4566 = vld [vmem:[%s5 + $0xb0] sm:$0xf]
      %v4567 = vld [vmem:[%s5 + $0xb4] sm:$0xf]
      %v4568 = vld [vmem:[%s5 + $0xb8] sm:$0xf]
      %v4569 = vld [vmem:[%s5 + $0xbc] sm:$0xf]
      %v4618 = vunpack.c.l.b16 %v4522
      %v4619 = vunpack.c.l.b16 %v4523
      %v4620 = vunpack.c.l.b16 %v4524
      %v4621 = vunpack.c.l.b16 %v4525
      %v4622 = vunpack.c.l.b16 %v4526
      %v4623 = vunpack.c.l.b16 %v4527
      %v4624 = vunpack.c.l.b16 %v4528
      %v4625 = vunpack.c.l.b16 %v4529
      %v4626 = vunpack.c.l.b16 %v4530
      %v4627 = vunpack.c.l.b16 %v4531
      %v4628 = vunpack.c.l.b16 %v4532
      %v4629 = vunpack.c.l.b16 %v4533
      %v4630 = vunpack.c.l.b16 %v4534
      %v4631 = vunpack.c.l.b16 %v4535
      %v4632 = vunpack.c.l.b16 %v4536
      %v4633 = vunpack.c.l.b16 %v4537
      %v4634 = vunpack.c.l.b16 %v4538
      %v4635 = vunpack.c.l.b16 %v4539
      %v4636 = vunpack.c.l.b16 %v4540
      %v4637 = vunpack.c.l.b16 %v4541
      %v4638 = vunpack.c.l.b16 %v4542
      %v4639 = vunpack.c.l.b16 %v4543
      %v4640 = vunpack.c.l.b16 %v4544
      %v4641 = vunpack.c.l.b16 %v4545
      %v4642 = vunpack.c.l.b16 %v4546
      %v4643 = vunpack.c.l.b16 %v4547
      %v4644 = vunpack.c.l.b16 %v4548
      %v4645 = vunpack.c.l.b16 %v4549
      %v4646 = vunpack.c.l.b16 %v4550
      %v4647 = vunpack.c.l.b16 %v4551
      %v4648 = vunpack.c.l.b16 %v4552
      %v4649 = vunpack.c.l.b16 %v4553
      %v4650 = vunpack.c.l.b16 %v4554
      %v4651 = vunpack.c.l.b16 %v4555
      %v4652 = vunpack.c.l.b16 %v4556
      %v4653 = vunpack.c.l.b16 %v4557
      %v4654 = vunpack.c.l.b16 %v4558
      %v4655 = vunpack.c.l.b16 %v4559
      %v4656 = vunpack.c.l.b16 %v4560
      %v4657 = vunpack.c.l.b16 %v4561
      %v4658 = vunpack.c.l.b16 %v4562
      %v4659 = vunpack.c.l.b16 %v4563
      %v4660 = vunpack.c.l.b16 %v4564
      %v4661 = vunpack.c.l.b16 %v4565
      %v4662 = vunpack.c.l.b16 %v4566
      %v4663 = vunpack.c.l.b16 %v4567
      %v4664 = vunpack.c.l.b16 %v4568
      %v4665 = vunpack.c.l.b16 %v4569
      %v4666 = vpack.c.b16 %v4619, %v4618
      %v4667 = vpack.c.b16 %v4621, %v4620
      %v4668 = vpack.c.b16 %v4623, %v4622
      %v4669 = vpack.c.b16 %v4625, %v4624
      %v4670 = vpack.c.b16 %v4627, %v4626
      %v4671 = vpack.c.b16 %v4629, %v4628
      %v4672 = vpack.c.b16 %v4631, %v4630
      %v4673 = vpack.c.b16 %v4633, %v4632
      %v4674 = vpack.c.b16 %v4635, %v4634
      %v4675 = vpack.c.b16 %v4637, %v4636
      %v4676 = vpack.c.b16 %v4639, %v4638
      %v4677 = vpack.c.b16 %v4641, %v4640
      %v4678 = vpack.c.b16 %v4643, %v4642
      %v4679 = vpack.c.b16 %v4645, %v4644
      %v4680 = vpack.c.b16 %v4647, %v4646
      %v4681 = vpack.c.b16 %v4649, %v4648
      %v4682 = vpack.c.b16 %v4651, %v4650
      %v4683 = vpack.c.b16 %v4653, %v4652
      %v4684 = vpack.c.b16 %v4655, %v4654
      %v4685 = vpack.c.b16 %v4657, %v4656
      %v4686 = vpack.c.b16 %v4659, %v4658
      %v4687 = vpack.c.b16 %v4661, %v4660
      %v4688 = vpack.c.b16 %v4663, %v4662
      %v4689 = vpack.c.b16 %v4665, %v4664
      %4714 = vmatprep.subr.bf16.mxu0 0
      %4715 = vmatpush1.bf16.msra.mxu0 %v4666
      %4716 = vmatprep.subr.bf16.mxu0 0
      %4717 = vmatpush1.bf16.msra.mxu0 %v4667
      %4718 = vmatprep.subr.bf16.mxu0 0
      %4719 = vmatpush1.bf16.msra.mxu0 %v4668
      %4720 = vmatprep.subr.bf16.mxu0 0
      %4721 = vmatpush1.bf16.msra.mxu0 %v4669
      %4722 = vmatprep.subr.bf16.mxu0 0
      %4723 = vmatpush1.bf16.msra.mxu0 %v4670
      %4724 = vmatprep.subr.bf16.mxu0 0
      %4725 = vmatpush1.bf16.msra.mxu0 %v4671
      %4726 = vmatprep.subr.bf16.mxu0 0
      %4727 = vmatpush1.bf16.msra.mxu0 %v4672
      %4728 = vmatprep.subr.bf16.mxu0 0
      %4729 = vmatpush1.bf16.msra.mxu0 %v4673
      %4730 = vmatprep.subr.bf16.mxu0 0
      %4731 = vmatpush1.bf16.msra.mxu0 %v4674
      %4732 = vmatprep.subr.bf16.mxu0 0
      %4733 = vmatpush1.bf16.msra.mxu0 %v4675
      %4734 = vmatprep.subr.bf16.mxu0 0
      %4735 = vmatpush1.bf16.msra.mxu0 %v4676
      %4736 = vmatprep.subr.bf16.mxu0 0
      %4737 = vmatpush1.bf16.msra.mxu0 %v4677
      %4738 = vmatprep.subr.bf16.mxu0 0
      %4739 = vmatpush1.bf16.msra.mxu0 %v4678
      %4740 = vmatprep.subr.bf16.mxu0 0
      %4741 = vmatpush1.bf16.msra.mxu0 %v4679
      %4742 = vmatprep.subr.bf16.mxu0 0
      %4743 = vmatpush1.bf16.msra.mxu0 %v4680
      %4744 = vmatprep.subr.bf16.mxu0 0
      %4745 = vmatpush1.bf16.msra.mxu0 %v4681
      %4746 = vmatprep.mubr.bf16.mxu0 %v4443
      %4747 = vmatmul.mubr.bf16.gmra.mrb[0].mxu0 %v4371
      %v4748 = vpop.f32.mrb[0].mxu0
      %v4749 = vadd.f32 0.0, %v4748
      %v4750 = vpop.f32.mrb[0].mxu0
      %v4751 = vpop.f32.mrb[0].mxu0
      %v4752 = vadd.f32 0.0, %v4751
      %v4753 = vpop.f32.mrb[0].mxu0
      %4754 = vmatprep.mubr.bf16.mxu0 %v4444
      %4755 = vmatmul.mubr.bf16.gmra.mrb[0].mxu0 %v4372
      %v4756 = vpop.f32.mrb[0].mxu0
      %v4757 = vadd.f32 0.0, %v4756
      %v4758 = vpop.f32.mrb[0].mxu0
      %v4759 = vpop.f32.mrb[0].mxu0
      %v4760 = vadd.f32 0.0, %v4759
      %v4761 = vpop.f32.mrb[0].mxu0
      %4762 = vmatprep.mubr.bf16.mxu0 %v4445
      %4763 = vmatmul.mubr.bf16.gmra.mrb[0].mxu0 %v4373
      %v4764 = vpop.f32.mrb[0].mxu0
      %v4765 = vadd.f32 0.0, %v4764
      %v4766 = vpop.f32.mrb[0].mxu0
      %v4767 = vpop.f32.mrb[0].mxu0
      %v4768 = vadd.f32 0.0, %v4767
      %v4769 = vpop.f32.mrb[0].mxu0
      %4770 = vmatprep.mubr.bf16.mxu0 %v4446
      %4771 = vmatmul.mubr.bf16.gmra.mrb[0].mxu0 %v4374
      %v4772 = vpop.f32.mrb[0].mxu0
      %v4773 = vadd.f32 0.0, %v4772
      %v4774 = vpop.f32.mrb[0].mxu0
      %v4775 = vpop.f32.mrb[0].mxu0
      %v4776 = vadd.f32 0.0, %v4775
      %v4777 = vpop.f32.mrb[0].mxu0
      %4778 = vmatprep.mubr.bf16.mxu0 %v4447
      %4779 = vmatmul.mubr.bf16.gmra.mrb[0].mxu0 %v4375
      %v4780 = vpop.f32.mrb[0].mxu0
      %v4781 = vadd.f32 0.0, %v4780
      %v4782 = vpop.f32.mrb[0].mxu0
      %v4783 = vpop.f32.mrb[0].mxu0
      %v4784 = vadd.f32 0.0, %v4783
      %v4785 = vpop.f32.mrb[0].mxu0
      %4786 = vmatprep.mubr.bf16.mxu0 %v4448
      %4787 = vmatmul.mubr.bf16.gmra.mrb[0].mxu0 %v4376
      %v4788 = vpop.f32.mrb[0].mxu0
      %v4789 = vadd.f32 0.0, %v4788
      %v4790 = vpop.f32.mrb[0].mxu0
      %v4791 = vpop.f32.mrb[0].mxu0
      %v4792 = vadd.f32 0.0, %v4791
      %v4793 = vpop.f32.mrb[0].mxu0
      %4794 = vmatprep.mubr.bf16.mxu0 %v4449
      %4795 = vmatmul.mubr.bf16.gmra.mrb[0].mxu0 %v4377
      %v4796 = vpop.f32.mrb[0].mxu0
      %v4797 = vadd.f32 0.0, %v4796
      %v4798 = vpop.f32.mrb[0].mxu0
      %v4799 = vpop.f32.mrb[0].mxu0
      %v4800 = vadd.f32 0.0, %v4799
      %v4801 = vpop.f32.mrb[0].mxu0
      %4802 = vmatprep.mubr.bf16.mxu0 %v4450
      %4803 = vmatmul.mubr.bf16.gmra.mrb[0].mxu0 %v4378
      %v4804 = vpop.f32.mrb[0].mxu0
      %v4805 = vadd.f32 0.0, %v4804
      %v4806 = vpop.f32.mrb[0].mxu0
      %v4807 = vpop.f32.mrb[0].mxu0
      %v4808 = vadd.f32 0.0, %v4807
      %v4809 = vpop.f32.mrb[0].mxu0
      %4810 = vmatprep.mubr.bf16.mxu0 %v4451
      %4811 = vmatmul.mubr.bf16.gmra.mrb[0].mxu0 %v4379
      %v4812 = vpop.f32.mrb[0].mxu0
      %v4813 = vadd.f32 0.0, %v4812
      %v4814 = vpop.f32.mrb[0].mxu0
      %v4815 = vpop.f32.mrb[0].mxu0
      %v4816 = vadd.f32 0.0, %v4815
      %v4817 = vpop.f32.mrb[0].mxu0
      %4818 = vmatprep.mubr.bf16.mxu0 %v4452
      %4819 = vmatmul.mubr.bf16.gmra.mrb[0].mxu0 %v4380
      %v4820 = vpop.f32.mrb[0].mxu0
      %v4821 = vadd.f32 0.0, %v4820
      %v4822 = vpop.f32.mrb[0].mxu0
      %v4823 = vpop.f32.mrb[0].mxu0
      %v4824 = vadd.f32 0.0, %v4823
      %v4825 = vpop.f32.mrb[0].mxu0
      %4826 = vmatprep.mubr.bf16.mxu0 %v4453
      %4827 = vmatmul.mubr.bf16.gmra.mrb[0].mxu0 %v4381
      %v4828 = vpop.f32.mrb[0].mxu0
      %v4829 = vadd.f32 0.0, %v4828
      %v4830 = vpop.f32.mrb[0].mxu0
      %v4831 = vpop.f32.mrb[0].mxu0
      %v4832 = vadd.f32 0.0, %v4831
      %v4833 = vpop.f32.mrb[0].mxu0
      %4834 = vmatprep.mubr.bf16.mxu0 %v4454
      %4835 = vmatmul.mubr.bf16.gmra.mrb[0].mxu0 %v4382
      %v4836 = vpop.f32.mrb[0].mxu0
      %v4837 = vadd.f32 0.0, %v4836
      %v4838 = vpop.f32.mrb[0].mxu0
      %v4839 = vpop.f32.mrb[0].mxu0
      %v4840 = vadd.f32 0.0, %v4839
      %v4841 = vpop.f32.mrb[0].mxu0
      %4842 = vmatprep.mubr.bf16.mxu0 %v4455
      %4843 = vmatmul.mubr.bf16.gmra.mrb[0].mxu0 %v4383
      %v4844 = vpop.f32.mrb[0].mxu0
      %v4845 = vadd.f32 0.0, %v4844
      %v4846 = vpop.f32.mrb[0].mxu0
      %v4847 = vpop.f32.mrb[0].mxu0
      %v4848 = vadd.f32 0.0, %v4847
      %v4849 = vpop.f32.mrb[0].mxu0
      %4850 = vmatprep.mubr.bf16.mxu0 %v4456
      %4851 = vmatmul.mubr.bf16.gmra.mrb[0].mxu0 %v4384
      %v4852 = vpop.f32.mrb[0].mxu0
      %v4853 = vadd.f32 0.0, %v4852
      %v4854 = vpop.f32.mrb[0].mxu0
      %v4855 = vpop.f32.mrb[0].mxu0
      %v4856 = vadd.f32 0.0, %v4855
      %v4857 = vpop.f32.mrb[0].mxu0
      %4858 = vmatprep.mubr.bf16.mxu0 %v4457
      %4859 = vmatmul.mubr.bf16.gmra.mrb[0].mxu0 %v4385
      %v4860 = vpop.f32.mrb[0].mxu0
      %v4861 = vadd.f32 0.0, %v4860
      %v4862 = vpop.f32.mrb[0].mxu0
      %v4863 = vpop.f32.mrb[0].mxu0
      %v4864 = vadd.f32 0.0, %v4863
      %v4865 = vpop.f32.mrb[0].mxu0
      %4866 = vmatprep.mubr.bf16.mxu0 %v4458
      %4867 = vmatmul.mubr.bf16.gmra.mrb[0].mxu0 %v4386
      %v4868 = vpop.f32.mrb[0].mxu0
      %v4869 = vadd.f32 0.0, %v4868
      %v4870 = vpop.f32.mrb[0].mxu0
      %v4871 = vpop.f32.mrb[0].mxu0
      %v4872 = vadd.f32 0.0, %v4871
      %v4873 = vpop.f32.mrb[0].mxu0
      %4874 = vdwg.mxu0
      %4875 = vmatprep.subr.bf16.mxu0 0
      %4876 = vmatpush1.bf16.msra.mxu0 %v4682
      %4877 = vmatprep.subr.bf16.mxu0 0
      %4878 = vmatpush1.bf16.msra.mxu0 %v4683
      %4879 = vmatprep.subr.bf16.mxu0 0
      %4880 = vmatpush1.bf16.msra.mxu0 %v4684
      %4881 = vmatprep.subr.bf16.mxu0 0
      %4882 = vmatpush1.bf16.msra.mxu0 %v4685
      %4883 = vmatprep.subr.bf16.mxu0 0
      %4884 = vmatpush1.bf16.msra.mxu0 %v4686
      %4885 = vmatprep.subr.bf16.mxu0 0
      %4886 = vmatpush1.bf16.msra.mxu0 %v4687
      %4887 = vmatprep.subr.bf16.mxu0 0
      %4888 = vmatpush1.bf16.msra.mxu0 %v4688
      %4889 = vmatprep.subr.bf16.mxu0 0
      %4890 = vmatpush1.bf16.msra.mxu0 %v4689
      %4891 = vmatprep.subr.bf16.mxu0 0
      %4892 = vmatpush1.bf16.msra.mxu0 0
      %4893 = vmatprep.subr.bf16.mxu0 0
      %4894 = vmatpush1.bf16.msra.mxu0 0
      %4895 = vmatprep.subr.bf16.mxu0 0
      %4896 = vmatpush1.bf16.msra.mxu0 0
      %4897 = vmatprep.subr.bf16.mxu0 0
      %4898 = vmatpush1.bf16.msra.mxu0 0
      %4899 = vmatprep.subr.bf16.mxu0 0
      %4900 = vmatpush1.bf16.msra.mxu0 0
      %4901 = vmatprep.subr.bf16.mxu0 0
      %4902 = vmatpush1.bf16.msra.mxu0 0
      %4903 = vmatprep.subr.bf16.mxu0 0
      %4904 = vmatpush1.bf16.msra.mxu0 0
      %4905 = vmatprep.subr.bf16.mxu0 0
      %4906 = vmatpush1.bf16.msra.mxu0 0
      %4907 = vmatprep.mubr.bf16.mxu0 0
      %4908 = vmatmul.mubr.bf16.gmra.mrb[0].mxu0 %v4491
      %v4909 = vpop.f32.mrb[0].mxu0
      %v4910 = vadd.f32 %v4749, %v4909
      %v4911 = vpop.f32.mrb[0].mxu0
      %v4912 = vpop.f32.mrb[0].mxu0
      %v4913 = vadd.f32 %v4752, %v4912
      %v4914 = vpop.f32.mrb[0].mxu0
      %4915 = vmatprep.mubr.bf16.mxu0 0
      %4916 = vmatmul.mubr.bf16.gmra.mrb[0].mxu0 %v4492
      %v4917 = vpop.f32.mrb[0].mxu0
      %v4918 = vadd.f32 %v4757, %v4917
      %v4919 = vpop.f32.mrb[0].mxu0
      %v4920 = vpop.f32.mrb[0].mxu0
      %v4921 = vadd.f32 %v4760, %v4920
      %v4922 = vpop.f32.mrb[0].mxu0
      %4923 = vmatprep.mubr.bf16.mxu0 0
      %4924 = vmatmul.mubr.bf16.gmra.mrb[0].mxu0 %v4493
      %v4925 = vpop.f32.mrb[0].mxu0
      %v4926 = vadd.f32 %v4765, %v4925
      %v4927 = vpop.f32.mrb[0].mxu0
      %v4928 = vpop.f32.mrb[0].mxu0
      %v4929 = vadd.f32 %v4768, %v4928
      %v4930 = vpop.f32.mrb[0].mxu0
      %4931 = vmatprep.mubr.bf16.mxu0 0
      %4932 = vmatmul.mubr.bf16.gmra.mrb[0].mxu0 %v4494
      %v4933 = vpop.f32.mrb[0].mxu0
      %v4934 = vadd.f32 %v4773, %v4933
      %v4935 = vpop.f32.mrb[0].mxu0
      %v4936 = vpop.f32.mrb[0].mxu0
      %v4937 = vadd.f32 %v4776, %v4936
      %v4938 = vpop.f32.mrb[0].mxu0
      %4939 = vmatprep.mubr.bf16.mxu0 0
      %4940 = vmatmul.mubr.bf16.gmra.mrb[0].mxu0 %v4495
      %v4941 = vpop.f32.mrb[0].mxu0
      %v4942 = vadd.f32 %v4781, %v4941
      %v4943 = vpop.f32.mrb[0].mxu0
      %v4944 = vpop.f32.mrb[0].mxu0
      %v4945 = vadd.f32 %v4784, %v4944
      %v4946 = vpop.f32.mrb[0].mxu0
      %4947 = vmatprep.mubr.bf16.mxu0 0
      %4948 = vmatmul.mubr.bf16.gmra.mrb[0].mxu0 %v4496
      %v4949 = vpop.f32.mrb[0].mxu0
      %v4950 = vadd.f32 %v4789, %v4949
      %v4951 = vpop.f32.mrb[0].mxu0
      %v4952 = vpop.f32.mrb[0].mxu0
      %v4953 = vadd.f32 %v4792, %v4952
      %v4954 = vpop.f32.mrb[0].mxu0
      %4955 = vmatprep.mubr.bf16.mxu0 0
      %4956 = vmatmul.mubr.bf16.gmra.mrb[0].mxu0 %v4497
      %v4957 = vpop.f32.mrb[0].mxu0
      %v4958 = vadd.f32 %v4797, %v4957
      %v4959 = vpop.f32.mrb[0].mxu0
      %v4960 = vpop.f32.mrb[0].mxu0
      %v4961 = vadd.f32 %v4800, %v4960
      %v4962 = vpop.f32.mrb[0].mxu0
      %4963 = vmatprep.mubr.bf16.mxu0 0
      %4964 = vmatmul.mubr.bf16.gmra.mrb[0].mxu0 %v4498
      %v4965 = vpop.f32.mrb[0].mxu0
      %v4966 = vadd.f32 %v4805, %v4965
      %v4967 = vpop.f32.mrb[0].mxu0
      %v4968 = vpop.f32.mrb[0].mxu0
      %v4969 = vadd.f32 %v4808, %v4968
      %v4970 = vpop.f32.mrb[0].mxu0
      %4971 = vmatprep.mubr.bf16.mxu0 0
      %4972 = vmatmul.mubr.bf16.gmra.mrb[0].mxu0 %v4499
      %v4973 = vpop.f32.mrb[0].mxu0
      %v4974 = vadd.f32 %v4813, %v4973
      %v4975 = vpop.f32.mrb[0].mxu0
      %v4976 = vpop.f32.mrb[0].mxu0
      %v4977 = vadd.f32 %v4816, %v4976
      %v4978 = vpop.f32.mrb[0].mxu0
      %4979 = vmatprep.mubr.bf16.mxu0 0
      %4980 = vmatmul.mubr.bf16.gmra.mrb[0].mxu0 %v4500
      %v4981 = vpop.f32.mrb[0].mxu0
      %v4982 = vadd.f32 %v4821, %v4981
      %v4983 = vpop.f32.mrb[0].mxu0
      %v4984 = vpop.f32.mrb[0].mxu0
      %v4985 = vadd.f32 %v4824, %v4984
      %v4986 = vpop.f32.mrb[0].mxu0
      %4987 = vmatprep.mubr.bf16.mxu0 0
      %4988 = vmatmul.mubr.bf16.gmra.mrb[0].mxu0 %v4501
      %v4989 = vpop.f32.mrb[0].mxu0
      %v4990 = vadd.f32 %v4829, %v4989
      %v4991 = vpop.f32.mrb[0].mxu0
      %v4992 = vpop.f32.mrb[0].mxu0
      %v4993 = vadd.f32 %v4832, %v4992
      %v4994 = vpop.f32.mrb[0].mxu0
      %4995 = vmatprep.mubr.bf16.mxu0 0
      %4996 = vmatmul.mubr.bf16.gmra.mrb[0].mxu0 %v4502
      %v4997 = vpop.f32.mrb[0].mxu0
      %v4998 = vadd.f32 %v4837, %v4997
      %v4999 = vpop.f32.mrb[0].mxu0
      %v5000 = vpop.f32.mrb[0].mxu0
      %v5001 = vadd.f32 %v4840, %v5000
      %v5002 = vpop.f32.mrb[0].mxu0
      %5003 = vmatprep.mubr.bf16.mxu0 0
      %5004 = vmatmul.mubr.bf16.gmra.mrb[0].mxu0 %v4503
      %v5005 = vpop.f32.mrb[0].mxu0
      %v5006 = vadd.f32 %v4845, %v5005
      %v5007 = vpop.f32.mrb[0].mxu0
      %v5008 = vpop.f32.mrb[0].mxu0
      %v5009 = vadd.f32 %v4848, %v5008
      %v5010 = vpop.f32.mrb[0].mxu0
      %5011 = vmatprep.mubr.bf16.mxu0 0
      %5012 = vmatmul.mubr.bf16.gmra.mrb[0].mxu0 %v4504
      %v5013 = vpop.f32.mrb[0].mxu0
      %v5014 = vadd.f32 %v4853, %v5013
      %v5015 = vpop.f32.mrb[0].mxu0
      %v5016 = vpop.f32.mrb[0].mxu0
      %v5017 = vadd.f32 %v4856, %v5016
      %v5018 = vpop.f32.mrb[0].mxu0
      %5019 = vmatprep.mubr.bf16.mxu0 0
      %5020 = vmatmul.mubr.bf16.gmra.mrb[0].mxu0 %v4505
      %v5021 = vpop.f32.mrb[0].mxu0
      %v5022 = vadd.f32 %v4861, %v5021
      %v5023 = vpop.f32.mrb[0].mxu0
      %v5024 = vpop.f32.mrb[0].mxu0
      %v5025 = vadd.f32 %v4864, %v5024
      %v5026 = vpop.f32.mrb[0].mxu0
      %5027 = vmatprep.mubr.bf16.mxu0 0
      %5028 = vmatmul.mubr.bf16.gmra.mrb[0].mxu0 %v4506
      %v5029 = vpop.f32.mrb[0].mxu0
      %v5030 = vadd.f32 %v4869, %v5029
      %v5031 = vpop.f32.mrb[0].mxu0
      %v5032 = vpop.f32.mrb[0].mxu0
      %v5033 = vadd.f32 %v4872, %v5032
      %v5034 = vpop.f32.mrb[0].mxu0
      %5035 = vdwg.mxu0
      %v5036 = vadd.f32 %v4520, %v4910
      %v5037 = vadd.f32 %v4520, %v4913
      %v5038 = vadd.f32 %v4520, %v4918
      %v5039 = vadd.f32 %v4520, %v4921
      %v5040 = vadd.f32 %v4520, %v4926
      %v5041 = vadd.f32 %v4520, %v4929
      %v5042 = vadd.f32 %v4520, %v4934
      %v5043 = vadd.f32 %v4520, %v4937
      %v5044 = vadd.f32 %v4520, %v4942
      %v5045 = vadd.f32 %v4520, %v4945
      %v5046 = vadd.f32 %v4520, %v4950
      %v5047 = vadd.f32 %v4520, %v4953
      %v5048 = vadd.f32 %v4520, %v4958
      %v5049 = vadd.f32 %v4520, %v4961
      %v5050 = vadd.f32 %v4520, %v4966
      %v5051 = vadd.f32 %v4520, %v4969
      %v5052 = vadd.f32 %v4520, %v4974
      %v5053 = vadd.f32 %v4520, %v4977
      %v5054 = vadd.f32 %v4520, %v4982
      %v5055 = vadd.f32 %v4520, %v4985
      %v5056 = vadd.f32 %v4520, %v4990
      %v5057 = vadd.f32 %v4520, %v4993
      %v5058 = vadd.f32 %v4520, %v4998
      %v5059 = vadd.f32 %v4520, %v5001
      %v5060 = vadd.f32 %v4520, %v5006
      %v5061 = vadd.f32 %v4520, %v5009
      %v5062 = vadd.f32 %v4520, %v5014
      %v5063 = vadd.f32 %v4520, %v5017
      %v5064 = vadd.f32 %v4520, %v5022
      %v5065 = vadd.f32 %v4520, %v5025
      %v5066 = vadd.f32 %v4520, %v5030
      %v5067 = vadd.f32 %v4520, %v5033
      %v5068 = vld [vmem:[%s5 + $0xc0] sm:$0xf]
      %v5069 = vld [vmem:[%s5 + $0xc4] sm:$0xf]
      %v5070 = vld [vmem:[%s5 + $0xc8] sm:$0xf]
      %v5071 = vld [vmem:[%s5 + $0xcc] sm:$0xf]
      %v5072 = vld [vmem:[%s5 + $0xd0] sm:$0xf]
      %v5073 = vld [vmem:[%s5 + $0xd4] sm:$0xf]
      %v5074 = vld [vmem:[%s5 + $0xd8] sm:$0xf]
      %v5075 = vld [vmem:[%s5 + $0xdc] sm:$0xf]
      %v5076 = vld [vmem:[%s5 + $0xe0] sm:$0xf]
      %v5077 = vld [vmem:[%s5 + $0xe4] sm:$0xf]
      %v5078 = vld [vmem:[%s5 + $0xe8] sm:$0xf]
      %v5079 = vld [vmem:[%s5 + $0xec] sm:$0xf]
      %v5080 = vld [vmem:[%s5 + $0xf0] sm:$0xf]
      %v5081 = vld [vmem:[%s5 + $0xf4] sm:$0xf]
      %v5082 = vld [vmem:[%s5 + $0xf8] sm:$0xf]
      %v5083 = vld [vmem:[%s5 + $0xfc] sm:$0xf]
      %v5084 = vld [vmem:[%s5 + $0x100] sm:$0xf]
      %v5085 = vld [vmem:[%s5 + $0x104] sm:$0xf]
      %v5086 = vld [vmem:[%s5 + $0x108] sm:$0xf]
      %v5087 = vld [vmem:[%s5 + $0x10c] sm:$0xf]
      %v5088 = vld [vmem:[%s5 + $0x110] sm:$0xf]
      %v5089 = vld [vmem:[%s5 + $0x114] sm:$0xf]
      %v5090 = vld [vmem:[%s5 + $0x118] sm:$0xf]
      %v5091 = vld [vmem:[%s5 + $0x11c] sm:$0xf]
      %v5092 = vld [vmem:[%s5 + $0x120] sm:$0xf]
      %v5093 = vld [vmem:[%s5 + $0x124] sm:$0xf]
      %v5094 = vld [vmem:[%s5 + $0x128] sm:$0xf]
      %v5095 = vld [vmem:[%s5 + $0x12c] sm:$0xf]
      %v5096 = vld [vmem:[%s5 + $0x130] sm:$0xf]
      %v5097 = vld [vmem:[%s5 + $0x134] sm:$0xf]
      %v5098 = vld [vmem:[%s5 + $0x138] sm:$0xf]
      %v5099 = vld [vmem:[%s5 + $0x13c] sm:$0xf]
      %v5100 = vld [vmem:[%s5 + $0x140] sm:$0xf]
      %v5101 = vld [vmem:[%s5 + $0x144] sm:$0xf]
      %v5102 = vld [vmem:[%s5 + $0x148] sm:$0xf]
      %v5103 = vld [vmem:[%s5 + $0x14c] sm:$0xf]
      %v5104 = vld [vmem:[%s5 + $0x150] sm:$0xf]
      %v5105 = vld [vmem:[%s5 + $0x154] sm:$0xf]
      %v5106 = vld [vmem:[%s5 + $0x158] sm:$0xf]
      %v5107 = vld [vmem:[%s5 + $0x15c] sm:$0xf]
      %v5108 = vld [vmem:[%s5 + $0x160] sm:$0xf]
      %v5109 = vld [vmem:[%s5 + $0x164] sm:$0xf]
      %v5110 = vld [vmem:[%s5 + $0x168] sm:$0xf]
      %v5111 = vld [vmem:[%s5 + $0x16c] sm:$0xf]
      %v5112 = vld [vmem:[%s5 + $0x170] sm:$0xf]
      %v5113 = vld [vmem:[%s5 + $0x174] sm:$0xf]
      %v5114 = vld [vmem:[%s5 + $0x178] sm:$0xf]
      %v5115 = vld [vmem:[%s5 + $0x17c] sm:$0xf]
      %v5164 = vunpack.c.l.b16 %v5068
      %v5165 = vunpack.c.l.b16 %v5069
      %v5166 = vunpack.c.l.b16 %v5070
      %v5167 = vunpack.c.l.b16 %v5071
      %v5168 = vunpack.c.l.b16 %v5072
      %v5169 = vunpack.c.l.b16 %v5073
      %v5170 = vunpack.c.l.b16 %v5074
      %v5171 = vunpack.c.l.b16 %v5075
      %v5172 = vunpack.c.l.b16 %v5076
      %v5173 = vunpack.c.l.b16 %v5077
      %v5174 = vunpack.c.l.b16 %v5078
      %v5175 = vunpack.c.l.b16 %v5079
      %v5176 = vunpack.c.l.b16 %v5080
      %v5177 = vunpack.c.l.b16 %v5081
      %v5178 = vunpack.c.l.b16 %v5082
      %v5179 = vunpack.c.l.b16 %v5083
      %v5180 = vunpack.c.l.b16 %v5084
      %v5181 = vunpack.c.l.b16 %v5085
      %v5182 = vunpack.c.l.b16 %v5086
      %v5183 = vunpack.c.l.b16 %v5087
      %v5184 = vunpack.c.l.b16 %v5088
      %v5185 = vunpack.c.l.b16 %v5089
      %v5186 = vunpack.c.l.b16 %v5090
      %v5187 = vunpack.c.l.b16 %v5091
      %v5188 = vunpack.c.l.b16 %v5092
      %v5189 = vunpack.c.l.b16 %v5093
      %v5190 = vunpack.c.l.b16 %v5094
      %v5191 = vunpack.c.l.b16 %v5095
      %v5192 = vunpack.c.l.b16 %v5096
      %v5193 = vunpack.c.l.b16 %v5097
      %v5194 = vunpack.c.l.b16 %v5098
      %v5195 = vunpack.c.l.b16 %v5099
      %v5196 = vunpack.c.l.b16 %v5100
      %v5197 = vunpack.c.l.b16 %v5101
      %v5198 = vunpack.c.l.b16 %v5102
      %v5199 = vunpack.c.l.b16 %v5103
      %v5200 = vunpack.c.l.b16 %v5104
      %v5201 = vunpack.c.l.b16 %v5105
      %v5202 = vunpack.c.l.b16 %v5106
      %v5203 = vunpack.c.l.b16 %v5107
      %v5204 = vunpack.c.l.b16 %v5108
      %v5205 = vunpack.c.l.b16 %v5109
      %v5206 = vunpack.c.l.b16 %v5110
      %v5207 = vunpack.c.l.b16 %v5111
      %v5208 = vunpack.c.l.b16 %v5112
      %v5209 = vunpack.c.l.b16 %v5113
      %v5210 = vunpack.c.l.b16 %v5114
      %v5211 = vunpack.c.l.b16 %v5115
      %v5212 = vpack.c.b16 %v5165, %v5164
      %v5213 = vpack.c.b16 %v5167, %v5166
      %v5214 = vpack.c.b16 %v5169, %v5168
      %v5215 = vpack.c.b16 %v5171, %v5170
      %v5216 = vpack.c.b16 %v5173, %v5172
      %v5217 = vpack.c.b16 %v5175, %v5174
      %v5218 = vpack.c.b16 %v5177, %v5176
      %v5219 = vpack.c.b16 %v5179, %v5178
      %v5220 = vpack.c.b16 %v5181, %v5180
      %v5221 = vpack.c.b16 %v5183, %v5182
      %v5222 = vpack.c.b16 %v5185, %v5184
      %v5223 = vpack.c.b16 %v5187, %v5186
      %v5224 = vpack.c.b16 %v5189, %v5188
      %v5225 = vpack.c.b16 %v5191, %v5190
      %v5226 = vpack.c.b16 %v5193, %v5192
      %v5227 = vpack.c.b16 %v5195, %v5194
      %v5228 = vpack.c.b16 %v5197, %v5196
      %v5229 = vpack.c.b16 %v5199, %v5198
      %v5230 = vpack.c.b16 %v5201, %v5200
      %v5231 = vpack.c.b16 %v5203, %v5202
      %v5232 = vpack.c.b16 %v5205, %v5204
      %v5233 = vpack.c.b16 %v5207, %v5206
      %v5234 = vpack.c.b16 %v5209, %v5208
      %v5235 = vpack.c.b16 %v5211, %v5210
      %5260 = vmatprep.subr.bf16.mxu0 0
      %5261 = vmatpush1.bf16.msra.mxu0 %v5212
      %5262 = vmatprep.subr.bf16.mxu0 0
      %5263 = vmatpush1.bf16.msra.mxu0 %v5213
      %5264 = vmatprep.subr.bf16.mxu0 0
      %5265 = vmatpush1.bf16.msra.mxu0 %v5214
      %5266 = vmatprep.subr.bf16.mxu0 0
      %5267 = vmatpush1.bf16.msra.mxu0 %v5215
      %5268 = vmatprep.subr.bf16.mxu0 0
      %5269 = vmatpush1.bf16.msra.mxu0 %v5216
      %5270 = vmatprep.subr.bf16.mxu0 0
      %5271 = vmatpush1.bf16.msra.mxu0 %v5217
      %5272 = vmatprep.subr.bf16.mxu0 0
      %5273 = vmatpush1.bf16.msra.mxu0 %v5218
      %5274 = vmatprep.subr.bf16.mxu0 0
      %5275 = vmatpush1.bf16.msra.mxu0 %v5219
      %5276 = vmatprep.subr.bf16.mxu0 0
      %5277 = vmatpush1.bf16.msra.mxu0 %v5220
      %5278 = vmatprep.subr.bf16.mxu0 0
      %5279 = vmatpush1.bf16.msra.mxu0 %v5221
      %5280 = vmatprep.subr.bf16.mxu0 0
      %5281 = vmatpush1.bf16.msra.mxu0 %v5222
      %5282 = vmatprep.subr.bf16.mxu0 0
      %5283 = vmatpush1.bf16.msra.mxu0 %v5223
      %5284 = vmatprep.subr.bf16.mxu0 0
      %5285 = vmatpush1.bf16.msra.mxu0 %v5224
      %5286 = vmatprep.subr.bf16.mxu0 0
      %5287 = vmatpush1.bf16.msra.mxu0 %v5225
      %5288 = vmatprep.subr.bf16.mxu0 0
      %5289 = vmatpush1.bf16.msra.mxu0 %v5226
      %5290 = vmatprep.subr.bf16.mxu0 0
      %5291 = vmatpush1.bf16.msra.mxu0 %v5227
      %5292 = vmatprep.mubr.bf16.mxu0 %v4447
      %5293 = vmatmul.mubr.bf16.gmra.mrb[0].mxu0 %v4375
      %v5294 = vpop.f32.mrb[0].mxu0
      %v5295 = vadd.f32 0.0, %v5294
      %v5296 = vpop.f32.mrb[0].mxu0
      %v5297 = vpop.f32.mrb[0].mxu0
      %v5298 = vadd.f32 0.0, %v5297
      %v5299 = vpop.f32.mrb[0].mxu0
      %5300 = vmatprep.mubr.bf16.mxu0 %v4448
      %5301 = vmatmul.mubr.bf16.gmra.mrb[0].mxu0 %v4376
      %v5302 = vpop.f32.mrb[0].mxu0
      %v5303 = vadd.f32 0.0, %v5302
      %v5304 = vpop.f32.mrb[0].mxu0
      %v5305 = vpop.f32.mrb[0].mxu0
      %v5306 = vadd.f32 0.0, %v5305
      %v5307 = vpop.f32.mrb[0].mxu0
      %5308 = vmatprep.mubr.bf16.mxu0 %v4449
      %5309 = vmatmul.mubr.bf16.gmra.mrb[0].mxu0 %v4377
      %v5310 = vpop.f32.mrb[0].mxu0
      %v5311 = vadd.f32 0.0, %v5310
      %v5312 = vpop.f32.mrb[0].mxu0
      %v5313 = vpop.f32.mrb[0].mxu0
      %v5314 = vadd.f32 0.0, %v5313
      %v5315 = vpop.f32.mrb[0].mxu0
      %5316 = vmatprep.mubr.bf16.mxu0 %v4450
      %5317 = vmatmul.mubr.bf16.gmra.mrb[0].mxu0 %v4378
      %v5318 = vpop.f32.mrb[0].mxu0
      %v5319 = vadd.f32 0.0, %v5318
      %v5320 = vpop.f32.mrb[0].mxu0
      %v5321 = vpop.f32.mrb[0].mxu0
      %v5322 = vadd.f32 0.0, %v5321
      %v5323 = vpop.f32.mrb[0].mxu0
      %5324 = vmatprep.mubr.bf16.mxu0 %v4451
      %5325 = vmatmul.mubr.bf16.gmra.mrb[0].mxu0 %v4379
      %v5326 = vpop.f32.mrb[0].mxu0
      %v5327 = vadd.f32 0.0, %v5326
      %v5328 = vpop.f32.mrb[0].mxu0
      %v5329 = vpop.f32.mrb[0].mxu0
      %v5330 = vadd.f32 0.0, %v5329
      %v5331 = vpop.f32.mrb[0].mxu0
      %5332 = vmatprep.mubr.bf16.mxu0 %v4452
      %5333 = vmatmul.mubr.bf16.gmra.mrb[0].mxu0 %v4380
      %v5334 = vpop.f32.mrb[0].mxu0
      %v5335 = vadd.f32 0.0, %v5334
      %v5336 = vpop.f32.mrb[0].mxu0
      %v5337 = vpop.f32.mrb[0].mxu0
      %v5338 = vadd.f32 0.0, %v5337
      %v5339 = vpop.f32.mrb[0].mxu0
      %5340 = vmatprep.mubr.bf16.mxu0 %v4453
      %5341 = vmatmul.mubr.bf16.gmra.mrb[0].mxu0 %v4381
      %v5342 = vpop.f32.mrb[0].mxu0
      %v5343 = vadd.f32 0.0, %v5342
      %v5344 = vpop.f32.mrb[0].mxu0
      %v5345 = vpop.f32.mrb[0].mxu0
      %v5346 = vadd.f32 0.0, %v5345
      %v5347 = vpop.f32.mrb[0].mxu0
      %5348 = vmatprep.mubr.bf16.mxu0 %v4454
      %5349 = vmatmul.mubr.bf16.gmra.mrb[0].mxu0 %v4382
      %v5350 = vpop.f32.mrb[0].mxu0
      %v5351 = vadd.f32 0.0, %v5350
      %v5352 = vpop.f32.mrb[0].mxu0
      %v5353 = vpop.f32.mrb[0].mxu0
      %v5354 = vadd.f32 0.0, %v5353
      %v5355 = vpop.f32.mrb[0].mxu0
      %5356 = vmatprep.mubr.bf16.mxu0 %v4455
      %5357 = vmatmul.mubr.bf16.gmra.mrb[0].mxu0 %v4383
      %v5358 = vpop.f32.mrb[0].mxu0
      %v5359 = vadd.f32 0.0, %v5358
      %v5360 = vpop.f32.mrb[0].mxu0
      %v5361 = vpop.f32.mrb[0].mxu0
      %v5362 = vadd.f32 0.0, %v5361
      %v5363 = vpop.f32.mrb[0].mxu0
      %5364 = vmatprep.mubr.bf16.mxu0 %v4456
      %5365 = vmatmul.mubr.bf16.gmra.mrb[0].mxu0 %v4384
      %v5366 = vpop.f32.mrb[0].mxu0
      %v5367 = vadd.f32 0.0, %v5366
      %v5368 = vpop.f32.mrb[0].mxu0
      %v5369 = vpop.f32.mrb[0].mxu0
      %v5370 = vadd.f32 0.0, %v5369
      %v5371 = vpop.f32.mrb[0].mxu0
      %5372 = vmatprep.mubr.bf16.mxu0 %v4457
      %5373 = vmatmul.mubr.bf16.gmra.mrb[0].mxu0 %v4385
      %v5374 = vpop.f32.mrb[0].mxu0
      %v5375 = vadd.f32 0.0, %v5374
      %v5376 = vpop.f32.mrb[0].mxu0
      %v5377 = vpop.f32.mrb[0].mxu0
      %v5378 = vadd.f32 0.0, %v5377
      %v5379 = vpop.f32.mrb[0].mxu0
      %5380 = vmatprep.mubr.bf16.mxu0 %v4458
      %5381 = vmatmul.mubr.bf16.gmra.mrb[0].mxu0 %v4386
      %v5382 = vpop.f32.mrb[0].mxu0
      %v5383 = vadd.f32 0.0, %v5382
      %v5384 = vpop.f32.mrb[0].mxu0
      %v5385 = vpop.f32.mrb[0].mxu0
      %v5386 = vadd.f32 0.0, %v5385
      %v5387 = vpop.f32.mrb[0].mxu0
      %5388 = vmatprep.mubr.bf16.mxu0 %v4459
      %5389 = vmatmul.mubr.bf16.gmra.mrb[0].mxu0 %v4387
      %v5390 = vpop.f32.mrb[0].mxu0
      %v5391 = vadd.f32 0.0, %v5390
      %v5392 = vpop.f32.mrb[0].mxu0
      %v5393 = vpop.f32.mrb[0].mxu0
      %v5394 = vadd.f32 0.0, %v5393
      %v5395 = vpop.f32.mrb[0].mxu0
      %5396 = vmatprep.mubr.bf16.mxu0 %v4460
      %5397 = vmatmul.mubr.bf16.gmra.mrb[0].mxu0 %v4388
      %v5398 = vpop.f32.mrb[0].mxu0
      %v5399 = vadd.f32 0.0, %v5398
      %v5400 = vpop.f32.mrb[0].mxu0
      %v5401 = vpop.f32.mrb[0].mxu0
      %v5402 = vadd.f32 0.0, %v5401
      %v5403 = vpop.f32.mrb[0].mxu0
      %5404 = vmatprep.mubr.bf16.mxu0 %v4461
      %5405 = vmatmul.mubr.bf16.gmra.mrb[0].mxu0 %v4389
      %v5406 = vpop.f32.mrb[0].mxu0
      %v5407 = vadd.f32 0.0, %v5406
      %v5408 = vpop.f32.mrb[0].mxu0
      %v5409 = vpop.f32.mrb[0].mxu0
      %v5410 = vadd.f32 0.0, %v5409
      %v5411 = vpop.f32.mrb[0].mxu0
      %5412 = vmatprep.mubr.bf16.mxu0 %v4462
      %5413 = vmatmul.mubr.bf16.gmra.mrb[0].mxu0 %v4390
      %v5414 = vpop.f32.mrb[0].mxu0
      %v5415 = vadd.f32 0.0, %v5414
      %v5416 = vpop.f32.mrb[0].mxu0
      %v5417 = vpop.f32.mrb[0].mxu0
      %v5418 = vadd.f32 0.0, %v5417
      %v5419 = vpop.f32.mrb[0].mxu0
      %5420 = vdwg.mxu0
      %5421 = vmatprep.subr.bf16.mxu0 0
      %5422 = vmatpush1.bf16.msra.mxu0 %v5228
      %5423 = vmatprep.subr.bf16.mxu0 0
      %5424 = vmatpush1.bf16.msra.mxu0 %v5229
      %5425 = vmatprep.subr.bf16.mxu0 0
      %5426 = vmatpush1.bf16.msra.mxu0 %v5230
      %5427 = vmatprep.subr.bf16.mxu0 0
      %5428 = vmatpush1.bf16.msra.mxu0 %v5231
      %5429 = vmatprep.subr.bf16.mxu0 0
      %5430 = vmatpush1.bf16.msra.mxu0 %v5232
      %5431 = vmatprep.subr.bf16.mxu0 0
      %5432 = vmatpush1.bf16.msra.mxu0 %v5233
      %5433 = vmatprep.subr.bf16.mxu0 0
      %5434 = vmatpush1.bf16.msra.mxu0 %v5234
      %5435 = vmatprep.subr.bf16.mxu0 0
      %5436 = vmatpush1.bf16.msra.mxu0 %v5235
      %5437 = vmatprep.subr.bf16.mxu0 0
      %5438 = vmatpush1.bf16.msra.mxu0 0
      %5439 = vmatprep.subr.bf16.mxu0 0
      %5440 = vmatpush1.bf16.msra.mxu0 0
      %5441 = vmatprep.subr.bf16.mxu0 0
      %5442 = vmatpush1.bf16.msra.mxu0 0
      %5443 = vmatprep.subr.bf16.mxu0 0
      %5444 = vmatpush1.bf16.msra.mxu0 0
      %5445 = vmatprep.subr.bf16.mxu0 0
      %5446 = vmatpush1.bf16.msra.mxu0 0
      %5447 = vmatprep.subr.bf16.mxu0 0
      %5448 = vmatpush1.bf16.msra.mxu0 0
      %5449 = vmatprep.subr.bf16.mxu0 0
      %5450 = vmatpush1.bf16.msra.mxu0 0
      %5451 = vmatprep.subr.bf16.mxu0 0
      %5452 = vmatpush1.bf16.msra.mxu0 0
      %5453 = vmatprep.mubr.bf16.mxu0 0
      %5454 = vmatmul.mubr.bf16.gmra.mrb[0].mxu0 %v4495
      %v5455 = vpop.f32.mrb[0].mxu0
      %v5456 = vadd.f32 %v5295, %v5455
      %v5457 = vpop.f32.mrb[0].mxu0
      %v5458 = vpop.f32.mrb[0].mxu0
      %v5459 = vadd.f32 %v5298, %v5458
      %v5460 = vpop.f32.mrb[0].mxu0
      %5461 = vmatprep.mubr.bf16.mxu0 0
      %5462 = vmatmul.mubr.bf16.gmra.mrb[0].mxu0 %v4496
      %v5463 = vpop.f32.mrb[0].mxu0
      %v5464 = vadd.f32 %v5303, %v5463
      %v5465 = vpop.f32.mrb[0].mxu0
      %v5466 = vpop.f32.mrb[0].mxu0
      %v5467 = vadd.f32 %v5306, %v5466
      %v5468 = vpop.f32.mrb[0].mxu0
      %5469 = vmatprep.mubr.bf16.mxu0 0
      %5470 = vmatmul.mubr.bf16.gmra.mrb[0].mxu0 %v4497
      %v5471 = vpop.f32.mrb[0].mxu0
      %v5472 = vadd.f32 %v5311, %v5471
      %v5473 = vpop.f32.mrb[0].mxu0
      %v5474 = vpop.f32.mrb[0].mxu0
      %v5475 = vadd.f32 %v5314, %v5474
      %v5476 = vpop.f32.mrb[0].mxu0
      %5477 = vmatprep.mubr.bf16.mxu0 0
      %5478 = vmatmul.mubr.bf16.gmra.mrb[0].mxu0 %v4498
      %v5479 = vpop.f32.mrb[0].mxu0
      %v5480 = vadd.f32 %v5319, %v5479
      %v5481 = vpop.f32.mrb[0].mxu0
      %v5482 = vpop.f32.mrb[0].mxu0
      %v5483 = vadd.f32 %v5322, %v5482
      %v5484 = vpop.f32.mrb[0].mxu0
      %5485 = vmatprep.mubr.bf16.mxu0 0
      %5486 = vmatmul.mubr.bf16.gmra.mrb[0].mxu0 %v4499
      %v5487 = vpop.f32.mrb[0].mxu0
      %v5488 = vadd.f32 %v5327, %v5487
      %v5489 = vpop.f32.mrb[0].mxu0
      %v5490 = vpop.f32.mrb[0].mxu0
      %v5491 = vadd.f32 %v5330, %v5490
      %v5492 = vpop.f32.mrb[0].mxu0
      %5493 = vmatprep.mubr.bf16.mxu0 0
      %5494 = vmatmul.mubr.bf16.gmra.mrb[0].mxu0 %v4500
      %v5495 = vpop.f32.mrb[0].mxu0
      %v5496 = vadd.f32 %v5335, %v5495
      %v5497 = vpop.f32.mrb[0].mxu0
      %v5498 = vpop.f32.mrb[0].mxu0
      %v5499 = vadd.f32 %v5338, %v5498
      %v5500 = vpop.f32.mrb[0].mxu0
      %5501 = vmatprep.mubr.bf16.mxu0 0
      %5502 = vmatmul.mubr.bf16.gmra.mrb[0].mxu0 %v4501
      %v5503 = vpop.f32.mrb[0].mxu0
      %v5504 = vadd.f32 %v5343, %v5503
      %v5505 = vpop.f32.mrb[0].mxu0
      %v5506 = vpop.f32.mrb[0].mxu0
      %v5507 = vadd.f32 %v5346, %v5506
      %v5508 = vpop.f32.mrb[0].mxu0
      %5509 = vmatprep.mubr.bf16.mxu0 0
      %5510 = vmatmul.mubr.bf16.gmra.mrb[0].mxu0 %v4502
      %v5511 = vpop.f32.mrb[0].mxu0
      %v5512 = vadd.f32 %v5351, %v5511
      %v5513 = vpop.f32.mrb[0].mxu0
      %v5514 = vpop.f32.mrb[0].mxu0
      %v5515 = vadd.f32 %v5354, %v5514
      %v5516 = vpop.f32.mrb[0].mxu0
      %5517 = vmatprep.mubr.bf16.mxu0 0
      %5518 = vmatmul.mubr.bf16.gmra.mrb[0].mxu0 %v4503
      %v5519 = vpop.f32.mrb[0].mxu0
      %v5520 = vadd.f32 %v5359, %v5519
      %v5521 = vpop.f32.mrb[0].mxu0
      %v5522 = vpop.f32.mrb[0].mxu0
      %v5523 = vadd.f32 %v5362, %v5522
      %v5524 = vpop.f32.mrb[0].mxu0
      %5525 = vmatprep.mubr.bf16.mxu0 0
      %5526 = vmatmul.mubr.bf16.gmra.mrb[0].mxu0 %v4504
      %v5527 = vpop.f32.mrb[0].mxu0
      %v5528 = vadd.f32 %v5367, %v5527
      %v5529 = vpop.f32.mrb[0].mxu0
      %v5530 = vpop.f32.mrb[0].mxu0
      %v5531 = vadd.f32 %v5370, %v5530
      %v5532 = vpop.f32.mrb[0].mxu0
      %5533 = vmatprep.mubr.bf16.mxu0 0
      %5534 = vmatmul.mubr.bf16.gmra.mrb[0].mxu0 %v4505
      %v5535 = vpop.f32.mrb[0].mxu0
      %v5536 = vadd.f32 %v5375, %v5535
      %v5537 = vpop.f32.mrb[0].mxu0
      %v5538 = vpop.f32.mrb[0].mxu0
      %v5539 = vadd.f32 %v5378, %v5538
      %v5540 = vpop.f32.mrb[0].mxu0
      %5541 = vmatprep.mubr.bf16.mxu0 0
      %5542 = vmatmul.mubr.bf16.gmra.mrb[0].mxu0 %v4506
      %v5543 = vpop.f32.mrb[0].mxu0
      %v5544 = vadd.f32 %v5383, %v5543
      %v5545 = vpop.f32.mrb[0].mxu0
      %v5546 = vpop.f32.mrb[0].mxu0
      %v5547 = vadd.f32 %v5386, %v5546
      %v5548 = vpop.f32.mrb[0].mxu0
      %5549 = vmatprep.mubr.bf16.mxu0 0
      %5550 = vmatmul.mubr.bf16.gmra.mrb[0].mxu0 %v4507
      %v5551 = vpop.f32.mrb[0].mxu0
      %v5552 = vadd.f32 %v5391, %v5551
      %v5553 = vpop.f32.mrb[0].mxu0
      %v5554 = vpop.f32.mrb[0].mxu0
      %v5555 = vadd.f32 %v5394, %v5554
      %v5556 = vpop.f32.mrb[0].mxu0
      %5557 = vmatprep.mubr.bf16.mxu0 0
      %5558 = vmatmul.mubr.bf16.gmra.mrb[0].mxu0 %v4508
      %v5559 = vpop.f32.mrb[0].mxu0
      %v5560 = vadd.f32 %v5399, %v5559
      %v5561 = vpop.f32.mrb[0].mxu0
      %v5562 = vpop.f32.mrb[0].mxu0
      %v5563 = vadd.f32 %v5402, %v5562
      %v5564 = vpop.f32.mrb[0].mxu0
      %5565 = vmatprep.mubr.bf16.mxu0 0
      %5566 = vmatmul.mubr.bf16.gmra.mrb[0].mxu0 %v4509
      %v5567 = vpop.f32.mrb[0].mxu0
      %v5568 = vadd.f32 %v5407, %v5567
      %v5569 = vpop.f32.mrb[0].mxu0
      %v5570 = vpop.f32.mrb[0].mxu0
      %v5571 = vadd.f32 %v5410, %v5570
      %v5572 = vpop.f32.mrb[0].mxu0
      %5573 = vmatprep.mubr.bf16.mxu0 0
      %5574 = vmatmul.mubr.bf16.gmra.mrb[0].mxu0 %v4510
      %v5575 = vpop.f32.mrb[0].mxu0
      %v5576 = vadd.f32 %v5415, %v5575
      %v5577 = vpop.f32.mrb[0].mxu0
      %v5578 = vpop.f32.mrb[0].mxu0
      %v5579 = vadd.f32 %v5418, %v5578
      %v5580 = vpop.f32.mrb[0].mxu0
      %5581 = vdwg.mxu0
      %v5582 = vadd.f32 %v5036, %v5456
      %v5583 = vadd.f32 %v5037, %v5459
      %v5584 = vadd.f32 %v5038, %v5464
      %v5585 = vadd.f32 %v5039, %v5467
      %v5586 = vadd.f32 %v5040, %v5472
      %v5587 = vadd.f32 %v5041, %v5475
      %v5588 = vadd.f32 %v5042, %v5480
      %v5589 = vadd.f32 %v5043, %v5483
      %v5590 = vadd.f32 %v5044, %v5488
      %v5591 = vadd.f32 %v5045, %v5491
      %v5592 = vadd.f32 %v5046, %v5496
      %v5593 = vadd.f32 %v5047, %v5499
      %v5594 = vadd.f32 %v5048, %v5504
      %v5595 = vadd.f32 %v5049, %v5507
      %v5596 = vadd.f32 %v5050, %v5512
      %v5597 = vadd.f32 %v5051, %v5515
      %v5598 = vadd.f32 %v5052, %v5520
      %v5599 = vadd.f32 %v5053, %v5523
      %v5600 = vadd.f32 %v5054, %v5528
      %v5601 = vadd.f32 %v5055, %v5531
      %v5602 = vadd.f32 %v5056, %v5536
      %v5603 = vadd.f32 %v5057, %v5539
      %v5604 = vadd.f32 %v5058, %v5544
      %v5605 = vadd.f32 %v5059, %v5547
      %v5606 = vadd.f32 %v5060, %v5552
      %v5607 = vadd.f32 %v5061, %v5555
      %v5608 = vadd.f32 %v5062, %v5560
      %v5609 = vadd.f32 %v5063, %v5563
      %v5610 = vadd.f32 %v5064, %v5568
      %v5611 = vadd.f32 %v5065, %v5571
      %v5612 = vadd.f32 %v5066, %v5576
      %v5613 = vadd.f32 %v5067, %v5579
      %v5614 = vld [vmem:[%s5 + $0x180] sm:$0xf]
      %v5615 = vld [vmem:[%s5 + $0x184] sm:$0xf]
      %v5616 = vld [vmem:[%s5 + $0x188] sm:$0xf]
      %v5617 = vld [vmem:[%s5 + $0x18c] sm:$0xf]
      %v5618 = vld [vmem:[%s5 + $0x190] sm:$0xf]
      %v5619 = vld [vmem:[%s5 + $0x194] sm:$0xf]
      %v5620 = vld [vmem:[%s5 + $0x198] sm:$0xf]
      %v5621 = vld [vmem:[%s5 + $0x19c] sm:$0xf]
      %v5622 = vld [vmem:[%s5 + $0x1a0] sm:$0xf]
      %v5623 = vld [vmem:[%s5 + $0x1a4] sm:$0xf]
      %v5624 = vld [vmem:[%s5 + $0x1a8] sm:$0xf]
      %v5625 = vld [vmem:[%s5 + $0x1ac] sm:$0xf]
      %v5626 = vld [vmem:[%s5 + $0x1b0] sm:$0xf]
      %v5627 = vld [vmem:[%s5 + $0x1b4] sm:$0xf]
      %v5628 = vld [vmem:[%s5 + $0x1b8] sm:$0xf]
      %v5629 = vld [vmem:[%s5 + $0x1bc] sm:$0xf]
      %v5630 = vld [vmem:[%s5 + $0x1c0] sm:$0xf]
      %v5631 = vld [vmem:[%s5 + $0x1c4] sm:$0xf]
      %v5632 = vld [vmem:[%s5 + $0x1c8] sm:$0xf]
      %v5633 = vld [vmem:[%s5 + $0x1cc] sm:$0xf]
      %v5634 = vld [vmem:[%s5 + $0x1d0] sm:$0xf]
      %v5635 = vld [vmem:[%s5 + $0x1d4] sm:$0xf]
      %v5636 = vld [vmem:[%s5 + $0x1d8] sm:$0xf]
      %v5637 = vld [vmem:[%s5 + $0x1dc] sm:$0xf]
      %v5638 = vld [vmem:[%s5 + $0x1e0] sm:$0xf]
      %v5639 = vld [vmem:[%s5 + $0x1e4] sm:$0xf]
      %v5640 = vld [vmem:[%s5 + $0x1e8] sm:$0xf]
      %v5641 = vld [vmem:[%s5 + $0x1ec] sm:$0xf]
      %v5642 = vld [vmem:[%s5 + $0x1f0] sm:$0xf]
      %v5643 = vld [vmem:[%s5 + $0x1f4] sm:$0xf]
      %v5644 = vld [vmem:[%s5 + $0x1f8] sm:$0xf]
      %v5645 = vld [vmem:[%s5 + $0x1fc] sm:$0xf]
      %v5646 = vld [vmem:[%s5 + $0x200] sm:$0xf]
      %v5647 = vld [vmem:[%s5 + $0x204] sm:$0xf]
      %v5648 = vld [vmem:[%s5 + $0x208] sm:$0xf]
      %v5649 = vld [vmem:[%s5 + $0x20c] sm:$0xf]
      %v5650 = vld [vmem:[%s5 + $0x210] sm:$0xf]
      %v5651 = vld [vmem:[%s5 + $0x214] sm:$0xf]
      %v5652 = vld [vmem:[%s5 + $0x218] sm:$0xf]
      %v5653 = vld [vmem:[%s5 + $0x21c] sm:$0xf]
      %v5654 = vld [vmem:[%s5 + $0x220] sm:$0xf]
      %v5655 = vld [vmem:[%s5 + $0x224] sm:$0xf]
      %v5656 = vld [vmem:[%s5 + $0x228] sm:$0xf]
      %v5657 = vld [vmem:[%s5 + $0x22c] sm:$0xf]
      %v5658 = vld [vmem:[%s5 + $0x230] sm:$0xf]
      %v5659 = vld [vmem:[%s5 + $0x234] sm:$0xf]
      %v5660 = vld [vmem:[%s5 + $0x238] sm:$0xf]
      %v5661 = vld [vmem:[%s5 + $0x23c] sm:$0xf]
      %v5710 = vunpack.c.l.b16 %v5614
      %v5711 = vunpack.c.l.b16 %v5615
      %v5712 = vunpack.c.l.b16 %v5616
      %v5713 = vunpack.c.l.b16 %v5617
      %v5714 = vunpack.c.l.b16 %v5618
      %v5715 = vunpack.c.l.b16 %v5619
      %v5716 = vunpack.c.l.b16 %v5620
      %v5717 = vunpack.c.l.b16 %v5621
      %v5718 = vunpack.c.l.b16 %v5622
      %v5719 = vunpack.c.l.b16 %v5623
      %v5720 = vunpack.c.l.b16 %v5624
      %v5721 = vunpack.c.l.b16 %v5625
      %v5722 = vunpack.c.l.b16 %v5626
      %v5723 = vunpack.c.l.b16 %v5627
      %v5724 = vunpack.c.l.b16 %v5628
      %v5725 = vunpack.c.l.b16 %v5629
      %v5726 = vunpack.c.l.b16 %v5630
      %v5727 = vunpack.c.l.b16 %v5631
      %v5728 = vunpack.c.l.b16 %v5632
      %v5729 = vunpack.c.l.b16 %v5633
      %v5730 = vunpack.c.l.b16 %v5634
      %v5731 = vunpack.c.l.b16 %v5635
      %v5732 = vunpack.c.l.b16 %v5636
      %v5733 = vunpack.c.l.b16 %v5637
      %v5734 = vunpack.c.l.b16 %v5638
      %v5735 = vunpack.c.l.b16 %v5639
      %v5736 = vunpack.c.l.b16 %v5640
      %v5737 = vunpack.c.l.b16 %v5641
      %v5738 = vunpack.c.l.b16 %v5642
      %v5739 = vunpack.c.l.b16 %v5643
      %v5740 = vunpack.c.l.b16 %v5644
      %v5741 = vunpack.c.l.b16 %v5645
      %v5742 = vunpack.c.l.b16 %v5646
      %v5743 = vunpack.c.l.b16 %v5647
      %v5744 = vunpack.c.l.b16 %v5648
      %v5745 = vunpack.c.l.b16 %v5649
      %v5746 = vunpack.c.l.b16 %v5650
      %v5747 = vunpack.c.l.b16 %v5651
      %v5748 = vunpack.c.l.b16 %v5652
      %v5749 = vunpack.c.l.b16 %v5653
      %v5750 = vunpack.c.l.b16 %v5654
      %v5751 = vunpack.c.l.b16 %v5655
      %v5752 = vunpack.c.l.b16 %v5656
      %v5753 = vunpack.c.l.b16 %v5657
      %v5754 = vunpack.c.l.b16 %v5658
      %v5755 = vunpack.c.l.b16 %v5659
      %v5756 = vunpack.c.l.b16 %v5660
      %v5757 = vunpack.c.l.b16 %v5661
      %v5758 = vpack.c.b16 %v5711, %v5710
      %v5759 = vpack.c.b16 %v5713, %v5712
      %v5760 = vpack.c.b16 %v5715, %v5714
      %v5761 = vpack.c.b16 %v5717, %v5716
      %v5762 = vpack.c.b16 %v5719, %v5718
      %v5763 = vpack.c.b16 %v5721, %v5720
      %v5764 = vpack.c.b16 %v5723, %v5722
      %v5765 = vpack.c.b16 %v5725, %v5724
      %v5766 = vpack.c.b16 %v5727, %v5726
      %v5767 = vpack.c.b16 %v5729, %v5728
      %v5768 = vpack.c.b16 %v5731, %v5730
      %v5769 = vpack.c.b16 %v5733, %v5732
      %v5770 = vpack.c.b16 %v5735, %v5734
      %v5771 = vpack.c.b16 %v5737, %v5736
      %v5772 = vpack.c.b16 %v5739, %v5738
      %v5773 = vpack.c.b16 %v5741, %v5740
      %v5774 = vpack.c.b16 %v5743, %v5742
      %v5775 = vpack.c.b16 %v5745, %v5744
      %v5776 = vpack.c.b16 %v5747, %v5746
      %v5777 = vpack.c.b16 %v5749, %v5748
      %v5778 = vpack.c.b16 %v5751, %v5750
      %v5779 = vpack.c.b16 %v5753, %v5752
      %v5780 = vpack.c.b16 %v5755, %v5754
      %v5781 = vpack.c.b16 %v5757, %v5756
      %5806 = vmatprep.subr.bf16.mxu0 0
      %5807 = vmatpush1.bf16.msra.mxu0 %v5758
      %5808 = vmatprep.subr.bf16.mxu0 0
      %5809 = vmatpush1.bf16.msra.mxu0 %v5759
      %5810 = vmatprep.subr.bf16.mxu0 0
      %5811 = vmatpush1.bf16.msra.mxu0 %v5760
      %5812 = vmatprep.subr.bf16.mxu0 0
      %5813 = vmatpush1.bf16.msra.mxu0 %v5761
      %5814 = vmatprep.subr.bf16.mxu0 0
      %5815 = vmatpush1.bf16.msra.mxu0 %v5762
      %5816 = vmatprep.subr.bf16.mxu0 0
      %5817 = vmatpush1.bf16.msra.mxu0 %v5763
      %5818 = vmatprep.subr.bf16.mxu0 0
      %5819 = vmatpush1.bf16.msra.mxu0 %v5764
      %5820 = vmatprep.subr.bf16.mxu0 0
      %5821 = vmatpush1.bf16.msra.mxu0 %v5765
      %5822 = vmatprep.subr.bf16.mxu0 0
      %5823 = vmatpush1.bf16.msra.mxu0 %v5766
      %5824 = vmatprep.subr.bf16.mxu0 0
      %5825 = vmatpush1.bf16.msra.mxu0 %v5767
      %5826 = vmatprep.subr.bf16.mxu0 0
      %5827 = vmatpush1.bf16.msra.mxu0 %v5768
      %5828 = vmatprep.subr.bf16.mxu0 0
      %5829 = vmatpush1.bf16.msra.mxu0 %v5769
      %5830 = vmatprep.subr.bf16.mxu0 0
      %5831 = vmatpush1.bf16.msra.mxu0 %v5770
      %5832 = vmatprep.subr.bf16.mxu0 0
      %5833 = vmatpush1.bf16.msra.mxu0 %v5771
      %5834 = vmatprep.subr.bf16.mxu0 0
      %5835 = vmatpush1.bf16.msra.mxu0 %v5772
      %5836 = vmatprep.subr.bf16.mxu0 0
      %5837 = vmatpush1.bf16.msra.mxu0 %v5773
      %5838 = vmatprep.mubr.bf16.mxu0 %v4451
      %5839 = vmatmul.mubr.bf16.gmra.mrb[0].mxu0 %v4379
      %v5840 = vpop.f32.mrb[0].mxu0
      %v5841 = vadd.f32 0.0, %v5840
      %v5842 = vpop.f32.mrb[0].mxu0
      %v5843 = vpop.f32.mrb[0].mxu0
      %v5844 = vadd.f32 0.0, %v5843
      %v5845 = vpop.f32.mrb[0].mxu0
      %5846 = vmatprep.mubr.bf16.mxu0 %v4452
      %5847 = vmatmul.mubr.bf16.gmra.mrb[0].mxu0 %v4380
      %v5848 = vpop.f32.mrb[0].mxu0
      %v5849 = vadd.f32 0.0, %v5848
      %v5850 = vpop.f32.mrb[0].mxu0
      %v5851 = vpop.f32.mrb[0].mxu0
      %v5852 = vadd.f32 0.0, %v5851
      %v5853 = vpop.f32.mrb[0].mxu0
      %5854 = vmatprep.mubr.bf16.mxu0 %v4453
      %5855 = vmatmul.mubr.bf16.gmra.mrb[0].mxu0 %v4381
      %v5856 = vpop.f32.mrb[0].mxu0
      %v5857 = vadd.f32 0.0, %v5856
      %v5858 = vpop.f32.mrb[0].mxu0
      %v5859 = vpop.f32.mrb[0].mxu0
      %v5860 = vadd.f32 0.0, %v5859
      %v5861 = vpop.f32.mrb[0].mxu0
      %5862 = vmatprep.mubr.bf16.mxu0 %v4454
      %5863 = vmatmul.mubr.bf16.gmra.mrb[0].mxu0 %v4382
      %v5864 = vpop.f32.mrb[0].mxu0
      %v5865 = vadd.f32 0.0, %v5864
      %v5866 = vpop.f32.mrb[0].mxu0
      %v5867 = vpop.f32.mrb[0].mxu0
      %v5868 = vadd.f32 0.0, %v5867
      %v5869 = vpop.f32.mrb[0].mxu0
      %5870 = vmatprep.mubr.bf16.mxu0 %v4455
      %5871 = vmatmul.mubr.bf16.gmra.mrb[0].mxu0 %v4383
      %v5872 = vpop.f32.mrb[0].mxu0
      %v5873 = vadd.f32 0.0, %v5872
      %v5874 = vpop.f32.mrb[0].mxu0
      %v5875 = vpop.f32.mrb[0].mxu0
      %v5876 = vadd.f32 0.0, %v5875
      %v5877 = vpop.f32.mrb[0].mxu0
      %5878 = vmatprep.mubr.bf16.mxu0 %v4456
      %5879 = vmatmul.mubr.bf16.gmra.mrb[0].mxu0 %v4384
      %v5880 = vpop.f32.mrb[0].mxu0
      %v5881 = vadd.f32 0.0, %v5880
      %v5882 = vpop.f32.mrb[0].mxu0
      %v5883 = vpop.f32.mrb[0].mxu0
      %v5884 = vadd.f32 0.0, %v5883
      %v5885 = vpop.f32.mrb[0].mxu0
      %5886 = vmatprep.mubr.bf16.mxu0 %v4457
      %5887 = vmatmul.mubr.bf16.gmra.mrb[0].mxu0 %v4385
      %v5888 = vpop.f32.mrb[0].mxu0
      %v5889 = vadd.f32 0.0, %v5888
      %v5890 = vpop.f32.mrb[0].mxu0
      %v5891 = vpop.f32.mrb[0].mxu0
      %v5892 = vadd.f32 0.0, %v5891
      %v5893 = vpop.f32.mrb[0].mxu0
      %5894 = vmatprep.mubr.bf16.mxu0 %v4458
      %5895 = vmatmul.mubr.bf16.gmra.mrb[0].mxu0 %v4386
      %v5896 = vpop.f32.mrb[0].mxu0
      %v5897 = vadd.f32 0.0, %v5896
      %v5898 = vpop.f32.mrb[0].mxu0
      %v5899 = vpop.f32.mrb[0].mxu0
      %v5900 = vadd.f32 0.0, %v5899
      %v5901 = vpop.f32.mrb[0].mxu0
      %5902 = vmatprep.mubr.bf16.mxu0 %v4459
      %5903 = vmatmul.mubr.bf16.gmra.mrb[0].mxu0 %v4387
      %v5904 = vpop.f32.mrb[0].mxu0
      %v5905 = vadd.f32 0.0, %v5904
      %v5906 = vpop.f32.mrb[0].mxu0
      %v5907 = vpop.f32.mrb[0].mxu0
      %v5908 = vadd.f32 0.0, %v5907
      %v5909 = vpop.f32.mrb[0].mxu0
      %5910 = vmatprep.mubr.bf16.mxu0 %v4460
      %5911 = vmatmul.mubr.bf16.gmra.mrb[0].mxu0 %v4388
      %v5912 = vpop.f32.mrb[0].mxu0
      %v5913 = vadd.f32 0.0, %v5912
      %v5914 = vpop.f32.mrb[0].mxu0
      %v5915 = vpop.f32.mrb[0].mxu0
      %v5916 = vadd.f32 0.0, %v5915
      %v5917 = vpop.f32.mrb[0].mxu0
      %5918 = vmatprep.mubr.bf16.mxu0 %v4461
      %5919 = vmatmul.mubr.bf16.gmra.mrb[0].mxu0 %v4389
      %v5920 = vpop.f32.mrb[0].mxu0
      %v5921 = vadd.f32 0.0, %v5920
      %v5922 = vpop.f32.mrb[0].mxu0
      %v5923 = vpop.f32.mrb[0].mxu0
      %v5924 = vadd.f32 0.0, %v5923
      %v5925 = vpop.f32.mrb[0].mxu0
      %5926 = vmatprep.mubr.bf16.mxu0 %v4462
      %5927 = vmatmul.mubr.bf16.gmra.mrb[0].mxu0 %v4390
      %v5928 = vpop.f32.mrb[0].mxu0
      %v5929 = vadd.f32 0.0, %v5928
      %v5930 = vpop.f32.mrb[0].mxu0
      %v5931 = vpop.f32.mrb[0].mxu0
      %v5932 = vadd.f32 0.0, %v5931
      %v5933 = vpop.f32.mrb[0].mxu0
      %5934 = vmatprep.mubr.bf16.mxu0 %v4463
      %5935 = vmatmul.mubr.bf16.gmra.mrb[0].mxu0 %v4391
      %v5936 = vpop.f32.mrb[0].mxu0
      %v5937 = vadd.f32 0.0, %v5936
      %v5938 = vpop.f32.mrb[0].mxu0
      %v5939 = vpop.f32.mrb[0].mxu0
      %v5940 = vadd.f32 0.0, %v5939
      %v5941 = vpop.f32.mrb[0].mxu0
      %5942 = vmatprep.mubr.bf16.mxu0 %v4464
      %5943 = vmatmul.mubr.bf16.gmra.mrb[0].mxu0 %v4392
      %v5944 = vpop.f32.mrb[0].mxu0
      %v5945 = vadd.f32 0.0, %v5944
      %v5946 = vpop.f32.mrb[0].mxu0
      %v5947 = vpop.f32.mrb[0].mxu0
      %v5948 = vadd.f32 0.0, %v5947
      %v5949 = vpop.f32.mrb[0].mxu0
      %5950 = vmatprep.mubr.bf16.mxu0 %v4465
      %5951 = vmatmul.mubr.bf16.gmra.mrb[0].mxu0 %v4393
      %v5952 = vpop.f32.mrb[0].mxu0
      %v5953 = vadd.f32 0.0, %v5952
      %v5954 = vpop.f32.mrb[0].mxu0
      %v5955 = vpop.f32.mrb[0].mxu0
      %v5956 = vadd.f32 0.0, %v5955
      %v5957 = vpop.f32.mrb[0].mxu0
      %5958 = vmatprep.mubr.bf16.mxu0 %v4466
      %5959 = vmatmul.mubr.bf16.gmra.mrb[0].mxu0 %v4394
      %v5960 = vpop.f32.mrb[0].mxu0
      %v5961 = vadd.f32 0.0, %v5960
      %v5962 = vpop.f32.mrb[0].mxu0
      %v5963 = vpop.f32.mrb[0].mxu0
      %v5964 = vadd.f32 0.0, %v5963
      %v5965 = vpop.f32.mrb[0].mxu0
      %5966 = vdwg.mxu0
      %5967 = vmatprep.subr.bf16.mxu0 0
      %5968 = vmatpush1.bf16.msra.mxu0 %v5774
      %5969 = vmatprep.subr.bf16.mxu0 0
      %5970 = vmatpush1.bf16.msra.mxu0 %v5775
      %5971 = vmatprep.subr.bf16.mxu0 0
      %5972 = vmatpush1.bf16.msra.mxu0 %v5776
      %5973 = vmatprep.subr.bf16.mxu0 0
      %5974 = vmatpush1.bf16.msra.mxu0 %v5777
      %5975 = vmatprep.subr.bf16.mxu0 0
      %5976 = vmatpush1.bf16.msra.mxu0 %v5778
      %5977 = vmatprep.subr.bf16.mxu0 0
      %5978 = vmatpush1.bf16.msra.mxu0 %v5779
      %5979 = vmatprep.subr.bf16.mxu0 0
      %5980 = vmatpush1.bf16.msra.mxu0 %v5780
      %5981 = vmatprep.subr.bf16.mxu0 0
      %5982 = vmatpush1.bf16.msra.mxu0 %v5781
      %5983 = vmatprep.subr.bf16.mxu0 0
      %5984 = vmatpush1.bf16.msra.mxu0 0
      %5985 = vmatprep.subr.bf16.mxu0 0
      %5986 = vmatpush1.bf16.msra.mxu0 0
      %5987 = vmatprep.subr.bf16.mxu0 0
      %5988 = vmatpush1.bf16.msra.mxu0 0
      %5989 = vmatprep.subr.bf16.mxu0 0
      %5990 = vmatpush1.bf16.msra.mxu0 0
      %5991 = vmatprep.subr.bf16.mxu0 0
      %5992 = vmatpush1.bf16.msra.mxu0 0
      %5993 = vmatprep.subr.bf16.mxu0 0
      %5994 = vmatpush1.bf16.msra.mxu0 0
      %5995 = vmatprep.subr.bf16.mxu0 0
      %5996 = vmatpush1.bf16.msra.mxu0 0
      %5997 = vmatprep.subr.bf16.mxu0 0
      %5998 = vmatpush1.bf16.msra.mxu0 0
      %5999 = vmatprep.mubr.bf16.mxu0 0
      %6000 = vmatmul.mubr.bf16.gmra.mrb[0].mxu0 %v4499
      %v6001 = vpop.f32.mrb[0].mxu0
      %v6002 = vadd.f32 %v5841, %v6001
      %v6003 = vpop.f32.mrb[0].mxu0
      %v6004 = vpop.f32.mrb[0].mxu0
      %v6005 = vadd.f32 %v5844, %v6004
      %v6006 = vpop.f32.mrb[0].mxu0
      %6007 = vmatprep.mubr.bf16.mxu0 0
      %6008 = vmatmul.mubr.bf16.gmra.mrb[0].mxu0 %v4500
      %v6009 = vpop.f32.mrb[0].mxu0
      %v6010 = vadd.f32 %v5849, %v6009
      %v6011 = vpop.f32.mrb[0].mxu0
      %v6012 = vpop.f32.mrb[0].mxu0
      %v6013 = vadd.f32 %v5852, %v6012
      %v6014 = vpop.f32.mrb[0].mxu0
      %6015 = vmatprep.mubr.bf16.mxu0 0
      %6016 = vmatmul.mubr.bf16.gmra.mrb[0].mxu0 %v4501
      %v6017 = vpop.f32.mrb[0].mxu0
      %v6018 = vadd.f32 %v5857, %v6017
      %v6019 = vpop.f32.mrb[0].mxu0
      %v6020 = vpop.f32.mrb[0].mxu0
      %v6021 = vadd.f32 %v5860, %v6020
      %v6022 = vpop.f32.mrb[0].mxu0
      %6023 = vmatprep.mubr.bf16.mxu0 0
      %6024 = vmatmul.mubr.bf16.gmra.mrb[0].mxu0 %v4502
      %v6025 = vpop.f32.mrb[0].mxu0
      %v6026 = vadd.f32 %v5865, %v6025
      %v6027 = vpop.f32.mrb[0].mxu0
      %v6028 = vpop.f32.mrb[0].mxu0
      %v6029 = vadd.f32 %v5868, %v6028
      %v6030 = vpop.f32.mrb[0].mxu0
      %6031 = vmatprep.mubr.bf16.mxu0 0
      %6032 = vmatmul.mubr.bf16.gmra.mrb[0].mxu0 %v4503
      %v6033 = vpop.f32.mrb[0].mxu0
      %v6034 = vadd.f32 %v5873, %v6033
      %v6035 = vpop.f32.mrb[0].mxu0
      %v6036 = vpop.f32.mrb[0].mxu0
      %v6037 = vadd.f32 %v5876, %v6036
      %v6038 = vpop.f32.mrb[0].mxu0
      %6039 = vmatprep.mubr.bf16.mxu0 0
      %6040 = vmatmul.mubr.bf16.gmra.mrb[0].mxu0 %v4504
      %v6041 = vpop.f32.mrb[0].mxu0
      %v6042 = vadd.f32 %v5881, %v6041
      %v6043 = vpop.f32.mrb[0].mxu0
      %v6044 = vpop.f32.mrb[0].mxu0
      %v6045 = vadd.f32 %v5884, %v6044
      %v6046 = vpop.f32.mrb[0].mxu0
      %6047 = vmatprep.mubr.bf16.mxu0 0
      %6048 = vmatmul.mubr.bf16.gmra.mrb[0].mxu0 %v4505
      %v6049 = vpop.f32.mrb[0].mxu0
      %v6050 = vadd.f32 %v5889, %v6049
      %v6051 = vpop.f32.mrb[0].mxu0
      %v6052 = vpop.f32.mrb[0].mxu0
      %v6053 = vadd.f32 %v5892, %v6052
      %v6054 = vpop.f32.mrb[0].mxu0
      %6055 = vmatprep.mubr.bf16.mxu0 0
      %6056 = vmatmul.mubr.bf16.gmra.mrb[0].mxu0 %v4506
      %v6057 = vpop.f32.mrb[0].mxu0
      %v6058 = vadd.f32 %v5897, %v6057
      %v6059 = vpop.f32.mrb[0].mxu0
      %v6060 = vpop.f32.mrb[0].mxu0
      %v6061 = vadd.f32 %v5900, %v6060
      %v6062 = vpop.f32.mrb[0].mxu0
      %6063 = vmatprep.mubr.bf16.mxu0 0
      %6064 = vmatmul.mubr.bf16.gmra.mrb[0].mxu0 %v4507
      %v6065 = vpop.f32.mrb[0].mxu0
      %v6066 = vadd.f32 %v5905, %v6065
      %v6067 = vpop.f32.mrb[0].mxu0
      %v6068 = vpop.f32.mrb[0].mxu0
      %v6069 = vadd.f32 %v5908, %v6068
      %v6070 = vpop.f32.mrb[0].mxu0
      %6071 = vmatprep.mubr.bf16.mxu0 0
      %6072 = vmatmul.mubr.bf16.gmra.mrb[0].mxu0 %v4508
      %v6073 = vpop.f32.mrb[0].mxu0
      %v6074 = vadd.f32 %v5913, %v6073
      %v6075 = vpop.f32.mrb[0].mxu0
      %v6076 = vpop.f32.mrb[0].mxu0
      %v6077 = vadd.f32 %v5916, %v6076
      %v6078 = vpop.f32.mrb[0].mxu0
      %6079 = vmatprep.mubr.bf16.mxu0 0
      %6080 = vmatmul.mubr.bf16.gmra.mrb[0].mxu0 %v4509
      %v6081 = vpop.f32.mrb[0].mxu0
      %v6082 = vadd.f32 %v5921, %v6081
      %v6083 = vpop.f32.mrb[0].mxu0
      %v6084 = vpop.f32.mrb[0].mxu0
      %v6085 = vadd.f32 %v5924, %v6084
      %v6086 = vpop.f32.mrb[0].mxu0
      %6087 = vmatprep.mubr.bf16.mxu0 0
      %6088 = vmatmul.mubr.bf16.gmra.mrb[0].mxu0 %v4510
      %v6089 = vpop.f32.mrb[0].mxu0
      %v6090 = vadd.f32 %v5929, %v6089
      %v6091 = vpop.f32.mrb[0].mxu0
      %v6092 = vpop.f32.mrb[0].mxu0
      %v6093 = vadd.f32 %v5932, %v6092
      %v6094 = vpop.f32.mrb[0].mxu0
      %6095 = vmatprep.mubr.bf16.mxu0 0
      %6096 = vmatmul.mubr.bf16.gmra.mrb[0].mxu0 %v4511
      %v6097 = vpop.f32.mrb[0].mxu0
      %v6098 = vadd.f32 %v5937, %v6097
      %v6099 = vpop.f32.mrb[0].mxu0
      %v6100 = vpop.f32.mrb[0].mxu0
      %v6101 = vadd.f32 %v5940, %v6100
      %v6102 = vpop.f32.mrb[0].mxu0
      %6103 = vmatprep.mubr.bf16.mxu0 0
      %6104 = vmatmul.mubr.bf16.gmra.mrb[0].mxu0 %v4512
      %v6105 = vpop.f32.mrb[0].mxu0
      %v6106 = vadd.f32 %v5945, %v6105
      %v6107 = vpop.f32.mrb[0].mxu0
      %v6108 = vpop.f32.mrb[0].mxu0
      %v6109 = vadd.f32 %v5948, %v6108
      %v6110 = vpop.f32.mrb[0].mxu0
      %6111 = vmatprep.mubr.bf16.mxu0 0
      %6112 = vmatmul.mubr.bf16.gmra.mrb[0].mxu0 %v4513
      %v6113 = vpop.f32.mrb[0].mxu0
      %v6114 = vadd.f32 %v5953, %v6113
      %v6115 = vpop.f32.mrb[0].mxu0
      %v6116 = vpop.f32.mrb[0].mxu0
      %v6117 = vadd.f32 %v5956, %v6116
      %v6118 = vpop.f32.mrb[0].mxu0
      %6119 = vmatprep.mubr.bf16.mxu0 0
      %6120 = vmatmul.mubr.bf16.gmra.mrb[0].mxu0 %v4514
      %v6121 = vpop.f32.mrb[0].mxu0
      %v6122 = vadd.f32 %v5961, %v6121
      %v6123 = vpop.f32.mrb[0].mxu0
      %v6124 = vpop.f32.mrb[0].mxu0
      %v6125 = vadd.f32 %v5964, %v6124
      %v6126 = vpop.f32.mrb[0].mxu0
      %6127 = vdwg.mxu0
      %v6128 = vadd.f32 %v5582, %v6002
      %v6129 = vadd.f32 %v5583, %v6005
      %v6130 = vadd.f32 %v5584, %v6010
      %v6131 = vadd.f32 %v5585, %v6013
      %v6132 = vadd.f32 %v5586, %v6018
      %v6133 = vadd.f32 %v5587, %v6021
      %v6134 = vadd.f32 %v5588, %v6026
      %v6135 = vadd.f32 %v5589, %v6029
      %v6136 = vadd.f32 %v5590, %v6034
      %v6137 = vadd.f32 %v5591, %v6037
      %v6138 = vadd.f32 %v5592, %v6042
      %v6139 = vadd.f32 %v5593, %v6045
      %v6140 = vadd.f32 %v5594, %v6050
      %v6141 = vadd.f32 %v5595, %v6053
      %v6142 = vadd.f32 %v5596, %v6058
      %v6143 = vadd.f32 %v5597, %v6061
      %v6144 = vadd.f32 %v5598, %v6066
      %v6145 = vadd.f32 %v5599, %v6069
      %v6146 = vadd.f32 %v5600, %v6074
      %v6147 = vadd.f32 %v5601, %v6077
      %v6148 = vadd.f32 %v5602, %v6082
      %v6149 = vadd.f32 %v5603, %v6085
      %v6150 = vadd.f32 %v5604, %v6090
      %v6151 = vadd.f32 %v5605, %v6093
      %v6152 = vadd.f32 %v5606, %v6098
      %v6153 = vadd.f32 %v5607, %v6101
      %v6154 = vadd.f32 %v5608, %v6106
      %v6155 = vadd.f32 %v5609, %v6109
      %v6156 = vadd.f32 %v5610, %v6114
      %v6157 = vadd.f32 %v5611, %v6117
      %v6158 = vadd.f32 %v5612, %v6122
      %v6159 = vadd.f32 %v5613, %v6125
      %v6160 = vmax.f32 %v6128, 0.0
      %v6161 = vmax.f32 %v6129, 0.0
      %v6162 = vmax.f32 %v6130, 0.0
      %v6163 = vmax.f32 %v6131, 0.0
      %v6164 = vmax.f32 %v6132, 0.0
      %v6165 = vmax.f32 %v6133, 0.0
      %v6166 = vmax.f32 %v6134, 0.0
      %v6167 = vmax.f32 %v6135, 0.0
      %v6168 = vmax.f32 %v6136, 0.0
      %v6169 = vmax.f32 %v6137, 0.0
      %v6170 = vmax.f32 %v6138, 0.0
      %v6171 = vmax.f32 %v6139, 0.0
      %v6172 = vmax.f32 %v6140, 0.0
      %v6173 = vmax.f32 %v6141, 0.0
      %v6174 = vmax.f32 %v6142, 0.0
      %v6175 = vmax.f32 %v6143, 0.0
      %v6176 = vmax.f32 %v6144, 0.0
      %v6177 = vmax.f32 %v6145, 0.0
      %v6178 = vmax.f32 %v6146, 0.0
      %v6179 = vmax.f32 %v6147, 0.0
      %v6180 = vmax.f32 %v6148, 0.0
      %v6181 = vmax.f32 %v6149, 0.0
      %v6182 = vmax.f32 %v6150, 0.0
      %v6183 = vmax.f32 %v6151, 0.0
      %v6184 = vmax.f32 %v6152, 0.0
      %v6185 = vmax.f32 %v6153, 0.0
      %v6186 = vmax.f32 %v6154, 0.0
      %v6187 = vmax.f32 %v6155, 0.0
      %v6188 = vmax.f32 %v6156, 0.0
      %v6189 = vmax.f32 %v6157, 0.0
      %v6190 = vmax.f32 %v6158, 0.0
      %v6191 = vmax.f32 %v6159, 0.0
      %v6192 = vadd.f32 %v4258, %v6160
      %v6193 = vadd.f32 %v4259, %v6161
      %v6194 = vadd.f32 %v4260, %v6162
      %v6195 = vadd.f32 %v4261, %v6163
      %v6196 = vadd.f32 %v4262, %v6164
      %v6197 = vadd.f32 %v4263, %v6165
      %v6198 = vadd.f32 %v4264, %v6166
      %v6199 = vadd.f32 %v4265, %v6167
      %v6200 = vadd.f32 %v4266, %v6168
      %v6201 = vadd.f32 %v4267, %v6169
      %v6202 = vadd.f32 %v4268, %v6170
      %v6203 = vadd.f32 %v4269, %v6171
      %v6204 = vadd.f32 %v4270, %v6172
      %v6205 = vadd.f32 %v4271, %v6173
      %v6206 = vadd.f32 %v4272, %v6174
      %v6207 = vadd.f32 %v4273, %v6175
      %v6208 = vadd.f32 %v4274, %v6176
      %v6209 = vadd.f32 %v4275, %v6177
      %v6210 = vadd.f32 %v4276, %v6178
      %v6211 = vadd.f32 %v4277, %v6179
      %v6212 = vadd.f32 %v4278, %v6180
      %v6213 = vadd.f32 %v4279, %v6181
      %v6214 = vadd.f32 %v4280, %v6182
      %v6215 = vadd.f32 %v4281, %v6183
      %v6216 = vadd.f32 %v4282, %v6184
      %v6217 = vadd.f32 %v4283, %v6185
      %v6218 = vadd.f32 %v4284, %v6186
      %v6219 = vadd.f32 %v4285, %v6187
      %v6220 = vadd.f32 %v4286, %v6188
      %v6221 = vadd.f32 %v4287, %v6189
      %v6222 = vadd.f32 %v4288, %v6190
      %v6223 = vadd.f32 %v4289, %v6191
      %6224 = vst [vmem:[%s399 + $0x8] sm:$0xff] %v6160
      %6225 = vst [vmem:[%s399 + $0x10] sm:$0xff] %v6161
      %6226 = vst [vmem:[%s399 + $0x28] sm:$0xff] %v6162
      %6227 = vst [vmem:[%s399 + $0x30] sm:$0xff] %v6163
      %6228 = vst [vmem:[%s399 + $0x48] sm:$0xff] %v6164
      %6229 = vst [vmem:[%s399 + $0x50] sm:$0xff] %v6165
      %6230 = vst [vmem:[%s399 + $0x68] sm:$0xff] %v6166
      %6231 = vst [vmem:[%s399 + $0x70] sm:$0xff] %v6167
      %6232 = vst [vmem:[%s399 + $0x88] sm:$0xff] %v6168
      %6233 = vst [vmem:[%s399 + $0x90] sm:$0xff] %v6169
      %6234 = vst [vmem:[%s399 + $0xa8] sm:$0xff] %v6170
      %6235 = vst [vmem:[%s399 + $0xb0] sm:$0xff] %v6171
      %6236 = vst [vmem:[%s399 + $0xc8] sm:$0xff] %v6172
      %6237 = vst [vmem:[%s399 + $0xd0] sm:$0xff] %v6173
      %6238 = vst [vmem:[%s399 + $0xe8] sm:$0xff] %v6174
      %6239 = vst [vmem:[%s399 + $0xf0] sm:$0xff] %v6175
      %6240 = vst [vmem:[%s399 + $0x108] sm:$0xff] %v6176
      %6241 = vst [vmem:[%s399 + $0x110] sm:$0xff] %v6177
      %6242 = vst [vmem:[%s399 + $0x128] sm:$0xff] %v6178
      %6243 = vst [vmem:[%s399 + $0x130] sm:$0xff] %v6179
      %6244 = vst [vmem:[%s399 + $0x148] sm:$0xff] %v6180
      %6245 = vst [vmem:[%s399 + $0x150] sm:$0xff] %v6181
      %6246 = vst [vmem:[%s399 + $0x168] sm:$0xff] %v6182
      %6247 = vst [vmem:[%s399 + $0x170] sm:$0xff] %v6183
      %6248 = vst [vmem:[%s399 + $0x188] sm:$0xff] %v6184
      %6249 = vst [vmem:[%s399 + $0x190] sm:$0xff] %v6185
      %6250 = vst [vmem:[%s399 + $0x1a8] sm:$0xff] %v6186
      %6251 = vst [vmem:[%s399 + $0x1b0] sm:$0xff] %v6187
      %6252 = vst [vmem:[%s399 + $0x1c8] sm:$0xff] %v6188
      %6253 = vst [vmem:[%s399 + $0x1d0] sm:$0xff] %v6189
      %6254 = vst [vmem:[%s399 + $0x1e8] sm:$0xff] %v6190
      %6255 = vst [vmem:[%s399 + $0x1f0] sm:$0xff] %v6191
      %v6256 = vld [vmem:[#allocation2] sm:$0xff]
      %v6257 = vld [vmem:[#allocation2 + $0x8] sm:$0xff]
      %v6258 = vld [vmem:[#allocation2 + $0x20] sm:$0xff]
      %v6259 = vld [vmem:[#allocation2 + $0x28] sm:$0xff]
      %v6260 = vld [vmem:[#allocation2 + $0x40] sm:$0xff]
      %v6261 = vld [vmem:[#allocation2 + $0x48] sm:$0xff]
      %v6262 = vld [vmem:[#allocation2 + $0x60] sm:$0xff]
      %v6263 = vld [vmem:[#allocation2 + $0x68] sm:$0xff]
      %v6264 = vld [vmem:[#allocation2 + $0x80] sm:$0xff]
      %v6265 = vld [vmem:[#allocation2 + $0x88] sm:$0xff]
      %v6266 = vld [vmem:[#allocation2 + $0xa0] sm:$0xff]
      %v6267 = vld [vmem:[#allocation2 + $0xa8] sm:$0xff]
      %v6268 = vld [vmem:[#allocation2 + $0xc0] sm:$0xff]
      %v6269 = vld [vmem:[#allocation2 + $0xc8] sm:$0xff]
      %v6270 = vld [vmem:[#allocation2 + $0xe0] sm:$0xff]
      %v6271 = vld [vmem:[#allocation2 + $0xe8] sm:$0xff]
      %v6272 = vld [vmem:[#allocation2 + $0x100] sm:$0xff]
      %v6273 = vld [vmem:[#allocation2 + $0x108] sm:$0xff]
      %v6274 = vld [vmem:[#allocation2 + $0x120] sm:$0xff]
      %v6275 = vld [vmem:[#allocation2 + $0x128] sm:$0xff]
      %v6276 = vld [vmem:[#allocation2 + $0x140] sm:$0xff]
      %v6277 = vld [vmem:[#allocation2 + $0x148] sm:$0xff]
      %v6278 = vld [vmem:[#allocation2 + $0x160] sm:$0xff]
      %v6279 = vld [vmem:[#allocation2 + $0x168] sm:$0xff]
      %v6280 = vld [vmem:[#allocation2 + $0x180] sm:$0xff]
      %v6281 = vld [vmem:[#allocation2 + $0x188] sm:$0xff]
      %v6282 = vld [vmem:[#allocation2 + $0x1a0] sm:$0xff]
      %v6283 = vld [vmem:[#allocation2 + $0x1a8] sm:$0xff]
      %v6284 = vld [vmem:[#allocation2 + $0x1c0] sm:$0xff]
      %v6285 = vld [vmem:[#allocation2 + $0x1c8] sm:$0xff]
      %v6286 = vld [vmem:[#allocation2 + $0x1e0] sm:$0xff]
      %v6287 = vld [vmem:[#allocation2 + $0x1e8] sm:$0xff]
      %v6288 = vld [vmem:[#allocation2 + $0x200] sm:$0xff]
      %v6289 = vld [vmem:[#allocation2 + $0x208] sm:$0xff]
      %v6290 = vld [vmem:[#allocation2 + $0x220] sm:$0xff]
      %v6291 = vld [vmem:[#allocation2 + $0x228] sm:$0xff]
      %v6292 = vld [vmem:[#allocation2 + $0x240] sm:$0xff]
      %v6293 = vld [vmem:[#allocation2 + $0x248] sm:$0xff]
      %v6294 = vld [vmem:[#allocation2 + $0x260] sm:$0xff]
      %v6295 = vld [vmem:[#allocation2 + $0x268] sm:$0xff]
      %v6296 = vld [vmem:[#allocation2 + $0x280] sm:$0xff]
      %v6297 = vld [vmem:[#allocation2 + $0x288] sm:$0xff]
      %v6298 = vld [vmem:[#allocation2 + $0x2a0] sm:$0xff]
      %v6299 = vld [vmem:[#allocation2 + $0x2a8] sm:$0xff]
      %v6300 = vld [vmem:[#allocation2 + $0x2c0] sm:$0xff]
      %v6301 = vld [vmem:[#allocation2 + $0x2c8] sm:$0xff]
      %v6302 = vld [vmem:[#allocation2 + $0x2e0] sm:$0xff]
      %v6303 = vld [vmem:[#allocation2 + $0x2e8] sm:$0xff]
      %v6304 = vld [vmem:[#allocation2 + $0x300] sm:$0xff]
      %v6305 = vld [vmem:[#allocation2 + $0x308] sm:$0xff]
      %v6306 = vld [vmem:[#allocation2 + $0x320] sm:$0xff]
      %v6307 = vld [vmem:[#allocation2 + $0x328] sm:$0xff]
      %v6308 = vld [vmem:[#allocation2 + $0x340] sm:$0xff]
      %v6309 = vld [vmem:[#allocation2 + $0x348] sm:$0xff]
      %v6310 = vld [vmem:[#allocation2 + $0x360] sm:$0xff]
      %v6311 = vld [vmem:[#allocation2 + $0x368] sm:$0xff]
      %v6312 = vld [vmem:[#allocation2 + $0x380] sm:$0xff]
      %v6313 = vld [vmem:[#allocation2 + $0x388] sm:$0xff]
      %v6314 = vld [vmem:[#allocation2 + $0x3a0] sm:$0xff]
      %v6315 = vld [vmem:[#allocation2 + $0x3a8] sm:$0xff]
      %v6316 = vld [vmem:[#allocation2 + $0x3c0] sm:$0xff]
      %v6317 = vld [vmem:[#allocation2 + $0x3c8] sm:$0xff]
      %v6318 = vld [vmem:[#allocation2 + $0x3e0] sm:$0xff]
      %v6319 = vld [vmem:[#allocation2 + $0x3e8] sm:$0xff]
      %v6320 = vpack.c.bf16 %v6257, %v6256
      %v6321 = vpack.c.bf16 %v6259, %v6258
      %v6322 = vpack.c.bf16 %v6261, %v6260
      %v6323 = vpack.c.bf16 %v6263, %v6262
      %v6324 = vpack.c.bf16 %v6265, %v6264
      %v6325 = vpack.c.bf16 %v6267, %v6266
      %v6326 = vpack.c.bf16 %v6269, %v6268
      %v6327 = vpack.c.bf16 %v6271, %v6270
      %v6328 = vpack.c.bf16 %v6273, %v6272
      %v6329 = vpack.c.bf16 %v6275, %v6274
      %v6330 = vpack.c.bf16 %v6277, %v6276
      %v6331 = vpack.c.bf16 %v6279, %v6278
      %v6332 = vpack.c.bf16 %v6281, %v6280
      %v6333 = vpack.c.bf16 %v6283, %v6282
      %v6334 = vpack.c.bf16 %v6285, %v6284
      %v6335 = vpack.c.bf16 %v6287, %v6286
      %v6336 = vpack.c.bf16 %v6289, %v6288
      %v6337 = vpack.c.bf16 %v6291, %v6290
      %v6338 = vpack.c.bf16 %v6293, %v6292
      %v6339 = vpack.c.bf16 %v6295, %v6294
      %v6340 = vpack.c.bf16 %v6297, %v6296
      %v6341 = vpack.c.bf16 %v6299, %v6298
      %v6342 = vpack.c.bf16 %v6301, %v6300
      %v6343 = vpack.c.bf16 %v6303, %v6302
      %v6344 = vpack.c.bf16 %v6305, %v6304
      %v6345 = vpack.c.bf16 %v6307, %v6306
      %v6346 = vpack.c.bf16 %v6309, %v6308
      %v6347 = vpack.c.bf16 %v6311, %v6310
      %v6348 = vpack.c.bf16 %v6313, %v6312
      %v6349 = vpack.c.bf16 %v6315, %v6314
      %v6350 = vpack.c.bf16 %v6317, %v6316
      %v6351 = vpack.c.bf16 %v6319, %v6318
      %v6352 = vld [vmem:[#allocation2 + $0x10] sm:$0xff]
      %v6353 = vld [vmem:[#allocation2 + $0x30] sm:$0xff]
      %v6354 = vld [vmem:[#allocation2 + $0x50] sm:$0xff]
      %v6355 = vld [vmem:[#allocation2 + $0x70] sm:$0xff]
      %v6356 = vld [vmem:[#allocation2 + $0x90] sm:$0xff]
      %v6357 = vld [vmem:[#allocation2 + $0xb0] sm:$0xff]
      %v6358 = vld [vmem:[#allocation2 + $0xd0] sm:$0xff]
      %v6359 = vld [vmem:[#allocation2 + $0xf0] sm:$0xff]
      %v6360 = vld [vmem:[#allocation2 + $0x110] sm:$0xff]
      %v6361 = vld [vmem:[#allocation2 + $0x130] sm:$0xff]
      %v6362 = vld [vmem:[#allocation2 + $0x150] sm:$0xff]
      %v6363 = vld [vmem:[#allocation2 + $0x170] sm:$0xff]
      %v6364 = vld [vmem:[#allocation2 + $0x190] sm:$0xff]
      %v6365 = vld [vmem:[#allocation2 + $0x1b0] sm:$0xff]
      %v6366 = vld [vmem:[#allocation2 + $0x1d0] sm:$0xff]
      %v6367 = vld [vmem:[#allocation2 + $0x1f0] sm:$0xff]
      %v6368 = vld [vmem:[#allocation2 + $0x210] sm:$0xff]
      %v6369 = vld [vmem:[#allocation2 + $0x230] sm:$0xff]
      %v6370 = vld [vmem:[#allocation2 + $0x250] sm:$0xff]
      %v6371 = vld [vmem:[#allocation2 + $0x270] sm:$0xff]
      %v6372 = vld [vmem:[#allocation2 + $0x290] sm:$0xff]
      %v6373 = vld [vmem:[#allocation2 + $0x2b0] sm:$0xff]
      %v6374 = vld [vmem:[#allocation2 + $0x2d0] sm:$0xff]
      %v6375 = vld [vmem:[#allocation2 + $0x2f0] sm:$0xff]
      %v6376 = vld [vmem:[#allocation2 + $0x310] sm:$0xff]
      %v6377 = vld [vmem:[#allocation2 + $0x330] sm:$0xff]
      %v6378 = vld [vmem:[#allocation2 + $0x350] sm:$0xff]
      %v6379 = vld [vmem:[#allocation2 + $0x370] sm:$0xff]
      %v6380 = vld [vmem:[#allocation2 + $0x390] sm:$0xff]
      %v6381 = vld [vmem:[#allocation2 + $0x3b0] sm:$0xff]
      %v6382 = vld [vmem:[#allocation2 + $0x3d0] sm:$0xff]
      %v6383 = vld [vmem:[#allocation2 + $0x3f0] sm:$0xff]
      %v6384 = vpack.c.bf16 %v6352, %v6257
      %v6385 = vpack.c.bf16 %v6353, %v6259
      %v6386 = vpack.c.bf16 %v6354, %v6261
      %v6387 = vpack.c.bf16 %v6355, %v6263
      %v6388 = vpack.c.bf16 %v6356, %v6265
      %v6389 = vpack.c.bf16 %v6357, %v6267
      %v6390 = vpack.c.bf16 %v6358, %v6269
      %v6391 = vpack.c.bf16 %v6359, %v6271
      %v6392 = vpack.c.bf16 %v6360, %v6273
      %v6393 = vpack.c.bf16 %v6361, %v6275
      %v6394 = vpack.c.bf16 %v6362, %v6277
      %v6395 = vpack.c.bf16 %v6363, %v6279
      %v6396 = vpack.c.bf16 %v6364, %v6281
      %v6397 = vpack.c.bf16 %v6365, %v6283
      %v6398 = vpack.c.bf16 %v6366, %v6285
      %v6399 = vpack.c.bf16 %v6367, %v6287
      %v6400 = vpack.c.bf16 %v6368, %v6289
      %v6401 = vpack.c.bf16 %v6369, %v6291
      %v6402 = vpack.c.bf16 %v6370, %v6293
      %v6403 = vpack.c.bf16 %v6371, %v6295
      %v6404 = vpack.c.bf16 %v6372, %v6297
      %v6405 = vpack.c.bf16 %v6373, %v6299
      %v6406 = vpack.c.bf16 %v6374, %v6301
      %v6407 = vpack.c.bf16 %v6375, %v6303
      %v6408 = vpack.c.bf16 %v6376, %v6305
      %v6409 = vpack.c.bf16 %v6377, %v6307
      %v6410 = vpack.c.bf16 %v6378, %v6309
      %v6411 = vpack.c.bf16 %v6379, %v6311
      %v6412 = vpack.c.bf16 %v6380, %v6313
      %v6413 = vpack.c.bf16 %v6381, %v6315
      %v6414 = vpack.c.bf16 %v6382, %v6317
      %v6415 = vpack.c.bf16 %v6383, %v6319
      %v6416 = vld [vmem:[#allocation2 + $0x10] sm:$0xff]
      %v6417 = vld [vmem:[#allocation2 + $0x18] sm:$0xff]
      %v6418 = vld [vmem:[#allocation2 + $0x30] sm:$0xff]
      %v6419 = vld [vmem:[#allocation2 + $0x38] sm:$0xff]
      %v6420 = vld [vmem:[#allocation2 + $0x50] sm:$0xff]
      %v6421 = vld [vmem:[#allocation2 + $0x58] sm:$0xff]
      %v6422 = vld [vmem:[#allocation2 + $0x70] sm:$0xff]
      %v6423 = vld [vmem:[#allocation2 + $0x78] sm:$0xff]
      %v6424 = vld [vmem:[#allocation2 + $0x90] sm:$0xff]
      %v6425 = vld [vmem:[#allocation2 + $0x98] sm:$0xff]
      %v6426 = vld [vmem:[#allocation2 + $0xb0] sm:$0xff]
      %v6427 = vld [vmem:[#allocation2 + $0xb8] sm:$0xff]
      %v6428 = vld [vmem:[#allocation2 + $0xd0] sm:$0xff]
      %v6429 = vld [vmem:[#allocation2 + $0xd8] sm:$0xff]
      %v6430 = vld [vmem:[#allocation2 + $0xf0] sm:$0xff]
      %v6431 = vld [vmem:[#allocation2 + $0xf8] sm:$0xff]
      %v6432 = vld [vmem:[#allocation2 + $0x110] sm:$0xff]
      %v6433 = vld [vmem:[#allocation2 + $0x118] sm:$0xff]
      %v6434 = vld [vmem:[#allocation2 + $0x130] sm:$0xff]
      %v6435 = vld [vmem:[#allocation2 + $0x138] sm:$0xff]
      %v6436 = vld [vmem:[#allocation2 + $0x150] sm:$0xff]
      %v6437 = vld [vmem:[#allocation2 + $0x158] sm:$0xff]
      %v6438 = vld [vmem:[#allocation2 + $0x170] sm:$0xff]
      %v6439 = vld [vmem:[#allocation2 + $0x178] sm:$0xff]
      %v6440 = vld [vmem:[#allocation2 + $0x190] sm:$0xff]
      %v6441 = vld [vmem:[#allocation2 + $0x198] sm:$0xff]
      %v6442 = vld [vmem:[#allocation2 + $0x1b0] sm:$0xff]
      %v6443 = vld [vmem:[#allocation2 + $0x1b8] sm:$0xff]
      %v6444 = vld [vmem:[#allocation2 + $0x1d0] sm:$0xff]
      %v6445 = vld [vmem:[#allocation2 + $0x1d8] sm:$0xff]
      %v6446 = vld [vmem:[#allocation2 + $0x1f0] sm:$0xff]
      %v6447 = vld [vmem:[#allocation2 + $0x1f8] sm:$0xff]
      %v6448 = vld [vmem:[#allocation2 + $0x210] sm:$0xff]
      %v6449 = vld [vmem:[#allocation2 + $0x218] sm:$0xff]
      %v6450 = vld [vmem:[#allocation2 + $0x230] sm:$0xff]
      %v6451 = vld [vmem:[#allocation2 + $0x238] sm:$0xff]
      %v6452 = vld [vmem:[#allocation2 + $0x250] sm:$0xff]
      %v6453 = vld [vmem:[#allocation2 + $0x258] sm:$0xff]
      %v6454 = vld [vmem:[#allocation2 + $0x270] sm:$0xff]
      %v6455 = vld [vmem:[#allocation2 + $0x278] sm:$0xff]
      %v6456 = vld [vmem:[#allocation2 + $0x290] sm:$0xff]
      %v6457 = vld [vmem:[#allocation2 + $0x298] sm:$0xff]
      %v6458 = vld [vmem:[#allocation2 + $0x2b0] sm:$0xff]
      %v6459 = vld [vmem:[#allocation2 + $0x2b8] sm:$0xff]
      %v6460 = vld [vmem:[#allocation2 + $0x2d0] sm:$0xff]
      %v6461 = vld [vmem:[#allocation2 + $0x2d8] sm:$0xff]
      %v6462 = vld [vmem:[#allocation2 + $0x2f0] sm:$0xff]
      %v6463 = vld [vmem:[#allocation2 + $0x2f8] sm:$0xff]
      %v6464 = vld [vmem:[#allocation2 + $0x310] sm:$0xff]
      %v6465 = vld [vmem:[#allocation2 + $0x318] sm:$0xff]
      %v6466 = vld [vmem:[#allocation2 + $0x330] sm:$0xff]
      %v6467 = vld [vmem:[#allocation2 + $0x338] sm:$0xff]
      %v6468 = vld [vmem:[#allocation2 + $0x350] sm:$0xff]
      %v6469 = vld [vmem:[#allocation2 + $0x358] sm:$0xff]
      %v6470 = vld [vmem:[#allocation2 + $0x370] sm:$0xff]
      %v6471 = vld [vmem:[#allocation2 + $0x378] sm:$0xff]
      %v6472 = vld [vmem:[#allocation2 + $0x390] sm:$0xff]
      %v6473 = vld [vmem:[#allocation2 + $0x398] sm:$0xff]
      %v6474 = vld [vmem:[#allocation2 + $0x3b0] sm:$0xff]
      %v6475 = vld [vmem:[#allocation2 + $0x3b8] sm:$0xff]
      %v6476 = vld [vmem:[#allocation2 + $0x3d0] sm:$0xff]
      %v6477 = vld [vmem:[#allocation2 + $0x3d8] sm:$0xff]
      %v6478 = vld [vmem:[#allocation2 + $0x3f0] sm:$0xff]
      %v6479 = vld [vmem:[#allocation2 + $0x3f8] sm:$0xff]
      %v6480 = vpack.c.bf16 %v6417, %v6416
      %v6481 = vpack.c.bf16 %v6419, %v6418
      %v6482 = vpack.c.bf16 %v6421, %v6420
      %v6483 = vpack.c.bf16 %v6423, %v6422
      %v6484 = vpack.c.bf16 %v6425, %v6424
      %v6485 = vpack.c.bf16 %v6427, %v6426
      %v6486 = vpack.c.bf16 %v6429, %v6428
      %v6487 = vpack.c.bf16 %v6431, %v6430
      %v6488 = vpack.c.bf16 %v6433, %v6432
      %v6489 = vpack.c.bf16 %v6435, %v6434
      %v6490 = vpack.c.bf16 %v6437, %v6436
      %v6491 = vpack.c.bf16 %v6439, %v6438
      %v6492 = vpack.c.bf16 %v6441, %v6440
      %v6493 = vpack.c.bf16 %v6443, %v6442
      %v6494 = vpack.c.bf16 %v6445, %v6444
      %v6495 = vpack.c.bf16 %v6447, %v6446
      %v6496 = vpack.c.bf16 %v6449, %v6448
      %v6497 = vpack.c.bf16 %v6451, %v6450
      %v6498 = vpack.c.bf16 %v6453, %v6452
      %v6499 = vpack.c.bf16 %v6455, %v6454
      %v6500 = vpack.c.bf16 %v6457, %v6456
      %v6501 = vpack.c.bf16 %v6459, %v6458
      %v6502 = vpack.c.bf16 %v6461, %v6460
      %v6503 = vpack.c.bf16 %v6463, %v6462
      %v6504 = vpack.c.bf16 %v6465, %v6464
      %v6505 = vpack.c.bf16 %v6467, %v6466
      %v6506 = vpack.c.bf16 %v6469, %v6468
      %v6507 = vpack.c.bf16 %v6471, %v6470
      %v6508 = vpack.c.bf16 %v6473, %v6472
      %v6509 = vpack.c.bf16 %v6475, %v6474
      %v6510 = vpack.c.bf16 %v6477, %v6476
      %v6511 = vpack.c.bf16 %v6479, %v6478
      %v6512 = vld [vmem:[%s8] sm:$0x1]
      %v6514 = vlaneseq
      %v6515 = vshrl.u32 %v6514, 7
      %v6516 = vsub.s32 0, %v6515
      %v6517 = vrot.slane %v6512, %v6516
      %v6519 = vld [vmem:[%s7] sm:$0xf]
      %v6520 = vld [vmem:[%s7 + $0x4] sm:$0xf]
      %v6521 = vld [vmem:[%s7 + $0x8] sm:$0xf]
      %v6522 = vld [vmem:[%s7 + $0xc] sm:$0xf]
      %v6523 = vld [vmem:[%s7 + $0x10] sm:$0xf]
      %v6524 = vld [vmem:[%s7 + $0x14] sm:$0xf]
      %v6525 = vld [vmem:[%s7 + $0x18] sm:$0xf]
      %v6526 = vld [vmem:[%s7 + $0x1c] sm:$0xf]
      %v6527 = vld [vmem:[%s7 + $0x20] sm:$0xf]
      %v6528 = vld [vmem:[%s7 + $0x24] sm:$0xf]
      %v6529 = vld [vmem:[%s7 + $0x28] sm:$0xf]
      %v6530 = vld [vmem:[%s7 + $0x2c] sm:$0xf]
      %v6531 = vld [vmem:[%s7 + $0x30] sm:$0xf]
      %v6532 = vld [vmem:[%s7 + $0x34] sm:$0xf]
      %v6533 = vld [vmem:[%s7 + $0x38] sm:$0xf]
      %v6534 = vld [vmem:[%s7 + $0x3c] sm:$0xf]
      %v6535 = vld [vmem:[%s7 + $0x40] sm:$0xf]
      %v6536 = vld [vmem:[%s7 + $0x44] sm:$0xf]
      %v6537 = vld [vmem:[%s7 + $0x48] sm:$0xf]
      %v6538 = vld [vmem:[%s7 + $0x4c] sm:$0xf]
      %v6539 = vld [vmem:[%s7 + $0x50] sm:$0xf]
      %v6540 = vld [vmem:[%s7 + $0x54] sm:$0xf]
      %v6541 = vld [vmem:[%s7 + $0x58] sm:$0xf]
      %v6542 = vld [vmem:[%s7 + $0x5c] sm:$0xf]
      %v6543 = vld [vmem:[%s7 + $0x60] sm:$0xf]
      %v6544 = vld [vmem:[%s7 + $0x64] sm:$0xf]
      %v6545 = vld [vmem:[%s7 + $0x68] sm:$0xf]
      %v6546 = vld [vmem:[%s7 + $0x6c] sm:$0xf]
      %v6547 = vld [vmem:[%s7 + $0x70] sm:$0xf]
      %v6548 = vld [vmem:[%s7 + $0x74] sm:$0xf]
      %v6549 = vld [vmem:[%s7 + $0x78] sm:$0xf]
      %v6550 = vld [vmem:[%s7 + $0x7c] sm:$0xf]
      %v6551 = vld [vmem:[%s7 + $0x80] sm:$0xf]
      %v6552 = vld [vmem:[%s7 + $0x84] sm:$0xf]
      %v6553 = vld [vmem:[%s7 + $0x88] sm:$0xf]
      %v6554 = vld [vmem:[%s7 + $0x8c] sm:$0xf]
      %v6555 = vld [vmem:[%s7 + $0x90] sm:$0xf]
      %v6556 = vld [vmem:[%s7 + $0x94] sm:$0xf]
      %v6557 = vld [vmem:[%s7 + $0x98] sm:$0xf]
      %v6558 = vld [vmem:[%s7 + $0x9c] sm:$0xf]
      %v6559 = vld [vmem:[%s7 + $0xa0] sm:$0xf]
      %v6560 = vld [vmem:[%s7 + $0xa4] sm:$0xf]
      %v6561 = vld [vmem:[%s7 + $0xa8] sm:$0xf]
      %v6562 = vld [vmem:[%s7 + $0xac] sm:$0xf]
      %v6563 = vld [vmem:[%s7 + $0xb0] sm:$0xf]
      %v6564 = vld [vmem:[%s7 + $0xb4] sm:$0xf]
      %v6565 = vld [vmem:[%s7 + $0xb8] sm:$0xf]
      %v6566 = vld [vmem:[%s7 + $0xbc] sm:$0xf]
      %v6615 = vunpack.c.l.b16 %v6519
      %v6616 = vunpack.c.l.b16 %v6520
      %v6617 = vunpack.c.l.b16 %v6521
      %v6618 = vunpack.c.l.b16 %v6522
      %v6619 = vunpack.c.l.b16 %v6523
      %v6620 = vunpack.c.l.b16 %v6524
      %v6621 = vunpack.c.l.b16 %v6525
      %v6622 = vunpack.c.l.b16 %v6526
      %v6623 = vunpack.c.l.b16 %v6527
      %v6624 = vunpack.c.l.b16 %v6528
      %v6625 = vunpack.c.l.b16 %v6529
      %v6626 = vunpack.c.l.b16 %v6530
      %v6627 = vunpack.c.l.b16 %v6531
      %v6628 = vunpack.c.l.b16 %v6532
      %v6629 = vunpack.c.l.b16 %v6533
      %v6630 = vunpack.c.l.b16 %v6534
      %v6631 = vunpack.c.l.b16 %v6535
      %v6632 = vunpack.c.l.b16 %v6536
      %v6633 = vunpack.c.l.b16 %v6537
      %v6634 = vunpack.c.l.b16 %v6538
      %v6635 = vunpack.c.l.b16 %v6539
      %v6636 = vunpack.c.l.b16 %v6540
      %v6637 = vunpack.c.l.b16 %v6541
      %v6638 = vunpack.c.l.b16 %v6542
      %v6639 = vunpack.c.l.b16 %v6543
      %v6640 = vunpack.c.l.b16 %v6544
      %v6641 = vunpack.c.l.b16 %v6545
      %v6642 = vunpack.c.l.b16 %v6546
      %v6643 = vunpack.c.l.b16 %v6547
      %v6644 = vunpack.c.l.b16 %v6548
      %v6645 = vunpack.c.l.b16 %v6549
      %v6646 = vunpack.c.l.b16 %v6550
      %v6647 = vunpack.c.l.b16 %v6551
      %v6648 = vunpack.c.l.b16 %v6552
      %v6649 = vunpack.c.l.b16 %v6553
      %v6650 = vunpack.c.l.b16 %v6554
      %v6651 = vunpack.c.l.b16 %v6555
      %v6652 = vunpack.c.l.b16 %v6556
      %v6653 = vunpack.c.l.b16 %v6557
      %v6654 = vunpack.c.l.b16 %v6558
      %v6655 = vunpack.c.l.b16 %v6559
      %v6656 = vunpack.c.l.b16 %v6560
      %v6657 = vunpack.c.l.b16 %v6561
      %v6658 = vunpack.c.l.b16 %v6562
      %v6659 = vunpack.c.l.b16 %v6563
      %v6660 = vunpack.c.l.b16 %v6564
      %v6661 = vunpack.c.l.b16 %v6565
      %v6662 = vunpack.c.l.b16 %v6566
      %v6663 = vpack.c.b16 %v6616, %v6615
      %v6664 = vpack.c.b16 %v6618, %v6617
      %v6665 = vpack.c.b16 %v6620, %v6619
      %v6666 = vpack.c.b16 %v6622, %v6621
      %v6667 = vpack.c.b16 %v6624, %v6623
      %v6668 = vpack.c.b16 %v6626, %v6625
      %v6669 = vpack.c.b16 %v6628, %v6627
      %v6670 = vpack.c.b16 %v6630, %v6629
      %v6671 = vpack.c.b16 %v6632, %v6631
      %v6672 = vpack.c.b16 %v6634, %v6633
      %v6673 = vpack.c.b16 %v6636, %v6635
      %v6674 = vpack.c.b16 %v6638, %v6637
      %v6675 = vpack.c.b16 %v6640, %v6639
      %v6676 = vpack.c.b16 %v6642, %v6641
      %v6677 = vpack.c.b16 %v6644, %v6643
      %v6678 = vpack.c.b16 %v6646, %v6645
      %v6679 = vpack.c.b16 %v6648, %v6647
      %v6680 = vpack.c.b16 %v6650, %v6649
      %v6681 = vpack.c.b16 %v6652, %v6651
      %v6682 = vpack.c.b16 %v6654, %v6653
      %v6683 = vpack.c.b16 %v6656, %v6655
      %v6684 = vpack.c.b16 %v6658, %v6657
      %v6685 = vpack.c.b16 %v6660, %v6659
      %v6686 = vpack.c.b16 %v6662, %v6661
      %6711 = vmatprep.subr.bf16.mxu0 0
      %6712 = vmatpush1.bf16.msra.mxu0 %v6663
      %6713 = vmatprep.subr.bf16.mxu0 0
      %6714 = vmatpush1.bf16.msra.mxu0 %v6664
      %6715 = vmatprep.subr.bf16.mxu0 0
      %6716 = vmatpush1.bf16.msra.mxu0 %v6665
      %6717 = vmatprep.subr.bf16.mxu0 0
      %6718 = vmatpush1.bf16.msra.mxu0 %v6666
      %6719 = vmatprep.subr.bf16.mxu0 0
      %6720 = vmatpush1.bf16.msra.mxu0 %v6667
      %6721 = vmatprep.subr.bf16.mxu0 0
      %6722 = vmatpush1.bf16.msra.mxu0 %v6668
      %6723 = vmatprep.subr.bf16.mxu0 0
      %6724 = vmatpush1.bf16.msra.mxu0 %v6669
      %6725 = vmatprep.subr.bf16.mxu0 0
      %6726 = vmatpush1.bf16.msra.mxu0 %v6670
      %6727 = vmatprep.subr.bf16.mxu0 0
      %6728 = vmatpush1.bf16.msra.mxu0 %v6671
      %6729 = vmatprep.subr.bf16.mxu0 0
      %6730 = vmatpush1.bf16.msra.mxu0 %v6672
      %6731 = vmatprep.subr.bf16.mxu0 0
      %6732 = vmatpush1.bf16.msra.mxu0 %v6673
      %6733 = vmatprep.subr.bf16.mxu0 0
      %6734 = vmatpush1.bf16.msra.mxu0 %v6674
      %6735 = vmatprep.subr.bf16.mxu0 0
      %6736 = vmatpush1.bf16.msra.mxu0 %v6675
      %6737 = vmatprep.subr.bf16.mxu0 0
      %6738 = vmatpush1.bf16.msra.mxu0 %v6676
      %6739 = vmatprep.subr.bf16.mxu0 0
      %6740 = vmatpush1.bf16.msra.mxu0 %v6677
      %6741 = vmatprep.subr.bf16.mxu0 0
      %6742 = vmatpush1.bf16.msra.mxu0 %v6678
      %6743 = vmatprep.mubr.bf16.mxu0 %v6384
      %6744 = vmatmul.mubr.bf16.gmra.mrb[0].mxu0 %v6320
      %v6745 = vpop.f32.mrb[0].mxu0
      %v6746 = vadd.f32 0.0, %v6745
      %v6747 = vpop.f32.mrb[0].mxu0
      %v6748 = vpop.f32.mrb[0].mxu0
      %v6749 = vadd.f32 0.0, %v6748
      %v6750 = vpop.f32.mrb[0].mxu0
      %6751 = vmatprep.mubr.bf16.mxu0 %v6385
      %6752 = vmatmul.mubr.bf16.gmra.mrb[0].mxu0 %v6321
      %v6753 = vpop.f32.mrb[0].mxu0
      %v6754 = vadd.f32 0.0, %v6753
      %v6755 = vpop.f32.mrb[0].mxu0
      %v6756 = vpop.f32.mrb[0].mxu0
      %v6757 = vadd.f32 0.0, %v6756
      %v6758 = vpop.f32.mrb[0].mxu0
      %6759 = vmatprep.mubr.bf16.mxu0 %v6386
      %6760 = vmatmul.mubr.bf16.gmra.mrb[0].mxu0 %v6322
      %v6761 = vpop.f32.mrb[0].mxu0
      %v6762 = vadd.f32 0.0, %v6761
      %v6763 = vpop.f32.mrb[0].mxu0
      %v6764 = vpop.f32.mrb[0].mxu0
      %v6765 = vadd.f32 0.0, %v6764
      %v6766 = vpop.f32.mrb[0].mxu0
      %6767 = vmatprep.mubr.bf16.mxu0 %v6387
      %6768 = vmatmul.mubr.bf16.gmra.mrb[0].mxu0 %v6323
      %v6769 = vpop.f32.mrb[0].mxu0
      %v6770 = vadd.f32 0.0, %v6769
      %v6771 = vpop.f32.mrb[0].mxu0
      %v6772 = vpop.f32.mrb[0].mxu0
      %v6773 = vadd.f32 0.0, %v6772
      %v6774 = vpop.f32.mrb[0].mxu0
      %6775 = vmatprep.mubr.bf16.mxu0 %v6388
      %6776 = vmatmul.mubr.bf16.gmra.mrb[0].mxu0 %v6324
      %v6777 = vpop.f32.mrb[0].mxu0
      %v6778 = vadd.f32 0.0, %v6777
      %v6779 = vpop.f32.mrb[0].mxu0
      %v6780 = vpop.f32.mrb[0].mxu0
      %v6781 = vadd.f32 0.0, %v6780
      %v6782 = vpop.f32.mrb[0].mxu0
      %6783 = vmatprep.mubr.bf16.mxu0 %v6389
      %6784 = vmatmul.mubr.bf16.gmra.mrb[0].mxu0 %v6325
      %v6785 = vpop.f32.mrb[0].mxu0
      %v6786 = vadd.f32 0.0, %v6785
      %v6787 = vpop.f32.mrb[0].mxu0
      %v6788 = vpop.f32.mrb[0].mxu0
      %v6789 = vadd.f32 0.0, %v6788
      %v6790 = vpop.f32.mrb[0].mxu0
      %6791 = vmatprep.mubr.bf16.mxu0 %v6390
      %6792 = vmatmul.mubr.bf16.gmra.mrb[0].mxu0 %v6326
      %v6793 = vpop.f32.mrb[0].mxu0
      %v6794 = vadd.f32 0.0, %v6793
      %v6795 = vpop.f32.mrb[0].mxu0
      %v6796 = vpop.f32.mrb[0].mxu0
      %v6797 = vadd.f32 0.0, %v6796
      %v6798 = vpop.f32.mrb[0].mxu0
      %6799 = vmatprep.mubr.bf16.mxu0 %v6391
      %6800 = vmatmul.mubr.bf16.gmra.mrb[0].mxu0 %v6327
      %v6801 = vpop.f32.mrb[0].mxu0
      %v6802 = vadd.f32 0.0, %v6801
      %v6803 = vpop.f32.mrb[0].mxu0
      %v6804 = vpop.f32.mrb[0].mxu0
      %v6805 = vadd.f32 0.0, %v6804
      %v6806 = vpop.f32.mrb[0].mxu0
      %6807 = vmatprep.mubr.bf16.mxu0 %v6392
      %6808 = vmatmul.mubr.bf16.gmra.mrb[0].mxu0 %v6328
      %v6809 = vpop.f32.mrb[0].mxu0
      %v6810 = vadd.f32 0.0, %v6809
      %v6811 = vpop.f32.mrb[0].mxu0
      %v6812 = vpop.f32.mrb[0].mxu0
      %v6813 = vadd.f32 0.0, %v6812
      %v6814 = vpop.f32.mrb[0].mxu0
      %6815 = vmatprep.mubr.bf16.mxu0 %v6393
      %6816 = vmatmul.mubr.bf16.gmra.mrb[0].mxu0 %v6329
      %v6817 = vpop.f32.mrb[0].mxu0
      %v6818 = vadd.f32 0.0, %v6817
      %v6819 = vpop.f32.mrb[0].mxu0
      %v6820 = vpop.f32.mrb[0].mxu0
      %v6821 = vadd.f32 0.0, %v6820
      %v6822 = vpop.f32.mrb[0].mxu0
      %6823 = vmatprep.mubr.bf16.mxu0 %v6394
      %6824 = vmatmul.mubr.bf16.gmra.mrb[0].mxu0 %v6330
      %v6825 = vpop.f32.mrb[0].mxu0
      %v6826 = vadd.f32 0.0, %v6825
      %v6827 = vpop.f32.mrb[0].mxu0
      %v6828 = vpop.f32.mrb[0].mxu0
      %v6829 = vadd.f32 0.0, %v6828
      %v6830 = vpop.f32.mrb[0].mxu0
      %6831 = vmatprep.mubr.bf16.mxu0 %v6395
      %6832 = vmatmul.mubr.bf16.gmra.mrb[0].mxu0 %v6331
      %v6833 = vpop.f32.mrb[0].mxu0
      %v6834 = vadd.f32 0.0, %v6833
      %v6835 = vpop.f32.mrb[0].mxu0
      %v6836 = vpop.f32.mrb[0].mxu0
      %v6837 = vadd.f32 0.0, %v6836
      %v6838 = vpop.f32.mrb[0].mxu0
      %6839 = vmatprep.mubr.bf16.mxu0 %v6396
      %6840 = vmatmul.mubr.bf16.gmra.mrb[0].mxu0 %v6332
      %v6841 = vpop.f32.mrb[0].mxu0
      %v6842 = vadd.f32 0.0, %v6841
      %v6843 = vpop.f32.mrb[0].mxu0
      %v6844 = vpop.f32.mrb[0].mxu0
      %v6845 = vadd.f32 0.0, %v6844
      %v6846 = vpop.f32.mrb[0].mxu0
      %6847 = vmatprep.mubr.bf16.mxu0 %v6397
      %6848 = vmatmul.mubr.bf16.gmra.mrb[0].mxu0 %v6333
      %v6849 = vpop.f32.mrb[0].mxu0
      %v6850 = vadd.f32 0.0, %v6849
      %v6851 = vpop.f32.mrb[0].mxu0
      %v6852 = vpop.f32.mrb[0].mxu0
      %v6853 = vadd.f32 0.0, %v6852
      %v6854 = vpop.f32.mrb[0].mxu0
      %6855 = vmatprep.mubr.bf16.mxu0 %v6398
      %6856 = vmatmul.mubr.bf16.gmra.mrb[0].mxu0 %v6334
      %v6857 = vpop.f32.mrb[0].mxu0
      %v6858 = vadd.f32 0.0, %v6857
      %v6859 = vpop.f32.mrb[0].mxu0
      %v6860 = vpop.f32.mrb[0].mxu0
      %v6861 = vadd.f32 0.0, %v6860
      %v6862 = vpop.f32.mrb[0].mxu0
      %6863 = vmatprep.mubr.bf16.mxu0 %v6399
      %6864 = vmatmul.mubr.bf16.gmra.mrb[0].mxu0 %v6335
      %v6865 = vpop.f32.mrb[0].mxu0
      %v6866 = vadd.f32 0.0, %v6865
      %v6867 = vpop.f32.mrb[0].mxu0
      %v6868 = vpop.f32.mrb[0].mxu0
      %v6869 = vadd.f32 0.0, %v6868
      %v6870 = vpop.f32.mrb[0].mxu0
      %6871 = vdwg.mxu0
      %6872 = vmatprep.subr.bf16.mxu0 0
      %6873 = vmatpush1.bf16.msra.mxu0 %v6679
      %6874 = vmatprep.subr.bf16.mxu0 0
      %6875 = vmatpush1.bf16.msra.mxu0 %v6680
      %6876 = vmatprep.subr.bf16.mxu0 0
      %6877 = vmatpush1.bf16.msra.mxu0 %v6681
      %6878 = vmatprep.subr.bf16.mxu0 0
      %6879 = vmatpush1.bf16.msra.mxu0 %v6682
      %6880 = vmatprep.subr.bf16.mxu0 0
      %6881 = vmatpush1.bf16.msra.mxu0 %v6683
      %6882 = vmatprep.subr.bf16.mxu0 0
      %6883 = vmatpush1.bf16.msra.mxu0 %v6684
      %6884 = vmatprep.subr.bf16.mxu0 0
      %6885 = vmatpush1.bf16.msra.mxu0 %v6685
      %6886 = vmatprep.subr.bf16.mxu0 0
      %6887 = vmatpush1.bf16.msra.mxu0 %v6686
      %6888 = vmatprep.subr.bf16.mxu0 0
      %6889 = vmatpush1.bf16.msra.mxu0 0
      %6890 = vmatprep.subr.bf16.mxu0 0
      %6891 = vmatpush1.bf16.msra.mxu0 0
      %6892 = vmatprep.subr.bf16.mxu0 0
      %6893 = vmatpush1.bf16.msra.mxu0 0
      %6894 = vmatprep.subr.bf16.mxu0 0
      %6895 = vmatpush1.bf16.msra.mxu0 0
      %6896 = vmatprep.subr.bf16.mxu0 0
      %6897 = vmatpush1.bf16.msra.mxu0 0
      %6898 = vmatprep.subr.bf16.mxu0 0
      %6899 = vmatpush1.bf16.msra.mxu0 0
      %6900 = vmatprep.subr.bf16.mxu0 0
      %6901 = vmatpush1.bf16.msra.mxu0 0
      %6902 = vmatprep.subr.bf16.mxu0 0
      %6903 = vmatpush1.bf16.msra.mxu0 0
      %6904 = vmatprep.mubr.bf16.mxu0 0
      %6905 = vmatmul.mubr.bf16.gmra.mrb[0].mxu0 %v6480
      %v6906 = vpop.f32.mrb[0].mxu0
      %v6907 = vadd.f32 %v6746, %v6906
      %v6908 = vpop.f32.mrb[0].mxu0
      %v6909 = vpop.f32.mrb[0].mxu0
      %v6910 = vadd.f32 %v6749, %v6909
      %v6911 = vpop.f32.mrb[0].mxu0
      %6912 = vmatprep.mubr.bf16.mxu0 0
      %6913 = vmatmul.mubr.bf16.gmra.mrb[0].mxu0 %v6481
      %v6914 = vpop.f32.mrb[0].mxu0
      %v6915 = vadd.f32 %v6754, %v6914
      %v6916 = vpop.f32.mrb[0].mxu0
      %v6917 = vpop.f32.mrb[0].mxu0
      %v6918 = vadd.f32 %v6757, %v6917
      %v6919 = vpop.f32.mrb[0].mxu0
      %6920 = vmatprep.mubr.bf16.mxu0 0
      %6921 = vmatmul.mubr.bf16.gmra.mrb[0].mxu0 %v6482
      %v6922 = vpop.f32.mrb[0].mxu0
      %v6923 = vadd.f32 %v6762, %v6922
      %v6924 = vpop.f32.mrb[0].mxu0
      %v6925 = vpop.f32.mrb[0].mxu0
      %v6926 = vadd.f32 %v6765, %v6925
      %v6927 = vpop.f32.mrb[0].mxu0
      %6928 = vmatprep.mubr.bf16.mxu0 0
      %6929 = vmatmul.mubr.bf16.gmra.mrb[0].mxu0 %v6483
      %v6930 = vpop.f32.mrb[0].mxu0
      %v6931 = vadd.f32 %v6770, %v6930
      %v6932 = vpop.f32.mrb[0].mxu0
      %v6933 = vpop.f32.mrb[0].mxu0
      %v6934 = vadd.f32 %v6773, %v6933
      %v6935 = vpop.f32.mrb[0].mxu0
      %6936 = vmatprep.mubr.bf16.mxu0 0
      %6937 = vmatmul.mubr.bf16.gmra.mrb[0].mxu0 %v6484
      %v6938 = vpop.f32.mrb[0].mxu0
      %v6939 = vadd.f32 %v6778, %v6938
      %v6940 = vpop.f32.mrb[0].mxu0
      %v6941 = vpop.f32.mrb[0].mxu0
      %v6942 = vadd.f32 %v6781, %v6941
      %v6943 = vpop.f32.mrb[0].mxu0
      %6944 = vmatprep.mubr.bf16.mxu0 0
      %6945 = vmatmul.mubr.bf16.gmra.mrb[0].mxu0 %v6485
      %v6946 = vpop.f32.mrb[0].mxu0
      %v6947 = vadd.f32 %v6786, %v6946
      %v6948 = vpop.f32.mrb[0].mxu0
      %v6949 = vpop.f32.mrb[0].mxu0
      %v6950 = vadd.f32 %v6789, %v6949
      %v6951 = vpop.f32.mrb[0].mxu0
      %6952 = vmatprep.mubr.bf16.mxu0 0
      %6953 = vmatmul.mubr.bf16.gmra.mrb[0].mxu0 %v6486
      %v6954 = vpop.f32.mrb[0].mxu0
      %v6955 = vadd.f32 %v6794, %v6954
      %v6956 = vpop.f32.mrb[0].mxu0
      %v6957 = vpop.f32.mrb[0].mxu0
      %v6958 = vadd.f32 %v6797, %v6957
      %v6959 = vpop.f32.mrb[0].mxu0
      %6960 = vmatprep.mubr.bf16.mxu0 0
      %6961 = vmatmul.mubr.bf16.gmra.mrb[0].mxu0 %v6487
      %v6962 = vpop.f32.mrb[0].mxu0
      %v6963 = vadd.f32 %v6802, %v6962
      %v6964 = vpop.f32.mrb[0].mxu0
      %v6965 = vpop.f32.mrb[0].mxu0
      %v6966 = vadd.f32 %v6805, %v6965
      %v6967 = vpop.f32.mrb[0].mxu0
      %6968 = vmatprep.mubr.bf16.mxu0 0
      %6969 = vmatmul.mubr.bf16.gmra.mrb[0].mxu0 %v6488
      %v6970 = vpop.f32.mrb[0].mxu0
      %v6971 = vadd.f32 %v6810, %v6970
      %v6972 = vpop.f32.mrb[0].mxu0
      %v6973 = vpop.f32.mrb[0].mxu0
      %v6974 = vadd.f32 %v6813, %v6973
      %v6975 = vpop.f32.mrb[0].mxu0
      %6976 = vmatprep.mubr.bf16.mxu0 0
      %6977 = vmatmul.mubr.bf16.gmra.mrb[0].mxu0 %v6489
      %v6978 = vpop.f32.mrb[0].mxu0
      %v6979 = vadd.f32 %v6818, %v6978
      %v6980 = vpop.f32.mrb[0].mxu0
      %v6981 = vpop.f32.mrb[0].mxu0
      %v6982 = vadd.f32 %v6821, %v6981
      %v6983 = vpop.f32.mrb[0].mxu0
      %6984 = vmatprep.mubr.bf16.mxu0 0
      %6985 = vmatmul.mubr.bf16.gmra.mrb[0].mxu0 %v6490
      %v6986 = vpop.f32.mrb[0].mxu0
      %v6987 = vadd.f32 %v6826, %v6986
      %v6988 = vpop.f32.mrb[0].mxu0
      %v6989 = vpop.f32.mrb[0].mxu0
      %v6990 = vadd.f32 %v6829, %v6989
      %v6991 = vpop.f32.mrb[0].mxu0
      %6992 = vmatprep.mubr.bf16.mxu0 0
      %6993 = vmatmul.mubr.bf16.gmra.mrb[0].mxu0 %v6491
      %v6994 = vpop.f32.mrb[0].mxu0
      %v6995 = vadd.f32 %v6834, %v6994
      %v6996 = vpop.f32.mrb[0].mxu0
      %v6997 = vpop.f32.mrb[0].mxu0
      %v6998 = vadd.f32 %v6837, %v6997
      %v6999 = vpop.f32.mrb[0].mxu0
      %7000 = vmatprep.mubr.bf16.mxu0 0
      %7001 = vmatmul.mubr.bf16.gmra.mrb[0].mxu0 %v6492
      %v7002 = vpop.f32.mrb[0].mxu0
      %v7003 = vadd.f32 %v6842, %v7002
      %v7004 = vpop.f32.mrb[0].mxu0
      %v7005 = vpop.f32.mrb[0].mxu0
      %v7006 = vadd.f32 %v6845, %v7005
      %v7007 = vpop.f32.mrb[0].mxu0
      %7008 = vmatprep.mubr.bf16.mxu0 0
      %7009 = vmatmul.mubr.bf16.gmra.mrb[0].mxu0 %v6493
      %v7010 = vpop.f32.mrb[0].mxu0
      %v7011 = vadd.f32 %v6850, %v7010
      %v7012 = vpop.f32.mrb[0].mxu0
      %v7013 = vpop.f32.mrb[0].mxu0
      %v7014 = vadd.f32 %v6853, %v7013
      %v7015 = vpop.f32.mrb[0].mxu0
      %7016 = vmatprep.mubr.bf16.mxu0 0
      %7017 = vmatmul.mubr.bf16.gmra.mrb[0].mxu0 %v6494
      %v7018 = vpop.f32.mrb[0].mxu0
      %v7019 = vadd.f32 %v6858, %v7018
      %v7020 = vpop.f32.mrb[0].mxu0
      %v7021 = vpop.f32.mrb[0].mxu0
      %v7022 = vadd.f32 %v6861, %v7021
      %v7023 = vpop.f32.mrb[0].mxu0
      %7024 = vmatprep.mubr.bf16.mxu0 0
      %7025 = vmatmul.mubr.bf16.gmra.mrb[0].mxu0 %v6495
      %v7026 = vpop.f32.mrb[0].mxu0
      %v7027 = vadd.f32 %v6866, %v7026
      %v7028 = vpop.f32.mrb[0].mxu0
      %v7029 = vpop.f32.mrb[0].mxu0
      %v7030 = vadd.f32 %v6869, %v7029
      %v7031 = vpop.f32.mrb[0].mxu0
      %7032 = vdwg.mxu0
      %v7033 = vadd.f32 %v6517, %v6907
      %v7034 = vadd.f32 %v6517, %v6910
      %v7035 = vadd.f32 %v6517, %v6915
      %v7036 = vadd.f32 %v6517, %v6918
      %v7037 = vadd.f32 %v6517, %v6923
      %v7038 = vadd.f32 %v6517, %v6926
      %v7039 = vadd.f32 %v6517, %v6931
      %v7040 = vadd.f32 %v6517, %v6934
      %v7041 = vadd.f32 %v6517, %v6939
      %v7042 = vadd.f32 %v6517, %v6942
      %v7043 = vadd.f32 %v6517, %v6947
      %v7044 = vadd.f32 %v6517, %v6950
      %v7045 = vadd.f32 %v6517, %v6955
      %v7046 = vadd.f32 %v6517, %v6958
      %v7047 = vadd.f32 %v6517, %v6963
      %v7048 = vadd.f32 %v6517, %v6966
      %v7049 = vadd.f32 %v6517, %v6971
      %v7050 = vadd.f32 %v6517, %v6974
      %v7051 = vadd.f32 %v6517, %v6979
      %v7052 = vadd.f32 %v6517, %v6982
      %v7053 = vadd.f32 %v6517, %v6987
      %v7054 = vadd.f32 %v6517, %v6990
      %v7055 = vadd.f32 %v6517, %v6995
      %v7056 = vadd.f32 %v6517, %v6998
      %v7057 = vadd.f32 %v6517, %v7003
      %v7058 = vadd.f32 %v6517, %v7006
      %v7059 = vadd.f32 %v6517, %v7011
      %v7060 = vadd.f32 %v6517, %v7014
      %v7061 = vadd.f32 %v6517, %v7019
      %v7062 = vadd.f32 %v6517, %v7022
      %v7063 = vadd.f32 %v6517, %v7027
      %v7064 = vadd.f32 %v6517, %v7030
      %v7065 = vld [vmem:[%s7 + $0xc0] sm:$0xf]
      %v7066 = vld [vmem:[%s7 + $0xc4] sm:$0xf]
      %v7067 = vld [vmem:[%s7 + $0xc8] sm:$0xf]
      %v7068 = vld [vmem:[%s7 + $0xcc] sm:$0xf]
      %v7069 = vld [vmem:[%s7 + $0xd0] sm:$0xf]
      %v7070 = vld [vmem:[%s7 + $0xd4] sm:$0xf]
      %v7071 = vld [vmem:[%s7 + $0xd8] sm:$0xf]
      %v7072 = vld [vmem:[%s7 + $0xdc] sm:$0xf]
      %v7073 = vld [vmem:[%s7 + $0xe0] sm:$0xf]
      %v7074 = vld [vmem:[%s7 + $0xe4] sm:$0xf]
      %v7075 = vld [vmem:[%s7 + $0xe8] sm:$0xf]
      %v7076 = vld [vmem:[%s7 + $0xec] sm:$0xf]
      %v7077 = vld [vmem:[%s7 + $0xf0] sm:$0xf]
      %v7078 = vld [vmem:[%s7 + $0xf4] sm:$0xf]
      %v7079 = vld [vmem:[%s7 + $0xf8] sm:$0xf]
      %v7080 = vld [vmem:[%s7 + $0xfc] sm:$0xf]
      %v7081 = vld [vmem:[%s7 + $0x100] sm:$0xf]
      %v7082 = vld [vmem:[%s7 + $0x104] sm:$0xf]
      %v7083 = vld [vmem:[%s7 + $0x108] sm:$0xf]
      %v7084 = vld [vmem:[%s7 + $0x10c] sm:$0xf]
      %v7085 = vld [vmem:[%s7 + $0x110] sm:$0xf]
      %v7086 = vld [vmem:[%s7 + $0x114] sm:$0xf]
      %v7087 = vld [vmem:[%s7 + $0x118] sm:$0xf]
      %v7088 = vld [vmem:[%s7 + $0x11c] sm:$0xf]
      %v7089 = vld [vmem:[%s7 + $0x120] sm:$0xf]
      %v7090 = vld [vmem:[%s7 + $0x124] sm:$0xf]
      %v7091 = vld [vmem:[%s7 + $0x128] sm:$0xf]
      %v7092 = vld [vmem:[%s7 + $0x12c] sm:$0xf]
      %v7093 = vld [vmem:[%s7 + $0x130] sm:$0xf]
      %v7094 = vld [vmem:[%s7 + $0x134] sm:$0xf]
      %v7095 = vld [vmem:[%s7 + $0x138] sm:$0xf]
      %v7096 = vld [vmem:[%s7 + $0x13c] sm:$0xf]
      %v7097 = vld [vmem:[%s7 + $0x140] sm:$0xf]
      %v7098 = vld [vmem:[%s7 + $0x144] sm:$0xf]
      %v7099 = vld [vmem:[%s7 + $0x148] sm:$0xf]
      %v7100 = vld [vmem:[%s7 + $0x14c] sm:$0xf]
      %v7101 = vld [vmem:[%s7 + $0x150] sm:$0xf]
      %v7102 = vld [vmem:[%s7 + $0x154] sm:$0xf]
      %v7103 = vld [vmem:[%s7 + $0x158] sm:$0xf]
      %v7104 = vld [vmem:[%s7 + $0x15c] sm:$0xf]
      %v7105 = vld [vmem:[%s7 + $0x160] sm:$0xf]
      %v7106 = vld [vmem:[%s7 + $0x164] sm:$0xf]
      %v7107 = vld [vmem:[%s7 + $0x168] sm:$0xf]
      %v7108 = vld [vmem:[%s7 + $0x16c] sm:$0xf]
      %v7109 = vld [vmem:[%s7 + $0x170] sm:$0xf]
      %v7110 = vld [vmem:[%s7 + $0x174] sm:$0xf]
      %v7111 = vld [vmem:[%s7 + $0x178] sm:$0xf]
      %v7112 = vld [vmem:[%s7 + $0x17c] sm:$0xf]
      %v7161 = vunpack.c.l.b16 %v7065
      %v7162 = vunpack.c.l.b16 %v7066
      %v7163 = vunpack.c.l.b16 %v7067
      %v7164 = vunpack.c.l.b16 %v7068
      %v7165 = vunpack.c.l.b16 %v7069
      %v7166 = vunpack.c.l.b16 %v7070
      %v7167 = vunpack.c.l.b16 %v7071
      %v7168 = vunpack.c.l.b16 %v7072
      %v7169 = vunpack.c.l.b16 %v7073
      %v7170 = vunpack.c.l.b16 %v7074
      %v7171 = vunpack.c.l.b16 %v7075
      %v7172 = vunpack.c.l.b16 %v7076
      %v7173 = vunpack.c.l.b16 %v7077
      %v7174 = vunpack.c.l.b16 %v7078
      %v7175 = vunpack.c.l.b16 %v7079
      %v7176 = vunpack.c.l.b16 %v7080
      %v7177 = vunpack.c.l.b16 %v7081
      %v7178 = vunpack.c.l.b16 %v7082
      %v7179 = vunpack.c.l.b16 %v7083
      %v7180 = vunpack.c.l.b16 %v7084
      %v7181 = vunpack.c.l.b16 %v7085
      %v7182 = vunpack.c.l.b16 %v7086
      %v7183 = vunpack.c.l.b16 %v7087
      %v7184 = vunpack.c.l.b16 %v7088
      %v7185 = vunpack.c.l.b16 %v7089
      %v7186 = vunpack.c.l.b16 %v7090
      %v7187 = vunpack.c.l.b16 %v7091
      %v7188 = vunpack.c.l.b16 %v7092
      %v7189 = vunpack.c.l.b16 %v7093
      %v7190 = vunpack.c.l.b16 %v7094
      %v7191 = vunpack.c.l.b16 %v7095
      %v7192 = vunpack.c.l.b16 %v7096
      %v7193 = vunpack.c.l.b16 %v7097
      %v7194 = vunpack.c.l.b16 %v7098
      %v7195 = vunpack.c.l.b16 %v7099
      %v7196 = vunpack.c.l.b16 %v7100
      %v7197 = vunpack.c.l.b16 %v7101
      %v7198 = vunpack.c.l.b16 %v7102
      %v7199 = vunpack.c.l.b16 %v7103
      %v7200 = vunpack.c.l.b16 %v7104
      %v7201 = vunpack.c.l.b16 %v7105
      %v7202 = vunpack.c.l.b16 %v7106
      %v7203 = vunpack.c.l.b16 %v7107
      %v7204 = vunpack.c.l.b16 %v7108
      %v7205 = vunpack.c.l.b16 %v7109
      %v7206 = vunpack.c.l.b16 %v7110
      %v7207 = vunpack.c.l.b16 %v7111
      %v7208 = vunpack.c.l.b16 %v7112
      %v7209 = vpack.c.b16 %v7162, %v7161
      %v7210 = vpack.c.b16 %v7164, %v7163
      %v7211 = vpack.c.b16 %v7166, %v7165
      %v7212 = vpack.c.b16 %v7168, %v7167
      %v7213 = vpack.c.b16 %v7170, %v7169
      %v7214 = vpack.c.b16 %v7172, %v7171
      %v7215 = vpack.c.b16 %v7174, %v7173
      %v7216 = vpack.c.b16 %v7176, %v7175
      %v7217 = vpack.c.b16 %v7178, %v7177
      %v7218 = vpack.c.b16 %v7180, %v7179
      %v7219 = vpack.c.b16 %v7182, %v7181
      %v7220 = vpack.c.b16 %v7184, %v7183
      %v7221 = vpack.c.b16 %v7186, %v7185
      %v7222 = vpack.c.b16 %v7188, %v7187
      %v7223 = vpack.c.b16 %v7190, %v7189
      %v7224 = vpack.c.b16 %v7192, %v7191
      %v7225 = vpack.c.b16 %v7194, %v7193
      %v7226 = vpack.c.b16 %v7196, %v7195
      %v7227 = vpack.c.b16 %v7198, %v7197
      %v7228 = vpack.c.b16 %v7200, %v7199
      %v7229 = vpack.c.b16 %v7202, %v7201
      %v7230 = vpack.c.b16 %v7204, %v7203
      %v7231 = vpack.c.b16 %v7206, %v7205
      %v7232 = vpack.c.b16 %v7208, %v7207
      %7257 = vmatprep.subr.bf16.mxu0 0
      %7258 = vmatpush1.bf16.msra.mxu0 %v7209
      %7259 = vmatprep.subr.bf16.mxu0 0
      %7260 = vmatpush1.bf16.msra.mxu0 %v7210
      %7261 = vmatprep.subr.bf16.mxu0 0
      %7262 = vmatpush1.bf16.msra.mxu0 %v7211
      %7263 = vmatprep.subr.bf16.mxu0 0
      %7264 = vmatpush1.bf16.msra.mxu0 %v7212
      %7265 = vmatprep.subr.bf16.mxu0 0
      %7266 = vmatpush1.bf16.msra.mxu0 %v7213
      %7267 = vmatprep.subr.bf16.mxu0 0
      %7268 = vmatpush1.bf16.msra.mxu0 %v7214
      %7269 = vmatprep.subr.bf16.mxu0 0
      %7270 = vmatpush1.bf16.msra.mxu0 %v7215
      %7271 = vmatprep.subr.bf16.mxu0 0
      %7272 = vmatpush1.bf16.msra.mxu0 %v7216
      %7273 = vmatprep.subr.bf16.mxu0 0
      %7274 = vmatpush1.bf16.msra.mxu0 %v7217
      %7275 = vmatprep.subr.bf16.mxu0 0
      %7276 = vmatpush1.bf16.msra.mxu0 %v7218
      %7277 = vmatprep.subr.bf16.mxu0 0
      %7278 = vmatpush1.bf16.msra.mxu0 %v7219
      %7279 = vmatprep.subr.bf16.mxu0 0
      %7280 = vmatpush1.bf16.msra.mxu0 %v7220
      %7281 = vmatprep.subr.bf16.mxu0 0
      %7282 = vmatpush1.bf16.msra.mxu0 %v7221
      %7283 = vmatprep.subr.bf16.mxu0 0
      %7284 = vmatpush1.bf16.msra.mxu0 %v7222
      %7285 = vmatprep.subr.bf16.mxu0 0
      %7286 = vmatpush1.bf16.msra.mxu0 %v7223
      %7287 = vmatprep.subr.bf16.mxu0 0
      %7288 = vmatpush1.bf16.msra.mxu0 %v7224
      %7289 = vmatprep.mubr.bf16.mxu0 %v6392
      %7290 = vmatmul.mubr.bf16.gmra.mrb[0].mxu0 %v6328
      %v7291 = vpop.f32.mrb[0].mxu0
      %v7292 = vadd.f32 0.0, %v7291
      %v7293 = vpop.f32.mrb[0].mxu0
      %v7294 = vpop.f32.mrb[0].mxu0
      %v7295 = vadd.f32 0.0, %v7294
      %v7296 = vpop.f32.mrb[0].mxu0
      %7297 = vmatprep.mubr.bf16.mxu0 %v6393
      %7298 = vmatmul.mubr.bf16.gmra.mrb[0].mxu0 %v6329
      %v7299 = vpop.f32.mrb[0].mxu0
      %v7300 = vadd.f32 0.0, %v7299
      %v7301 = vpop.f32.mrb[0].mxu0
      %v7302 = vpop.f32.mrb[0].mxu0
      %v7303 = vadd.f32 0.0, %v7302
      %v7304 = vpop.f32.mrb[0].mxu0
      %7305 = vmatprep.mubr.bf16.mxu0 %v6394
      %7306 = vmatmul.mubr.bf16.gmra.mrb[0].mxu0 %v6330
      %v7307 = vpop.f32.mrb[0].mxu0
      %v7308 = vadd.f32 0.0, %v7307
      %v7309 = vpop.f32.mrb[0].mxu0
      %v7310 = vpop.f32.mrb[0].mxu0
      %v7311 = vadd.f32 0.0, %v7310
      %v7312 = vpop.f32.mrb[0].mxu0
      %7313 = vmatprep.mubr.bf16.mxu0 %v6395
      %7314 = vmatmul.mubr.bf16.gmra.mrb[0].mxu0 %v6331
      %v7315 = vpop.f32.mrb[0].mxu0
      %v7316 = vadd.f32 0.0, %v7315
      %v7317 = vpop.f32.mrb[0].mxu0
      %v7318 = vpop.f32.mrb[0].mxu0
      %v7319 = vadd.f32 0.0, %v7318
      %v7320 = vpop.f32.mrb[0].mxu0
      %7321 = vmatprep.mubr.bf16.mxu0 %v6396
      %7322 = vmatmul.mubr.bf16.gmra.mrb[0].mxu0 %v6332
      %v7323 = vpop.f32.mrb[0].mxu0
      %v7324 = vadd.f32 0.0, %v7323
      %v7325 = vpop.f32.mrb[0].mxu0
      %v7326 = vpop.f32.mrb[0].mxu0
      %v7327 = vadd.f32 0.0, %v7326
      %v7328 = vpop.f32.mrb[0].mxu0
      %7329 = vmatprep.mubr.bf16.mxu0 %v6397
      %7330 = vmatmul.mubr.bf16.gmra.mrb[0].mxu0 %v6333
      %v7331 = vpop.f32.mrb[0].mxu0
      %v7332 = vadd.f32 0.0, %v7331
      %v7333 = vpop.f32.mrb[0].mxu0
      %v7334 = vpop.f32.mrb[0].mxu0
      %v7335 = vadd.f32 0.0, %v7334
      %v7336 = vpop.f32.mrb[0].mxu0
      %7337 = vmatprep.mubr.bf16.mxu0 %v6398
      %7338 = vmatmul.mubr.bf16.gmra.mrb[0].mxu0 %v6334
      %v7339 = vpop.f32.mrb[0].mxu0
      %v7340 = vadd.f32 0.0, %v7339
      %v7341 = vpop.f32.mrb[0].mxu0
      %v7342 = vpop.f32.mrb[0].mxu0
      %v7343 = vadd.f32 0.0, %v7342
      %v7344 = vpop.f32.mrb[0].mxu0
      %7345 = vmatprep.mubr.bf16.mxu0 %v6399
      %7346 = vmatmul.mubr.bf16.gmra.mrb[0].mxu0 %v6335
      %v7347 = vpop.f32.mrb[0].mxu0
      %v7348 = vadd.f32 0.0, %v7347
      %v7349 = vpop.f32.mrb[0].mxu0
      %v7350 = vpop.f32.mrb[0].mxu0
      %v7351 = vadd.f32 0.0, %v7350
      %v7352 = vpop.f32.mrb[0].mxu0
      %7353 = vmatprep.mubr.bf16.mxu0 %v6400
      %7354 = vmatmul.mubr.bf16.gmra.mrb[0].mxu0 %v6336
      %v7355 = vpop.f32.mrb[0].mxu0
      %v7356 = vadd.f32 0.0, %v7355
      %v7357 = vpop.f32.mrb[0].mxu0
      %v7358 = vpop.f32.mrb[0].mxu0
      %v7359 = vadd.f32 0.0, %v7358
      %v7360 = vpop.f32.mrb[0].mxu0
      %7361 = vmatprep.mubr.bf16.mxu0 %v6401
      %7362 = vmatmul.mubr.bf16.gmra.mrb[0].mxu0 %v6337
      %v7363 = vpop.f32.mrb[0].mxu0
      %v7364 = vadd.f32 0.0, %v7363
      %v7365 = vpop.f32.mrb[0].mxu0
      %v7366 = vpop.f32.mrb[0].mxu0
      %v7367 = vadd.f32 0.0, %v7366
      %v7368 = vpop.f32.mrb[0].mxu0
      %7369 = vmatprep.mubr.bf16.mxu0 %v6402
      %7370 = vmatmul.mubr.bf16.gmra.mrb[0].mxu0 %v6338
      %v7371 = vpop.f32.mrb[0].mxu0
      %v7372 = vadd.f32 0.0, %v7371
      %v7373 = vpop.f32.mrb[0].mxu0
      %v7374 = vpop.f32.mrb[0].mxu0
      %v7375 = vadd.f32 0.0, %v7374
      %v7376 = vpop.f32.mrb[0].mxu0
      %7377 = vmatprep.mubr.bf16.mxu0 %v6403
      %7378 = vmatmul.mubr.bf16.gmra.mrb[0].mxu0 %v6339
      %v7379 = vpop.f32.mrb[0].mxu0
      %v7380 = vadd.f32 0.0, %v7379
      %v7381 = vpop.f32.mrb[0].mxu0
      %v7382 = vpop.f32.mrb[0].mxu0
      %v7383 = vadd.f32 0.0, %v7382
      %v7384 = vpop.f32.mrb[0].mxu0
      %7385 = vmatprep.mubr.bf16.mxu0 %v6404
      %7386 = vmatmul.mubr.bf16.gmra.mrb[0].mxu0 %v6340
      %v7387 = vpop.f32.mrb[0].mxu0
      %v7388 = vadd.f32 0.0, %v7387
      %v7389 = vpop.f32.mrb[0].mxu0
      %v7390 = vpop.f32.mrb[0].mxu0
      %v7391 = vadd.f32 0.0, %v7390
      %v7392 = vpop.f32.mrb[0].mxu0
      %7393 = vmatprep.mubr.bf16.mxu0 %v6405
      %7394 = vmatmul.mubr.bf16.gmra.mrb[0].mxu0 %v6341
      %v7395 = vpop.f32.mrb[0].mxu0
      %v7396 = vadd.f32 0.0, %v7395
      %v7397 = vpop.f32.mrb[0].mxu0
      %v7398 = vpop.f32.mrb[0].mxu0
      %v7399 = vadd.f32 0.0, %v7398
      %v7400 = vpop.f32.mrb[0].mxu0
      %7401 = vmatprep.mubr.bf16.mxu0 %v6406
      %7402 = vmatmul.mubr.bf16.gmra.mrb[0].mxu0 %v6342
      %v7403 = vpop.f32.mrb[0].mxu0
      %v7404 = vadd.f32 0.0, %v7403
      %v7405 = vpop.f32.mrb[0].mxu0
      %v7406 = vpop.f32.mrb[0].mxu0
      %v7407 = vadd.f32 0.0, %v7406
      %v7408 = vpop.f32.mrb[0].mxu0
      %7409 = vmatprep.mubr.bf16.mxu0 %v6407
      %7410 = vmatmul.mubr.bf16.gmra.mrb[0].mxu0 %v6343
      %v7411 = vpop.f32.mrb[0].mxu0
      %v7412 = vadd.f32 0.0, %v7411
      %v7413 = vpop.f32.mrb[0].mxu0
      %v7414 = vpop.f32.mrb[0].mxu0
      %v7415 = vadd.f32 0.0, %v7414
      %v7416 = vpop.f32.mrb[0].mxu0
      %7417 = vdwg.mxu0
      %7418 = vmatprep.subr.bf16.mxu0 0
      %7419 = vmatpush1.bf16.msra.mxu0 %v7225
      %7420 = vmatprep.subr.bf16.mxu0 0
      %7421 = vmatpush1.bf16.msra.mxu0 %v7226
      %7422 = vmatprep.subr.bf16.mxu0 0
      %7423 = vmatpush1.bf16.msra.mxu0 %v7227
      %7424 = vmatprep.subr.bf16.mxu0 0
      %7425 = vmatpush1.bf16.msra.mxu0 %v7228
      %7426 = vmatprep.subr.bf16.mxu0 0
      %7427 = vmatpush1.bf16.msra.mxu0 %v7229
      %7428 = vmatprep.subr.bf16.mxu0 0
      %7429 = vmatpush1.bf16.msra.mxu0 %v7230
      %7430 = vmatprep.subr.bf16.mxu0 0
      %7431 = vmatpush1.bf16.msra.mxu0 %v7231
      %7432 = vmatprep.subr.bf16.mxu0 0
      %7433 = vmatpush1.bf16.msra.mxu0 %v7232
      %7434 = vmatprep.subr.bf16.mxu0 0
      %7435 = vmatpush1.bf16.msra.mxu0 0
      %7436 = vmatprep.subr.bf16.mxu0 0
      %7437 = vmatpush1.bf16.msra.mxu0 0
      %7438 = vmatprep.subr.bf16.mxu0 0
      %7439 = vmatpush1.bf16.msra.mxu0 0
      %7440 = vmatprep.subr.bf16.mxu0 0
      %7441 = vmatpush1.bf16.msra.mxu0 0
      %7442 = vmatprep.subr.bf16.mxu0 0
      %7443 = vmatpush1.bf16.msra.mxu0 0
      %7444 = vmatprep.subr.bf16.mxu0 0
      %7445 = vmatpush1.bf16.msra.mxu0 0
      %7446 = vmatprep.subr.bf16.mxu0 0
      %7447 = vmatpush1.bf16.msra.mxu0 0
      %7448 = vmatprep.subr.bf16.mxu0 0
      %7449 = vmatpush1.bf16.msra.mxu0 0
      %7450 = vmatprep.mubr.bf16.mxu0 0
      %7451 = vmatmul.mubr.bf16.gmra.mrb[0].mxu0 %v6488
      %v7452 = vpop.f32.mrb[0].mxu0
      %v7453 = vadd.f32 %v7292, %v7452
      %v7454 = vpop.f32.mrb[0].mxu0
      %v7455 = vpop.f32.mrb[0].mxu0
      %v7456 = vadd.f32 %v7295, %v7455
      %v7457 = vpop.f32.mrb[0].mxu0
      %7458 = vmatprep.mubr.bf16.mxu0 0
      %7459 = vmatmul.mubr.bf16.gmra.mrb[0].mxu0 %v6489
      %v7460 = vpop.f32.mrb[0].mxu0
      %v7461 = vadd.f32 %v7300, %v7460
      %v7462 = vpop.f32.mrb[0].mxu0
      %v7463 = vpop.f32.mrb[0].mxu0
      %v7464 = vadd.f32 %v7303, %v7463
      %v7465 = vpop.f32.mrb[0].mxu0
      %7466 = vmatprep.mubr.bf16.mxu0 0
      %7467 = vmatmul.mubr.bf16.gmra.mrb[0].mxu0 %v6490
      %v7468 = vpop.f32.mrb[0].mxu0
      %v7469 = vadd.f32 %v7308, %v7468
      %v7470 = vpop.f32.mrb[0].mxu0
      %v7471 = vpop.f32.mrb[0].mxu0
      %v7472 = vadd.f32 %v7311, %v7471
      %v7473 = vpop.f32.mrb[0].mxu0
      %7474 = vmatprep.mubr.bf16.mxu0 0
      %7475 = vmatmul.mubr.bf16.gmra.mrb[0].mxu0 %v6491
      %v7476 = vpop.f32.mrb[0].mxu0
      %v7477 = vadd.f32 %v7316, %v7476
      %v7478 = vpop.f32.mrb[0].mxu0
      %v7479 = vpop.f32.mrb[0].mxu0
      %v7480 = vadd.f32 %v7319, %v7479
      %v7481 = vpop.f32.mrb[0].mxu0
      %7482 = vmatprep.mubr.bf16.mxu0 0
      %7483 = vmatmul.mubr.bf16.gmra.mrb[0].mxu0 %v6492
      %v7484 = vpop.f32.mrb[0].mxu0
      %v7485 = vadd.f32 %v7324, %v7484
      %v7486 = vpop.f32.mrb[0].mxu0
      %v7487 = vpop.f32.mrb[0].mxu0
      %v7488 = vadd.f32 %v7327, %v7487
      %v7489 = vpop.f32.mrb[0].mxu0
      %7490 = vmatprep.mubr.bf16.mxu0 0
      %7491 = vmatmul.mubr.bf16.gmra.mrb[0].mxu0 %v6493
      %v7492 = vpop.f32.mrb[0].mxu0
      %v7493 = vadd.f32 %v7332, %v7492
      %v7494 = vpop.f32.mrb[0].mxu0
      %v7495 = vpop.f32.mrb[0].mxu0
      %v7496 = vadd.f32 %v7335, %v7495
      %v7497 = vpop.f32.mrb[0].mxu0
      %7498 = vmatprep.mubr.bf16.mxu0 0
      %7499 = vmatmul.mubr.bf16.gmra.mrb[0].mxu0 %v6494
      %v7500 = vpop.f32.mrb[0].mxu0
      %v7501 = vadd.f32 %v7340, %v7500
      %v7502 = vpop.f32.mrb[0].mxu0
      %v7503 = vpop.f32.mrb[0].mxu0
      %v7504 = vadd.f32 %v7343, %v7503
      %v7505 = vpop.f32.mrb[0].mxu0
      %7506 = vmatprep.mubr.bf16.mxu0 0
      %7507 = vmatmul.mubr.bf16.gmra.mrb[0].mxu0 %v6495
      %v7508 = vpop.f32.mrb[0].mxu0
      %v7509 = vadd.f32 %v7348, %v7508
      %v7510 = vpop.f32.mrb[0].mxu0
      %v7511 = vpop.f32.mrb[0].mxu0
      %v7512 = vadd.f32 %v7351, %v7511
      %v7513 = vpop.f32.mrb[0].mxu0
      %7514 = vmatprep.mubr.bf16.mxu0 0
      %7515 = vmatmul.mubr.bf16.gmra.mrb[0].mxu0 %v6496
      %v7516 = vpop.f32.mrb[0].mxu0
      %v7517 = vadd.f32 %v7356, %v7516
      %v7518 = vpop.f32.mrb[0].mxu0
      %v7519 = vpop.f32.mrb[0].mxu0
      %v7520 = vadd.f32 %v7359, %v7519
      %v7521 = vpop.f32.mrb[0].mxu0
      %7522 = vmatprep.mubr.bf16.mxu0 0
      %7523 = vmatmul.mubr.bf16.gmra.mrb[0].mxu0 %v6497
      %v7524 = vpop.f32.mrb[0].mxu0
      %v7525 = vadd.f32 %v7364, %v7524
      %v7526 = vpop.f32.mrb[0].mxu0
      %v7527 = vpop.f32.mrb[0].mxu0
      %v7528 = vadd.f32 %v7367, %v7527
      %v7529 = vpop.f32.mrb[0].mxu0
      %7530 = vmatprep.mubr.bf16.mxu0 0
      %7531 = vmatmul.mubr.bf16.gmra.mrb[0].mxu0 %v6498
      %v7532 = vpop.f32.mrb[0].mxu0
      %v7533 = vadd.f32 %v7372, %v7532
      %v7534 = vpop.f32.mrb[0].mxu0
      %v7535 = vpop.f32.mrb[0].mxu0
      %v7536 = vadd.f32 %v7375, %v7535
      %v7537 = vpop.f32.mrb[0].mxu0
      %7538 = vmatprep.mubr.bf16.mxu0 0
      %7539 = vmatmul.mubr.bf16.gmra.mrb[0].mxu0 %v6499
      %v7540 = vpop.f32.mrb[0].mxu0
      %v7541 = vadd.f32 %v7380, %v7540
      %v7542 = vpop.f32.mrb[0].mxu0
      %v7543 = vpop.f32.mrb[0].mxu0
      %v7544 = vadd.f32 %v7383, %v7543
      %v7545 = vpop.f32.mrb[0].mxu0
      %7546 = vmatprep.mubr.bf16.mxu0 0
      %7547 = vmatmul.mubr.bf16.gmra.mrb[0].mxu0 %v6500
      %v7548 = vpop.f32.mrb[0].mxu0
      %v7549 = vadd.f32 %v7388, %v7548
      %v7550 = vpop.f32.mrb[0].mxu0
      %v7551 = vpop.f32.mrb[0].mxu0
      %v7552 = vadd.f32 %v7391, %v7551
      %v7553 = vpop.f32.mrb[0].mxu0
      %7554 = vmatprep.mubr.bf16.mxu0 0
      %7555 = vmatmul.mubr.bf16.gmra.mrb[0].mxu0 %v6501
      %v7556 = vpop.f32.mrb[0].mxu0
      %v7557 = vadd.f32 %v7396, %v7556
      %v7558 = vpop.f32.mrb[0].mxu0
      %v7559 = vpop.f32.mrb[0].mxu0
      %v7560 = vadd.f32 %v7399, %v7559
      %v7561 = vpop.f32.mrb[0].mxu0
      %7562 = vmatprep.mubr.bf16.mxu0 0
      %7563 = vmatmul.mubr.bf16.gmra.mrb[0].mxu0 %v6502
      %v7564 = vpop.f32.mrb[0].mxu0
      %v7565 = vadd.f32 %v7404, %v7564
      %v7566 = vpop.f32.mrb[0].mxu0
      %v7567 = vpop.f32.mrb[0].mxu0
      %v7568 = vadd.f32 %v7407, %v7567
      %v7569 = vpop.f32.mrb[0].mxu0
      %7570 = vmatprep.mubr.bf16.mxu0 0
      %7571 = vmatmul.mubr.bf16.gmra.mrb[0].mxu0 %v6503
      %v7572 = vpop.f32.mrb[0].mxu0
      %v7573 = vadd.f32 %v7412, %v7572
      %v7574 = vpop.f32.mrb[0].mxu0
      %v7575 = vpop.f32.mrb[0].mxu0
      %v7576 = vadd.f32 %v7415, %v7575
      %v7577 = vpop.f32.mrb[0].mxu0
      %7578 = vdwg.mxu0
      %v7579 = vadd.f32 %v7033, %v7453
      %v7580 = vadd.f32 %v7034, %v7456
      %v7581 = vadd.f32 %v7035, %v7461
      %v7582 = vadd.f32 %v7036, %v7464
      %v7583 = vadd.f32 %v7037, %v7469
      %v7584 = vadd.f32 %v7038, %v7472
      %v7585 = vadd.f32 %v7039, %v7477
      %v7586 = vadd.f32 %v7040, %v7480
      %v7587 = vadd.f32 %v7041, %v7485
      %v7588 = vadd.f32 %v7042, %v7488
      %v7589 = vadd.f32 %v7043, %v7493
      %v7590 = vadd.f32 %v7044, %v7496
      %v7591 = vadd.f32 %v7045, %v7501
      %v7592 = vadd.f32 %v7046, %v7504
      %v7593 = vadd.f32 %v7047, %v7509
      %v7594 = vadd.f32 %v7048, %v7512
      %v7595 = vadd.f32 %v7049, %v7517
      %v7596 = vadd.f32 %v7050, %v7520
      %v7597 = vadd.f32 %v7051, %v7525
      %v7598 = vadd.f32 %v7052, %v7528
      %v7599 = vadd.f32 %v7053, %v7533
      %v7600 = vadd.f32 %v7054, %v7536
      %v7601 = vadd.f32 %v7055, %v7541
      %v7602 = vadd.f32 %v7056, %v7544
      %v7603 = vadd.f32 %v7057, %v7549
      %v7604 = vadd.f32 %v7058, %v7552
      %v7605 = vadd.f32 %v7059, %v7557
      %v7606 = vadd.f32 %v7060, %v7560
      %v7607 = vadd.f32 %v7061, %v7565
      %v7608 = vadd.f32 %v7062, %v7568
      %v7609 = vadd.f32 %v7063, %v7573
      %v7610 = vadd.f32 %v7064, %v7576
      %v7611 = vld [vmem:[%s7 + $0x180] sm:$0xf]
      %v7612 = vld [vmem:[%s7 + $0x184] sm:$0xf]
      %v7613 = vld [vmem:[%s7 + $0x188] sm:$0xf]
      %v7614 = vld [vmem:[%s7 + $0x18c] sm:$0xf]
      %v7615 = vld [vmem:[%s7 + $0x190] sm:$0xf]
      %v7616 = vld [vmem:[%s7 + $0x194] sm:$0xf]
      %v7617 = vld [vmem:[%s7 + $0x198] sm:$0xf]
      %v7618 = vld [vmem:[%s7 + $0x19c] sm:$0xf]
      %v7619 = vld [vmem:[%s7 + $0x1a0] sm:$0xf]
      %v7620 = vld [vmem:[%s7 + $0x1a4] sm:$0xf]
      %v7621 = vld [vmem:[%s7 + $0x1a8] sm:$0xf]
      %v7622 = vld [vmem:[%s7 + $0x1ac] sm:$0xf]
      %v7623 = vld [vmem:[%s7 + $0x1b0] sm:$0xf]
      %v7624 = vld [vmem:[%s7 + $0x1b4] sm:$0xf]
      %v7625 = vld [vmem:[%s7 + $0x1b8] sm:$0xf]
      %v7626 = vld [vmem:[%s7 + $0x1bc] sm:$0xf]
      %v7627 = vld [vmem:[%s7 + $0x1c0] sm:$0xf]
      %v7628 = vld [vmem:[%s7 + $0x1c4] sm:$0xf]
      %v7629 = vld [vmem:[%s7 + $0x1c8] sm:$0xf]
      %v7630 = vld [vmem:[%s7 + $0x1cc] sm:$0xf]
      %v7631 = vld [vmem:[%s7 + $0x1d0] sm:$0xf]
      %v7632 = vld [vmem:[%s7 + $0x1d4] sm:$0xf]
      %v7633 = vld [vmem:[%s7 + $0x1d8] sm:$0xf]
      %v7634 = vld [vmem:[%s7 + $0x1dc] sm:$0xf]
      %v7635 = vld [vmem:[%s7 + $0x1e0] sm:$0xf]
      %v7636 = vld [vmem:[%s7 + $0x1e4] sm:$0xf]
      %v7637 = vld [vmem:[%s7 + $0x1e8] sm:$0xf]
      %v7638 = vld [vmem:[%s7 + $0x1ec] sm:$0xf]
      %v7639 = vld [vmem:[%s7 + $0x1f0] sm:$0xf]
      %v7640 = vld [vmem:[%s7 + $0x1f4] sm:$0xf]
      %v7641 = vld [vmem:[%s7 + $0x1f8] sm:$0xf]
      %v7642 = vld [vmem:[%s7 + $0x1fc] sm:$0xf]
      %v7643 = vld [vmem:[%s7 + $0x200] sm:$0xf]
      %v7644 = vld [vmem:[%s7 + $0x204] sm:$0xf]
      %v7645 = vld [vmem:[%s7 + $0x208] sm:$0xf]
      %v7646 = vld [vmem:[%s7 + $0x20c] sm:$0xf]
      %v7647 = vld [vmem:[%s7 + $0x210] sm:$0xf]
      %v7648 = vld [vmem:[%s7 + $0x214] sm:$0xf]
      %v7649 = vld [vmem:[%s7 + $0x218] sm:$0xf]
      %v7650 = vld [vmem:[%s7 + $0x21c] sm:$0xf]
      %v7651 = vld [vmem:[%s7 + $0x220] sm:$0xf]
      %v7652 = vld [vmem:[%s7 + $0x224] sm:$0xf]
      %v7653 = vld [vmem:[%s7 + $0x228] sm:$0xf]
      %v7654 = vld [vmem:[%s7 + $0x22c] sm:$0xf]
      %v7655 = vld [vmem:[%s7 + $0x230] sm:$0xf]
      %v7656 = vld [vmem:[%s7 + $0x234] sm:$0xf]
      %v7657 = vld [vmem:[%s7 + $0x238] sm:$0xf]
      %v7658 = vld [vmem:[%s7 + $0x23c] sm:$0xf]
      %v7707 = vunpack.c.l.b16 %v7611
      %v7708 = vunpack.c.l.b16 %v7612
      %v7709 = vunpack.c.l.b16 %v7613
      %v7710 = vunpack.c.l.b16 %v7614
      %v7711 = vunpack.c.l.b16 %v7615
      %v7712 = vunpack.c.l.b16 %v7616
      %v7713 = vunpack.c.l.b16 %v7617
      %v7714 = vunpack.c.l.b16 %v7618
      %v7715 = vunpack.c.l.b16 %v7619
      %v7716 = vunpack.c.l.b16 %v7620
      %v7717 = vunpack.c.l.b16 %v7621
      %v7718 = vunpack.c.l.b16 %v7622
      %v7719 = vunpack.c.l.b16 %v7623
      %v7720 = vunpack.c.l.b16 %v7624
      %v7721 = vunpack.c.l.b16 %v7625
      %v7722 = vunpack.c.l.b16 %v7626
      %v7723 = vunpack.c.l.b16 %v7627
      %v7724 = vunpack.c.l.b16 %v7628
      %v7725 = vunpack.c.l.b16 %v7629
      %v7726 = vunpack.c.l.b16 %v7630
      %v7727 = vunpack.c.l.b16 %v7631
      %v7728 = vunpack.c.l.b16 %v7632
      %v7729 = vunpack.c.l.b16 %v7633
      %v7730 = vunpack.c.l.b16 %v7634
      %v7731 = vunpack.c.l.b16 %v7635
      %v7732 = vunpack.c.l.b16 %v7636
      %v7733 = vunpack.c.l.b16 %v7637
      %v7734 = vunpack.c.l.b16 %v7638
      %v7735 = vunpack.c.l.b16 %v7639
      %v7736 = vunpack.c.l.b16 %v7640
      %v7737 = vunpack.c.l.b16 %v7641
      %v7738 = vunpack.c.l.b16 %v7642
      %v7739 = vunpack.c.l.b16 %v7643
      %v7740 = vunpack.c.l.b16 %v7644
      %v7741 = vunpack.c.l.b16 %v7645
      %v7742 = vunpack.c.l.b16 %v7646
      %v7743 = vunpack.c.l.b16 %v7647
      %v7744 = vunpack.c.l.b16 %v7648
      %v7745 = vunpack.c.l.b16 %v7649
      %v7746 = vunpack.c.l.b16 %v7650
      %v7747 = vunpack.c.l.b16 %v7651
      %v7748 = vunpack.c.l.b16 %v7652
      %v7749 = vunpack.c.l.b16 %v7653
      %v7750 = vunpack.c.l.b16 %v7654
      %v7751 = vunpack.c.l.b16 %v7655
      %v7752 = vunpack.c.l.b16 %v7656
      %v7753 = vunpack.c.l.b16 %v7657
      %v7754 = vunpack.c.l.b16 %v7658
      %v7755 = vpack.c.b16 %v7708, %v7707
      %v7756 = vpack.c.b16 %v7710, %v7709
      %v7757 = vpack.c.b16 %v7712, %v7711
      %v7758 = vpack.c.b16 %v7714, %v7713
      %v7759 = vpack.c.b16 %v7716, %v7715
      %v7760 = vpack.c.b16 %v7718, %v7717
      %v7761 = vpack.c.b16 %v7720, %v7719
      %v7762 = vpack.c.b16 %v7722, %v7721
      %v7763 = vpack.c.b16 %v7724, %v7723
      %v7764 = vpack.c.b16 %v7726, %v7725
      %v7765 = vpack.c.b16 %v7728, %v7727
      %v7766 = vpack.c.b16 %v7730, %v7729
      %v7767 = vpack.c.b16 %v7732, %v7731
      %v7768 = vpack.c.b16 %v7734, %v7733
      %v7769 = vpack.c.b16 %v7736, %v7735
      %v7770 = vpack.c.b16 %v7738, %v7737
      %v7771 = vpack.c.b16 %v7740, %v7739
      %v7772 = vpack.c.b16 %v7742, %v7741
      %v7773 = vpack.c.b16 %v7744, %v7743
      %v7774 = vpack.c.b16 %v7746, %v7745
      %v7775 = vpack.c.b16 %v7748, %v7747
      %v7776 = vpack.c.b16 %v7750, %v7749
      %v7777 = vpack.c.b16 %v7752, %v7751
      %v7778 = vpack.c.b16 %v7754, %v7753
      %7803 = vmatprep.subr.bf16.mxu0 0
      %7804 = vmatpush1.bf16.msra.mxu0 %v7755
      %7805 = vmatprep.subr.bf16.mxu0 0
      %7806 = vmatpush1.bf16.msra.mxu0 %v7756
      %7807 = vmatprep.subr.bf16.mxu0 0
      %7808 = vmatpush1.bf16.msra.mxu0 %v7757
      %7809 = vmatprep.subr.bf16.mxu0 0
      %7810 = vmatpush1.bf16.msra.mxu0 %v7758
      %7811 = vmatprep.subr.bf16.mxu0 0
      %7812 = vmatpush1.bf16.msra.mxu0 %v7759
      %7813 = vmatprep.subr.bf16.mxu0 0
      %7814 = vmatpush1.bf16.msra.mxu0 %v7760
      %7815 = vmatprep.subr.bf16.mxu0 0
      %7816 = vmatpush1.bf16.msra.mxu0 %v7761
      %7817 = vmatprep.subr.bf16.mxu0 0
      %7818 = vmatpush1.bf16.msra.mxu0 %v7762
      %7819 = vmatprep.subr.bf16.mxu0 0
      %7820 = vmatpush1.bf16.msra.mxu0 %v7763
      %7821 = vmatprep.subr.bf16.mxu0 0
      %7822 = vmatpush1.bf16.msra.mxu0 %v7764
      %7823 = vmatprep.subr.bf16.mxu0 0
      %7824 = vmatpush1.bf16.msra.mxu0 %v7765
      %7825 = vmatprep.subr.bf16.mxu0 0
      %7826 = vmatpush1.bf16.msra.mxu0 %v7766
      %7827 = vmatprep.subr.bf16.mxu0 0
      %7828 = vmatpush1.bf16.msra.mxu0 %v7767
      %7829 = vmatprep.subr.bf16.mxu0 0
      %7830 = vmatpush1.bf16.msra.mxu0 %v7768
      %7831 = vmatprep.subr.bf16.mxu0 0
      %7832 = vmatpush1.bf16.msra.mxu0 %v7769
      %7833 = vmatprep.subr.bf16.mxu0 0
      %7834 = vmatpush1.bf16.msra.mxu0 %v7770
      %7835 = vmatprep.mubr.bf16.mxu0 %v6400
      %7836 = vmatmul.mubr.bf16.gmra.mrb[0].mxu0 %v6336
      %v7837 = vpop.f32.mrb[0].mxu0
      %v7838 = vadd.f32 0.0, %v7837
      %v7839 = vpop.f32.mrb[0].mxu0
      %v7840 = vpop.f32.mrb[0].mxu0
      %v7841 = vadd.f32 0.0, %v7840
      %v7842 = vpop.f32.mrb[0].mxu0
      %7843 = vmatprep.mubr.bf16.mxu0 %v6401
      %7844 = vmatmul.mubr.bf16.gmra.mrb[0].mxu0 %v6337
      %v7845 = vpop.f32.mrb[0].mxu0
      %v7846 = vadd.f32 0.0, %v7845
      %v7847 = vpop.f32.mrb[0].mxu0
      %v7848 = vpop.f32.mrb[0].mxu0
      %v7849 = vadd.f32 0.0, %v7848
      %v7850 = vpop.f32.mrb[0].mxu0
      %7851 = vmatprep.mubr.bf16.mxu0 %v6402
      %7852 = vmatmul.mubr.bf16.gmra.mrb[0].mxu0 %v6338
      %v7853 = vpop.f32.mrb[0].mxu0
      %v7854 = vadd.f32 0.0, %v7853
      %v7855 = vpop.f32.mrb[0].mxu0
      %v7856 = vpop.f32.mrb[0].mxu0
      %v7857 = vadd.f32 0.0, %v7856
      %v7858 = vpop.f32.mrb[0].mxu0
      %7859 = vmatprep.mubr.bf16.mxu0 %v6403
      %7860 = vmatmul.mubr.bf16.gmra.mrb[0].mxu0 %v6339
      %v7861 = vpop.f32.mrb[0].mxu0
      %v7862 = vadd.f32 0.0, %v7861
      %v7863 = vpop.f32.mrb[0].mxu0
      %v7864 = vpop.f32.mrb[0].mxu0
      %v7865 = vadd.f32 0.0, %v7864
      %v7866 = vpop.f32.mrb[0].mxu0
      %7867 = vmatprep.mubr.bf16.mxu0 %v6404
      %7868 = vmatmul.mubr.bf16.gmra.mrb[0].mxu0 %v6340
      %v7869 = vpop.f32.mrb[0].mxu0
      %v7870 = vadd.f32 0.0, %v7869
      %v7871 = vpop.f32.mrb[0].mxu0
      %v7872 = vpop.f32.mrb[0].mxu0
      %v7873 = vadd.f32 0.0, %v7872
      %v7874 = vpop.f32.mrb[0].mxu0
      %7875 = vmatprep.mubr.bf16.mxu0 %v6405
      %7876 = vmatmul.mubr.bf16.gmra.mrb[0].mxu0 %v6341
      %v7877 = vpop.f32.mrb[0].mxu0
      %v7878 = vadd.f32 0.0, %v7877
      %v7879 = vpop.f32.mrb[0].mxu0
      %v7880 = vpop.f32.mrb[0].mxu0
      %v7881 = vadd.f32 0.0, %v7880
      %v7882 = vpop.f32.mrb[0].mxu0
      %7883 = vmatprep.mubr.bf16.mxu0 %v6406
      %7884 = vmatmul.mubr.bf16.gmra.mrb[0].mxu0 %v6342
      %v7885 = vpop.f32.mrb[0].mxu0
      %v7886 = vadd.f32 0.0, %v7885
      %v7887 = vpop.f32.mrb[0].mxu0
      %v7888 = vpop.f32.mrb[0].mxu0
      %v7889 = vadd.f32 0.0, %v7888
      %v7890 = vpop.f32.mrb[0].mxu0
      %7891 = vmatprep.mubr.bf16.mxu0 %v6407
      %7892 = vmatmul.mubr.bf16.gmra.mrb[0].mxu0 %v6343
      %v7893 = vpop.f32.mrb[0].mxu0
      %v7894 = vadd.f32 0.0, %v7893
      %v7895 = vpop.f32.mrb[0].mxu0
      %v7896 = vpop.f32.mrb[0].mxu0
      %v7897 = vadd.f32 0.0, %v7896
      %v7898 = vpop.f32.mrb[0].mxu0
      %7899 = vmatprep.mubr.bf16.mxu0 %v6408
      %7900 = vmatmul.mubr.bf16.gmra.mrb[0].mxu0 %v6344
      %v7901 = vpop.f32.mrb[0].mxu0
      %v7902 = vadd.f32 0.0, %v7901
      %v7903 = vpop.f32.mrb[0].mxu0
      %v7904 = vpop.f32.mrb[0].mxu0
      %v7905 = vadd.f32 0.0, %v7904
      %v7906 = vpop.f32.mrb[0].mxu0
      %7907 = vmatprep.mubr.bf16.mxu0 %v6409
      %7908 = vmatmul.mubr.bf16.gmra.mrb[0].mxu0 %v6345
      %v7909 = vpop.f32.mrb[0].mxu0
      %v7910 = vadd.f32 0.0, %v7909
      %v7911 = vpop.f32.mrb[0].mxu0
      %v7912 = vpop.f32.mrb[0].mxu0
      %v7913 = vadd.f32 0.0, %v7912
      %v7914 = vpop.f32.mrb[0].mxu0
      %7915 = vmatprep.mubr.bf16.mxu0 %v6410
      %7916 = vmatmul.mubr.bf16.gmra.mrb[0].mxu0 %v6346
      %v7917 = vpop.f32.mrb[0].mxu0
      %v7918 = vadd.f32 0.0, %v7917
      %v7919 = vpop.f32.mrb[0].mxu0
      %v7920 = vpop.f32.mrb[0].mxu0
      %v7921 = vadd.f32 0.0, %v7920
      %v7922 = vpop.f32.mrb[0].mxu0
      %7923 = vmatprep.mubr.bf16.mxu0 %v6411
      %7924 = vmatmul.mubr.bf16.gmra.mrb[0].mxu0 %v6347
      %v7925 = vpop.f32.mrb[0].mxu0
      %v7926 = vadd.f32 0.0, %v7925
      %v7927 = vpop.f32.mrb[0].mxu0
      %v7928 = vpop.f32.mrb[0].mxu0
      %v7929 = vadd.f32 0.0, %v7928
      %v7930 = vpop.f32.mrb[0].mxu0
      %7931 = vmatprep.mubr.bf16.mxu0 %v6412
      %7932 = vmatmul.mubr.bf16.gmra.mrb[0].mxu0 %v6348
      %v7933 = vpop.f32.mrb[0].mxu0
      %v7934 = vadd.f32 0.0, %v7933
      %v7935 = vpop.f32.mrb[0].mxu0
      %v7936 = vpop.f32.mrb[0].mxu0
      %v7937 = vadd.f32 0.0, %v7936
      %v7938 = vpop.f32.mrb[0].mxu0
      %7939 = vmatprep.mubr.bf16.mxu0 %v6413
      %7940 = vmatmul.mubr.bf16.gmra.mrb[0].mxu0 %v6349
      %v7941 = vpop.f32.mrb[0].mxu0
      %v7942 = vadd.f32 0.0, %v7941
      %v7943 = vpop.f32.mrb[0].mxu0
      %v7944 = vpop.f32.mrb[0].mxu0
      %v7945 = vadd.f32 0.0, %v7944
      %v7946 = vpop.f32.mrb[0].mxu0
      %7947 = vmatprep.mubr.bf16.mxu0 %v6414
      %7948 = vmatmul.mubr.bf16.gmra.mrb[0].mxu0 %v6350
      %v7949 = vpop.f32.mrb[0].mxu0
      %v7950 = vadd.f32 0.0, %v7949
      %v7951 = vpop.f32.mrb[0].mxu0
      %v7952 = vpop.f32.mrb[0].mxu0
      %v7953 = vadd.f32 0.0, %v7952
      %v7954 = vpop.f32.mrb[0].mxu0
      %7955 = vmatprep.mubr.bf16.mxu0 %v6415
      %7956 = vmatmul.mubr.bf16.gmra.mrb[0].mxu0 %v6351
      %v7957 = vpop.f32.mrb[0].mxu0
      %v7958 = vadd.f32 0.0, %v7957
      %v7959 = vpop.f32.mrb[0].mxu0
      %v7960 = vpop.f32.mrb[0].mxu0
      %v7961 = vadd.f32 0.0, %v7960
      %v7962 = vpop.f32.mrb[0].mxu0
      %7963 = vdwg.mxu0
      %7964 = vmatprep.subr.bf16.mxu0 0
      %7965 = vmatpush1.bf16.msra.mxu0 %v7771
      %7966 = vmatprep.subr.bf16.mxu0 0
      %7967 = vmatpush1.bf16.msra.mxu0 %v7772
      %7968 = vmatprep.subr.bf16.mxu0 0
      %7969 = vmatpush1.bf16.msra.mxu0 %v7773
      %7970 = vmatprep.subr.bf16.mxu0 0
      %7971 = vmatpush1.bf16.msra.mxu0 %v7774
      %7972 = vmatprep.subr.bf16.mxu0 0
      %7973 = vmatpush1.bf16.msra.mxu0 %v7775
      %7974 = vmatprep.subr.bf16.mxu0 0
      %7975 = vmatpush1.bf16.msra.mxu0 %v7776
      %7976 = vmatprep.subr.bf16.mxu0 0
      %7977 = vmatpush1.bf16.msra.mxu0 %v7777
      %7978 = vmatprep.subr.bf16.mxu0 0
      %7979 = vmatpush1.bf16.msra.mxu0 %v7778
      %7980 = vmatprep.subr.bf16.mxu0 0
      %7981 = vmatpush1.bf16.msra.mxu0 0
      %7982 = vmatprep.subr.bf16.mxu0 0
      %7983 = vmatpush1.bf16.msra.mxu0 0
      %7984 = vmatprep.subr.bf16.mxu0 0
      %7985 = vmatpush1.bf16.msra.mxu0 0
      %7986 = vmatprep.subr.bf16.mxu0 0
      %7987 = vmatpush1.bf16.msra.mxu0 0
      %7988 = vmatprep.subr.bf16.mxu0 0
      %7989 = vmatpush1.bf16.msra.mxu0 0
      %7990 = vmatprep.subr.bf16.mxu0 0
      %7991 = vmatpush1.bf16.msra.mxu0 0
      %7992 = vmatprep.subr.bf16.mxu0 0
      %7993 = vmatpush1.bf16.msra.mxu0 0
      %7994 = vmatprep.subr.bf16.mxu0 0
      %7995 = vmatpush1.bf16.msra.mxu0 0
      %7996 = vmatprep.mubr.bf16.mxu0 0
      %7997 = vmatmul.mubr.bf16.gmra.mrb[0].mxu0 %v6496
      %v7998 = vpop.f32.mrb[0].mxu0
      %v7999 = vadd.f32 %v7838, %v7998
      %v8000 = vpop.f32.mrb[0].mxu0
      %v8001 = vpop.f32.mrb[0].mxu0
      %v8002 = vadd.f32 %v7841, %v8001
      %v8003 = vpop.f32.mrb[0].mxu0
      %8004 = vmatprep.mubr.bf16.mxu0 0
      %8005 = vmatmul.mubr.bf16.gmra.mrb[0].mxu0 %v6497
      %v8006 = vpop.f32.mrb[0].mxu0
      %v8007 = vadd.f32 %v7846, %v8006
      %v8008 = vpop.f32.mrb[0].mxu0
      %v8009 = vpop.f32.mrb[0].mxu0
      %v8010 = vadd.f32 %v7849, %v8009
      %v8011 = vpop.f32.mrb[0].mxu0
      %8012 = vmatprep.mubr.bf16.mxu0 0
      %8013 = vmatmul.mubr.bf16.gmra.mrb[0].mxu0 %v6498
      %v8014 = vpop.f32.mrb[0].mxu0
      %v8015 = vadd.f32 %v7854, %v8014
      %v8016 = vpop.f32.mrb[0].mxu0
      %v8017 = vpop.f32.mrb[0].mxu0
      %v8018 = vadd.f32 %v7857, %v8017
      %v8019 = vpop.f32.mrb[0].mxu0
      %8020 = vmatprep.mubr.bf16.mxu0 0
      %8021 = vmatmul.mubr.bf16.gmra.mrb[0].mxu0 %v6499
      %v8022 = vpop.f32.mrb[0].mxu0
      %v8023 = vadd.f32 %v7862, %v8022
      %v8024 = vpop.f32.mrb[0].mxu0
      %v8025 = vpop.f32.mrb[0].mxu0
      %v8026 = vadd.f32 %v7865, %v8025
      %v8027 = vpop.f32.mrb[0].mxu0
      %8028 = vmatprep.mubr.bf16.mxu0 0
      %8029 = vmatmul.mubr.bf16.gmra.mrb[0].mxu0 %v6500
      %v8030 = vpop.f32.mrb[0].mxu0
      %v8031 = vadd.f32 %v7870, %v8030
      %v8032 = vpop.f32.mrb[0].mxu0
      %v8033 = vpop.f32.mrb[0].mxu0
      %v8034 = vadd.f32 %v7873, %v8033
      %v8035 = vpop.f32.mrb[0].mxu0
      %8036 = vmatprep.mubr.bf16.mxu0 0
      %8037 = vmatmul.mubr.bf16.gmra.mrb[0].mxu0 %v6501
      %v8038 = vpop.f32.mrb[0].mxu0
      %v8039 = vadd.f32 %v7878, %v8038
      %v8040 = vpop.f32.mrb[0].mxu0
      %v8041 = vpop.f32.mrb[0].mxu0
      %v8042 = vadd.f32 %v7881, %v8041
      %v8043 = vpop.f32.mrb[0].mxu0
      %8044 = vmatprep.mubr.bf16.mxu0 0
      %8045 = vmatmul.mubr.bf16.gmra.mrb[0].mxu0 %v6502
      %v8046 = vpop.f32.mrb[0].mxu0
      %v8047 = vadd.f32 %v7886, %v8046
      %v8048 = vpop.f32.mrb[0].mxu0
      %v8049 = vpop.f32.mrb[0].mxu0
      %v8050 = vadd.f32 %v7889, %v8049
      %v8051 = vpop.f32.mrb[0].mxu0
      %8052 = vmatprep.mubr.bf16.mxu0 0
      %8053 = vmatmul.mubr.bf16.gmra.mrb[0].mxu0 %v6503
      %v8054 = vpop.f32.mrb[0].mxu0
      %v8055 = vadd.f32 %v7894, %v8054
      %v8056 = vpop.f32.mrb[0].mxu0
      %v8057 = vpop.f32.mrb[0].mxu0
      %v8058 = vadd.f32 %v7897, %v8057
      %v8059 = vpop.f32.mrb[0].mxu0
      %8060 = vmatprep.mubr.bf16.mxu0 0
      %8061 = vmatmul.mubr.bf16.gmra.mrb[0].mxu0 %v6504
      %v8062 = vpop.f32.mrb[0].mxu0
      %v8063 = vadd.f32 %v7902, %v8062
      %v8064 = vpop.f32.mrb[0].mxu0
      %v8065 = vpop.f32.mrb[0].mxu0
      %v8066 = vadd.f32 %v7905, %v8065
      %v8067 = vpop.f32.mrb[0].mxu0
      %8068 = vmatprep.mubr.bf16.mxu0 0
      %8069 = vmatmul.mubr.bf16.gmra.mrb[0].mxu0 %v6505
      %v8070 = vpop.f32.mrb[0].mxu0
      %v8071 = vadd.f32 %v7910, %v8070
      %v8072 = vpop.f32.mrb[0].mxu0
      %v8073 = vpop.f32.mrb[0].mxu0
      %v8074 = vadd.f32 %v7913, %v8073
      %v8075 = vpop.f32.mrb[0].mxu0
      %8076 = vmatprep.mubr.bf16.mxu0 0
      %8077 = vmatmul.mubr.bf16.gmra.mrb[0].mxu0 %v6506
      %v8078 = vpop.f32.mrb[0].mxu0
      %v8079 = vadd.f32 %v7918, %v8078
      %v8080 = vpop.f32.mrb[0].mxu0
      %v8081 = vpop.f32.mrb[0].mxu0
      %v8082 = vadd.f32 %v7921, %v8081
      %v8083 = vpop.f32.mrb[0].mxu0
      %8084 = vmatprep.mubr.bf16.mxu0 0
      %8085 = vmatmul.mubr.bf16.gmra.mrb[0].mxu0 %v6507
      %v8086 = vpop.f32.mrb[0].mxu0
      %v8087 = vadd.f32 %v7926, %v8086
      %v8088 = vpop.f32.mrb[0].mxu0
      %v8089 = vpop.f32.mrb[0].mxu0
      %v8090 = vadd.f32 %v7929, %v8089
      %v8091 = vpop.f32.mrb[0].mxu0
      %8092 = vmatprep.mubr.bf16.mxu0 0
      %8093 = vmatmul.mubr.bf16.gmra.mrb[0].mxu0 %v6508
      %v8094 = vpop.f32.mrb[0].mxu0
      %v8095 = vadd.f32 %v7934, %v8094
      %v8096 = vpop.f32.mrb[0].mxu0
      %v8097 = vpop.f32.mrb[0].mxu0
      %v8098 = vadd.f32 %v7937, %v8097
      %v8099 = vpop.f32.mrb[0].mxu0
      %8100 = vmatprep.mubr.bf16.mxu0 0
      %8101 = vmatmul.mubr.bf16.gmra.mrb[0].mxu0 %v6509
      %v8102 = vpop.f32.mrb[0].mxu0
      %v8103 = vadd.f32 %v7942, %v8102
      %v8104 = vpop.f32.mrb[0].mxu0
      %v8105 = vpop.f32.mrb[0].mxu0
      %v8106 = vadd.f32 %v7945, %v8105
      %v8107 = vpop.f32.mrb[0].mxu0
      %8108 = vmatprep.mubr.bf16.mxu0 0
      %8109 = vmatmul.mubr.bf16.gmra.mrb[0].mxu0 %v6510
      %v8110 = vpop.f32.mrb[0].mxu0
      %v8111 = vadd.f32 %v7950, %v8110
      %v8112 = vpop.f32.mrb[0].mxu0
      %v8113 = vpop.f32.mrb[0].mxu0
      %v8114 = vadd.f32 %v7953, %v8113
      %v8115 = vpop.f32.mrb[0].mxu0
      %8116 = vmatprep.mubr.bf16.mxu0 0
      %8117 = vmatmul.mubr.bf16.gmra.mrb[0].mxu0 %v6511
      %v8118 = vpop.f32.mrb[0].mxu0
      %v8119 = vadd.f32 %v7958, %v8118
      %v8120 = vpop.f32.mrb[0].mxu0
      %v8121 = vpop.f32.mrb[0].mxu0
      %v8122 = vadd.f32 %v7961, %v8121
      %v8123 = vpop.f32.mrb[0].mxu0
      %8124 = vdwg.mxu0
      %v8125 = vadd.f32 %v7579, %v7999
      %v8126 = vadd.f32 %v7580, %v8002
      %v8127 = vadd.f32 %v7581, %v8007
      %v8128 = vadd.f32 %v7582, %v8010
      %v8129 = vadd.f32 %v7583, %v8015
      %v8130 = vadd.f32 %v7584, %v8018
      %v8131 = vadd.f32 %v7585, %v8023
      %v8132 = vadd.f32 %v7586, %v8026
      %v8133 = vadd.f32 %v7587, %v8031
      %v8134 = vadd.f32 %v7588, %v8034
      %v8135 = vadd.f32 %v7589, %v8039
      %v8136 = vadd.f32 %v7590, %v8042
      %v8137 = vadd.f32 %v7591, %v8047
      %v8138 = vadd.f32 %v7592, %v8050
      %v8139 = vadd.f32 %v7593, %v8055
      %v8140 = vadd.f32 %v7594, %v8058
      %v8141 = vadd.f32 %v7595, %v8063
      %v8142 = vadd.f32 %v7596, %v8066
      %v8143 = vadd.f32 %v7597, %v8071
      %v8144 = vadd.f32 %v7598, %v8074
      %v8145 = vadd.f32 %v7599, %v8079
      %v8146 = vadd.f32 %v7600, %v8082
      %v8147 = vadd.f32 %v7601, %v8087
      %v8148 = vadd.f32 %v7602, %v8090
      %v8149 = vadd.f32 %v7603, %v8095
      %v8150 = vadd.f32 %v7604, %v8098
      %v8151 = vadd.f32 %v7605, %v8103
      %v8152 = vadd.f32 %v7606, %v8106
      %v8153 = vadd.f32 %v7607, %v8111
      %v8154 = vadd.f32 %v7608, %v8114
      %v8155 = vadd.f32 %v7609, %v8119
      %v8156 = vadd.f32 %v7610, %v8122
      %v8157 = vmax.f32 %v8125, 0.0
      %v8158 = vmax.f32 %v8126, 0.0
      %v8159 = vmax.f32 %v8127, 0.0
      %v8160 = vmax.f32 %v8128, 0.0
      %v8161 = vmax.f32 %v8129, 0.0
      %v8162 = vmax.f32 %v8130, 0.0
      %v8163 = vmax.f32 %v8131, 0.0
      %v8164 = vmax.f32 %v8132, 0.0
      %v8165 = vmax.f32 %v8133, 0.0
      %v8166 = vmax.f32 %v8134, 0.0
      %v8167 = vmax.f32 %v8135, 0.0
      %v8168 = vmax.f32 %v8136, 0.0
      %v8169 = vmax.f32 %v8137, 0.0
      %v8170 = vmax.f32 %v8138, 0.0
      %v8171 = vmax.f32 %v8139, 0.0
      %v8172 = vmax.f32 %v8140, 0.0
      %v8173 = vmax.f32 %v8141, 0.0
      %v8174 = vmax.f32 %v8142, 0.0
      %v8175 = vmax.f32 %v8143, 0.0
      %v8176 = vmax.f32 %v8144, 0.0
      %v8177 = vmax.f32 %v8145, 0.0
      %v8178 = vmax.f32 %v8146, 0.0
      %v8179 = vmax.f32 %v8147, 0.0
      %v8180 = vmax.f32 %v8148, 0.0
      %v8181 = vmax.f32 %v8149, 0.0
      %v8182 = vmax.f32 %v8150, 0.0
      %v8183 = vmax.f32 %v8151, 0.0
      %v8184 = vmax.f32 %v8152, 0.0
      %v8185 = vmax.f32 %v8153, 0.0
      %v8186 = vmax.f32 %v8154, 0.0
      %v8187 = vmax.f32 %v8155, 0.0
      %v8188 = vmax.f32 %v8156, 0.0
      %v8189 = vadd.f32 %v6192, %v8157
      %v8190 = vadd.f32 %v6193, %v8158
      %v8191 = vadd.f32 %v6194, %v8159
      %v8192 = vadd.f32 %v6195, %v8160
      %v8193 = vadd.f32 %v6196, %v8161
      %v8194 = vadd.f32 %v6197, %v8162
      %v8195 = vadd.f32 %v6198, %v8163
      %v8196 = vadd.f32 %v6199, %v8164
      %v8197 = vadd.f32 %v6200, %v8165
      %v8198 = vadd.f32 %v6201, %v8166
      %v8199 = vadd.f32 %v6202, %v8167
      %v8200 = vadd.f32 %v6203, %v8168
      %v8201 = vadd.f32 %v6204, %v8169
      %v8202 = vadd.f32 %v6205, %v8170
      %v8203 = vadd.f32 %v6206, %v8171
      %v8204 = vadd.f32 %v6207, %v8172
      %v8205 = vadd.f32 %v6208, %v8173
      %v8206 = vadd.f32 %v6209, %v8174
      %v8207 = vadd.f32 %v6210, %v8175
      %v8208 = vadd.f32 %v6211, %v8176
      %v8209 = vadd.f32 %v6212, %v8177
      %v8210 = vadd.f32 %v6213, %v8178
      %v8211 = vadd.f32 %v6214, %v8179
      %v8212 = vadd.f32 %v6215, %v8180
      %v8213 = vadd.f32 %v6216, %v8181
      %v8214 = vadd.f32 %v6217, %v8182
      %v8215 = vadd.f32 %v6218, %v8183
      %v8216 = vadd.f32 %v6219, %v8184
      %v8217 = vadd.f32 %v6220, %v8185
      %v8218 = vadd.f32 %v6221, %v8186
      %v8219 = vadd.f32 %v6222, %v8187
      %v8220 = vadd.f32 %v6223, %v8188
      %8221 = vst [vmem:[%s332] sm:$0xff] %v8189
      %8222 = vst [vmem:[%s332 + $0x8] sm:$0xff] %v8190
      %8223 = vst [vmem:[%s332 + $0x10] sm:$0xff] %v8191
      %8224 = vst [vmem:[%s332 + $0x18] sm:$0xff] %v8192
      %8225 = vst [vmem:[%s332 + $0x20] sm:$0xff] %v8193
      %8226 = vst [vmem:[%s332 + $0x28] sm:$0xff] %v8194
      %8227 = vst [vmem:[%s332 + $0x30] sm:$0xff] %v8195
      %8228 = vst [vmem:[%s332 + $0x38] sm:$0xff] %v8196
      %8229 = vst [vmem:[%s332 + $0x40] sm:$0xff] %v8197
      %8230 = vst [vmem:[%s332 + $0x48] sm:$0xff] %v8198
      %8231 = vst [vmem:[%s332 + $0x50] sm:$0xff] %v8199
      %8232 = vst [vmem:[%s332 + $0x58] sm:$0xff] %v8200
      %8233 = vst [vmem:[%s332 + $0x60] sm:$0xff] %v8201
      %8234 = vst [vmem:[%s332 + $0x68] sm:$0xff] %v8202
      %8235 = vst [vmem:[%s332 + $0x70] sm:$0xff] %v8203
      %8236 = vst [vmem:[%s332 + $0x78] sm:$0xff] %v8204
      %8237 = vst [vmem:[%s332 + $0x80] sm:$0xff] %v8205
      %8238 = vst [vmem:[%s332 + $0x88] sm:$0xff] %v8206
      %8239 = vst [vmem:[%s332 + $0x90] sm:$0xff] %v8207
      %8240 = vst [vmem:[%s332 + $0x98] sm:$0xff] %v8208
      %8241 = vst [vmem:[%s332 + $0xa0] sm:$0xff] %v8209
      %8242 = vst [vmem:[%s332 + $0xa8] sm:$0xff] %v8210
      %8243 = vst [vmem:[%s332 + $0xb0] sm:$0xff] %v8211
      %8244 = vst [vmem:[%s332 + $0xb8] sm:$0xff] %v8212
      %8245 = vst [vmem:[%s332 + $0xc0] sm:$0xff] %v8213
      %8246 = vst [vmem:[%s332 + $0xc8] sm:$0xff] %v8214
      %8247 = vst [vmem:[%s332 + $0xd0] sm:$0xff] %v8215
      %8248 = vst [vmem:[%s332 + $0xd8] sm:$0xff] %v8216
      %8249 = vst [vmem:[%s332 + $0xe0] sm:$0xff] %v8217
      %8250 = vst [vmem:[%s332 + $0xe8] sm:$0xff] %v8218
      %8251 = vst [vmem:[%s332 + $0xf0] sm:$0xff] %v8219
      %8252 = vst [vmem:[%s332 + $0xf8] sm:$0xff] %v8220
      %p8253 = scmp.lt.s32.totalorder %s20, 1
      %s8254 = scalar_select %p8253, %s20, 1
      %s8255 = smul.addr %s8254, 32
      %s8256 = smul.addr %s8255, 8
      %s8257 = scalar_lea.vmem %s9, %s8256
      // Predicated region
      $region57: #{dblock_forward.1} parent=55 // pred_check
        %p8258 = pneg %p232
      $region58: #{dblock_forward.1} parent=55 // pred_check_branch
        %8260 = sbr.rel (%p8258) target = $region60
      $region59: #{dblock_forward.1} parent=55 // pred_region
        _
      $region60: #{dblock_forward.1} parent=55 // pred_fallthru
        _
    $region56: #{dblock_forward.1} parent=5 // pred_fallthru
      _
    %p8261 = scmp.le.s32.totalorder 2, %s15
    // Predicated region
    $region61: #{dblock_forward.1} parent=5 // pred_check
      %p8262 = pneg %p8261
    $region62: #{dblock_forward.1} parent=5 // pred_check_branch
      %8264 = sbr.rel (%p8262) target = $region64
    $region63: #{dblock_forward.1} parent=5 // pred_region
      %s8265 = ssub.s32 %s15, 2
      // Predicated region
      $region65: #{dblock_forward.1} parent=63 // pred_check
        %p8266 = pneg %p238
      $region66: #{dblock_forward.1} parent=63 // pred_check_branch
        %8268 = sbr.rel (%p8266) target = $region68
      $region67: #{dblock_forward.1} parent=63 // pred_region
        %p8269 = scmp.lt.s32.totalorder %s21, 1
        %s8270 = scalar_select %p8269, %s21, 1
        %s8271 = smul.addr %s8270, 32
        %s8272 = smul.addr %s8271, 8
        %s8273 = scalar_lea.vmem %s9, %s8272
      $region68: #{dblock_forward.1} parent=63 // pred_fallthru
        _
    $region64: #{dblock_forward.1} parent=5 // pred_fallthru
      _
  $region6: #{dblock_forward.1} parent=0 // loop_footer
    %s19 = sadd.s32 1, %s15
  $region7: #{dblock_forward.1} parent=0 // loop_footer_branch
    %14 = sbr.rel target = $region3
  $region8: #{dblock_forward.1} parent=0 // loop_exit
    _

</llo_original>
